<compile_context>
chip_gen: v7x
topology: tpu7x:2x2x1
jax: 0.10.0
libtpu: 0.0.40
codegen_flags: <defaults>
</compile_context>

<pallas_src>
import functools

import jax
import jax.numpy as jnp
from jax.experimental import pallas as pl
from jax.experimental.pallas import tpu as pltpu

BN_EPS = 1e-5
LANE = 128


def _round_up(x, m):
    return (x + m - 1) // m * m


# ---------------------------------------------------------------------------
# Tiling choice / VMEM budgeting
# ---------------------------------------------------------------------------
def _vmem_bytes(th, w, cinp, cmidp, coutp):
    """Rough per-step VMEM footprint (pipeline blocks double-buffered + scratch)."""
    x_blk = (th + 4) * (w + 2) * cinp * 2           # bf16 input halo tile
    wgt = 9 * cinp * cmidp * 2 + 9 * cmidp * coutp * 2
    out_blk = th * w * coutp * 2
    mid = (th + 2) * (w + 2) * cmidp * 2
    acc = (th + 2) * w * cmidp * 4 + th * w * coutp * 4
    return 2 * x_blk + 2 * wgt + 2 * out_blk + mid + acc


def _choose_th(h, w, cinp, cmidp, coutp, budget_bytes=12 << 20):
    """Largest divisor of H whose fused per-step working set fits the budget."""
    best = 1
    for th in range(1, h + 1):
        if h % th == 0 and _vmem_bytes(th, w, cinp, cmidp, coutp) <= budget_bytes:
            best = th
    return best


# ---------------------------------------------------------------------------
# Fused kernel: (3x3 conv + folded BN + ReLU) x 2 for one (n, row-group) step.
#
#  x_ref   : (TH+4, W+2, Cinp)  bf16 input halo tile (2-row / 1-col zero halo)
#  w1_ref  : (3, 3*Cinp, Cmidp) bf16, layout (dy, dx*Cinp + c, o), BN1 folded
#  b1_ref  : (1, Cmidp)         f32  conv1 bias + BN1 shift
#  w2_ref  : (3, 3*Cmidp, Coutp) bf16
#  b2_ref  : (1, Coutp)         f32
#  o_ref   : (TH, W, Coutp)     bf16
#  mid_ref : (TH+2, W+2, Cmidp) bf16 scratch, conv1 rows r0-1..r0+TH + zero halo
#  acc1/2  : f32 VMEM accumulators
# ---------------------------------------------------------------------------
def _fused_conv_block_kernel(x_ref, w1_ref, b1_ref, w2_ref, b2_ref, o_ref,
                             mid_ref, acc1_ref, acc2_ref):
    g = pl.program_id(1)
    ng = pl.num_programs(1)
    th = o_ref.shape[0]
    w = o_ref.shape[1]
    cmid = mid_ref.shape[-1]

    # ---- stage 1: conv1 + BN1 + ReLU over TH+2 rows (the conv2 row halo) ----
    # One matmul per dy: M = (TH+2)*W, K = 3*Cinp (all dx taps packed along
    # the contraction -> fills the 256-wide MXU contraction on v6e/v7x).
    for dy in range(3):
        patch = jnp.concatenate(
            [x_ref[dy:dy + th + 2, dx:dx + w, :] for dx in range(3)], axis=-1)
        patch = patch.reshape((th + 2) * w, patch.shape[-1])
        contrib = jnp.dot(patch, w1_ref[dy],
                          preferred_element_type=jnp.float32)
        if dy == 0:
            acc1_ref[...] = contrib
        else:
            acc1_ref[...] += contrib
    y1 = jnp.maximum(acc1_ref[...] + b1_ref[...], 0.0).astype(mid_ref.dtype)

    # conv1 result stays in VMEM (no HBM round trip). Zero the spatial halo,
    # then fill the interior columns.
    mid_ref[...] = jnp.zeros_like(mid_ref)
    mid_ref[:, 1:w + 1, :] = y1.reshape(th + 2, w, cmid)

    # Rows outside the image are zero padding, NOT conv1 outputs.
    @pl.when(g == 0)
    def _():
        mid_ref[0, :, :] = jnp.zeros((w + 2, cmid), mid_ref.dtype)

    @pl.when(g == ng - 1)
    def _():
        mid_ref[th + 1, :, :] = jnp.zeros((w + 2, cmid), mid_ref.dtype)

    # ---- stage 2: conv2 + BN2 + ReLU over TH rows ---------------------------
    for dy in range(3):
        patch = jnp.concatenate(
            [mid_ref[dy:dy + th, dx:dx + w, :] for dx in range(3)], axis=-1)
        patch = patch.reshape(th * w, patch.shape[-1])
        contrib = jnp.dot(patch, w2_ref[dy],
                          preferred_element_type=jnp.float32)
        if dy == 0:
            acc2_ref[...] = contrib
        else:
            acc2_ref[...] += contrib
    y2 = jnp.maximum(acc2_ref[...] + b2_ref[...], 0.0)
    o_ref[...] = y2.reshape(th, w, o_ref.shape[-1]).astype(o_ref.dtype)


# ---------------------------------------------------------------------------
# Host wrapper: NCHW in / NCHW out, BN pre-folded into (w, b).
# ---------------------------------------------------------------------------
def conv_block_pallas(x_nchw, w1, b1, w2, b2):
    """x_nchw (N,Cin,H,W) f32 -> (N,Cout,H,W) f32.  w*: (3,3,Cin,Cout) HWIO, BN folded."""
    N, Cin, H, W = x_nchw.shape
    Cmid = w1.shape[-1]
    Cout = w2.shape[-1]
    Cinp = _round_up(Cin, LANE)
    Cmidp = _round_up(Cmid, LANE)
    Coutp = _round_up(Cout, LANE)

    TH = _choose_th(H, W, Cinp, Cmidp, Coutp)
    G = H // TH

    # NCHW -> NHWC, bf16, spatial halo (2 rows / 1 col per side), lane-pad channels.
    x = jnp.transpose(x_nchw, (0, 2, 3, 1)).astype(jnp.bfloat16)
    xp = jnp.pad(x, ((0, 0), (2, 2), (1, 1), (0, Cinp - Cin)))
    if G == 1:
        xg = xp[:, None]                                    # (N,1,H+4,W+2,Cinp)
    else:
        # Materialize overlapping row-groups with their halo ((TH+4)/TH extra
        # traffic, vs. 3x before).
        # TODO(synk): for large images, fetch the halo via manual DMA
        # (memory_space=pl.ANY + pltpu.make_async_copy) to avoid this host gather.
        idx = (jnp.arange(G) * TH)[:, None] + jnp.arange(TH + 4)[None, :]
        xg = xp[:, idx]                                     # (N,G,TH+4,W+2,Cinp)

    def pack_w(wt, cin, cinp, cout, coutp):
        wp = jnp.pad(wt.astype(jnp.float32),
                     ((0, 0), (0, 0), (0, cinp - cin), (0, coutp - cout)))
        # (3,3,cinp,coutp) -> (dy, dx*cinp + c, o): all dx taps share one K.
        return wp.reshape(3, 3 * cinp, coutp).astype(jnp.bfloat16)

    w1p = pack_w(w1, Cin, Cinp, Cmid, Cmidp)
    w2p = pack_w(w2, Cmid, Cmidp, Cout, Coutp)
    b1p = jnp.pad(b1.astype(jnp.float32), (0, Cmidp - Cmid)).reshape(1, Cmidp)
    b2p = jnp.pad(b2.astype(jnp.float32), (0, Coutp - Cout)).reshape(1, Coutp)

    out = pl.pallas_call(
        _fused_conv_block_kernel,
        out_shape=jax.ShapeDtypeStruct((N, H, W, Coutp), jnp.bfloat16),
        grid=(N, G),
        in_specs=[
            pl.BlockSpec((None, None, TH + 4, W + 2, Cinp),
                         lambda n, g: (n, g, 0, 0, 0)),
            pl.BlockSpec((3, 3 * Cinp, Cmidp), lambda n, g: (0, 0, 0)),
            pl.BlockSpec((1, Cmidp), lambda n, g: (0, 0)),
            pl.BlockSpec((3, 3 * Cmidp, Coutp), lambda n, g: (0, 0, 0)),
            pl.BlockSpec((1, Coutp), lambda n, g: (0, 0)),
        ],
        out_specs=pl.BlockSpec((None, TH, W, Coutp), lambda n, g: (n, g, 0, 0)),
        scratch_shapes=[
            pltpu.VMEM((TH + 2, W + 2, Cmidp), jnp.bfloat16),   # conv1 intermediate
            pltpu.VMEM(((TH + 2) * W, Cmidp), jnp.float32),     # conv1 f32 acc
            pltpu.VMEM((TH * W, Coutp), jnp.float32),           # conv2 f32 acc
        ],
        compiler_params=pltpu.CompilerParams(
            dimension_semantics=("parallel", "parallel"),
            vmem_limit_bytes=32 * 1024 * 1024),
    )(xg, w1p, b1p, w2p, b2p)

    return jnp.transpose(out[..., :Cout].astype(jnp.float32), (0, 3, 1, 2))


# ---------------------------------------------------------------------------
# BN folding (eval-mode) and parameter construction
# ---------------------------------------------------------------------------
def fold_bn(w, b, gamma, beta, mean, var):
    """Fold eval-mode BatchNorm into conv weight/bias (exact)."""
    scale = gamma / jnp.sqrt(var + BN_EPS)        # (Cout,)
    w_f = w * scale                               # broadcast over last axis
    b_f = (b - mean) * scale + beta
    return w_f, b_f


def build_params(ch_in, ch_out, seed=0):
    key = jax.random.PRNGKey(seed)
    ks = jax.random.split(key, 12)

    def conv_w(k, cin, cout):
        fan_in = 9 * cin
        return (jax.random.normal(k, (3, 3, cin, cout), jnp.float32)
                * (2.0 / fan_in) ** 0.5)

    def vec(k, c, lo, hi):
        return jax.random.uniform(k, (c,), jnp.float32, minval=lo, maxval=hi)

    p = {
        "w1": conv_w(ks[0], ch_in, ch_out), "b1": vec(ks[1], ch_out, -0.1, 0.1),
        "g1": vec(ks[2], ch_out, 0.5, 1.5), "be1": vec(ks[3], ch_out, -0.1, 0.1),
        "m1": vec(ks[4], ch_out, -0.1, 0.1), "v1": vec(ks[5], ch_out, 0.5, 1.5),
        "w2": conv_w(ks[6], ch_out, ch_out), "b2": vec(ks[7], ch_out, -0.1, 0.1),
        "g2": vec(ks[8], ch_out, 0.5, 1.5), "be2": vec(ks[9], ch_out, -0.1, 0.1),
        "m2": vec(ks[10], ch_out, -0.1, 0.1), "v2": vec(ks[11], ch_out, 0.5, 1.5),
    }
    p["w1f"], p["b1f"] = fold_bn(p["w1"], p["b1"], p["g1"], p["be1"],
                                 p["m1"], p["v1"])
    p["w2f"], p["b2f"] = fold_bn(p["w2"], p["b2"], p["g2"], p["be2"],
                                 p["m2"], p["v2"])
    return p


def conv_block_forward(params, x_nchw):
    return conv_block_pallas(x_nchw, params["w1f"], params["b1f"],
                             params["w2f"], params["b2f"])


# Pure-JAX reference (unfolded conv -> BN -> ReLU), for a correctness check.
def conv_block_ref(params, x_nchw):
    x = jnp.transpose(x_nchw, (0, 2, 3, 1)).astype(jnp.float32)
    for i in ("1", "2"):
        y = jax.lax.conv_general_dilated(
            x, params["w" + i], (1, 1), "SAME",
            dimension_numbers=("NHWC", "HWIO", "NHWC"))
        y = y + params["b" + i]
        scale = params["g" + i] / jnp.sqrt(params["v" + i] + BN_EPS)
        y = (y - params["m" + i]) * scale + params["be" + i]
        x = jnp.maximum(y, 0.0)
    return jnp.transpose(x, (0, 3, 1, 2))


if __name__ == "__main__":
    ch_in, ch_out = 4, 32
    key = jax.random.PRNGKey(0)
    x = jax.random.normal(key, (2, ch_in, 16, 16), jnp.float32)

    params = build_params(ch_in, ch_out, seed=0)
    fwd = jax.jit(functools.partial(conv_block_forward, params))
    out = jax.block_until_ready(fwd(x))

    assert out.shape == (2, ch_out, 16, 16), out.shape
    assert bool(jnp.all(jnp.isfinite(out)))

    ref = conv_block_ref(params, x)
    err = float(jnp.max(jnp.abs(out - ref)))
    tol = 5e-2 * (float(jnp.max(jnp.abs(ref))) + 1.0)   # generous bf16 budget
    assert err <= tol, (err, tol)
    print("KERNEL_OK")
</pallas_src>

<mosaic_0001>
module attributes {stable_mosaic.version = 11 : i64} {
  func.func @_fused_conv_block_kernel(%arg0: i32, %arg1: i32, %arg2: memref<1x1x20x18x128xbf16, #tpu.memory_space<vmem>>, %arg3: memref<3x384x128xbf16, #tpu.memory_space<vmem>>, %arg4: memref<1x128xf32, #tpu.memory_space<vmem>>, %arg5: memref<3x384x128xbf16, #tpu.memory_space<vmem>>, %arg6: memref<1x128xf32, #tpu.memory_space<vmem>>, %arg7: memref<1x16x16x128xbf16, #tpu.memory_space<vmem>>, %arg8: memref<18x18x128xbf16, #tpu.memory_space<vmem>>, %arg9: memref<288x128xf32, #tpu.memory_space<vmem>>, %arg10: memref<256x128xf32, #tpu.memory_space<vmem>>) attributes {dimension_semantics = [#tpu.dimension_semantics<parallel>, #tpu.dimension_semantics<parallel>], iteration_bounds = array<i64: 2, 1>, scalar_prefetch = 0 : i64, scratch_operands = 3 : i64, tpu.core_type = #tpu.core_type<tc>, window_params = [{transform_indices = @transform_0, window_bounds = array<i64: 1, 1, 20, 18, 128>}, {pipeline_mode = #tpu.pipeline_mode<synchronous>, transform_indices = @transform_1, window_bounds = array<i64: 3, 384, 128>}, {pipeline_mode = #tpu.pipeline_mode<synchronous>, transform_indices = @transform_2, window_bounds = array<i64: 1, 128>}, {pipeline_mode = #tpu.pipeline_mode<synchronous>, transform_indices = @transform_3, window_bounds = array<i64: 3, 384, 128>}, {pipeline_mode = #tpu.pipeline_mode<synchronous>, transform_indices = @transform_4, window_bounds = array<i64: 1, 128>}, {transform_indices = @transform_5, window_bounds = array<i64: 1, 16, 16, 128>}]} {
    %c0 = arith.constant 0 : index
    %c0_0 = arith.constant 0 : index
    %c0_1 = arith.constant 0 : index
    %c0_2 = arith.constant 0 : index
    %c0_3 = arith.constant 0 : index
    %0 = vector.load %arg2[%c0, %c0_0, %c0_1, %c0_2, %c0_3] : memref<1x1x20x18x128xbf16, #tpu.memory_space<vmem>>, vector<1x1x18x16x128xbf16>
    %1 = vector.shape_cast %0 : vector<1x1x18x16x128xbf16> to vector<18x16x128xbf16>
    %c0_4 = arith.constant 0 : index
    %c0_5 = arith.constant 0 : index
    %c0_6 = arith.constant 0 : index
    %c1 = arith.constant 1 : index
    %c0_7 = arith.constant 0 : index
    %2 = vector.load %arg2[%c0_4, %c0_5, %c0_6, %c1, %c0_7] : memref<1x1x20x18x128xbf16, #tpu.memory_space<vmem>>, vector<1x1x18x16x128xbf16>
    %3 = vector.shape_cast %2 : vector<1x1x18x16x128xbf16> to vector<18x16x128xbf16>
    %c0_8 = arith.constant 0 : index
    %c0_9 = arith.constant 0 : index
    %c0_10 = arith.constant 0 : index
    %c2 = arith.constant 2 : index
    %c0_11 = arith.constant 0 : index
    %4 = vector.load %arg2[%c0_8, %c0_9, %c0_10, %c2, %c0_11] : memref<1x1x20x18x128xbf16, #tpu.memory_space<vmem>>, vector<1x1x18x16x128xbf16>
    %5 = vector.shape_cast %4 : vector<1x1x18x16x128xbf16> to vector<18x16x128xbf16>
    %6 = tpu.concatenate %1, %3, %5 in 2 : vector<18x16x128xbf16>, vector<18x16x128xbf16>, vector<18x16x128xbf16> -> vector<18x16x384xbf16>
    %7 = vector.shape_cast %6 : vector<18x16x384xbf16> to vector<288x384xbf16>
    %c0_12 = arith.constant 0 : index
    %c0_13 = arith.constant 0 : index
    %c0_14 = arith.constant 0 : index
    %8 = vector.load %arg3[%c0_12, %c0_13, %c0_14] : memref<3x384x128xbf16, #tpu.memory_space<vmem>>, vector<1x384x128xbf16>
    %9 = vector.shape_cast %8 : vector<1x384x128xbf16> to vector<384x128xbf16>
    %cst = arith.constant dense<0.000000e+00> : vector<288x128xf32>
    %10 = tpu.matmul %7, %9, %cst {dimension_numbers = #tpu.dot_dimension_numbers<[1], [0], [0], [1], [0, 0, 1, 1], [], []>} : vector<288x384xbf16>, vector<384x128xbf16>, vector<288x128xf32> -> vector<288x128xf32>
    %c0_15 = arith.constant 0 : index
    %c0_16 = arith.constant 0 : index
    %11 = vector.load %arg9[%c0_15, %c0_16] : memref<288x128xf32, #tpu.memory_space<vmem>>, vector<288x128xf32>
    tpu.vector_store %arg9[%c0_15, %c0_16], %10 {strides = array<i32>} : memref<288x128xf32, #tpu.memory_space<vmem>>, vector<288x128xf32>,
    %c0_17 = arith.constant 0 : index
    %c0_18 = arith.constant 0 : index
    %c1_19 = arith.constant 1 : index
    %c0_20 = arith.constant 0 : index
    %c0_21 = arith.constant 0 : index
    %12 = vector.load %arg2[%c0_17, %c0_18, %c1_19, %c0_20, %c0_21] : memref<1x1x20x18x128xbf16, #tpu.memory_space<vmem>>, vector<1x1x18x16x128xbf16>
    %13 = vector.shape_cast %12 : vector<1x1x18x16x128xbf16> to vector<18x16x128xbf16>
    %c0_22 = arith.constant 0 : index
    %c0_23 = arith.constant 0 : index
    %c1_24 = arith.constant 1 : index
    %c1_25 = arith.constant 1 : index
    %c0_26 = arith.constant 0 : index
    %14 = vector.load %arg2[%c0_22, %c0_23, %c1_24, %c1_25, %c0_26] : memref<1x1x20x18x128xbf16, #tpu.memory_space<vmem>>, vector<1x1x18x16x128xbf16>
    %15 = vector.shape_cast %14 : vector<1x1x18x16x128xbf16> to vector<18x16x128xbf16>
    %c0_27 = arith.constant 0 : index
    %c0_28 = arith.constant 0 : index
    %c1_29 = arith.constant 1 : index
    %c2_30 = arith.constant 2 : index
    %c0_31 = arith.constant 0 : index
    %16 = vector.load %arg2[%c0_27, %c0_28, %c1_29, %c2_30, %c0_31] : memref<1x1x20x18x128xbf16, #tpu.memory_space<vmem>>, vector<1x1x18x16x128xbf16>
    %17 = vector.shape_cast %16 : vector<1x1x18x16x128xbf16> to vector<18x16x128xbf16>
    %18 = tpu.concatenate %13, %15, %17 in 2 : vector<18x16x128xbf16>, vector<18x16x128xbf16>, vector<18x16x128xbf16> -> vector<18x16x384xbf16>
    %19 = vector.shape_cast %18 : vector<18x16x384xbf16> to vector<288x384xbf16>
    %c1_32 = arith.constant 1 : index
    %c0_33 = arith.constant 0 : index
    %c0_34 = arith.constant 0 : index
    %20 = vector.load %arg3[%c1_32, %c0_33, %c0_34] : memref<3x384x128xbf16, #tpu.memory_space<vmem>>, vector<1x384x128xbf16>
    %21 = vector.shape_cast %20 : vector<1x384x128xbf16> to vector<384x128xbf16>
    %cst_35 = arith.constant dense<0.000000e+00> : vector<288x128xf32>
    %22 = tpu.matmul %19, %21, %cst_35 {dimension_numbers = #tpu.dot_dimension_numbers<[1], [0], [0], [1], [0, 0, 1, 1], [], []>} : vector<288x384xbf16>, vector<384x128xbf16>, vector<288x128xf32> -> vector<288x128xf32>
    %c0_36 = arith.constant 0 : index
    %c0_37 = arith.constant 0 : index
    %23 = vector.load %arg9[%c0_36, %c0_37] : memref<288x128xf32, #tpu.memory_space<vmem>>, vector<288x128xf32>
    %24 = arith.addf %23, %22 : vector<288x128xf32>
    %c0_38 = arith.constant 0 : index
    %c0_39 = arith.constant 0 : index
    %25 = vector.load %arg9[%c0_38, %c0_39] : memref<288x128xf32, #tpu.memory_space<vmem>>, vector<288x128xf32>
    tpu.vector_store %arg9[%c0_38, %c0_39], %24 {strides = array<i32>} : memref<288x128xf32, #tpu.memory_space<vmem>>, vector<288x128xf32>,
    %c0_40 = arith.constant 0 : index
    %c0_41 = arith.constant 0 : index
    %c2_42 = arith.constant 2 : index
    %c0_43 = arith.constant 0 : index
    %c0_44 = arith.constant 0 : index
    %26 = vector.load %arg2[%c0_40, %c0_41, %c2_42, %c0_43, %c0_44] : memref<1x1x20x18x128xbf16, #tpu.memory_space<vmem>>, vector<1x1x18x16x128xbf16>
    %27 = vector.shape_cast %26 : vector<1x1x18x16x128xbf16> to vector<18x16x128xbf16>
    %c0_45 = arith.constant 0 : index
    %c0_46 = arith.constant 0 : index
    %c2_47 = arith.constant 2 : index
    %c1_48 = arith.constant 1 : index
    %c0_49 = arith.constant 0 : index
    %28 = vector.load %arg2[%c0_45, %c0_46, %c2_47, %c1_48, %c0_49] : memref<1x1x20x18x128xbf16, #tpu.memory_space<vmem>>, vector<1x1x18x16x128xbf16>
    %29 = vector.shape_cast %28 : vector<1x1x18x16x128xbf16> to vector<18x16x128xbf16>
    %c0_50 = arith.constant 0 : index
    %c0_51 = arith.constant 0 : index
    %c2_52 = arith.constant 2 : index
    %c2_53 = arith.constant 2 : index
    %c0_54 = arith.constant 0 : index
    %30 = vector.load %arg2[%c0_50, %c0_51, %c2_52, %c2_53, %c0_54] : memref<1x1x20x18x128xbf16, #tpu.memory_space<vmem>>, vector<1x1x18x16x128xbf16>
    %31 = vector.shape_cast %30 : vector<1x1x18x16x128xbf16> to vector<18x16x128xbf16>
    %32 = tpu.concatenate %27, %29, %31 in 2 : vector<18x16x128xbf16>, vector<18x16x128xbf16>, vector<18x16x128xbf16> -> vector<18x16x384xbf16>
    %33 = vector.shape_cast %32 : vector<18x16x384xbf16> to vector<288x384xbf16>
    %c2_55 = arith.constant 2 : index
    %c0_56 = arith.constant 0 : index
    %c0_57 = arith.constant 0 : index
    %34 = vector.load %arg3[%c2_55, %c0_56, %c0_57] : memref<3x384x128xbf16, #tpu.memory_space<vmem>>, vector<1x384x128xbf16>
    %35 = vector.shape_cast %34 : vector<1x384x128xbf16> to vector<384x128xbf16>
    %cst_58 = arith.constant dense<0.000000e+00> : vector<288x128xf32>
    %36 = tpu.matmul %33, %35, %cst_58 {dimension_numbers = #tpu.dot_dimension_numbers<[1], [0], [0], [1], [0, 0, 1, 1], [], []>} : vector<288x384xbf16>, vector<384x128xbf16>, vector<288x128xf32> -> vector<288x128xf32>
    %c0_59 = arith.constant 0 : index
    %c0_60 = arith.constant 0 : index
    %37 = vector.load %arg9[%c0_59, %c0_60] : memref<288x128xf32, #tpu.memory_space<vmem>>, vector<288x128xf32>
    %38 = arith.addf %37, %36 : vector<288x128xf32>
    %c0_61 = arith.constant 0 : index
    %c0_62 = arith.constant 0 : index
    %39 = vector.load %arg9[%c0_61, %c0_62] : memref<288x128xf32, #tpu.memory_space<vmem>>, vector<288x128xf32>
    tpu.vector_store %arg9[%c0_61, %c0_62], %38 {strides = array<i32>} : memref<288x128xf32, #tpu.memory_space<vmem>>, vector<288x128xf32>,
    %c0_63 = arith.constant 0 : index
    %c0_64 = arith.constant 0 : index
    %40 = vector.load %arg9[%c0_63, %c0_64] : memref<288x128xf32, #tpu.memory_space<vmem>>, vector<288x128xf32>
    %c0_65 = arith.constant 0 : index
    %c0_66 = arith.constant 0 : index
    %41 = vector.load %arg4[%c0_65, %c0_66] : memref<1x128xf32, #tpu.memory_space<vmem>>, vector<1x128xf32>
    %42 = vector.broadcast %41 : vector<1x128xf32> to vector<288x128xf32>
    %43 = arith.addf %40, %42 : vector<288x128xf32>
    %cst_67 = arith.constant 0.000000e+00 : f32
    %44 = vector.broadcast %cst_67 : f32 to vector<288x128xf32>
    %45 = arith.maximumf %43, %44 : vector<288x128xf32>
    %46 = arith.truncf %45 : vector<288x128xf32> to vector<288x128xbf16>
    %cst_68 = arith.constant 0.000000e+00 : bf16
    %47 = vector.broadcast %cst_68 : bf16 to vector<18x18x128xbf16>
    %c0_69 = arith.constant 0 : index
    %c0_70 = arith.constant 0 : index
    %c0_71 = arith.constant 0 : index
    %48 = vector.load %arg8[%c0_69, %c0_70, %c0_71] : memref<18x18x128xbf16, #tpu.memory_space<vmem>>, vector<18x18x128xbf16>
    tpu.vector_store %arg8[%c0_69, %c0_70, %c0_71], %47 {strides = array<i32>} : memref<18x18x128xbf16, #tpu.memory_space<vmem>>, vector<18x18x128xbf16>,
    %49 = vector.shape_cast %46 : vector<288x128xbf16> to vector<18x16x128xbf16>
    %c0_72 = arith.constant 0 : index
    %c1_73 = arith.constant 1 : index
    %c0_74 = arith.constant 0 : index
    %50 = vector.load %arg8[%c0_72, %c1_73, %c0_74] : memref<18x18x128xbf16, #tpu.memory_space<vmem>>, vector<18x16x128xbf16>
    tpu.vector_store %arg8[%c0_72, %c1_73, %c0_74], %49 {strides = array<i32>} : memref<18x18x128xbf16, #tpu.memory_space<vmem>>, vector<18x16x128xbf16>,
    %c0_i32 = arith.constant 0 : i32
    %51 = arith.cmpi eq, %arg1, %c0_i32 : i32
    %52 = arith.extui %51 : i1 to i32
    %c0_i32_75 = arith.constant 0 : i32
    %53 = arith.cmpi ne, %52, %c0_i32_75 : i32
    scf.if %53 {
      %cst_136 = arith.constant 0.000000e+00 : bf16
      %99 = vector.broadcast %cst_136 : bf16 to vector<18x128xbf16>
      %c0_137 = arith.constant 0 : index
      %c0_138 = arith.constant 0 : index
      %c0_139 = arith.constant 0 : index
      %100 = vector.load %arg8[%c0_137, %c0_138, %c0_139] : memref<18x18x128xbf16, #tpu.memory_space<vmem>>, vector<1x18x128xbf16>
      %101 = vector.shape_cast %100 : vector<1x18x128xbf16> to vector<18x128xbf16>
      %102 = vector.shape_cast %99 : vector<18x128xbf16> to vector<1x18x128xbf16>
      tpu.vector_store %arg8[%c0_137, %c0_138, %c0_139], %102 {strides = array<i32>} : memref<18x18x128xbf16, #tpu.memory_space<vmem>>, vector<1x18x128xbf16>,
    } else {
    }
    %c0_i32_76 = arith.constant 0 : i32
    %54 = arith.cmpi eq, %arg1, %c0_i32_76 : i32
    %55 = arith.extui %54 : i1 to i32
    %c0_i32_77 = arith.constant 0 : i32
    %56 = arith.cmpi ne, %55, %c0_i32_77 : i32
    scf.if %56 {
      %cst_136 = arith.constant 0.000000e+00 : bf16
      %99 = vector.broadcast %cst_136 : bf16 to vector<18x128xbf16>
      %c17 = arith.constant 17 : index
      %c0_137 = arith.constant 0 : index
      %c0_138 = arith.constant 0 : index
      %100 = vector.load %arg8[%c17, %c0_137, %c0_138] : memref<18x18x128xbf16, #tpu.memory_space<vmem>>, vector<1x18x128xbf16>
      %101 = vector.shape_cast %100 : vector<1x18x128xbf16> to vector<18x128xbf16>
      %102 = vector.shape_cast %99 : vector<18x128xbf16> to vector<1x18x128xbf16>
      tpu.vector_store %arg8[%c17, %c0_137, %c0_138], %102 {strides = array<i32>} : memref<18x18x128xbf16, #tpu.memory_space<vmem>>, vector<1x18x128xbf16>,
    } else {
    }
    %c0_78 = arith.constant 0 : index
    %c0_79 = arith.constant 0 : index
    %c0_80 = arith.constant 0 : index
    %57 = vector.load %arg8[%c0_78, %c0_79, %c0_80] : memref<18x18x128xbf16, #tpu.memory_space<vmem>>, vector<16x16x128xbf16>
    %c0_81 = arith.constant 0 : index
    %c1_82 = arith.constant 1 : index
    %c0_83 = arith.constant 0 : index
    %58 = vector.load %arg8[%c0_81, %c1_82, %c0_83] : memref<18x18x128xbf16, #tpu.memory_space<vmem>>, vector<16x16x128xbf16>
    %c0_84 = arith.constant 0 : index
    %c2_85 = arith.constant 2 : index
    %c0_86 = arith.constant 0 : index
    %59 = vector.load %arg8[%c0_84, %c2_85, %c0_86] : memref<18x18x128xbf16, #tpu.memory_space<vmem>>, vector<16x16x128xbf16>
    %60 = tpu.concatenate %57, %58, %59 in 2 : vector<16x16x128xbf16>, vector<16x16x128xbf16>, vector<16x16x128xbf16> -> vector<16x16x384xbf16>
    %61 = vector.shape_cast %60 : vector<16x16x384xbf16> to vector<256x384xbf16>
    %c0_87 = arith.constant 0 : index
    %c0_88 = arith.constant 0 : index
    %c0_89 = arith.constant 0 : index
    %62 = vector.load %arg5[%c0_87, %c0_88, %c0_89] : memref<3x384x128xbf16, #tpu.memory_space<vmem>>, vector<1x384x128xbf16>
    %63 = vector.shape_cast %62 : vector<1x384x128xbf16> to vector<384x128xbf16>
    %cst_90 = arith.constant dense<0.000000e+00> : vector<256x128xf32>
    %64 = tpu.matmul %61, %63, %cst_90 {dimension_numbers = #tpu.dot_dimension_numbers<[1], [0], [0], [1], [0, 0, 1, 1], [], []>} : vector<256x384xbf16>, vector<384x128xbf16>, vector<256x128xf32> -> vector<256x128xf32>
    %c0_91 = arith.constant 0 : index
    %c0_92 = arith.constant 0 : index
    %65 = vector.load %arg10[%c0_91, %c0_92] : memref<256x128xf32, #tpu.memory_space<vmem>>, vector<256x128xf32>
    tpu.vector_store %arg10[%c0_91, %c0_92], %64 {strides = array<i32>} : memref<256x128xf32, #tpu.memory_space<vmem>>, vector<256x128xf32>,
    %c1_93 = arith.constant 1 : index
    %c0_94 = arith.constant 0 : index
    %c0_95 = arith.constant 0 : index
    %66 = vector.load %arg8[%c1_93, %c0_94, %c0_95] : memref<18x18x128xbf16, #tpu.memory_space<vmem>>, vector<16x16x128xbf16>
    %c1_96 = arith.constant 1 : index
    %c1_97 = arith.constant 1 : index
    %c0_98 = arith.constant 0 : index
    %67 = vector.load %arg8[%c1_96, %c1_97, %c0_98] : memref<18x18x128xbf16, #tpu.memory_space<vmem>>, vector<16x16x128xbf16>
    %c1_99 = arith.constant 1 : index
    %c2_100 = arith.constant 2 : index
    %c0_101 = arith.constant 0 : index
    %68 = vector.load %arg8[%c1_99, %c2_100, %c0_101] : memref<18x18x128xbf16, #tpu.memory_space<vmem>>, vector<16x16x128xbf16>
    %69 = tpu.concatenate %66, %67, %68 in 2 : vector<16x16x128xbf16>, vector<16x16x128xbf16>, vector<16x16x128xbf16> -> vector<16x16x384xbf16>
    %70 = vector.shape_cast %69 : vector<16x16x384xbf16> to vector<256x384xbf16>
    %c1_102 = arith.constant 1 : index
    %c0_103 = arith.constant 0 : index
    %c0_104 = arith.constant 0 : index
    %71 = vector.load %arg5[%c1_102, %c0_103, %c0_104] : memref<3x384x128xbf16, #tpu.memory_space<vmem>>, vector<1x384x128xbf16>
    %72 = vector.shape_cast %71 : vector<1x384x128xbf16> to vector<384x128xbf16>
    %cst_105 = arith.constant dense<0.000000e+00> : vector<256x128xf32>
    %73 = tpu.matmul %70, %72, %cst_105 {dimension_numbers = #tpu.dot_dimension_numbers<[1], [0], [0], [1], [0, 0, 1, 1], [], []>} : vector<256x384xbf16>, vector<384x128xbf16>, vector<256x128xf32> -> vector<256x128xf32>
    %c0_106 = arith.constant 0 : index
    %c0_107 = arith.constant 0 : index
    %74 = vector.load %arg10[%c0_106, %c0_107] : memref<256x128xf32, #tpu.memory_space<vmem>>, vector<256x128xf32>
    %75 = arith.addf %74, %73 : vector<256x128xf32>
    %c0_108 = arith.constant 0 : index
    %c0_109 = arith.constant 0 : index
    %76 = vector.load %arg10[%c0_108, %c0_109] : memref<256x128xf32, #tpu.memory_space<vmem>>, vector<256x128xf32>
    tpu.vector_store %arg10[%c0_108, %c0_109], %75 {strides = array<i32>} : memref<256x128xf32, #tpu.memory_space<vmem>>, vector<256x128xf32>,
    %c2_110 = arith.constant 2 : index
    %c0_111 = arith.constant 0 : index
    %c0_112 = arith.constant 0 : index
    %77 = vector.load %arg8[%c2_110, %c0_111, %c0_112] : memref<18x18x128xbf16, #tpu.memory_space<vmem>>, vector<16x16x128xbf16>
    %c2_113 = arith.constant 2 : index
    %c1_114 = arith.constant 1 : index
    %c0_115 = arith.constant 0 : index
    %78 = vector.load %arg8[%c2_113, %c1_114, %c0_115] : memref<18x18x128xbf16, #tpu.memory_space<vmem>>, vector<16x16x128xbf16>
    %c2_116 = arith.constant 2 : index
    %c2_117 = arith.constant 2 : index
    %c0_118 = arith.constant 0 : index
    %79 = vector.load %arg8[%c2_116, %c2_117, %c0_118] : memref<18x18x128xbf16, #tpu.memory_space<vmem>>, vector<16x16x128xbf16>
    %80 = tpu.concatenate %77, %78, %79 in 2 : vector<16x16x128xbf16>, vector<16x16x128xbf16>, vector<16x16x128xbf16> -> vector<16x16x384xbf16>
    %81 = vector.shape_cast %80 : vector<16x16x384xbf16> to vector<256x384xbf16>
    %c2_119 = arith.constant 2 : index
    %c0_120 = arith.constant 0 : index
    %c0_121 = arith.constant 0 : index
    %82 = vector.load %arg5[%c2_119, %c0_120, %c0_121] : memref<3x384x128xbf16, #tpu.memory_space<vmem>>, vector<1x384x128xbf16>
    %83 = vector.shape_cast %82 : vector<1x384x128xbf16> to vector<384x128xbf16>
    %cst_122 = arith.constant dense<0.000000e+00> : vector<256x128xf32>
    %84 = tpu.matmul %81, %83, %cst_122 {dimension_numbers = #tpu.dot_dimension_numbers<[1], [0], [0], [1], [0, 0, 1, 1], [], []>} : vector<256x384xbf16>, vector<384x128xbf16>, vector<256x128xf32> -> vector<256x128xf32>
    %c0_123 = arith.constant 0 : index
    %c0_124 = arith.constant 0 : index
    %85 = vector.load %arg10[%c0_123, %c0_124] : memref<256x128xf32, #tpu.memory_space<vmem>>, vector<256x128xf32>
    %86 = arith.addf %85, %84 : vector<256x128xf32>
    %c0_125 = arith.constant 0 : index
    %c0_126 = arith.constant 0 : index
    %87 = vector.load %arg10[%c0_125, %c0_126] : memref<256x128xf32, #tpu.memory_space<vmem>>, vector<256x128xf32>
    tpu.vector_store %arg10[%c0_125, %c0_126], %86 {strides = array<i32>} : memref<256x128xf32, #tpu.memory_space<vmem>>, vector<256x128xf32>,
    %c0_127 = arith.constant 0 : index
    %c0_128 = arith.constant 0 : index
    %88 = vector.load %arg10[%c0_127, %c0_128] : memref<256x128xf32, #tpu.memory_space<vmem>>, vector<256x128xf32>
    %c0_129 = arith.constant 0 : index
    %c0_130 = arith.constant 0 : index
    %89 = vector.load %arg6[%c0_129, %c0_130] : memref<1x128xf32, #tpu.memory_space<vmem>>, vector<1x128xf32>
    %90 = vector.broadcast %89 : vector<1x128xf32> to vector<256x128xf32>
    %91 = arith.addf %88, %90 : vector<256x128xf32>
    %cst_131 = arith.constant 0.000000e+00 : f32
    %92 = vector.broadcast %cst_131 : f32 to vector<256x128xf32>
    %93 = arith.maximumf %91, %92 : vector<256x128xf32>
    %94 = vector.shape_cast %93 : vector<256x128xf32> to vector<16x16x128xf32>
    %95 = arith.truncf %94 : vector<16x16x128xf32> to vector<16x16x128xbf16>
    %c0_132 = arith.constant 0 : index
    %c0_133 = arith.constant 0 : index
    %c0_134 = arith.constant 0 : index
    %c0_135 = arith.constant 0 : index
    %96 = vector.load %arg7[%c0_132, %c0_133, %c0_134, %c0_135] : memref<1x16x16x128xbf16, #tpu.memory_space<vmem>>, vector<1x16x16x128xbf16>
    %97 = vector.shape_cast %96 : vector<1x16x16x128xbf16> to vector<16x16x128xbf16>
    %98 = vector.shape_cast %95 : vector<16x16x128xbf16> to vector<1x16x16x128xbf16>
    tpu.vector_store %arg7[%c0_132, %c0_133, %c0_134, %c0_135], %98 {strides = array<i32>} : memref<1x16x16x128xbf16, #tpu.memory_space<vmem>>, vector<1x16x16x128xbf16>,
    return
  }
  func.func @transform_0(%arg0: i32, %arg1: i32) -> (i32, i32, i32, i32, i32) {
    %c0_i32 = arith.constant 0 : i32
    %c0_i32_0 = arith.constant 0 : i32
    %c0_i32_1 = arith.constant 0 : i32
    %c0_i32_2 = arith.constant 0 : i32
    return %arg0, %arg1, %c0_i32, %c0_i32_0, %c0_i32_1 : i32, i32, i32, i32, i32
  }
  func.func @transform_1(%arg0: i32, %arg1: i32) -> (i32, i32, i32) {
    %c0_i32 = arith.constant 0 : i32
    %c0_i32_0 = arith.constant 0 : i32
    %c0_i32_1 = arith.constant 0 : i32
    %c0_i32_2 = arith.constant 0 : i32
    return %c0_i32, %c0_i32_0, %c0_i32_1 : i32, i32, i32
  }
  func.func @transform_2(%arg0: i32, %arg1: i32) -> (i32, i32) {
    %c0_i32 = arith.constant 0 : i32
    %c0_i32_0 = arith.constant 0 : i32
    %c0_i32_1 = arith.constant 0 : i32
    return %c0_i32, %c0_i32_0 : i32, i32
  }
  func.func @transform_3(%arg0: i32, %arg1: i32) -> (i32, i32, i32) {
    %c0_i32 = arith.constant 0 : i32
    %c0_i32_0 = arith.constant 0 : i32
    %c0_i32_1 = arith.constant 0 : i32
    %c0_i32_2 = arith.constant 0 : i32
    return %c0_i32, %c0_i32_0, %c0_i32_1 : i32, i32, i32
  }
  func.func @transform_4(%arg0: i32, %arg1: i32) -> (i32, i32) {
    %c0_i32 = arith.constant 0 : i32
    %c0_i32_0 = arith.constant 0 : i32
    %c0_i32_1 = arith.constant 0 : i32
    return %c0_i32, %c0_i32_0 : i32, i32
  }
  func.func @transform_5(%arg0: i32, %arg1: i32) -> (i32, i32, i32, i32) {
    %c0_i32 = arith.constant 0 : i32
    %c0_i32_0 = arith.constant 0 : i32
    %c0_i32_1 = arith.constant 0 : i32
    return %arg0, %arg1, %c0_i32, %c0_i32_0 : i32, i32, i32, i32
  }
}

</mosaic_0001>

<llo_original>
// kernel: conv_block_forward.1
$region0: #{conv_block_forward.1}
  #allocation0 [shape = 'u32[]', space=smem, size = 0x4, offset = 0x4, fixed_abs, tag = 'smem constant byte address 0x4 - core index']
  #allocation1 [shape = 'u32[144,128]{1,0:T(1,128)}', space=vmem, size = 0x12000, scoped, tag = 'internal scratch']
  #allocation2 [shape = 'bf16[18,18,128]{2,1,0:T(8,128)(2,1)}', space=vmem, size = 0x1b000, scoped, tag = 'scratch operand']
  #allocation3 [shape = 'f32[288,128]{1,0:T(8,128)}', space=vmem, size = 0x24000, scoped, tag = 'scratch operand']
  #allocation4 [shape = 'f32[256,128]{1,0:T(8,128)}', space=vmem, size = 0x20000, scoped, tag = 'scratch operand']
  %s0 = inlined_call_operand.vmem [shape: bf16[2,1,20,18,128], index: 0, kind: input, shape index: {}]
  %s1 = inlined_call_operand.vmem [shape: bf16[3,384,128], index: 1, kind: input, shape index: {}]
  %s2 = inlined_call_operand.vmem [shape: f32[1,128], index: 2, kind: input, shape index: {}]
  %s3 = inlined_call_operand.vmem [shape: bf16[3,384,128], index: 3, kind: input, shape index: {}]
  %s4 = inlined_call_operand.vmem [shape: f32[1,128], index: 4, kind: input, shape index: {}]
  %s5 = inlined_call_operand.vmem [shape: bf16[2,16,16,128], index: 5, kind: output, shape index: {}]
  %s6 = sld [smem:[#allocation0]]
  $region57: #{conv_block_forward.1} parent=0
    _
  %s8 = ssub.s32 1, %s6
  %s9 = scalar_select 0, %s8, %s6
  loop: start=0, step=1, limit=4
  $region2: #{conv_block_forward.1} parent=0 // loop_pre_header
    _
  $region3: #{conv_block_forward.1} parent=0 // loop_header
    %s11 = sphi 0, %s15
    %p12 = scmp.ge.s32.totalorder %s11, 4
    %s18 = sphi 0, %s30
    %s19 = sphi 0, %s26
    %s20 = sphi 0, %s18
    %s21 = sphi 0, %s19
    %s22 = sphi 0, %s20
    %s23 = sphi 0, %s21
    %s35 = sphi 0, %s37
    %s38 = sphi 0, %s35
    %s39 = sphi 0, %s38
    %s55 = sphi 0, %s39
    %s59 = sphi 0, %s59
    %s61 = sphi 0, %s59
    %s62 = sphi 0, %s61
    %s76 = sphi 0, %s62
    %s80 = sphi 0, %s80
    %s82 = sphi 0, %s80
    %s83 = sphi 0, %s82
    %s97 = sphi 0, %s83
    %s101 = sphi 0, %s101
    %s103 = sphi 0, %s101
    %s104 = sphi 0, %s103
    %s118 = sphi 0, %s104
    %s122 = sphi 0, %s122
    %s124 = sphi 0, %s122
    %s125 = sphi 0, %s124
    %s139 = sphi 0, %s125
    %s147 = sphi 0, %s149
    %s150 = sphi 0, %s147
    %s151 = sphi 0, %s150
    %s167 = sphi 0, %s151
  $region4: #{conv_block_forward.1} parent=0 // loop_header_branch
    %14 = sbr.rel (%p12) target = $region8
  $region5: #{conv_block_forward.1} parent=0 // loop_body
    %s16 = ssub.s32 %s11, 1
    %s17 = ssub.s32 %s11, 2
    %s24 = sadd.s32 1, %s19
    %p25 = scmp.ge.s32.totalorder %s24, 1
    %s26 = scalar_select %p25, 0, %s24
    %s27 = sadd.s32 1, %s18
    %s28 = scalar_select %p25, %s27, %s18
    %p29 = scmp.ge.s32.totalorder %s28, 2
    %s30 = scalar_select %p29, 0, %s28
    %s31 = ssub.s32 %s18, %s30
    %s32 = ssub.s32 %s19, %s26
    %s33 = sor.u32 %s31, %s32
    %p34 = scmp.eq.s32.totalorder %s33, 0
    %s36 = sadd.s32 %s35, 1
    %s37 = scalar_select %p34, %s35, %s36
    %p40 = pneg %p34
    %p41 = scmp.eq.s32.totalorder %s11, 1
    %p42 = por %p40, %p41
    %p43 = scmp.ne.s32.totalorder %s35, %s38
    %p44 = scmp.eq.s32.totalorder %s11, 0
    %p45 = por %p43, %p44
    %p46 = scmp.ne.s32.totalorder %s35, %s38
    %p47 = scmp.eq.s32.totalorder %s16, 1
    %p48 = por %p46, %p47
    %p49 = scmp.ne.s32.totalorder %s38, %s39
    %p50 = scmp.eq.s32.totalorder %s16, 0
    %p51 = por %p49, %p50
    %p52 = scmp.ne.s32.totalorder %s38, %s39
    %p53 = scmp.eq.s32.totalorder %s17, 1
    %p54 = por %p52, %p53
    %p56 = scmp.ne.s32.totalorder %s39, %s55
    %p57 = scmp.eq.s32.totalorder %s17, 0
    %p58 = por %p56, %p57
    %s60 = sadd.s32 %s59, 1
    %p63 = scmp.eq.s32.totalorder %s11, 1
    %p64 = scmp.ne.s32.totalorder %s59, %s61
    %p65 = scmp.eq.s32.totalorder %s11, 0
    %p66 = por %p64, %p65
    %p67 = scmp.ne.s32.totalorder %s59, %s61
    %p68 = scmp.eq.s32.totalorder %s16, 1
    %p69 = por %p67, %p68
    %p70 = scmp.ne.s32.totalorder %s61, %s62
    %p71 = scmp.eq.s32.totalorder %s16, 0
    %p72 = por %p70, %p71
    %p73 = scmp.ne.s32.totalorder %s61, %s62
    %p74 = scmp.eq.s32.totalorder %s17, 1
    %p75 = por %p73, %p74
    %p77 = scmp.ne.s32.totalorder %s62, %s76
    %p78 = scmp.eq.s32.totalorder %s17, 0
    %p79 = por %p77, %p78
    %s81 = sadd.s32 %s80, 1
    %p84 = scmp.eq.s32.totalorder %s11, 1
    %p85 = scmp.ne.s32.totalorder %s80, %s82
    %p86 = scmp.eq.s32.totalorder %s11, 0
    %p87 = por %p85, %p86
    %p88 = scmp.ne.s32.totalorder %s80, %s82
    %p89 = scmp.eq.s32.totalorder %s16, 1
    %p90 = por %p88, %p89
    %p91 = scmp.ne.s32.totalorder %s82, %s83
    %p92 = scmp.eq.s32.totalorder %s16, 0
    %p93 = por %p91, %p92
    %p94 = scmp.ne.s32.totalorder %s82, %s83
    %p95 = scmp.eq.s32.totalorder %s17, 1
    %p96 = por %p94, %p95
    %p98 = scmp.ne.s32.totalorder %s83, %s97
    %p99 = scmp.eq.s32.totalorder %s17, 0
    %p100 = por %p98, %p99
    %s102 = sadd.s32 %s101, 1
    %p105 = scmp.eq.s32.totalorder %s11, 1
    %p106 = scmp.ne.s32.totalorder %s101, %s103
    %p107 = scmp.eq.s32.totalorder %s11, 0
    %p108 = por %p106, %p107
    %p109 = scmp.ne.s32.totalorder %s101, %s103
    %p110 = scmp.eq.s32.totalorder %s16, 1
    %p111 = por %p109, %p110
    %p112 = scmp.ne.s32.totalorder %s103, %s104
    %p113 = scmp.eq.s32.totalorder %s16, 0
    %p114 = por %p112, %p113
    %p115 = scmp.ne.s32.totalorder %s103, %s104
    %p116 = scmp.eq.s32.totalorder %s17, 1
    %p117 = por %p115, %p116
    %p119 = scmp.ne.s32.totalorder %s104, %s118
    %p120 = scmp.eq.s32.totalorder %s17, 0
    %p121 = por %p119, %p120
    %s123 = sadd.s32 %s122, 1
    %p126 = scmp.eq.s32.totalorder %s11, 1
    %p127 = scmp.ne.s32.totalorder %s122, %s124
    %p128 = scmp.eq.s32.totalorder %s11, 0
    %p129 = por %p127, %p128
    %p130 = scmp.ne.s32.totalorder %s122, %s124
    %p131 = scmp.eq.s32.totalorder %s16, 1
    %p132 = por %p130, %p131
    %p133 = scmp.ne.s32.totalorder %s124, %s125
    %p134 = scmp.eq.s32.totalorder %s16, 0
    %p135 = por %p133, %p134
    %p136 = scmp.ne.s32.totalorder %s124, %s125
    %p137 = scmp.eq.s32.totalorder %s17, 1
    %p138 = por %p136, %p137
    %p140 = scmp.ne.s32.totalorder %s125, %s139
    %p141 = scmp.eq.s32.totalorder %s17, 0
    %p142 = por %p140, %p141
    %s143 = ssub.s32 %s18, %s30
    %s144 = ssub.s32 %s19, %s26
    %s145 = sor.u32 %s143, %s144
    %p146 = scmp.eq.s32.totalorder %s145, 0
    %s148 = sadd.s32 %s147, 1
    %s149 = scalar_select %p146, %s147, %s148
    %p152 = pneg %p146
    %p153 = scmp.eq.s32.totalorder %s11, 1
    %p154 = por %p152, %p153
    %p155 = scmp.ne.s32.totalorder %s147, %s150
    %p156 = scmp.eq.s32.totalorder %s11, 0
    %p157 = por %p155, %p156
    %p158 = scmp.ne.s32.totalorder %s147, %s150
    %p159 = scmp.eq.s32.totalorder %s16, 1
    %p160 = por %p158, %p159
    %p161 = scmp.ne.s32.totalorder %s150, %s151
    %p162 = scmp.eq.s32.totalorder %s16, 0
    %p163 = por %p161, %p162
    %p164 = scmp.ne.s32.totalorder %s150, %s151
    %p165 = scmp.eq.s32.totalorder %s17, 1
    %p166 = por %p164, %p165
    %p168 = scmp.ne.s32.totalorder %s151, %s167
    %p169 = scmp.eq.s32.totalorder %s17, 0
    %p170 = por %p168, %p169
    %p171 = scmp.le.s32.totalorder 1, %s11
    %p172 = scmp.lt.s32.totalorder %s11, 3
    %p173 = pnand %p171, %p172
    %p174 = pneg %p173
    // Predicated region
    $region9: #{conv_block_forward.1} parent=5 // pred_check
      _
    $region10: #{conv_block_forward.1} parent=5 // pred_check_branch
      %176 = sbr.rel (%p173) target = $region12
    $region11: #{conv_block_forward.1} parent=5 // pred_region
      %s177 = ssub.s32 %s11, 1
      // Predicated region
      $region13: #{conv_block_forward.1} parent=11 // pred_check
        %p178 = pneg %p72
      $region14: #{conv_block_forward.1} parent=11 // pred_check_branch
        %180 = sbr.rel (%p178) target = $region16
      $region15: #{conv_block_forward.1} parent=11 // pred_region
        _
      $region16: #{conv_block_forward.1} parent=11 // pred_fallthru
        _
      // Predicated region
      $region17: #{conv_block_forward.1} parent=11 // pred_check
        %p181 = pneg %p93
      $region18: #{conv_block_forward.1} parent=11 // pred_check_branch
        %183 = sbr.rel (%p181) target = $region20
      $region19: #{conv_block_forward.1} parent=11 // pred_region
        _
      $region20: #{conv_block_forward.1} parent=11 // pred_fallthru
        _
      // Predicated region
      $region21: #{conv_block_forward.1} parent=11 // pred_check
        %p184 = pneg %p114
      $region22: #{conv_block_forward.1} parent=11 // pred_check_branch
        %186 = sbr.rel (%p184) target = $region24
      $region23: #{conv_block_forward.1} parent=11 // pred_region
        _
      $region24: #{conv_block_forward.1} parent=11 // pred_fallthru
        _
      // Predicated region
      $region25: #{conv_block_forward.1} parent=11 // pred_check
        %p187 = pneg %p135
      $region26: #{conv_block_forward.1} parent=11 // pred_check_branch
        %189 = sbr.rel (%p187) target = $region28
      $region27: #{conv_block_forward.1} parent=11 // pred_region
        _
      $region28: #{conv_block_forward.1} parent=11 // pred_fallthru
        _
    $region12: #{conv_block_forward.1} parent=5 // pred_fallthru
      _
    %p190 = scmp.lt.s32.totalorder %s11, 2
    // Predicated region
    $region29: #{conv_block_forward.1} parent=5 // pred_check
      %p191 = pneg %p190
    $region30: #{conv_block_forward.1} parent=5 // pred_check_branch
      %193 = sbr.rel (%p191) target = $region32
    $region31: #{conv_block_forward.1} parent=5 // pred_region
      // Predicated region
      $region33: #{conv_block_forward.1} parent=31 // pred_check
        %p194 = pneg %p45
      $region34: #{conv_block_forward.1} parent=31 // pred_check_branch
        %196 = sbr.rel (%p194) target = $region36
      $region35: #{conv_block_forward.1} parent=31 // pred_region
        %p197 = scmp.lt.s32.totalorder %s18, 1
        %s198 = scalar_select %p197, %s18, 1
        %p199 = scmp.lt.s32.totalorder %s19, 0
        %s200 = scalar_select %p199, %s19, 0
        %s201 = smul.addr %s200, 60
        %s202 = smul.addr %s198, 60
        %s203 = sadd.s32 %s201, %s202
        %s204 = smul.addr %s203, 4
        %s205 = scalar_lea.vmem %s0, %s204
      $region36: #{conv_block_forward.1} parent=31 // pred_fallthru
        _
    $region32: #{conv_block_forward.1} parent=5 // pred_fallthru
      _
    %p206 = scmp.le.s32.totalorder 1, %s11
    %p207 = scmp.lt.s32.totalorder %s11, 3
    %p208 = pnand %p206, %p207
    %p209 = pneg %p208
    // Predicated region
    $region37: #{conv_block_forward.1} parent=5 // pred_check
      _
    $region38: #{conv_block_forward.1} parent=5 // pred_check_branch
      %211 = sbr.rel (%p208) target = $region40
    $region39: #{conv_block_forward.1} parent=5 // pred_region
      %s212 = ssub.s32 %s11, 1
      %p213 = scmp.lt.s32.totalorder %s20, 1
      %s214 = scalar_select %p213, %s20, 1
      %p215 = scmp.lt.s32.totalorder %s21, 0
      %s216 = scalar_select %p215, %s21, 0
      %s217 = smul.addr %s216, 60
      %s218 = smul.addr %s214, 60
      %s219 = sadd.s32 %s217, %s218
      %s220 = smul.addr %s219, 4
      %s221 = scalar_lea.vmem %s0, %s220
      %p222 = pneg %p51
      %p223 = pneg %p48
      %p224 = pneg %p72
      %p225 = pneg %p69
      %p226 = pneg %p93
      %p227 = pneg %p90
      %p228 = pneg %p114
      %p229 = pneg %p111
      %p230 = pneg %p135
      %p231 = pneg %p132
      %p232 = pneg %p163
      %p233 = pneg %p160
      %s234 = smul.u32 16, %s21
      %p235 = scmp.lt.s32.totalorder %s20, 1
      %s236 = scalar_select %p235, %s20, 1
      %p237 = scmp.lt.s32.totalorder %s234, 15
      %s238 = scalar_select %p237, %s234, 15
      %s239 = smul.addr %s238, 2
      %s240 = smul.addr %s236, 32
      %s241 = sadd.s32 %s239, %s240
      %s242 = smul.addr %s241, 4
      %s243 = scalar_lea.vmem %s5, %s242
      %p244 = scmp.lt.s32.totalorder %s20, 1
      %s245 = scalar_select %p244, %s20, 1
      %p246 = scmp.lt.s32.totalorder %s21, 0
      %s247 = scalar_select %p246, %s21, 0
      %s248 = smul.addr %s247, 60
      %s249 = smul.addr %s245, 60
      %s250 = sadd.s32 %s248, %s249
      %s251 = smul.addr %s250, 4
      %s252 = scalar_lea.vmem %s0, %s251
      %s253 = smul.u32 16, %s21
      %p254 = scmp.lt.s32.totalorder %s20, 1
      %s255 = scalar_select %p254, %s20, 1
      %p256 = scmp.lt.s32.totalorder %s253, 15
      %s257 = scalar_select %p256, %s253, 15
      %s258 = smul.addr %s257, 2
      %s259 = smul.addr %s255, 32
      %s260 = sadd.s32 %s258, %s259
      %s261 = smul.addr %s260, 4
      %s262 = scalar_lea.vmem %s5, %s261
      %s263 = smul.u32 16, %s21
      %v265 = vld [vmem:[%s252] sm:$0xf]
      %v266 = vld [vmem:[%s252 + $0x4] sm:$0xf]
      %v267 = vld [vmem:[%s252 + $0xc] sm:$0xf]
      %v268 = vld [vmem:[%s252 + $0x10] sm:$0xf]
      %v269 = vld [vmem:[%s252 + $0x18] sm:$0xf]
      %v270 = vld [vmem:[%s252 + $0x1c] sm:$0xf]
      %v271 = vld [vmem:[%s252 + $0x24] sm:$0xf]
      %v272 = vld [vmem:[%s252 + $0x28] sm:$0xf]
      %v273 = vld [vmem:[%s252 + $0x30] sm:$0xf]
      %v274 = vld [vmem:[%s252 + $0x34] sm:$0xf]
      %v275 = vld [vmem:[%s252 + $0x3c] sm:$0xf]
      %v276 = vld [vmem:[%s252 + $0x40] sm:$0xf]
      %v277 = vld [vmem:[%s252 + $0x48] sm:$0xf]
      %v278 = vld [vmem:[%s252 + $0x4c] sm:$0xf]
      %v279 = vld [vmem:[%s252 + $0x54] sm:$0xf]
      %v280 = vld [vmem:[%s252 + $0x58] sm:$0xf]
      %v281 = vld [vmem:[%s252 + $0x60] sm:$0xf]
      %v282 = vld [vmem:[%s252 + $0x64] sm:$0xf]
      %v283 = vld [vmem:[%s252 + $0x6c] sm:$0xf]
      %v284 = vld [vmem:[%s252 + $0x70] sm:$0xf]
      %v285 = vld [vmem:[%s252 + $0x78] sm:$0xf]
      %v286 = vld [vmem:[%s252 + $0x7c] sm:$0xf]
      %v287 = vld [vmem:[%s252 + $0x84] sm:$0xf]
      %v288 = vld [vmem:[%s252 + $0x88] sm:$0xf]
      %v289 = vld [vmem:[%s252 + $0x90] sm:$0xf]
      %v290 = vld [vmem:[%s252 + $0x94] sm:$0xf]
      %v291 = vld [vmem:[%s252 + $0x9c] sm:$0xf]
      %v292 = vld [vmem:[%s252 + $0xa0] sm:$0xf]
      %v293 = vld [vmem:[%s252 + $0xa8] sm:$0xf]
      %v294 = vld [vmem:[%s252 + $0xac] sm:$0xf]
      %v295 = vld [vmem:[%s252 + $0xb4] sm:$0xf]
      %v296 = vld [vmem:[%s252 + $0xb8] sm:$0xf]
      %v297 = vld [vmem:[%s252 + $0xc0] sm:$0xf]
      %v298 = vld [vmem:[%s252 + $0xc4] sm:$0xf]
      %v299 = vld [vmem:[%s252 + $0xcc] sm:$0xf]
      %v300 = vld [vmem:[%s252 + $0xd0] sm:$0xf]
      %v301 = vld [vmem:[%s252 + $0x8] sm:$0x1]
      %v302 = vld [vmem:[%s252 + $0x14] sm:$0x1]
      %v303 = vld [vmem:[%s252 + $0x20] sm:$0x1]
      %v304 = vld [vmem:[%s252 + $0x2c] sm:$0x1]
      %v305 = vld [vmem:[%s252 + $0x38] sm:$0x1]
      %v306 = vld [vmem:[%s252 + $0x44] sm:$0x1]
      %v307 = vld [vmem:[%s252 + $0x50] sm:$0x1]
      %v308 = vld [vmem:[%s252 + $0x5c] sm:$0x1]
      %v309 = vld [vmem:[%s252 + $0x68] sm:$0x1]
      %v310 = vld [vmem:[%s252 + $0x74] sm:$0x1]
      %v311 = vld [vmem:[%s252 + $0x80] sm:$0x1]
      %v312 = vld [vmem:[%s252 + $0x8c] sm:$0x1]
      %v313 = vld [vmem:[%s252 + $0x98] sm:$0x1]
      %v314 = vld [vmem:[%s252 + $0xa4] sm:$0x1]
      %v315 = vld [vmem:[%s252 + $0xb0] sm:$0x1]
      %v316 = vld [vmem:[%s252 + $0xbc] sm:$0x1]
      %v317 = vld [vmem:[%s252 + $0xc8] sm:$0x1]
      %v318 = vld [vmem:[%s252 + $0xd4] sm:$0x1]
      %v319 = vld [vmem:[%s252] sm:$0xe]
      %v320 = vld [vmem:[%s252 + $0xc] sm:$0xe]
      %v321 = vld [vmem:[%s252 + $0x18] sm:$0xe]
      %v322 = vld [vmem:[%s252 + $0x24] sm:$0xe]
      %v323 = vld [vmem:[%s252 + $0x30] sm:$0xe]
      %v324 = vld [vmem:[%s252 + $0x3c] sm:$0xe]
      %v325 = vld [vmem:[%s252 + $0x48] sm:$0xe]
      %v326 = vld [vmem:[%s252 + $0x54] sm:$0xe]
      %v327 = vld [vmem:[%s252 + $0x60] sm:$0xe]
      %v328 = vld [vmem:[%s252 + $0x6c] sm:$0xe]
      %v329 = vld [vmem:[%s252 + $0x78] sm:$0xe]
      %v330 = vld [vmem:[%s252 + $0x84] sm:$0xe]
      %v331 = vld [vmem:[%s252 + $0x90] sm:$0xe]
      %v332 = vld [vmem:[%s252 + $0x9c] sm:$0xe]
      %v333 = vld [vmem:[%s252 + $0xa8] sm:$0xe]
      %v334 = vld [vmem:[%s252 + $0xb4] sm:$0xe]
      %v335 = vld [vmem:[%s252 + $0xc0] sm:$0xe]
      %v336 = vld [vmem:[%s252 + $0xcc] sm:$0xe]
      %v373 = vunpack.c.l.b16 %v265
      %v374 = vunpack.c.l.b16 %v266
      %v375 = vunpack.c.l.b16 %v267
      %v376 = vunpack.c.l.b16 %v268
      %v377 = vunpack.c.l.b16 %v269
      %v378 = vunpack.c.l.b16 %v270
      %v379 = vunpack.c.l.b16 %v271
      %v380 = vunpack.c.l.b16 %v272
      %v381 = vunpack.c.l.b16 %v273
      %v382 = vunpack.c.l.b16 %v274
      %v383 = vunpack.c.l.b16 %v275
      %v384 = vunpack.c.l.b16 %v276
      %v385 = vunpack.c.l.b16 %v277
      %v386 = vunpack.c.l.b16 %v278
      %v387 = vunpack.c.l.b16 %v279
      %v388 = vunpack.c.l.b16 %v280
      %v389 = vunpack.c.l.b16 %v281
      %v390 = vunpack.c.l.b16 %v282
      %v391 = vunpack.c.l.b16 %v283
      %v392 = vunpack.c.l.b16 %v284
      %v393 = vunpack.c.l.b16 %v285
      %v394 = vunpack.c.l.b16 %v286
      %v395 = vunpack.c.l.b16 %v287
      %v396 = vunpack.c.l.b16 %v288
      %v397 = vunpack.c.l.b16 %v289
      %v398 = vunpack.c.l.b16 %v290
      %v399 = vunpack.c.l.b16 %v291
      %v400 = vunpack.c.l.b16 %v292
      %v401 = vunpack.c.l.b16 %v293
      %v402 = vunpack.c.l.b16 %v294
      %v403 = vunpack.c.l.b16 %v295
      %v404 = vunpack.c.l.b16 %v296
      %v405 = vunpack.c.l.b16 %v297
      %v406 = vunpack.c.l.b16 %v298
      %v407 = vunpack.c.l.b16 %v299
      %v408 = vunpack.c.l.b16 %v300
      %v409 = vpack.c.b16 %v374, %v373
      %v410 = vpack.c.b16 %v376, %v375
      %v411 = vpack.c.b16 %v378, %v377
      %v412 = vpack.c.b16 %v380, %v379
      %v413 = vpack.c.b16 %v382, %v381
      %v414 = vpack.c.b16 %v384, %v383
      %v415 = vpack.c.b16 %v386, %v385
      %v416 = vpack.c.b16 %v388, %v387
      %v417 = vpack.c.b16 %v390, %v389
      %v418 = vpack.c.b16 %v392, %v391
      %v419 = vpack.c.b16 %v394, %v393
      %v420 = vpack.c.b16 %v396, %v395
      %v421 = vpack.c.b16 %v398, %v397
      %v422 = vpack.c.b16 %v400, %v399
      %v423 = vpack.c.b16 %v402, %v401
      %v424 = vpack.c.b16 %v404, %v403
      %v425 = vpack.c.b16 %v406, %v405
      %v426 = vpack.c.b16 %v408, %v407
      %v463 = vunpack.c.l.b16 %v301
      %v464 = vunpack.c.l.b16 %v302
      %v465 = vunpack.c.l.b16 %v303
      %v466 = vunpack.c.l.b16 %v304
      %v467 = vunpack.c.l.b16 %v305
      %v468 = vunpack.c.l.b16 %v306
      %v469 = vunpack.c.l.b16 %v307
      %v470 = vunpack.c.l.b16 %v308
      %v471 = vunpack.c.l.b16 %v309
      %v472 = vunpack.c.l.b16 %v310
      %v473 = vunpack.c.l.b16 %v311
      %v474 = vunpack.c.l.b16 %v312
      %v475 = vunpack.c.l.b16 %v313
      %v476 = vunpack.c.l.b16 %v314
      %v477 = vunpack.c.l.b16 %v315
      %v478 = vunpack.c.l.b16 %v316
      %v479 = vunpack.c.l.b16 %v317
      %v480 = vunpack.c.l.b16 %v318
      %v481 = vpack.c.b16 %v463, %v463
      %v482 = vpack.c.b16 %v464, %v464
      %v483 = vpack.c.b16 %v465, %v465
      %v484 = vpack.c.b16 %v466, %v466
      %v485 = vpack.c.b16 %v467, %v467
      %v486 = vpack.c.b16 %v468, %v468
      %v487 = vpack.c.b16 %v469, %v469
      %v488 = vpack.c.b16 %v470, %v470
      %v489 = vpack.c.b16 %v471, %v471
      %v490 = vpack.c.b16 %v472, %v472
      %v491 = vpack.c.b16 %v473, %v473
      %v492 = vpack.c.b16 %v474, %v474
      %v493 = vpack.c.b16 %v475, %v475
      %v494 = vpack.c.b16 %v476, %v476
      %v495 = vpack.c.b16 %v477, %v477
      %v496 = vpack.c.b16 %v478, %v478
      %v497 = vpack.c.b16 %v479, %v479
      %v498 = vpack.c.b16 %v480, %v480
      %vm499 = vsmask.f32 7424
      %v501 = vshrl.u32 %v409, 16
      %v503 = vshll.u32 %v409, 16
      %v505 = vrot.slane %v503, 1
      %v506 = vor.u32 %v501, %v505
      %v508 = vshll.u32 %v481, 16
      %v510 = vrot.slane %v508, 1
      %v511 = vsel %vm499, %v506, %v510
      %v513 = vshrl.u32 %v410, 16
      %v515 = vshll.u32 %v410, 16
      %v517 = vrot.slane %v515, 1
      %v518 = vor.u32 %v513, %v517
      %v520 = vshll.u32 %v482, 16
      %v522 = vrot.slane %v520, 1
      %v523 = vsel %vm499, %v518, %v522
      %v525 = vshrl.u32 %v411, 16
      %v527 = vshll.u32 %v411, 16
      %v529 = vrot.slane %v527, 1
      %v530 = vor.u32 %v525, %v529
      %v532 = vshll.u32 %v483, 16
      %v534 = vrot.slane %v532, 1
      %v535 = vsel %vm499, %v530, %v534
      %v537 = vshrl.u32 %v412, 16
      %v539 = vshll.u32 %v412, 16
      %v541 = vrot.slane %v539, 1
      %v542 = vor.u32 %v537, %v541
      %v544 = vshll.u32 %v484, 16
      %v546 = vrot.slane %v544, 1
      %v547 = vsel %vm499, %v542, %v546
      %v549 = vshrl.u32 %v413, 16
      %v551 = vshll.u32 %v413, 16
      %v553 = vrot.slane %v551, 1
      %v554 = vor.u32 %v549, %v553
      %v556 = vshll.u32 %v485, 16
      %v558 = vrot.slane %v556, 1
      %v559 = vsel %vm499, %v554, %v558
      %v561 = vshrl.u32 %v414, 16
      %v563 = vshll.u32 %v414, 16
      %v565 = vrot.slane %v563, 1
      %v566 = vor.u32 %v561, %v565
      %v568 = vshll.u32 %v486, 16
      %v570 = vrot.slane %v568, 1
      %v571 = vsel %vm499, %v566, %v570
      %v573 = vshrl.u32 %v415, 16
      %v575 = vshll.u32 %v415, 16
      %v577 = vrot.slane %v575, 1
      %v578 = vor.u32 %v573, %v577
      %v580 = vshll.u32 %v487, 16
      %v582 = vrot.slane %v580, 1
      %v583 = vsel %vm499, %v578, %v582
      %v585 = vshrl.u32 %v416, 16
      %v587 = vshll.u32 %v416, 16
      %v589 = vrot.slane %v587, 1
      %v590 = vor.u32 %v585, %v589
      %v592 = vshll.u32 %v488, 16
      %v594 = vrot.slane %v592, 1
      %v595 = vsel %vm499, %v590, %v594
      %v597 = vshrl.u32 %v417, 16
      %v599 = vshll.u32 %v417, 16
      %v601 = vrot.slane %v599, 1
      %v602 = vor.u32 %v597, %v601
      %v604 = vshll.u32 %v489, 16
      %v606 = vrot.slane %v604, 1
      %v607 = vsel %vm499, %v602, %v606
      %v609 = vshrl.u32 %v418, 16
      %v611 = vshll.u32 %v418, 16
      %v613 = vrot.slane %v611, 1
      %v614 = vor.u32 %v609, %v613
      %v616 = vshll.u32 %v490, 16
      %v618 = vrot.slane %v616, 1
      %v619 = vsel %vm499, %v614, %v618
      %v621 = vshrl.u32 %v419, 16
      %v623 = vshll.u32 %v419, 16
      %v625 = vrot.slane %v623, 1
      %v626 = vor.u32 %v621, %v625
      %v628 = vshll.u32 %v491, 16
      %v630 = vrot.slane %v628, 1
      %v631 = vsel %vm499, %v626, %v630
      %v633 = vshrl.u32 %v420, 16
      %v635 = vshll.u32 %v420, 16
      %v637 = vrot.slane %v635, 1
      %v638 = vor.u32 %v633, %v637
      %v640 = vshll.u32 %v492, 16
      %v642 = vrot.slane %v640, 1
      %v643 = vsel %vm499, %v638, %v642
      %v645 = vshrl.u32 %v421, 16
      %v647 = vshll.u32 %v421, 16
      %v649 = vrot.slane %v647, 1
      %v650 = vor.u32 %v645, %v649
      %v652 = vshll.u32 %v493, 16
      %v654 = vrot.slane %v652, 1
      %v655 = vsel %vm499, %v650, %v654
      %v657 = vshrl.u32 %v422, 16
      %v659 = vshll.u32 %v422, 16
      %v661 = vrot.slane %v659, 1
      %v662 = vor.u32 %v657, %v661
      %v664 = vshll.u32 %v494, 16
      %v666 = vrot.slane %v664, 1
      %v667 = vsel %vm499, %v662, %v666
      %v669 = vshrl.u32 %v423, 16
      %v671 = vshll.u32 %v423, 16
      %v673 = vrot.slane %v671, 1
      %v674 = vor.u32 %v669, %v673
      %v676 = vshll.u32 %v495, 16
      %v678 = vrot.slane %v676, 1
      %v679 = vsel %vm499, %v674, %v678
      %v681 = vshrl.u32 %v424, 16
      %v683 = vshll.u32 %v424, 16
      %v685 = vrot.slane %v683, 1
      %v686 = vor.u32 %v681, %v685
      %v688 = vshll.u32 %v496, 16
      %v690 = vrot.slane %v688, 1
      %v691 = vsel %vm499, %v686, %v690
      %v693 = vshrl.u32 %v425, 16
      %v695 = vshll.u32 %v425, 16
      %v697 = vrot.slane %v695, 1
      %v698 = vor.u32 %v693, %v697
      %v700 = vshll.u32 %v497, 16
      %v702 = vrot.slane %v700, 1
      %v703 = vsel %vm499, %v698, %v702
      %v705 = vshrl.u32 %v426, 16
      %v707 = vshll.u32 %v426, 16
      %v709 = vrot.slane %v707, 1
      %v710 = vor.u32 %v705, %v709
      %v712 = vshll.u32 %v498, 16
      %v714 = vrot.slane %v712, 1
      %v715 = vsel %vm499, %v710, %v714
      %v752 = vunpack.c.l.b16 %v319
      %v753 = vunpack.c.l.b16 %v320
      %v754 = vunpack.c.l.b16 %v321
      %v755 = vunpack.c.l.b16 %v322
      %v756 = vunpack.c.l.b16 %v323
      %v757 = vunpack.c.l.b16 %v324
      %v758 = vunpack.c.l.b16 %v325
      %v759 = vunpack.c.l.b16 %v326
      %v760 = vunpack.c.l.b16 %v327
      %v761 = vunpack.c.l.b16 %v328
      %v762 = vunpack.c.l.b16 %v329
      %v763 = vunpack.c.l.b16 %v330
      %v764 = vunpack.c.l.b16 %v331
      %v765 = vunpack.c.l.b16 %v332
      %v766 = vunpack.c.l.b16 %v333
      %v767 = vunpack.c.l.b16 %v334
      %v768 = vunpack.c.l.b16 %v335
      %v769 = vunpack.c.l.b16 %v336
      %v770 = vpack.c.b16 %v374, %v752
      %v771 = vpack.c.b16 %v376, %v753
      %v772 = vpack.c.b16 %v378, %v754
      %v773 = vpack.c.b16 %v380, %v755
      %v774 = vpack.c.b16 %v382, %v756
      %v775 = vpack.c.b16 %v384, %v757
      %v776 = vpack.c.b16 %v386, %v758
      %v777 = vpack.c.b16 %v388, %v759
      %v778 = vpack.c.b16 %v390, %v760
      %v779 = vpack.c.b16 %v392, %v761
      %v780 = vpack.c.b16 %v394, %v762
      %v781 = vpack.c.b16 %v396, %v763
      %v782 = vpack.c.b16 %v398, %v764
      %v783 = vpack.c.b16 %v400, %v765
      %v784 = vpack.c.b16 %v402, %v766
      %v785 = vpack.c.b16 %v404, %v767
      %v786 = vpack.c.b16 %v406, %v768
      %v787 = vpack.c.b16 %v408, %v769
      %vm788 = vcmask 1046528
      %v789 = vrot.slane %v770, 1
      %v790 = vrot.slane %v481, 1
      %v791 = vsel %vm788, %v789, %v790
      %v792 = vrot.slane %v771, 1
      %v793 = vrot.slane %v482, 1
      %v794 = vsel %vm788, %v792, %v793
      %v795 = vrot.slane %v772, 1
      %v796 = vrot.slane %v483, 1
      %v797 = vsel %vm788, %v795, %v796
      %v798 = vrot.slane %v773, 1
      %v799 = vrot.slane %v484, 1
      %v800 = vsel %vm788, %v798, %v799
      %v801 = vrot.slane %v774, 1
      %v802 = vrot.slane %v485, 1
      %v803 = vsel %vm788, %v801, %v802
      %v804 = vrot.slane %v775, 1
      %v805 = vrot.slane %v486, 1
      %v806 = vsel %vm788, %v804, %v805
      %v807 = vrot.slane %v776, 1
      %v808 = vrot.slane %v487, 1
      %v809 = vsel %vm788, %v807, %v808
      %v810 = vrot.slane %v777, 1
      %v811 = vrot.slane %v488, 1
      %v812 = vsel %vm788, %v810, %v811
      %v813 = vrot.slane %v778, 1
      %v814 = vrot.slane %v489, 1
      %v815 = vsel %vm788, %v813, %v814
      %v816 = vrot.slane %v779, 1
      %v817 = vrot.slane %v490, 1
      %v818 = vsel %vm788, %v816, %v817
      %v819 = vrot.slane %v780, 1
      %v820 = vrot.slane %v491, 1
      %v821 = vsel %vm788, %v819, %v820
      %v822 = vrot.slane %v781, 1
      %v823 = vrot.slane %v492, 1
      %v824 = vsel %vm788, %v822, %v823
      %v825 = vrot.slane %v782, 1
      %v826 = vrot.slane %v493, 1
      %v827 = vsel %vm788, %v825, %v826
      %v828 = vrot.slane %v783, 1
      %v829 = vrot.slane %v494, 1
      %v830 = vsel %vm788, %v828, %v829
      %v831 = vrot.slane %v784, 1
      %v832 = vrot.slane %v495, 1
      %v833 = vsel %vm788, %v831, %v832
      %v834 = vrot.slane %v785, 1
      %v835 = vrot.slane %v496, 1
      %v836 = vsel %vm788, %v834, %v835
      %v837 = vrot.slane %v786, 1
      %v838 = vrot.slane %v497, 1
      %v839 = vsel %vm788, %v837, %v838
      %v840 = vrot.slane %v787, 1
      %v841 = vrot.slane %v498, 1
      %v842 = vsel %vm788, %v840, %v841
      %v861 = vld [vmem:[%s1] sm:$0xf]
      %v862 = vld [vmem:[%s1 + $0x4] sm:$0xf]
      %v863 = vld [vmem:[%s1 + $0x8] sm:$0xf]
      %v864 = vld [vmem:[%s1 + $0xc] sm:$0xf]
      %v865 = vld [vmem:[%s1 + $0x10] sm:$0xf]
      %v866 = vld [vmem:[%s1 + $0x14] sm:$0xf]
      %v867 = vld [vmem:[%s1 + $0x18] sm:$0xf]
      %v868 = vld [vmem:[%s1 + $0x1c] sm:$0xf]
      %v869 = vld [vmem:[%s1 + $0x20] sm:$0xf]
      %v870 = vld [vmem:[%s1 + $0x24] sm:$0xf]
      %v871 = vld [vmem:[%s1 + $0x28] sm:$0xf]
      %v872 = vld [vmem:[%s1 + $0x2c] sm:$0xf]
      %v873 = vld [vmem:[%s1 + $0x30] sm:$0xf]
      %v874 = vld [vmem:[%s1 + $0x34] sm:$0xf]
      %v875 = vld [vmem:[%s1 + $0x38] sm:$0xf]
      %v876 = vld [vmem:[%s1 + $0x3c] sm:$0xf]
      %v877 = vld [vmem:[%s1 + $0x40] sm:$0xf]
      %v878 = vld [vmem:[%s1 + $0x44] sm:$0xf]
      %v879 = vld [vmem:[%s1 + $0x48] sm:$0xf]
      %v880 = vld [vmem:[%s1 + $0x4c] sm:$0xf]
      %v881 = vld [vmem:[%s1 + $0x50] sm:$0xf]
      %v882 = vld [vmem:[%s1 + $0x54] sm:$0xf]
      %v883 = vld [vmem:[%s1 + $0x58] sm:$0xf]
      %v884 = vld [vmem:[%s1 + $0x5c] sm:$0xf]
      %v885 = vld [vmem:[%s1 + $0x60] sm:$0xf]
      %v886 = vld [vmem:[%s1 + $0x64] sm:$0xf]
      %v887 = vld [vmem:[%s1 + $0x68] sm:$0xf]
      %v888 = vld [vmem:[%s1 + $0x6c] sm:$0xf]
      %v889 = vld [vmem:[%s1 + $0x70] sm:$0xf]
      %v890 = vld [vmem:[%s1 + $0x74] sm:$0xf]
      %v891 = vld [vmem:[%s1 + $0x78] sm:$0xf]
      %v892 = vld [vmem:[%s1 + $0x7c] sm:$0xf]
      %v893 = vld [vmem:[%s1 + $0x80] sm:$0xf]
      %v894 = vld [vmem:[%s1 + $0x84] sm:$0xf]
      %v895 = vld [vmem:[%s1 + $0x88] sm:$0xf]
      %v896 = vld [vmem:[%s1 + $0x8c] sm:$0xf]
      %v897 = vld [vmem:[%s1 + $0x90] sm:$0xf]
      %v898 = vld [vmem:[%s1 + $0x94] sm:$0xf]
      %v899 = vld [vmem:[%s1 + $0x98] sm:$0xf]
      %v900 = vld [vmem:[%s1 + $0x9c] sm:$0xf]
      %v901 = vld [vmem:[%s1 + $0xa0] sm:$0xf]
      %v902 = vld [vmem:[%s1 + $0xa4] sm:$0xf]
      %v903 = vld [vmem:[%s1 + $0xa8] sm:$0xf]
      %v904 = vld [vmem:[%s1 + $0xac] sm:$0xf]
      %v905 = vld [vmem:[%s1 + $0xb0] sm:$0xf]
      %v906 = vld [vmem:[%s1 + $0xb4] sm:$0xf]
      %v907 = vld [vmem:[%s1 + $0xb8] sm:$0xf]
      %v908 = vld [vmem:[%s1 + $0xbc] sm:$0xf]
      %v957 = vunpack.c.l.b16 %v861
      %v958 = vunpack.c.l.b16 %v862
      %v959 = vunpack.c.l.b16 %v863
      %v960 = vunpack.c.l.b16 %v864
      %v961 = vunpack.c.l.b16 %v865
      %v962 = vunpack.c.l.b16 %v866
      %v963 = vunpack.c.l.b16 %v867
      %v964 = vunpack.c.l.b16 %v868
      %v965 = vunpack.c.l.b16 %v869
      %v966 = vunpack.c.l.b16 %v870
      %v967 = vunpack.c.l.b16 %v871
      %v968 = vunpack.c.l.b16 %v872
      %v969 = vunpack.c.l.b16 %v873
      %v970 = vunpack.c.l.b16 %v874
      %v971 = vunpack.c.l.b16 %v875
      %v972 = vunpack.c.l.b16 %v876
      %v973 = vunpack.c.l.b16 %v877
      %v974 = vunpack.c.l.b16 %v878
      %v975 = vunpack.c.l.b16 %v879
      %v976 = vunpack.c.l.b16 %v880
      %v977 = vunpack.c.l.b16 %v881
      %v978 = vunpack.c.l.b16 %v882
      %v979 = vunpack.c.l.b16 %v883
      %v980 = vunpack.c.l.b16 %v884
      %v981 = vunpack.c.l.b16 %v885
      %v982 = vunpack.c.l.b16 %v886
      %v983 = vunpack.c.l.b16 %v887
      %v984 = vunpack.c.l.b16 %v888
      %v985 = vunpack.c.l.b16 %v889
      %v986 = vunpack.c.l.b16 %v890
      %v987 = vunpack.c.l.b16 %v891
      %v988 = vunpack.c.l.b16 %v892
      %v989 = vunpack.c.l.b16 %v893
      %v990 = vunpack.c.l.b16 %v894
      %v991 = vunpack.c.l.b16 %v895
      %v992 = vunpack.c.l.b16 %v896
      %v993 = vunpack.c.l.b16 %v897
      %v994 = vunpack.c.l.b16 %v898
      %v995 = vunpack.c.l.b16 %v899
      %v996 = vunpack.c.l.b16 %v900
      %v997 = vunpack.c.l.b16 %v901
      %v998 = vunpack.c.l.b16 %v902
      %v999 = vunpack.c.l.b16 %v903
      %v1000 = vunpack.c.l.b16 %v904
      %v1001 = vunpack.c.l.b16 %v905
      %v1002 = vunpack.c.l.b16 %v906
      %v1003 = vunpack.c.l.b16 %v907
      %v1004 = vunpack.c.l.b16 %v908
      %v1005 = vpack.c.b16 %v958, %v957
      %v1006 = vpack.c.b16 %v960, %v959
      %v1007 = vpack.c.b16 %v962, %v961
      %v1008 = vpack.c.b16 %v964, %v963
      %v1009 = vpack.c.b16 %v966, %v965
      %v1010 = vpack.c.b16 %v968, %v967
      %v1011 = vpack.c.b16 %v970, %v969
      %v1012 = vpack.c.b16 %v972, %v971
      %v1013 = vpack.c.b16 %v974, %v973
      %v1014 = vpack.c.b16 %v976, %v975
      %v1015 = vpack.c.b16 %v978, %v977
      %v1016 = vpack.c.b16 %v980, %v979
      %v1017 = vpack.c.b16 %v982, %v981
      %v1018 = vpack.c.b16 %v984, %v983
      %v1019 = vpack.c.b16 %v986, %v985
      %v1020 = vpack.c.b16 %v988, %v987
      %v1021 = vpack.c.b16 %v990, %v989
      %v1022 = vpack.c.b16 %v992, %v991
      %v1023 = vpack.c.b16 %v994, %v993
      %v1024 = vpack.c.b16 %v996, %v995
      %v1025 = vpack.c.b16 %v998, %v997
      %v1026 = vpack.c.b16 %v1000, %v999
      %v1027 = vpack.c.b16 %v1002, %v1001
      %v1028 = vpack.c.b16 %v1004, %v1003
      %1053 = vmatprep.subr.bf16.mxu0 0
      %1054 = vmatpush1.bf16.msra.mxu0 %v1005
      %1055 = vmatprep.subr.bf16.mxu0 0
      %1056 = vmatpush1.bf16.msra.mxu0 %v1006
      %1057 = vmatprep.subr.bf16.mxu0 0
      %1058 = vmatpush1.bf16.msra.mxu0 %v1007
      %1059 = vmatprep.subr.bf16.mxu0 0
      %1060 = vmatpush1.bf16.msra.mxu0 %v1008
      %1061 = vmatprep.subr.bf16.mxu0 0
      %1062 = vmatpush1.bf16.msra.mxu0 %v1009
      %1063 = vmatprep.subr.bf16.mxu0 0
      %1064 = vmatpush1.bf16.msra.mxu0 %v1010
      %1065 = vmatprep.subr.bf16.mxu0 0
      %1066 = vmatpush1.bf16.msra.mxu0 %v1011
      %1067 = vmatprep.subr.bf16.mxu0 0
      %1068 = vmatpush1.bf16.msra.mxu0 %v1012
      %1069 = vmatprep.subr.bf16.mxu0 0
      %1070 = vmatpush1.bf16.msra.mxu0 %v1013
      %1071 = vmatprep.subr.bf16.mxu0 0
      %1072 = vmatpush1.bf16.msra.mxu0 %v1014
      %1073 = vmatprep.subr.bf16.mxu0 0
      %1074 = vmatpush1.bf16.msra.mxu0 %v1015
      %1075 = vmatprep.subr.bf16.mxu0 0
      %1076 = vmatpush1.bf16.msra.mxu0 %v1016
      %1077 = vmatprep.subr.bf16.mxu0 0
      %1078 = vmatpush1.bf16.msra.mxu0 %v1017
      %1079 = vmatprep.subr.bf16.mxu0 0
      %1080 = vmatpush1.bf16.msra.mxu0 %v1018
      %1081 = vmatprep.subr.bf16.mxu0 0
      %1082 = vmatpush1.bf16.msra.mxu0 %v1019
      %1083 = vmatprep.subr.bf16.mxu0 0
      %1084 = vmatpush1.bf16.msra.mxu0 %v1020
      %1085 = vmatprep.mubr.bf16.mxu0 %v511
      %1086 = vmatmul.mubr.bf16.gmra.mrb[0].mxu0 %v409
      %v1087 = vpop.f32.mrb[0].mxu0
      %v1088 = vadd.f32 0.0, %v1087
      %v1089 = vpop.f32.mrb[0].mxu0
      %v1090 = vpop.f32.mrb[0].mxu0
      %v1091 = vadd.f32 0.0, %v1090
      %v1092 = vpop.f32.mrb[0].mxu0
      %1093 = vmatprep.mubr.bf16.mxu0 %v523
      %1094 = vmatmul.mubr.bf16.gmra.mrb[0].mxu0 %v410
      %v1095 = vpop.f32.mrb[0].mxu0
      %v1096 = vadd.f32 0.0, %v1095
      %v1097 = vpop.f32.mrb[0].mxu0
      %v1098 = vpop.f32.mrb[0].mxu0
      %v1099 = vadd.f32 0.0, %v1098
      %v1100 = vpop.f32.mrb[0].mxu0
      %1101 = vmatprep.mubr.bf16.mxu0 %v535
      %1102 = vmatmul.mubr.bf16.gmra.mrb[0].mxu0 %v411
      %v1103 = vpop.f32.mrb[0].mxu0
      %v1104 = vadd.f32 0.0, %v1103
      %v1105 = vpop.f32.mrb[0].mxu0
      %v1106 = vpop.f32.mrb[0].mxu0
      %v1107 = vadd.f32 0.0, %v1106
      %v1108 = vpop.f32.mrb[0].mxu0
      %1109 = vmatprep.mubr.bf16.mxu0 %v547
      %1110 = vmatmul.mubr.bf16.gmra.mrb[0].mxu0 %v412
      %v1111 = vpop.f32.mrb[0].mxu0
      %v1112 = vadd.f32 0.0, %v1111
      %v1113 = vpop.f32.mrb[0].mxu0
      %v1114 = vpop.f32.mrb[0].mxu0
      %v1115 = vadd.f32 0.0, %v1114
      %v1116 = vpop.f32.mrb[0].mxu0
      %1117 = vmatprep.mubr.bf16.mxu0 %v559
      %1118 = vmatmul.mubr.bf16.gmra.mrb[0].mxu0 %v413
      %v1119 = vpop.f32.mrb[0].mxu0
      %v1120 = vadd.f32 0.0, %v1119
      %v1121 = vpop.f32.mrb[0].mxu0
      %v1122 = vpop.f32.mrb[0].mxu0
      %v1123 = vadd.f32 0.0, %v1122
      %v1124 = vpop.f32.mrb[0].mxu0
      %1125 = vmatprep.mubr.bf16.mxu0 %v571
      %1126 = vmatmul.mubr.bf16.gmra.mrb[0].mxu0 %v414
      %v1127 = vpop.f32.mrb[0].mxu0
      %v1128 = vadd.f32 0.0, %v1127
      %v1129 = vpop.f32.mrb[0].mxu0
      %v1130 = vpop.f32.mrb[0].mxu0
      %v1131 = vadd.f32 0.0, %v1130
      %v1132 = vpop.f32.mrb[0].mxu0
      %1133 = vmatprep.mubr.bf16.mxu0 %v583
      %1134 = vmatmul.mubr.bf16.gmra.mrb[0].mxu0 %v415
      %v1135 = vpop.f32.mrb[0].mxu0
      %v1136 = vadd.f32 0.0, %v1135
      %v1137 = vpop.f32.mrb[0].mxu0
      %v1138 = vpop.f32.mrb[0].mxu0
      %v1139 = vadd.f32 0.0, %v1138
      %v1140 = vpop.f32.mrb[0].mxu0
      %1141 = vmatprep.mubr.bf16.mxu0 %v595
      %1142 = vmatmul.mubr.bf16.gmra.mrb[0].mxu0 %v416
      %v1143 = vpop.f32.mrb[0].mxu0
      %v1144 = vadd.f32 0.0, %v1143
      %v1145 = vpop.f32.mrb[0].mxu0
      %v1146 = vpop.f32.mrb[0].mxu0
      %v1147 = vadd.f32 0.0, %v1146
      %v1148 = vpop.f32.mrb[0].mxu0
      %1149 = vmatprep.mubr.bf16.mxu0 %v607
      %1150 = vmatmul.mubr.bf16.gmra.mrb[0].mxu0 %v417
      %v1151 = vpop.f32.mrb[0].mxu0
      %v1152 = vadd.f32 0.0, %v1151
      %v1153 = vpop.f32.mrb[0].mxu0
      %v1154 = vpop.f32.mrb[0].mxu0
      %v1155 = vadd.f32 0.0, %v1154
      %v1156 = vpop.f32.mrb[0].mxu0
      %1157 = vmatprep.mubr.bf16.mxu0 %v619
      %1158 = vmatmul.mubr.bf16.gmra.mrb[0].mxu0 %v418
      %v1159 = vpop.f32.mrb[0].mxu0
      %v1160 = vadd.f32 0.0, %v1159
      %v1161 = vpop.f32.mrb[0].mxu0
      %v1162 = vpop.f32.mrb[0].mxu0
      %v1163 = vadd.f32 0.0, %v1162
      %v1164 = vpop.f32.mrb[0].mxu0
      %1165 = vmatprep.mubr.bf16.mxu0 %v631
      %1166 = vmatmul.mubr.bf16.gmra.mrb[0].mxu0 %v419
      %v1167 = vpop.f32.mrb[0].mxu0
      %v1168 = vadd.f32 0.0, %v1167
      %v1169 = vpop.f32.mrb[0].mxu0
      %v1170 = vpop.f32.mrb[0].mxu0
      %v1171 = vadd.f32 0.0, %v1170
      %v1172 = vpop.f32.mrb[0].mxu0
      %1173 = vmatprep.mubr.bf16.mxu0 %v643
      %1174 = vmatmul.mubr.bf16.gmra.mrb[0].mxu0 %v420
      %v1175 = vpop.f32.mrb[0].mxu0
      %v1176 = vadd.f32 0.0, %v1175
      %v1177 = vpop.f32.mrb[0].mxu0
      %v1178 = vpop.f32.mrb[0].mxu0
      %v1179 = vadd.f32 0.0, %v1178
      %v1180 = vpop.f32.mrb[0].mxu0
      %1181 = vmatprep.mubr.bf16.mxu0 %v655
      %1182 = vmatmul.mubr.bf16.gmra.mrb[0].mxu0 %v421
      %v1183 = vpop.f32.mrb[0].mxu0
      %v1184 = vadd.f32 0.0, %v1183
      %v1185 = vpop.f32.mrb[0].mxu0
      %v1186 = vpop.f32.mrb[0].mxu0
      %v1187 = vadd.f32 0.0, %v1186
      %v1188 = vpop.f32.mrb[0].mxu0
      %1189 = vmatprep.mubr.bf16.mxu0 %v667
      %1190 = vmatmul.mubr.bf16.gmra.mrb[0].mxu0 %v422
      %v1191 = vpop.f32.mrb[0].mxu0
      %v1192 = vadd.f32 0.0, %v1191
      %v1193 = vpop.f32.mrb[0].mxu0
      %v1194 = vpop.f32.mrb[0].mxu0
      %v1195 = vadd.f32 0.0, %v1194
      %v1196 = vpop.f32.mrb[0].mxu0
      %1197 = vmatprep.mubr.bf16.mxu0 %v679
      %1198 = vmatmul.mubr.bf16.gmra.mrb[0].mxu0 %v423
      %v1199 = vpop.f32.mrb[0].mxu0
      %v1200 = vadd.f32 0.0, %v1199
      %v1201 = vpop.f32.mrb[0].mxu0
      %v1202 = vpop.f32.mrb[0].mxu0
      %v1203 = vadd.f32 0.0, %v1202
      %v1204 = vpop.f32.mrb[0].mxu0
      %1205 = vmatprep.mubr.bf16.mxu0 %v691
      %1206 = vmatmul.mubr.bf16.gmra.mrb[0].mxu0 %v424
      %v1207 = vpop.f32.mrb[0].mxu0
      %v1208 = vadd.f32 0.0, %v1207
      %v1209 = vpop.f32.mrb[0].mxu0
      %v1210 = vpop.f32.mrb[0].mxu0
      %v1211 = vadd.f32 0.0, %v1210
      %v1212 = vpop.f32.mrb[0].mxu0
      %1213 = vmatprep.mubr.bf16.mxu0 %v703
      %1214 = vmatmul.mubr.bf16.gmra.mrb[0].mxu0 %v425
      %v1215 = vpop.f32.mrb[0].mxu0
      %v1216 = vadd.f32 0.0, %v1215
      %v1217 = vpop.f32.mrb[0].mxu0
      %v1218 = vpop.f32.mrb[0].mxu0
      %v1219 = vadd.f32 0.0, %v1218
      %v1220 = vpop.f32.mrb[0].mxu0
      %1221 = vmatprep.mubr.bf16.mxu0 %v715
      %1222 = vmatmul.mubr.bf16.gmra.mrb[0].mxu0 %v426
      %v1223 = vpop.f32.mrb[0].mxu0
      %v1224 = vadd.f32 0.0, %v1223
      %v1225 = vpop.f32.mrb[0].mxu0
      %v1226 = vpop.f32.mrb[0].mxu0
      %v1227 = vadd.f32 0.0, %v1226
      %v1228 = vpop.f32.mrb[0].mxu0
      %1229 = vdwg.mxu0
      %1230 = vmatprep.subr.bf16.mxu0 0
      %1231 = vmatpush1.bf16.msra.mxu0 %v1021
      %1232 = vmatprep.subr.bf16.mxu0 0
      %1233 = vmatpush1.bf16.msra.mxu0 %v1022
      %1234 = vmatprep.subr.bf16.mxu0 0
      %1235 = vmatpush1.bf16.msra.mxu0 %v1023
      %1236 = vmatprep.subr.bf16.mxu0 0
      %1237 = vmatpush1.bf16.msra.mxu0 %v1024
      %1238 = vmatprep.subr.bf16.mxu0 0
      %1239 = vmatpush1.bf16.msra.mxu0 %v1025
      %1240 = vmatprep.subr.bf16.mxu0 0
      %1241 = vmatpush1.bf16.msra.mxu0 %v1026
      %1242 = vmatprep.subr.bf16.mxu0 0
      %1243 = vmatpush1.bf16.msra.mxu0 %v1027
      %1244 = vmatprep.subr.bf16.mxu0 0
      %1245 = vmatpush1.bf16.msra.mxu0 %v1028
      %1246 = vmatprep.subr.bf16.mxu0 0
      %1247 = vmatpush1.bf16.msra.mxu0 0
      %1248 = vmatprep.subr.bf16.mxu0 0
      %1249 = vmatpush1.bf16.msra.mxu0 0
      %1250 = vmatprep.subr.bf16.mxu0 0
      %1251 = vmatpush1.bf16.msra.mxu0 0
      %1252 = vmatprep.subr.bf16.mxu0 0
      %1253 = vmatpush1.bf16.msra.mxu0 0
      %1254 = vmatprep.subr.bf16.mxu0 0
      %1255 = vmatpush1.bf16.msra.mxu0 0
      %1256 = vmatprep.subr.bf16.mxu0 0
      %1257 = vmatpush1.bf16.msra.mxu0 0
      %1258 = vmatprep.subr.bf16.mxu0 0
      %1259 = vmatpush1.bf16.msra.mxu0 0
      %1260 = vmatprep.subr.bf16.mxu0 0
      %1261 = vmatpush1.bf16.msra.mxu0 0
      %1262 = vmatprep.mubr.bf16.mxu0 0
      %1263 = vmatmul.mubr.bf16.gmra.mrb[0].mxu0 %v791
      %v1264 = vpop.f32.mrb[0].mxu0
      %v1265 = vadd.f32 %v1088, %v1264
      %v1266 = vpop.f32.mrb[0].mxu0
      %v1267 = vpop.f32.mrb[0].mxu0
      %v1268 = vadd.f32 %v1091, %v1267
      %v1269 = vpop.f32.mrb[0].mxu0
      %1270 = vmatprep.mubr.bf16.mxu0 0
      %1271 = vmatmul.mubr.bf16.gmra.mrb[0].mxu0 %v794
      %v1272 = vpop.f32.mrb[0].mxu0
      %v1273 = vadd.f32 %v1096, %v1272
      %v1274 = vpop.f32.mrb[0].mxu0
      %v1275 = vpop.f32.mrb[0].mxu0
      %v1276 = vadd.f32 %v1099, %v1275
      %v1277 = vpop.f32.mrb[0].mxu0
      %1278 = vmatprep.mubr.bf16.mxu0 0
      %1279 = vmatmul.mubr.bf16.gmra.mrb[0].mxu0 %v797
      %v1280 = vpop.f32.mrb[0].mxu0
      %v1281 = vadd.f32 %v1104, %v1280
      %v1282 = vpop.f32.mrb[0].mxu0
      %v1283 = vpop.f32.mrb[0].mxu0
      %v1284 = vadd.f32 %v1107, %v1283
      %v1285 = vpop.f32.mrb[0].mxu0
      %1286 = vmatprep.mubr.bf16.mxu0 0
      %1287 = vmatmul.mubr.bf16.gmra.mrb[0].mxu0 %v800
      %v1288 = vpop.f32.mrb[0].mxu0
      %v1289 = vadd.f32 %v1112, %v1288
      %v1290 = vpop.f32.mrb[0].mxu0
      %v1291 = vpop.f32.mrb[0].mxu0
      %v1292 = vadd.f32 %v1115, %v1291
      %v1293 = vpop.f32.mrb[0].mxu0
      %1294 = vmatprep.mubr.bf16.mxu0 0
      %1295 = vmatmul.mubr.bf16.gmra.mrb[0].mxu0 %v803
      %v1296 = vpop.f32.mrb[0].mxu0
      %v1297 = vadd.f32 %v1120, %v1296
      %v1298 = vpop.f32.mrb[0].mxu0
      %v1299 = vpop.f32.mrb[0].mxu0
      %v1300 = vadd.f32 %v1123, %v1299
      %v1301 = vpop.f32.mrb[0].mxu0
      %1302 = vmatprep.mubr.bf16.mxu0 0
      %1303 = vmatmul.mubr.bf16.gmra.mrb[0].mxu0 %v806
      %v1304 = vpop.f32.mrb[0].mxu0
      %v1305 = vadd.f32 %v1128, %v1304
      %v1306 = vpop.f32.mrb[0].mxu0
      %v1307 = vpop.f32.mrb[0].mxu0
      %v1308 = vadd.f32 %v1131, %v1307
      %v1309 = vpop.f32.mrb[0].mxu0
      %1310 = vmatprep.mubr.bf16.mxu0 0
      %1311 = vmatmul.mubr.bf16.gmra.mrb[0].mxu0 %v809
      %v1312 = vpop.f32.mrb[0].mxu0
      %v1313 = vadd.f32 %v1136, %v1312
      %v1314 = vpop.f32.mrb[0].mxu0
      %v1315 = vpop.f32.mrb[0].mxu0
      %v1316 = vadd.f32 %v1139, %v1315
      %v1317 = vpop.f32.mrb[0].mxu0
      %1318 = vmatprep.mubr.bf16.mxu0 0
      %1319 = vmatmul.mubr.bf16.gmra.mrb[0].mxu0 %v812
      %v1320 = vpop.f32.mrb[0].mxu0
      %v1321 = vadd.f32 %v1144, %v1320
      %v1322 = vpop.f32.mrb[0].mxu0
      %v1323 = vpop.f32.mrb[0].mxu0
      %v1324 = vadd.f32 %v1147, %v1323
      %v1325 = vpop.f32.mrb[0].mxu0
      %1326 = vmatprep.mubr.bf16.mxu0 0
      %1327 = vmatmul.mubr.bf16.gmra.mrb[0].mxu0 %v815
      %v1328 = vpop.f32.mrb[0].mxu0
      %v1329 = vadd.f32 %v1152, %v1328
      %v1330 = vpop.f32.mrb[0].mxu0
      %v1331 = vpop.f32.mrb[0].mxu0
      %v1332 = vadd.f32 %v1155, %v1331
      %v1333 = vpop.f32.mrb[0].mxu0
      %1334 = vmatprep.mubr.bf16.mxu0 0
      %1335 = vmatmul.mubr.bf16.gmra.mrb[0].mxu0 %v818
      %v1336 = vpop.f32.mrb[0].mxu0
      %v1337 = vadd.f32 %v1160, %v1336
      %v1338 = vpop.f32.mrb[0].mxu0
      %v1339 = vpop.f32.mrb[0].mxu0
      %v1340 = vadd.f32 %v1163, %v1339
      %v1341 = vpop.f32.mrb[0].mxu0
      %1342 = vmatprep.mubr.bf16.mxu0 0
      %1343 = vmatmul.mubr.bf16.gmra.mrb[0].mxu0 %v821
      %v1344 = vpop.f32.mrb[0].mxu0
      %v1345 = vadd.f32 %v1168, %v1344
      %v1346 = vpop.f32.mrb[0].mxu0
      %v1347 = vpop.f32.mrb[0].mxu0
      %v1348 = vadd.f32 %v1171, %v1347
      %v1349 = vpop.f32.mrb[0].mxu0
      %1350 = vmatprep.mubr.bf16.mxu0 0
      %1351 = vmatmul.mubr.bf16.gmra.mrb[0].mxu0 %v824
      %v1352 = vpop.f32.mrb[0].mxu0
      %v1353 = vadd.f32 %v1176, %v1352
      %v1354 = vpop.f32.mrb[0].mxu0
      %v1355 = vpop.f32.mrb[0].mxu0
      %v1356 = vadd.f32 %v1179, %v1355
      %v1357 = vpop.f32.mrb[0].mxu0
      %1358 = vmatprep.mubr.bf16.mxu0 0
      %1359 = vmatmul.mubr.bf16.gmra.mrb[0].mxu0 %v827
      %v1360 = vpop.f32.mrb[0].mxu0
      %v1361 = vadd.f32 %v1184, %v1360
      %v1362 = vpop.f32.mrb[0].mxu0
      %v1363 = vpop.f32.mrb[0].mxu0
      %v1364 = vadd.f32 %v1187, %v1363
      %v1365 = vpop.f32.mrb[0].mxu0
      %1366 = vmatprep.mubr.bf16.mxu0 0
      %1367 = vmatmul.mubr.bf16.gmra.mrb[0].mxu0 %v830
      %v1368 = vpop.f32.mrb[0].mxu0
      %v1369 = vadd.f32 %v1192, %v1368
      %v1370 = vpop.f32.mrb[0].mxu0
      %v1371 = vpop.f32.mrb[0].mxu0
      %v1372 = vadd.f32 %v1195, %v1371
      %v1373 = vpop.f32.mrb[0].mxu0
      %1374 = vmatprep.mubr.bf16.mxu0 0
      %1375 = vmatmul.mubr.bf16.gmra.mrb[0].mxu0 %v833
      %v1376 = vpop.f32.mrb[0].mxu0
      %v1377 = vadd.f32 %v1200, %v1376
      %v1378 = vpop.f32.mrb[0].mxu0
      %v1379 = vpop.f32.mrb[0].mxu0
      %v1380 = vadd.f32 %v1203, %v1379
      %v1381 = vpop.f32.mrb[0].mxu0
      %1382 = vmatprep.mubr.bf16.mxu0 0
      %1383 = vmatmul.mubr.bf16.gmra.mrb[0].mxu0 %v836
      %v1384 = vpop.f32.mrb[0].mxu0
      %v1385 = vadd.f32 %v1208, %v1384
      %v1386 = vpop.f32.mrb[0].mxu0
      %v1387 = vpop.f32.mrb[0].mxu0
      %v1388 = vadd.f32 %v1211, %v1387
      %v1389 = vpop.f32.mrb[0].mxu0
      %1390 = vmatprep.mubr.bf16.mxu0 0
      %1391 = vmatmul.mubr.bf16.gmra.mrb[0].mxu0 %v839
      %v1392 = vpop.f32.mrb[0].mxu0
      %v1393 = vadd.f32 %v1216, %v1392
      %v1394 = vpop.f32.mrb[0].mxu0
      %v1395 = vpop.f32.mrb[0].mxu0
      %v1396 = vadd.f32 %v1219, %v1395
      %v1397 = vpop.f32.mrb[0].mxu0
      %1398 = vmatprep.mubr.bf16.mxu0 0
      %1399 = vmatmul.mubr.bf16.gmra.mrb[0].mxu0 %v842
      %v1400 = vpop.f32.mrb[0].mxu0
      %v1401 = vadd.f32 %v1224, %v1400
      %v1402 = vpop.f32.mrb[0].mxu0
      %v1403 = vpop.f32.mrb[0].mxu0
      %v1404 = vadd.f32 %v1227, %v1403
      %v1405 = vpop.f32.mrb[0].mxu0
      %1406 = vdwg.mxu0
      %1407 = vst [vmem:[#allocation3] sm:$0xff] %v1265
      %1408 = vst [vmem:[#allocation3 + $0x8] sm:$0xff] %v1268
      %1409 = vst [vmem:[#allocation3 + $0x10] sm:$0xff] %v1273
      %1410 = vst [vmem:[#allocation3 + $0x18] sm:$0xff] %v1276
      %1411 = vst [vmem:[#allocation3 + $0x20] sm:$0xff] %v1281
      %1412 = vst [vmem:[#allocation3 + $0x28] sm:$0xff] %v1284
      %1413 = vst [vmem:[#allocation3 + $0x30] sm:$0xff] %v1289
      %1414 = vst [vmem:[#allocation3 + $0x38] sm:$0xff] %v1292
      %1415 = vst [vmem:[#allocation3 + $0x40] sm:$0xff] %v1297
      %1416 = vst [vmem:[#allocation3 + $0x48] sm:$0xff] %v1300
      %1417 = vst [vmem:[#allocation3 + $0x50] sm:$0xff] %v1305
      %1418 = vst [vmem:[#allocation3 + $0x58] sm:$0xff] %v1308
      %1419 = vst [vmem:[#allocation3 + $0x60] sm:$0xff] %v1313
      %1420 = vst [vmem:[#allocation3 + $0x68] sm:$0xff] %v1316
      %1421 = vst [vmem:[#allocation3 + $0x70] sm:$0xff] %v1321
      %1422 = vst [vmem:[#allocation3 + $0x78] sm:$0xff] %v1324
      %1423 = vst [vmem:[#allocation3 + $0x80] sm:$0xff] %v1329
      %1424 = vst [vmem:[#allocation3 + $0x88] sm:$0xff] %v1332
      %1425 = vst [vmem:[#allocation3 + $0x90] sm:$0xff] %v1337
      %1426 = vst [vmem:[#allocation3 + $0x98] sm:$0xff] %v1340
      %1427 = vst [vmem:[#allocation3 + $0xa0] sm:$0xff] %v1345
      %1428 = vst [vmem:[#allocation3 + $0xa8] sm:$0xff] %v1348
      %1429 = vst [vmem:[#allocation3 + $0xb0] sm:$0xff] %v1353
      %1430 = vst [vmem:[#allocation3 + $0xb8] sm:$0xff] %v1356
      %1431 = vst [vmem:[#allocation3 + $0xc0] sm:$0xff] %v1361
      %1432 = vst [vmem:[#allocation3 + $0xc8] sm:$0xff] %v1364
      %1433 = vst [vmem:[#allocation3 + $0xd0] sm:$0xff] %v1369
      %1434 = vst [vmem:[#allocation3 + $0xd8] sm:$0xff] %v1372
      %1435 = vst [vmem:[#allocation3 + $0xe0] sm:$0xff] %v1377
      %1436 = vst [vmem:[#allocation3 + $0xe8] sm:$0xff] %v1380
      %1437 = vst [vmem:[#allocation3 + $0xf0] sm:$0xff] %v1385
      %1438 = vst [vmem:[#allocation3 + $0xf8] sm:$0xff] %v1388
      %1439 = vst [vmem:[#allocation3 + $0x100] sm:$0xff] %v1393
      %1440 = vst [vmem:[#allocation3 + $0x108] sm:$0xff] %v1396
      %1441 = vst [vmem:[#allocation3 + $0x110] sm:$0xff] %v1401
      %1442 = vst [vmem:[#allocation3 + $0x118] sm:$0xff] %v1404
      %s1443 = scalar_lea.vmem %s252, 12
      %v1444 = vld [vmem:[%s1443] sm:$0xf]
      %v1445 = vld [vmem:[%s1443 + $0x4] sm:$0xf]
      %v1446 = vld [vmem:[%s1443 + $0xc] sm:$0xf]
      %v1447 = vld [vmem:[%s1443 + $0x10] sm:$0xf]
      %v1448 = vld [vmem:[%s1443 + $0x18] sm:$0xf]
      %v1449 = vld [vmem:[%s1443 + $0x1c] sm:$0xf]
      %v1450 = vld [vmem:[%s1443 + $0x24] sm:$0xf]
      %v1451 = vld [vmem:[%s1443 + $0x28] sm:$0xf]
      %v1452 = vld [vmem:[%s1443 + $0x30] sm:$0xf]
      %v1453 = vld [vmem:[%s1443 + $0x34] sm:$0xf]
      %v1454 = vld [vmem:[%s1443 + $0x3c] sm:$0xf]
      %v1455 = vld [vmem:[%s1443 + $0x40] sm:$0xf]
      %v1456 = vld [vmem:[%s1443 + $0x48] sm:$0xf]
      %v1457 = vld [vmem:[%s1443 + $0x4c] sm:$0xf]
      %v1458 = vld [vmem:[%s1443 + $0x54] sm:$0xf]
      %v1459 = vld [vmem:[%s1443 + $0x58] sm:$0xf]
      %v1460 = vld [vmem:[%s1443 + $0x60] sm:$0xf]
      %v1461 = vld [vmem:[%s1443 + $0x64] sm:$0xf]
      %v1462 = vld [vmem:[%s1443 + $0x6c] sm:$0xf]
      %v1463 = vld [vmem:[%s1443 + $0x70] sm:$0xf]
      %v1464 = vld [vmem:[%s1443 + $0x78] sm:$0xf]
      %v1465 = vld [vmem:[%s1443 + $0x7c] sm:$0xf]
      %v1466 = vld [vmem:[%s1443 + $0x84] sm:$0xf]
      %v1467 = vld [vmem:[%s1443 + $0x88] sm:$0xf]
      %v1468 = vld [vmem:[%s1443 + $0x90] sm:$0xf]
      %v1469 = vld [vmem:[%s1443 + $0x94] sm:$0xf]
      %v1470 = vld [vmem:[%s1443 + $0x9c] sm:$0xf]
      %v1471 = vld [vmem:[%s1443 + $0xa0] sm:$0xf]
      %v1472 = vld [vmem:[%s1443 + $0xa8] sm:$0xf]
      %v1473 = vld [vmem:[%s1443 + $0xac] sm:$0xf]
      %v1474 = vld [vmem:[%s1443 + $0xb4] sm:$0xf]
      %v1475 = vld [vmem:[%s1443 + $0xb8] sm:$0xf]
      %v1476 = vld [vmem:[%s1443 + $0xc0] sm:$0xf]
      %v1477 = vld [vmem:[%s1443 + $0xc4] sm:$0xf]
      %v1478 = vld [vmem:[%s1443 + $0xcc] sm:$0xf]
      %v1479 = vld [vmem:[%s1443 + $0xd0] sm:$0xf]
      %v1480 = vld [vmem:[%s1443 + $0x8] sm:$0x1]
      %v1481 = vld [vmem:[%s1443 + $0x14] sm:$0x1]
      %v1482 = vld [vmem:[%s1443 + $0x20] sm:$0x1]
      %v1483 = vld [vmem:[%s1443 + $0x2c] sm:$0x1]
      %v1484 = vld [vmem:[%s1443 + $0x38] sm:$0x1]
      %v1485 = vld [vmem:[%s1443 + $0x44] sm:$0x1]
      %v1486 = vld [vmem:[%s1443 + $0x50] sm:$0x1]
      %v1487 = vld [vmem:[%s1443 + $0x5c] sm:$0x1]
      %v1488 = vld [vmem:[%s1443 + $0x68] sm:$0x1]
      %v1489 = vld [vmem:[%s1443 + $0x74] sm:$0x1]
      %v1490 = vld [vmem:[%s1443 + $0x80] sm:$0x1]
      %v1491 = vld [vmem:[%s1443 + $0x8c] sm:$0x1]
      %v1492 = vld [vmem:[%s1443 + $0x98] sm:$0x1]
      %v1493 = vld [vmem:[%s1443 + $0xa4] sm:$0x1]
      %v1494 = vld [vmem:[%s1443 + $0xb0] sm:$0x1]
      %v1495 = vld [vmem:[%s1443 + $0xbc] sm:$0x1]
      %v1496 = vld [vmem:[%s1443 + $0xc8] sm:$0x1]
      %v1497 = vld [vmem:[%s1443 + $0xd4] sm:$0x1]
      %v1498 = vld [vmem:[%s1443] sm:$0xe]
      %v1499 = vld [vmem:[%s1443 + $0xc] sm:$0xe]
      %v1500 = vld [vmem:[%s1443 + $0x18] sm:$0xe]
      %v1501 = vld [vmem:[%s1443 + $0x24] sm:$0xe]
      %v1502 = vld [vmem:[%s1443 + $0x30] sm:$0xe]
      %v1503 = vld [vmem:[%s1443 + $0x3c] sm:$0xe]
      %v1504 = vld [vmem:[%s1443 + $0x48] sm:$0xe]
      %v1505 = vld [vmem:[%s1443 + $0x54] sm:$0xe]
      %v1506 = vld [vmem:[%s1443 + $0x60] sm:$0xe]
      %v1507 = vld [vmem:[%s1443 + $0x6c] sm:$0xe]
      %v1508 = vld [vmem:[%s1443 + $0x78] sm:$0xe]
      %v1509 = vld [vmem:[%s1443 + $0x84] sm:$0xe]
      %v1510 = vld [vmem:[%s1443 + $0x90] sm:$0xe]
      %v1511 = vld [vmem:[%s1443 + $0x9c] sm:$0xe]
      %v1512 = vld [vmem:[%s1443 + $0xa8] sm:$0xe]
      %v1513 = vld [vmem:[%s1443 + $0xb4] sm:$0xe]
      %v1514 = vld [vmem:[%s1443 + $0xc0] sm:$0xe]
      %v1515 = vld [vmem:[%s1443 + $0xcc] sm:$0xe]
      %v1552 = vunpack.c.l.b16 %v1444
      %v1553 = vunpack.c.l.b16 %v1445
      %v1554 = vunpack.c.l.b16 %v1446
      %v1555 = vunpack.c.l.b16 %v1447
      %v1556 = vunpack.c.l.b16 %v1448
      %v1557 = vunpack.c.l.b16 %v1449
      %v1558 = vunpack.c.l.b16 %v1450
      %v1559 = vunpack.c.l.b16 %v1451
      %v1560 = vunpack.c.l.b16 %v1452
      %v1561 = vunpack.c.l.b16 %v1453
      %v1562 = vunpack.c.l.b16 %v1454
      %v1563 = vunpack.c.l.b16 %v1455
      %v1564 = vunpack.c.l.b16 %v1456
      %v1565 = vunpack.c.l.b16 %v1457
      %v1566 = vunpack.c.l.b16 %v1458
      %v1567 = vunpack.c.l.b16 %v1459
      %v1568 = vunpack.c.l.b16 %v1460
      %v1569 = vunpack.c.l.b16 %v1461
      %v1570 = vunpack.c.l.b16 %v1462
      %v1571 = vunpack.c.l.b16 %v1463
      %v1572 = vunpack.c.l.b16 %v1464
      %v1573 = vunpack.c.l.b16 %v1465
      %v1574 = vunpack.c.l.b16 %v1466
      %v1575 = vunpack.c.l.b16 %v1467
      %v1576 = vunpack.c.l.b16 %v1468
      %v1577 = vunpack.c.l.b16 %v1469
      %v1578 = vunpack.c.l.b16 %v1470
      %v1579 = vunpack.c.l.b16 %v1471
      %v1580 = vunpack.c.l.b16 %v1472
      %v1581 = vunpack.c.l.b16 %v1473
      %v1582 = vunpack.c.l.b16 %v1474
      %v1583 = vunpack.c.l.b16 %v1475
      %v1584 = vunpack.c.l.b16 %v1476
      %v1585 = vunpack.c.l.b16 %v1477
      %v1586 = vunpack.c.l.b16 %v1478
      %v1587 = vunpack.c.l.b16 %v1479
      %v1588 = vpack.c.b16 %v1553, %v1552
      %v1589 = vpack.c.b16 %v1555, %v1554
      %v1590 = vpack.c.b16 %v1557, %v1556
      %v1591 = vpack.c.b16 %v1559, %v1558
      %v1592 = vpack.c.b16 %v1561, %v1560
      %v1593 = vpack.c.b16 %v1563, %v1562
      %v1594 = vpack.c.b16 %v1565, %v1564
      %v1595 = vpack.c.b16 %v1567, %v1566
      %v1596 = vpack.c.b16 %v1569, %v1568
      %v1597 = vpack.c.b16 %v1571, %v1570
      %v1598 = vpack.c.b16 %v1573, %v1572
      %v1599 = vpack.c.b16 %v1575, %v1574
      %v1600 = vpack.c.b16 %v1577, %v1576
      %v1601 = vpack.c.b16 %v1579, %v1578
      %v1602 = vpack.c.b16 %v1581, %v1580
      %v1603 = vpack.c.b16 %v1583, %v1582
      %v1604 = vpack.c.b16 %v1585, %v1584
      %v1605 = vpack.c.b16 %v1587, %v1586
      %v1642 = vunpack.c.l.b16 %v1480
      %v1643 = vunpack.c.l.b16 %v1481
      %v1644 = vunpack.c.l.b16 %v1482
      %v1645 = vunpack.c.l.b16 %v1483
      %v1646 = vunpack.c.l.b16 %v1484
      %v1647 = vunpack.c.l.b16 %v1485
      %v1648 = vunpack.c.l.b16 %v1486
      %v1649 = vunpack.c.l.b16 %v1487
      %v1650 = vunpack.c.l.b16 %v1488
      %v1651 = vunpack.c.l.b16 %v1489
      %v1652 = vunpack.c.l.b16 %v1490
      %v1653 = vunpack.c.l.b16 %v1491
      %v1654 = vunpack.c.l.b16 %v1492
      %v1655 = vunpack.c.l.b16 %v1493
      %v1656 = vunpack.c.l.b16 %v1494
      %v1657 = vunpack.c.l.b16 %v1495
      %v1658 = vunpack.c.l.b16 %v1496
      %v1659 = vunpack.c.l.b16 %v1497
      %v1660 = vpack.c.b16 %v1642, %v1642
      %v1661 = vpack.c.b16 %v1643, %v1643
      %v1662 = vpack.c.b16 %v1644, %v1644
      %v1663 = vpack.c.b16 %v1645, %v1645
      %v1664 = vpack.c.b16 %v1646, %v1646
      %v1665 = vpack.c.b16 %v1647, %v1647
      %v1666 = vpack.c.b16 %v1648, %v1648
      %v1667 = vpack.c.b16 %v1649, %v1649
      %v1668 = vpack.c.b16 %v1650, %v1650
      %v1669 = vpack.c.b16 %v1651, %v1651
      %v1670 = vpack.c.b16 %v1652, %v1652
      %v1671 = vpack.c.b16 %v1653, %v1653
      %v1672 = vpack.c.b16 %v1654, %v1654
      %v1673 = vpack.c.b16 %v1655, %v1655
      %v1674 = vpack.c.b16 %v1656, %v1656
      %v1675 = vpack.c.b16 %v1657, %v1657
      %v1676 = vpack.c.b16 %v1658, %v1658
      %v1677 = vpack.c.b16 %v1659, %v1659
      %v1679 = vshrl.u32 %v1588, 16
      %v1681 = vshll.u32 %v1588, 16
      %v1683 = vrot.slane %v1681, 1
      %v1684 = vor.u32 %v1679, %v1683
      %v1686 = vshll.u32 %v1660, 16
      %v1688 = vrot.slane %v1686, 1
      %v1689 = vsel %vm499, %v1684, %v1688
      %v1691 = vshrl.u32 %v1589, 16
      %v1693 = vshll.u32 %v1589, 16
      %v1695 = vrot.slane %v1693, 1
      %v1696 = vor.u32 %v1691, %v1695
      %v1698 = vshll.u32 %v1661, 16
      %v1700 = vrot.slane %v1698, 1
      %v1701 = vsel %vm499, %v1696, %v1700
      %v1703 = vshrl.u32 %v1590, 16
      %v1705 = vshll.u32 %v1590, 16
      %v1707 = vrot.slane %v1705, 1
      %v1708 = vor.u32 %v1703, %v1707
      %v1710 = vshll.u32 %v1662, 16
      %v1712 = vrot.slane %v1710, 1
      %v1713 = vsel %vm499, %v1708, %v1712
      %v1715 = vshrl.u32 %v1591, 16
      %v1717 = vshll.u32 %v1591, 16
      %v1719 = vrot.slane %v1717, 1
      %v1720 = vor.u32 %v1715, %v1719
      %v1722 = vshll.u32 %v1663, 16
      %v1724 = vrot.slane %v1722, 1
      %v1725 = vsel %vm499, %v1720, %v1724
      %v1727 = vshrl.u32 %v1592, 16
      %v1729 = vshll.u32 %v1592, 16
      %v1731 = vrot.slane %v1729, 1
      %v1732 = vor.u32 %v1727, %v1731
      %v1734 = vshll.u32 %v1664, 16
      %v1736 = vrot.slane %v1734, 1
      %v1737 = vsel %vm499, %v1732, %v1736
      %v1739 = vshrl.u32 %v1593, 16
      %v1741 = vshll.u32 %v1593, 16
      %v1743 = vrot.slane %v1741, 1
      %v1744 = vor.u32 %v1739, %v1743
      %v1746 = vshll.u32 %v1665, 16
      %v1748 = vrot.slane %v1746, 1
      %v1749 = vsel %vm499, %v1744, %v1748
      %v1751 = vshrl.u32 %v1594, 16
      %v1753 = vshll.u32 %v1594, 16
      %v1755 = vrot.slane %v1753, 1
      %v1756 = vor.u32 %v1751, %v1755
      %v1758 = vshll.u32 %v1666, 16
      %v1760 = vrot.slane %v1758, 1
      %v1761 = vsel %vm499, %v1756, %v1760
      %v1763 = vshrl.u32 %v1595, 16
      %v1765 = vshll.u32 %v1595, 16
      %v1767 = vrot.slane %v1765, 1
      %v1768 = vor.u32 %v1763, %v1767
      %v1770 = vshll.u32 %v1667, 16
      %v1772 = vrot.slane %v1770, 1
      %v1773 = vsel %vm499, %v1768, %v1772
      %v1775 = vshrl.u32 %v1596, 16
      %v1777 = vshll.u32 %v1596, 16
      %v1779 = vrot.slane %v1777, 1
      %v1780 = vor.u32 %v1775, %v1779
      %v1782 = vshll.u32 %v1668, 16
      %v1784 = vrot.slane %v1782, 1
      %v1785 = vsel %vm499, %v1780, %v1784
      %v1787 = vshrl.u32 %v1597, 16
      %v1789 = vshll.u32 %v1597, 16
      %v1791 = vrot.slane %v1789, 1
      %v1792 = vor.u32 %v1787, %v1791
      %v1794 = vshll.u32 %v1669, 16
      %v1796 = vrot.slane %v1794, 1
      %v1797 = vsel %vm499, %v1792, %v1796
      %v1799 = vshrl.u32 %v1598, 16
      %v1801 = vshll.u32 %v1598, 16
      %v1803 = vrot.slane %v1801, 1
      %v1804 = vor.u32 %v1799, %v1803
      %v1806 = vshll.u32 %v1670, 16
      %v1808 = vrot.slane %v1806, 1
      %v1809 = vsel %vm499, %v1804, %v1808
      %v1811 = vshrl.u32 %v1599, 16
      %v1813 = vshll.u32 %v1599, 16
      %v1815 = vrot.slane %v1813, 1
      %v1816 = vor.u32 %v1811, %v1815
      %v1818 = vshll.u32 %v1671, 16
      %v1820 = vrot.slane %v1818, 1
      %v1821 = vsel %vm499, %v1816, %v1820
      %v1823 = vshrl.u32 %v1600, 16
      %v1825 = vshll.u32 %v1600, 16
      %v1827 = vrot.slane %v1825, 1
      %v1828 = vor.u32 %v1823, %v1827
      %v1830 = vshll.u32 %v1672, 16
      %v1832 = vrot.slane %v1830, 1
      %v1833 = vsel %vm499, %v1828, %v1832
      %v1835 = vshrl.u32 %v1601, 16
      %v1837 = vshll.u32 %v1601, 16
      %v1839 = vrot.slane %v1837, 1
      %v1840 = vor.u32 %v1835, %v1839
      %v1842 = vshll.u32 %v1673, 16
      %v1844 = vrot.slane %v1842, 1
      %v1845 = vsel %vm499, %v1840, %v1844
      %v1847 = vshrl.u32 %v1602, 16
      %v1849 = vshll.u32 %v1602, 16
      %v1851 = vrot.slane %v1849, 1
      %v1852 = vor.u32 %v1847, %v1851
      %v1854 = vshll.u32 %v1674, 16
      %v1856 = vrot.slane %v1854, 1
      %v1857 = vsel %vm499, %v1852, %v1856
      %v1859 = vshrl.u32 %v1603, 16
      %v1861 = vshll.u32 %v1603, 16
      %v1863 = vrot.slane %v1861, 1
      %v1864 = vor.u32 %v1859, %v1863
      %v1866 = vshll.u32 %v1675, 16
      %v1868 = vrot.slane %v1866, 1
      %v1869 = vsel %vm499, %v1864, %v1868
      %v1871 = vshrl.u32 %v1604, 16
      %v1873 = vshll.u32 %v1604, 16
      %v1875 = vrot.slane %v1873, 1
      %v1876 = vor.u32 %v1871, %v1875
      %v1878 = vshll.u32 %v1676, 16
      %v1880 = vrot.slane %v1878, 1
      %v1881 = vsel %vm499, %v1876, %v1880
      %v1883 = vshrl.u32 %v1605, 16
      %v1885 = vshll.u32 %v1605, 16
      %v1887 = vrot.slane %v1885, 1
      %v1888 = vor.u32 %v1883, %v1887
      %v1890 = vshll.u32 %v1677, 16
      %v1892 = vrot.slane %v1890, 1
      %v1893 = vsel %vm499, %v1888, %v1892
      %v1930 = vunpack.c.l.b16 %v1498
      %v1931 = vunpack.c.l.b16 %v1499
      %v1932 = vunpack.c.l.b16 %v1500
      %v1933 = vunpack.c.l.b16 %v1501
      %v1934 = vunpack.c.l.b16 %v1502
      %v1935 = vunpack.c.l.b16 %v1503
      %v1936 = vunpack.c.l.b16 %v1504
      %v1937 = vunpack.c.l.b16 %v1505
      %v1938 = vunpack.c.l.b16 %v1506
      %v1939 = vunpack.c.l.b16 %v1507
      %v1940 = vunpack.c.l.b16 %v1508
      %v1941 = vunpack.c.l.b16 %v1509
      %v1942 = vunpack.c.l.b16 %v1510
      %v1943 = vunpack.c.l.b16 %v1511
      %v1944 = vunpack.c.l.b16 %v1512
      %v1945 = vunpack.c.l.b16 %v1513
      %v1946 = vunpack.c.l.b16 %v1514
      %v1947 = vunpack.c.l.b16 %v1515
      %v1948 = vpack.c.b16 %v1553, %v1930
      %v1949 = vpack.c.b16 %v1555, %v1931
      %v1950 = vpack.c.b16 %v1557, %v1932
      %v1951 = vpack.c.b16 %v1559, %v1933
      %v1952 = vpack.c.b16 %v1561, %v1934
      %v1953 = vpack.c.b16 %v1563, %v1935
      %v1954 = vpack.c.b16 %v1565, %v1936
      %v1955 = vpack.c.b16 %v1567, %v1937
      %v1956 = vpack.c.b16 %v1569, %v1938
      %v1957 = vpack.c.b16 %v1571, %v1939
      %v1958 = vpack.c.b16 %v1573, %v1940
      %v1959 = vpack.c.b16 %v1575, %v1941
      %v1960 = vpack.c.b16 %v1577, %v1942
      %v1961 = vpack.c.b16 %v1579, %v1943
      %v1962 = vpack.c.b16 %v1581, %v1944
      %v1963 = vpack.c.b16 %v1583, %v1945
      %v1964 = vpack.c.b16 %v1585, %v1946
      %v1965 = vpack.c.b16 %v1587, %v1947
      %v1966 = vrot.slane %v1948, 1
      %v1967 = vrot.slane %v1660, 1
      %v1968 = vsel %vm788, %v1966, %v1967
      %v1969 = vrot.slane %v1949, 1
      %v1970 = vrot.slane %v1661, 1
      %v1971 = vsel %vm788, %v1969, %v1970
      %v1972 = vrot.slane %v1950, 1
      %v1973 = vrot.slane %v1662, 1
      %v1974 = vsel %vm788, %v1972, %v1973
      %v1975 = vrot.slane %v1951, 1
      %v1976 = vrot.slane %v1663, 1
      %v1977 = vsel %vm788, %v1975, %v1976
      %v1978 = vrot.slane %v1952, 1
      %v1979 = vrot.slane %v1664, 1
      %v1980 = vsel %vm788, %v1978, %v1979
      %v1981 = vrot.slane %v1953, 1
      %v1982 = vrot.slane %v1665, 1
      %v1983 = vsel %vm788, %v1981, %v1982
      %v1984 = vrot.slane %v1954, 1
      %v1985 = vrot.slane %v1666, 1
      %v1986 = vsel %vm788, %v1984, %v1985
      %v1987 = vrot.slane %v1955, 1
      %v1988 = vrot.slane %v1667, 1
      %v1989 = vsel %vm788, %v1987, %v1988
      %v1990 = vrot.slane %v1956, 1
      %v1991 = vrot.slane %v1668, 1
      %v1992 = vsel %vm788, %v1990, %v1991
      %v1993 = vrot.slane %v1957, 1
      %v1994 = vrot.slane %v1669, 1
      %v1995 = vsel %vm788, %v1993, %v1994
      %v1996 = vrot.slane %v1958, 1
      %v1997 = vrot.slane %v1670, 1
      %v1998 = vsel %vm788, %v1996, %v1997
      %v1999 = vrot.slane %v1959, 1
      %v2000 = vrot.slane %v1671, 1
      %v2001 = vsel %vm788, %v1999, %v2000
      %v2002 = vrot.slane %v1960, 1
      %v2003 = vrot.slane %v1672, 1
      %v2004 = vsel %vm788, %v2002, %v2003
      %v2005 = vrot.slane %v1961, 1
      %v2006 = vrot.slane %v1673, 1
      %v2007 = vsel %vm788, %v2005, %v2006
      %v2008 = vrot.slane %v1962, 1
      %v2009 = vrot.slane %v1674, 1
      %v2010 = vsel %vm788, %v2008, %v2009
      %v2011 = vrot.slane %v1963, 1
      %v2012 = vrot.slane %v1675, 1
      %v2013 = vsel %vm788, %v2011, %v2012
      %v2014 = vrot.slane %v1964, 1
      %v2015 = vrot.slane %v1676, 1
      %v2016 = vsel %vm788, %v2014, %v2015
      %v2017 = vrot.slane %v1965, 1
      %v2018 = vrot.slane %v1677, 1
      %v2019 = vsel %vm788, %v2017, %v2018
      %s2038 = scalar_lea.vmem %s1, 192
      %v2039 = vld [vmem:[%s2038] sm:$0xf]
      %v2040 = vld [vmem:[%s2038 + $0x4] sm:$0xf]
      %v2041 = vld [vmem:[%s2038 + $0x8] sm:$0xf]
      %v2042 = vld [vmem:[%s2038 + $0xc] sm:$0xf]
      %v2043 = vld [vmem:[%s2038 + $0x10] sm:$0xf]
      %v2044 = vld [vmem:[%s2038 + $0x14] sm:$0xf]
      %v2045 = vld [vmem:[%s2038 + $0x18] sm:$0xf]
      %v2046 = vld [vmem:[%s2038 + $0x1c] sm:$0xf]
      %v2047 = vld [vmem:[%s2038 + $0x20] sm:$0xf]
      %v2048 = vld [vmem:[%s2038 + $0x24] sm:$0xf]
      %v2049 = vld [vmem:[%s2038 + $0x28] sm:$0xf]
      %v2050 = vld [vmem:[%s2038 + $0x2c] sm:$0xf]
      %v2051 = vld [vmem:[%s2038 + $0x30] sm:$0xf]
      %v2052 = vld [vmem:[%s2038 + $0x34] sm:$0xf]
      %v2053 = vld [vmem:[%s2038 + $0x38] sm:$0xf]
      %v2054 = vld [vmem:[%s2038 + $0x3c] sm:$0xf]
      %v2055 = vld [vmem:[%s2038 + $0x40] sm:$0xf]
      %v2056 = vld [vmem:[%s2038 + $0x44] sm:$0xf]
      %v2057 = vld [vmem:[%s2038 + $0x48] sm:$0xf]
      %v2058 = vld [vmem:[%s2038 + $0x4c] sm:$0xf]
      %v2059 = vld [vmem:[%s2038 + $0x50] sm:$0xf]
      %v2060 = vld [vmem:[%s2038 + $0x54] sm:$0xf]
      %v2061 = vld [vmem:[%s2038 + $0x58] sm:$0xf]
      %v2062 = vld [vmem:[%s2038 + $0x5c] sm:$0xf]
      %v2063 = vld [vmem:[%s2038 + $0x60] sm:$0xf]
      %v2064 = vld [vmem:[%s2038 + $0x64] sm:$0xf]
      %v2065 = vld [vmem:[%s2038 + $0x68] sm:$0xf]
      %v2066 = vld [vmem:[%s2038 + $0x6c] sm:$0xf]
      %v2067 = vld [vmem:[%s2038 + $0x70] sm:$0xf]
      %v2068 = vld [vmem:[%s2038 + $0x74] sm:$0xf]
      %v2069 = vld [vmem:[%s2038 + $0x78] sm:$0xf]
      %v2070 = vld [vmem:[%s2038 + $0x7c] sm:$0xf]
      %v2071 = vld [vmem:[%s2038 + $0x80] sm:$0xf]
      %v2072 = vld [vmem:[%s2038 + $0x84] sm:$0xf]
      %v2073 = vld [vmem:[%s2038 + $0x88] sm:$0xf]
      %v2074 = vld [vmem:[%s2038 + $0x8c] sm:$0xf]
      %v2075 = vld [vmem:[%s2038 + $0x90] sm:$0xf]
      %v2076 = vld [vmem:[%s2038 + $0x94] sm:$0xf]
      %v2077 = vld [vmem:[%s2038 + $0x98] sm:$0xf]
      %v2078 = vld [vmem:[%s2038 + $0x9c] sm:$0xf]
      %v2079 = vld [vmem:[%s2038 + $0xa0] sm:$0xf]
      %v2080 = vld [vmem:[%s2038 + $0xa4] sm:$0xf]
      %v2081 = vld [vmem:[%s2038 + $0xa8] sm:$0xf]
      %v2082 = vld [vmem:[%s2038 + $0xac] sm:$0xf]
      %v2083 = vld [vmem:[%s2038 + $0xb0] sm:$0xf]
      %v2084 = vld [vmem:[%s2038 + $0xb4] sm:$0xf]
      %v2085 = vld [vmem:[%s2038 + $0xb8] sm:$0xf]
      %v2086 = vld [vmem:[%s2038 + $0xbc] sm:$0xf]
      %v2135 = vunpack.c.l.b16 %v2039
      %v2136 = vunpack.c.l.b16 %v2040
      %v2137 = vunpack.c.l.b16 %v2041
      %v2138 = vunpack.c.l.b16 %v2042
      %v2139 = vunpack.c.l.b16 %v2043
      %v2140 = vunpack.c.l.b16 %v2044
      %v2141 = vunpack.c.l.b16 %v2045
      %v2142 = vunpack.c.l.b16 %v2046
      %v2143 = vunpack.c.l.b16 %v2047
      %v2144 = vunpack.c.l.b16 %v2048
      %v2145 = vunpack.c.l.b16 %v2049
      %v2146 = vunpack.c.l.b16 %v2050
      %v2147 = vunpack.c.l.b16 %v2051
      %v2148 = vunpack.c.l.b16 %v2052
      %v2149 = vunpack.c.l.b16 %v2053
      %v2150 = vunpack.c.l.b16 %v2054
      %v2151 = vunpack.c.l.b16 %v2055
      %v2152 = vunpack.c.l.b16 %v2056
      %v2153 = vunpack.c.l.b16 %v2057
      %v2154 = vunpack.c.l.b16 %v2058
      %v2155 = vunpack.c.l.b16 %v2059
      %v2156 = vunpack.c.l.b16 %v2060
      %v2157 = vunpack.c.l.b16 %v2061
      %v2158 = vunpack.c.l.b16 %v2062
      %v2159 = vunpack.c.l.b16 %v2063
      %v2160 = vunpack.c.l.b16 %v2064
      %v2161 = vunpack.c.l.b16 %v2065
      %v2162 = vunpack.c.l.b16 %v2066
      %v2163 = vunpack.c.l.b16 %v2067
      %v2164 = vunpack.c.l.b16 %v2068
      %v2165 = vunpack.c.l.b16 %v2069
      %v2166 = vunpack.c.l.b16 %v2070
      %v2167 = vunpack.c.l.b16 %v2071
      %v2168 = vunpack.c.l.b16 %v2072
      %v2169 = vunpack.c.l.b16 %v2073
      %v2170 = vunpack.c.l.b16 %v2074
      %v2171 = vunpack.c.l.b16 %v2075
      %v2172 = vunpack.c.l.b16 %v2076
      %v2173 = vunpack.c.l.b16 %v2077
      %v2174 = vunpack.c.l.b16 %v2078
      %v2175 = vunpack.c.l.b16 %v2079
      %v2176 = vunpack.c.l.b16 %v2080
      %v2177 = vunpack.c.l.b16 %v2081
      %v2178 = vunpack.c.l.b16 %v2082
      %v2179 = vunpack.c.l.b16 %v2083
      %v2180 = vunpack.c.l.b16 %v2084
      %v2181 = vunpack.c.l.b16 %v2085
      %v2182 = vunpack.c.l.b16 %v2086
      %v2183 = vpack.c.b16 %v2136, %v2135
      %v2184 = vpack.c.b16 %v2138, %v2137
      %v2185 = vpack.c.b16 %v2140, %v2139
      %v2186 = vpack.c.b16 %v2142, %v2141
      %v2187 = vpack.c.b16 %v2144, %v2143
      %v2188 = vpack.c.b16 %v2146, %v2145
      %v2189 = vpack.c.b16 %v2148, %v2147
      %v2190 = vpack.c.b16 %v2150, %v2149
      %v2191 = vpack.c.b16 %v2152, %v2151
      %v2192 = vpack.c.b16 %v2154, %v2153
      %v2193 = vpack.c.b16 %v2156, %v2155
      %v2194 = vpack.c.b16 %v2158, %v2157
      %v2195 = vpack.c.b16 %v2160, %v2159
      %v2196 = vpack.c.b16 %v2162, %v2161
      %v2197 = vpack.c.b16 %v2164, %v2163
      %v2198 = vpack.c.b16 %v2166, %v2165
      %v2199 = vpack.c.b16 %v2168, %v2167
      %v2200 = vpack.c.b16 %v2170, %v2169
      %v2201 = vpack.c.b16 %v2172, %v2171
      %v2202 = vpack.c.b16 %v2174, %v2173
      %v2203 = vpack.c.b16 %v2176, %v2175
      %v2204 = vpack.c.b16 %v2178, %v2177
      %v2205 = vpack.c.b16 %v2180, %v2179
      %v2206 = vpack.c.b16 %v2182, %v2181
      %2231 = vmatprep.subr.bf16.mxu0 0
      %2232 = vmatpush1.bf16.msra.mxu0 %v2183
      %2233 = vmatprep.subr.bf16.mxu0 0
      %2234 = vmatpush1.bf16.msra.mxu0 %v2184
      %2235 = vmatprep.subr.bf16.mxu0 0
      %2236 = vmatpush1.bf16.msra.mxu0 %v2185
      %2237 = vmatprep.subr.bf16.mxu0 0
      %2238 = vmatpush1.bf16.msra.mxu0 %v2186
      %2239 = vmatprep.subr.bf16.mxu0 0
      %2240 = vmatpush1.bf16.msra.mxu0 %v2187
      %2241 = vmatprep.subr.bf16.mxu0 0
      %2242 = vmatpush1.bf16.msra.mxu0 %v2188
      %2243 = vmatprep.subr.bf16.mxu0 0
      %2244 = vmatpush1.bf16.msra.mxu0 %v2189
      %2245 = vmatprep.subr.bf16.mxu0 0
      %2246 = vmatpush1.bf16.msra.mxu0 %v2190
      %2247 = vmatprep.subr.bf16.mxu0 0
      %2248 = vmatpush1.bf16.msra.mxu0 %v2191
      %2249 = vmatprep.subr.bf16.mxu0 0
      %2250 = vmatpush1.bf16.msra.mxu0 %v2192
      %2251 = vmatprep.subr.bf16.mxu0 0
      %2252 = vmatpush1.bf16.msra.mxu0 %v2193
      %2253 = vmatprep.subr.bf16.mxu0 0
      %2254 = vmatpush1.bf16.msra.mxu0 %v2194
      %2255 = vmatprep.subr.bf16.mxu0 0
      %2256 = vmatpush1.bf16.msra.mxu0 %v2195
      %2257 = vmatprep.subr.bf16.mxu0 0
      %2258 = vmatpush1.bf16.msra.mxu0 %v2196
      %2259 = vmatprep.subr.bf16.mxu0 0
      %2260 = vmatpush1.bf16.msra.mxu0 %v2197
      %2261 = vmatprep.subr.bf16.mxu0 0
      %2262 = vmatpush1.bf16.msra.mxu0 %v2198
      %2263 = vmatprep.mubr.bf16.mxu0 %v1689
      %2264 = vmatmul.mubr.bf16.gmra.mrb[0].mxu0 %v1588
      %v2265 = vpop.f32.mrb[0].mxu0
      %v2266 = vadd.f32 0.0, %v2265
      %v2267 = vpop.f32.mrb[0].mxu0
      %v2268 = vpop.f32.mrb[0].mxu0
      %v2269 = vadd.f32 0.0, %v2268
      %v2270 = vpop.f32.mrb[0].mxu0
      %2271 = vmatprep.mubr.bf16.mxu0 %v1701
      %2272 = vmatmul.mubr.bf16.gmra.mrb[0].mxu0 %v1589
      %v2273 = vpop.f32.mrb[0].mxu0
      %v2274 = vadd.f32 0.0, %v2273
      %v2275 = vpop.f32.mrb[0].mxu0
      %v2276 = vpop.f32.mrb[0].mxu0
      %v2277 = vadd.f32 0.0, %v2276
      %v2278 = vpop.f32.mrb[0].mxu0
      %2279 = vmatprep.mubr.bf16.mxu0 %v1713
      %2280 = vmatmul.mubr.bf16.gmra.mrb[0].mxu0 %v1590
      %v2281 = vpop.f32.mrb[0].mxu0
      %v2282 = vadd.f32 0.0, %v2281
      %v2283 = vpop.f32.mrb[0].mxu0
      %v2284 = vpop.f32.mrb[0].mxu0
      %v2285 = vadd.f32 0.0, %v2284
      %v2286 = vpop.f32.mrb[0].mxu0
      %2287 = vmatprep.mubr.bf16.mxu0 %v1725
      %2288 = vmatmul.mubr.bf16.gmra.mrb[0].mxu0 %v1591
      %v2289 = vpop.f32.mrb[0].mxu0
      %v2290 = vadd.f32 0.0, %v2289
      %v2291 = vpop.f32.mrb[0].mxu0
      %v2292 = vpop.f32.mrb[0].mxu0
      %v2293 = vadd.f32 0.0, %v2292
      %v2294 = vpop.f32.mrb[0].mxu0
      %2295 = vmatprep.mubr.bf16.mxu0 %v1737
      %2296 = vmatmul.mubr.bf16.gmra.mrb[0].mxu0 %v1592
      %v2297 = vpop.f32.mrb[0].mxu0
      %v2298 = vadd.f32 0.0, %v2297
      %v2299 = vpop.f32.mrb[0].mxu0
      %v2300 = vpop.f32.mrb[0].mxu0
      %v2301 = vadd.f32 0.0, %v2300
      %v2302 = vpop.f32.mrb[0].mxu0
      %2303 = vmatprep.mubr.bf16.mxu0 %v1749
      %2304 = vmatmul.mubr.bf16.gmra.mrb[0].mxu0 %v1593
      %v2305 = vpop.f32.mrb[0].mxu0
      %v2306 = vadd.f32 0.0, %v2305
      %v2307 = vpop.f32.mrb[0].mxu0
      %v2308 = vpop.f32.mrb[0].mxu0
      %v2309 = vadd.f32 0.0, %v2308
      %v2310 = vpop.f32.mrb[0].mxu0
      %2311 = vmatprep.mubr.bf16.mxu0 %v1761
      %2312 = vmatmul.mubr.bf16.gmra.mrb[0].mxu0 %v1594
      %v2313 = vpop.f32.mrb[0].mxu0
      %v2314 = vadd.f32 0.0, %v2313
      %v2315 = vpop.f32.mrb[0].mxu0
      %v2316 = vpop.f32.mrb[0].mxu0
      %v2317 = vadd.f32 0.0, %v2316
      %v2318 = vpop.f32.mrb[0].mxu0
      %2319 = vmatprep.mubr.bf16.mxu0 %v1773
      %2320 = vmatmul.mubr.bf16.gmra.mrb[0].mxu0 %v1595
      %v2321 = vpop.f32.mrb[0].mxu0
      %v2322 = vadd.f32 0.0, %v2321
      %v2323 = vpop.f32.mrb[0].mxu0
      %v2324 = vpop.f32.mrb[0].mxu0
      %v2325 = vadd.f32 0.0, %v2324
      %v2326 = vpop.f32.mrb[0].mxu0
      %2327 = vmatprep.mubr.bf16.mxu0 %v1785
      %2328 = vmatmul.mubr.bf16.gmra.mrb[0].mxu0 %v1596
      %v2329 = vpop.f32.mrb[0].mxu0
      %v2330 = vadd.f32 0.0, %v2329
      %v2331 = vpop.f32.mrb[0].mxu0
      %v2332 = vpop.f32.mrb[0].mxu0
      %v2333 = vadd.f32 0.0, %v2332
      %v2334 = vpop.f32.mrb[0].mxu0
      %2335 = vmatprep.mubr.bf16.mxu0 %v1797
      %2336 = vmatmul.mubr.bf16.gmra.mrb[0].mxu0 %v1597
      %v2337 = vpop.f32.mrb[0].mxu0
      %v2338 = vadd.f32 0.0, %v2337
      %v2339 = vpop.f32.mrb[0].mxu0
      %v2340 = vpop.f32.mrb[0].mxu0
      %v2341 = vadd.f32 0.0, %v2340
      %v2342 = vpop.f32.mrb[0].mxu0
      %2343 = vmatprep.mubr.bf16.mxu0 %v1809
      %2344 = vmatmul.mubr.bf16.gmra.mrb[0].mxu0 %v1598
      %v2345 = vpop.f32.mrb[0].mxu0
      %v2346 = vadd.f32 0.0, %v2345
      %v2347 = vpop.f32.mrb[0].mxu0
      %v2348 = vpop.f32.mrb[0].mxu0
      %v2349 = vadd.f32 0.0, %v2348
      %v2350 = vpop.f32.mrb[0].mxu0
      %2351 = vmatprep.mubr.bf16.mxu0 %v1821
      %2352 = vmatmul.mubr.bf16.gmra.mrb[0].mxu0 %v1599
      %v2353 = vpop.f32.mrb[0].mxu0
      %v2354 = vadd.f32 0.0, %v2353
      %v2355 = vpop.f32.mrb[0].mxu0
      %v2356 = vpop.f32.mrb[0].mxu0
      %v2357 = vadd.f32 0.0, %v2356
      %v2358 = vpop.f32.mrb[0].mxu0
      %2359 = vmatprep.mubr.bf16.mxu0 %v1833
      %2360 = vmatmul.mubr.bf16.gmra.mrb[0].mxu0 %v1600
      %v2361 = vpop.f32.mrb[0].mxu0
      %v2362 = vadd.f32 0.0, %v2361
      %v2363 = vpop.f32.mrb[0].mxu0
      %v2364 = vpop.f32.mrb[0].mxu0
      %v2365 = vadd.f32 0.0, %v2364
      %v2366 = vpop.f32.mrb[0].mxu0
      %2367 = vmatprep.mubr.bf16.mxu0 %v1845
      %2368 = vmatmul.mubr.bf16.gmra.mrb[0].mxu0 %v1601
      %v2369 = vpop.f32.mrb[0].mxu0
      %v2370 = vadd.f32 0.0, %v2369
      %v2371 = vpop.f32.mrb[0].mxu0
      %v2372 = vpop.f32.mrb[0].mxu0
      %v2373 = vadd.f32 0.0, %v2372
      %v2374 = vpop.f32.mrb[0].mxu0
      %2375 = vmatprep.mubr.bf16.mxu0 %v1857
      %2376 = vmatmul.mubr.bf16.gmra.mrb[0].mxu0 %v1602
      %v2377 = vpop.f32.mrb[0].mxu0
      %v2378 = vadd.f32 0.0, %v2377
      %v2379 = vpop.f32.mrb[0].mxu0
      %v2380 = vpop.f32.mrb[0].mxu0
      %v2381 = vadd.f32 0.0, %v2380
      %v2382 = vpop.f32.mrb[0].mxu0
      %2383 = vmatprep.mubr.bf16.mxu0 %v1869
      %2384 = vmatmul.mubr.bf16.gmra.mrb[0].mxu0 %v1603
      %v2385 = vpop.f32.mrb[0].mxu0
      %v2386 = vadd.f32 0.0, %v2385
      %v2387 = vpop.f32.mrb[0].mxu0
      %v2388 = vpop.f32.mrb[0].mxu0
      %v2389 = vadd.f32 0.0, %v2388
      %v2390 = vpop.f32.mrb[0].mxu0
      %2391 = vmatprep.mubr.bf16.mxu0 %v1881
      %2392 = vmatmul.mubr.bf16.gmra.mrb[0].mxu0 %v1604
      %v2393 = vpop.f32.mrb[0].mxu0
      %v2394 = vadd.f32 0.0, %v2393
      %v2395 = vpop.f32.mrb[0].mxu0
      %v2396 = vpop.f32.mrb[0].mxu0
      %v2397 = vadd.f32 0.0, %v2396
      %v2398 = vpop.f32.mrb[0].mxu0
      %2399 = vmatprep.mubr.bf16.mxu0 %v1893
      %2400 = vmatmul.mubr.bf16.gmra.mrb[0].mxu0 %v1605
      %v2401 = vpop.f32.mrb[0].mxu0
      %v2402 = vadd.f32 0.0, %v2401
      %v2403 = vpop.f32.mrb[0].mxu0
      %v2404 = vpop.f32.mrb[0].mxu0
      %v2405 = vadd.f32 0.0, %v2404
      %v2406 = vpop.f32.mrb[0].mxu0
      %2407 = vdwg.mxu0
      %2408 = vmatprep.subr.bf16.mxu0 0
      %2409 = vmatpush1.bf16.msra.mxu0 %v2199
      %2410 = vmatprep.subr.bf16.mxu0 0
      %2411 = vmatpush1.bf16.msra.mxu0 %v2200
      %2412 = vmatprep.subr.bf16.mxu0 0
      %2413 = vmatpush1.bf16.msra.mxu0 %v2201
      %2414 = vmatprep.subr.bf16.mxu0 0
      %2415 = vmatpush1.bf16.msra.mxu0 %v2202
      %2416 = vmatprep.subr.bf16.mxu0 0
      %2417 = vmatpush1.bf16.msra.mxu0 %v2203
      %2418 = vmatprep.subr.bf16.mxu0 0
      %2419 = vmatpush1.bf16.msra.mxu0 %v2204
      %2420 = vmatprep.subr.bf16.mxu0 0
      %2421 = vmatpush1.bf16.msra.mxu0 %v2205
      %2422 = vmatprep.subr.bf16.mxu0 0
      %2423 = vmatpush1.bf16.msra.mxu0 %v2206
      %2424 = vmatprep.subr.bf16.mxu0 0
      %2425 = vmatpush1.bf16.msra.mxu0 0
      %2426 = vmatprep.subr.bf16.mxu0 0
      %2427 = vmatpush1.bf16.msra.mxu0 0
      %2428 = vmatprep.subr.bf16.mxu0 0
      %2429 = vmatpush1.bf16.msra.mxu0 0
      %2430 = vmatprep.subr.bf16.mxu0 0
      %2431 = vmatpush1.bf16.msra.mxu0 0
      %2432 = vmatprep.subr.bf16.mxu0 0
      %2433 = vmatpush1.bf16.msra.mxu0 0
      %2434 = vmatprep.subr.bf16.mxu0 0
      %2435 = vmatpush1.bf16.msra.mxu0 0
      %2436 = vmatprep.subr.bf16.mxu0 0
      %2437 = vmatpush1.bf16.msra.mxu0 0
      %2438 = vmatprep.subr.bf16.mxu0 0
      %2439 = vmatpush1.bf16.msra.mxu0 0
      %2440 = vmatprep.mubr.bf16.mxu0 0
      %2441 = vmatmul.mubr.bf16.gmra.mrb[0].mxu0 %v1968
      %v2442 = vpop.f32.mrb[0].mxu0
      %v2443 = vadd.f32 %v2266, %v2442
      %v2444 = vpop.f32.mrb[0].mxu0
      %v2445 = vpop.f32.mrb[0].mxu0
      %v2446 = vadd.f32 %v2269, %v2445
      %v2447 = vpop.f32.mrb[0].mxu0
      %2448 = vmatprep.mubr.bf16.mxu0 0
      %2449 = vmatmul.mubr.bf16.gmra.mrb[0].mxu0 %v1971
      %v2450 = vpop.f32.mrb[0].mxu0
      %v2451 = vadd.f32 %v2274, %v2450
      %v2452 = vpop.f32.mrb[0].mxu0
      %v2453 = vpop.f32.mrb[0].mxu0
      %v2454 = vadd.f32 %v2277, %v2453
      %v2455 = vpop.f32.mrb[0].mxu0
      %2456 = vmatprep.mubr.bf16.mxu0 0
      %2457 = vmatmul.mubr.bf16.gmra.mrb[0].mxu0 %v1974
      %v2458 = vpop.f32.mrb[0].mxu0
      %v2459 = vadd.f32 %v2282, %v2458
      %v2460 = vpop.f32.mrb[0].mxu0
      %v2461 = vpop.f32.mrb[0].mxu0
      %v2462 = vadd.f32 %v2285, %v2461
      %v2463 = vpop.f32.mrb[0].mxu0
      %2464 = vmatprep.mubr.bf16.mxu0 0
      %2465 = vmatmul.mubr.bf16.gmra.mrb[0].mxu0 %v1977
      %v2466 = vpop.f32.mrb[0].mxu0
      %v2467 = vadd.f32 %v2290, %v2466
      %v2468 = vpop.f32.mrb[0].mxu0
      %v2469 = vpop.f32.mrb[0].mxu0
      %v2470 = vadd.f32 %v2293, %v2469
      %v2471 = vpop.f32.mrb[0].mxu0
      %2472 = vmatprep.mubr.bf16.mxu0 0
      %2473 = vmatmul.mubr.bf16.gmra.mrb[0].mxu0 %v1980
      %v2474 = vpop.f32.mrb[0].mxu0
      %v2475 = vadd.f32 %v2298, %v2474
      %v2476 = vpop.f32.mrb[0].mxu0
      %v2477 = vpop.f32.mrb[0].mxu0
      %v2478 = vadd.f32 %v2301, %v2477
      %v2479 = vpop.f32.mrb[0].mxu0
      %2480 = vmatprep.mubr.bf16.mxu0 0
      %2481 = vmatmul.mubr.bf16.gmra.mrb[0].mxu0 %v1983
      %v2482 = vpop.f32.mrb[0].mxu0
      %v2483 = vadd.f32 %v2306, %v2482
      %v2484 = vpop.f32.mrb[0].mxu0
      %v2485 = vpop.f32.mrb[0].mxu0
      %v2486 = vadd.f32 %v2309, %v2485
      %v2487 = vpop.f32.mrb[0].mxu0
      %2488 = vmatprep.mubr.bf16.mxu0 0
      %2489 = vmatmul.mubr.bf16.gmra.mrb[0].mxu0 %v1986
      %v2490 = vpop.f32.mrb[0].mxu0
      %v2491 = vadd.f32 %v2314, %v2490
      %v2492 = vpop.f32.mrb[0].mxu0
      %v2493 = vpop.f32.mrb[0].mxu0
      %v2494 = vadd.f32 %v2317, %v2493
      %v2495 = vpop.f32.mrb[0].mxu0
      %2496 = vmatprep.mubr.bf16.mxu0 0
      %2497 = vmatmul.mubr.bf16.gmra.mrb[0].mxu0 %v1989
      %v2498 = vpop.f32.mrb[0].mxu0
      %v2499 = vadd.f32 %v2322, %v2498
      %v2500 = vpop.f32.mrb[0].mxu0
      %v2501 = vpop.f32.mrb[0].mxu0
      %v2502 = vadd.f32 %v2325, %v2501
      %v2503 = vpop.f32.mrb[0].mxu0
      %2504 = vmatprep.mubr.bf16.mxu0 0
      %2505 = vmatmul.mubr.bf16.gmra.mrb[0].mxu0 %v1992
      %v2506 = vpop.f32.mrb[0].mxu0
      %v2507 = vadd.f32 %v2330, %v2506
      %v2508 = vpop.f32.mrb[0].mxu0
      %v2509 = vpop.f32.mrb[0].mxu0
      %v2510 = vadd.f32 %v2333, %v2509
      %v2511 = vpop.f32.mrb[0].mxu0
      %2512 = vmatprep.mubr.bf16.mxu0 0
      %2513 = vmatmul.mubr.bf16.gmra.mrb[0].mxu0 %v1995
      %v2514 = vpop.f32.mrb[0].mxu0
      %v2515 = vadd.f32 %v2338, %v2514
      %v2516 = vpop.f32.mrb[0].mxu0
      %v2517 = vpop.f32.mrb[0].mxu0
      %v2518 = vadd.f32 %v2341, %v2517
      %v2519 = vpop.f32.mrb[0].mxu0
      %2520 = vmatprep.mubr.bf16.mxu0 0
      %2521 = vmatmul.mubr.bf16.gmra.mrb[0].mxu0 %v1998
      %v2522 = vpop.f32.mrb[0].mxu0
      %v2523 = vadd.f32 %v2346, %v2522
      %v2524 = vpop.f32.mrb[0].mxu0
      %v2525 = vpop.f32.mrb[0].mxu0
      %v2526 = vadd.f32 %v2349, %v2525
      %v2527 = vpop.f32.mrb[0].mxu0
      %2528 = vmatprep.mubr.bf16.mxu0 0
      %2529 = vmatmul.mubr.bf16.gmra.mrb[0].mxu0 %v2001
      %v2530 = vpop.f32.mrb[0].mxu0
      %v2531 = vadd.f32 %v2354, %v2530
      %v2532 = vpop.f32.mrb[0].mxu0
      %v2533 = vpop.f32.mrb[0].mxu0
      %v2534 = vadd.f32 %v2357, %v2533
      %v2535 = vpop.f32.mrb[0].mxu0
      %2536 = vmatprep.mubr.bf16.mxu0 0
      %2537 = vmatmul.mubr.bf16.gmra.mrb[0].mxu0 %v2004
      %v2538 = vpop.f32.mrb[0].mxu0
      %v2539 = vadd.f32 %v2362, %v2538
      %v2540 = vpop.f32.mrb[0].mxu0
      %v2541 = vpop.f32.mrb[0].mxu0
      %v2542 = vadd.f32 %v2365, %v2541
      %v2543 = vpop.f32.mrb[0].mxu0
      %2544 = vmatprep.mubr.bf16.mxu0 0
      %2545 = vmatmul.mubr.bf16.gmra.mrb[0].mxu0 %v2007
      %v2546 = vpop.f32.mrb[0].mxu0
      %v2547 = vadd.f32 %v2370, %v2546
      %v2548 = vpop.f32.mrb[0].mxu0
      %v2549 = vpop.f32.mrb[0].mxu0
      %v2550 = vadd.f32 %v2373, %v2549
      %v2551 = vpop.f32.mrb[0].mxu0
      %2552 = vmatprep.mubr.bf16.mxu0 0
      %2553 = vmatmul.mubr.bf16.gmra.mrb[0].mxu0 %v2010
      %v2554 = vpop.f32.mrb[0].mxu0
      %v2555 = vadd.f32 %v2378, %v2554
      %v2556 = vpop.f32.mrb[0].mxu0
      %v2557 = vpop.f32.mrb[0].mxu0
      %v2558 = vadd.f32 %v2381, %v2557
      %v2559 = vpop.f32.mrb[0].mxu0
      %2560 = vmatprep.mubr.bf16.mxu0 0
      %2561 = vmatmul.mubr.bf16.gmra.mrb[0].mxu0 %v2013
      %v2562 = vpop.f32.mrb[0].mxu0
      %v2563 = vadd.f32 %v2386, %v2562
      %v2564 = vpop.f32.mrb[0].mxu0
      %v2565 = vpop.f32.mrb[0].mxu0
      %v2566 = vadd.f32 %v2389, %v2565
      %v2567 = vpop.f32.mrb[0].mxu0
      %2568 = vmatprep.mubr.bf16.mxu0 0
      %2569 = vmatmul.mubr.bf16.gmra.mrb[0].mxu0 %v2016
      %v2570 = vpop.f32.mrb[0].mxu0
      %v2571 = vadd.f32 %v2394, %v2570
      %v2572 = vpop.f32.mrb[0].mxu0
      %v2573 = vpop.f32.mrb[0].mxu0
      %v2574 = vadd.f32 %v2397, %v2573
      %v2575 = vpop.f32.mrb[0].mxu0
      %2576 = vmatprep.mubr.bf16.mxu0 0
      %2577 = vmatmul.mubr.bf16.gmra.mrb[0].mxu0 %v2019
      %v2578 = vpop.f32.mrb[0].mxu0
      %v2579 = vadd.f32 %v2402, %v2578
      %v2580 = vpop.f32.mrb[0].mxu0
      %v2581 = vpop.f32.mrb[0].mxu0
      %v2582 = vadd.f32 %v2405, %v2581
      %v2583 = vpop.f32.mrb[0].mxu0
      %2584 = vdwg.mxu0
      %v2585 = vld [vmem:[#allocation3] sm:$0xff]
      %v2586 = vld [vmem:[#allocation3 + $0x8] sm:$0xff]
      %v2587 = vld [vmem:[#allocation3 + $0x10] sm:$0xff]
      %v2588 = vld [vmem:[#allocation3 + $0x18] sm:$0xff]
      %v2589 = vld [vmem:[#allocation3 + $0x20] sm:$0xff]
      %v2590 = vld [vmem:[#allocation3 + $0x28] sm:$0xff]
      %v2591 = vld [vmem:[#allocation3 + $0x30] sm:$0xff]
      %v2592 = vld [vmem:[#allocation3 + $0x38] sm:$0xff]
      %v2593 = vld [vmem:[#allocation3 + $0x40] sm:$0xff]
      %v2594 = vld [vmem:[#allocation3 + $0x48] sm:$0xff]
      %v2595 = vld [vmem:[#allocation3 + $0x50] sm:$0xff]
      %v2596 = vld [vmem:[#allocation3 + $0x58] sm:$0xff]
      %v2597 = vld [vmem:[#allocation3 + $0x60] sm:$0xff]
      %v2598 = vld [vmem:[#allocation3 + $0x68] sm:$0xff]
      %v2599 = vld [vmem:[#allocation3 + $0x70] sm:$0xff]
      %v2600 = vld [vmem:[#allocation3 + $0x78] sm:$0xff]
      %v2601 = vld [vmem:[#allocation3 + $0x80] sm:$0xff]
      %v2602 = vld [vmem:[#allocation3 + $0x88] sm:$0xff]
      %v2603 = vld [vmem:[#allocation3 + $0x90] sm:$0xff]
      %v2604 = vld [vmem:[#allocation3 + $0x98] sm:$0xff]
      %v2605 = vld [vmem:[#allocation3 + $0xa0] sm:$0xff]
      %v2606 = vld [vmem:[#allocation3 + $0xa8] sm:$0xff]
      %v2607 = vld [vmem:[#allocation3 + $0xb0] sm:$0xff]
      %v2608 = vld [vmem:[#allocation3 + $0xb8] sm:$0xff]
      %v2609 = vld [vmem:[#allocation3 + $0xc0] sm:$0xff]
      %v2610 = vld [vmem:[#allocation3 + $0xc8] sm:$0xff]
      %v2611 = vld [vmem:[#allocation3 + $0xd0] sm:$0xff]
      %v2612 = vld [vmem:[#allocation3 + $0xd8] sm:$0xff]
      %v2613 = vld [vmem:[#allocation3 + $0xe0] sm:$0xff]
      %v2614 = vld [vmem:[#allocation3 + $0xe8] sm:$0xff]
      %v2615 = vld [vmem:[#allocation3 + $0xf0] sm:$0xff]
      %v2616 = vld [vmem:[#allocation3 + $0xf8] sm:$0xff]
      %v2617 = vld [vmem:[#allocation3 + $0x100] sm:$0xff]
      %v2618 = vld [vmem:[#allocation3 + $0x108] sm:$0xff]
      %v2619 = vld [vmem:[#allocation3 + $0x110] sm:$0xff]
      %v2620 = vld [vmem:[#allocation3 + $0x118] sm:$0xff]
      %v2621 = vadd.f32 %v2585, %v2443
      %v2622 = vadd.f32 %v2586, %v2446
      %v2623 = vadd.f32 %v2587, %v2451
      %v2624 = vadd.f32 %v2588, %v2454
      %v2625 = vadd.f32 %v2589, %v2459
      %v2626 = vadd.f32 %v2590, %v2462
      %v2627 = vadd.f32 %v2591, %v2467
      %v2628 = vadd.f32 %v2592, %v2470
      %v2629 = vadd.f32 %v2593, %v2475
      %v2630 = vadd.f32 %v2594, %v2478
      %v2631 = vadd.f32 %v2595, %v2483
      %v2632 = vadd.f32 %v2596, %v2486
      %v2633 = vadd.f32 %v2597, %v2491
      %v2634 = vadd.f32 %v2598, %v2494
      %v2635 = vadd.f32 %v2599, %v2499
      %v2636 = vadd.f32 %v2600, %v2502
      %v2637 = vadd.f32 %v2601, %v2507
      %v2638 = vadd.f32 %v2602, %v2510
      %v2639 = vadd.f32 %v2603, %v2515
      %v2640 = vadd.f32 %v2604, %v2518
      %v2641 = vadd.f32 %v2605, %v2523
      %v2642 = vadd.f32 %v2606, %v2526
      %v2643 = vadd.f32 %v2607, %v2531
      %v2644 = vadd.f32 %v2608, %v2534
      %v2645 = vadd.f32 %v2609, %v2539
      %v2646 = vadd.f32 %v2610, %v2542
      %v2647 = vadd.f32 %v2611, %v2547
      %v2648 = vadd.f32 %v2612, %v2550
      %v2649 = vadd.f32 %v2613, %v2555
      %v2650 = vadd.f32 %v2614, %v2558
      %v2651 = vadd.f32 %v2615, %v2563
      %v2652 = vadd.f32 %v2616, %v2566
      %v2653 = vadd.f32 %v2617, %v2571
      %v2654 = vadd.f32 %v2618, %v2574
      %v2655 = vadd.f32 %v2619, %v2579
      %v2656 = vadd.f32 %v2620, %v2582
      %2657 = vst [vmem:[#allocation3] sm:$0xff] %v2621
      %2658 = vst [vmem:[#allocation3 + $0x8] sm:$0xff] %v2622
      %2659 = vst [vmem:[#allocation3 + $0x10] sm:$0xff] %v2623
      %2660 = vst [vmem:[#allocation3 + $0x18] sm:$0xff] %v2624
      %2661 = vst [vmem:[#allocation3 + $0x20] sm:$0xff] %v2625
      %2662 = vst [vmem:[#allocation3 + $0x28] sm:$0xff] %v2626
      %2663 = vst [vmem:[#allocation3 + $0x30] sm:$0xff] %v2627
      %2664 = vst [vmem:[#allocation3 + $0x38] sm:$0xff] %v2628
      %2665 = vst [vmem:[#allocation3 + $0x40] sm:$0xff] %v2629
      %2666 = vst [vmem:[#allocation3 + $0x48] sm:$0xff] %v2630
      %2667 = vst [vmem:[#allocation3 + $0x50] sm:$0xff] %v2631
      %2668 = vst [vmem:[#allocation3 + $0x58] sm:$0xff] %v2632
      %2669 = vst [vmem:[#allocation3 + $0x60] sm:$0xff] %v2633
      %2670 = vst [vmem:[#allocation3 + $0x68] sm:$0xff] %v2634
      %2671 = vst [vmem:[#allocation3 + $0x70] sm:$0xff] %v2635
      %2672 = vst [vmem:[#allocation3 + $0x78] sm:$0xff] %v2636
      %2673 = vst [vmem:[#allocation3 + $0x80] sm:$0xff] %v2637
      %2674 = vst [vmem:[#allocation3 + $0x88] sm:$0xff] %v2638
      %2675 = vst [vmem:[#allocation3 + $0x90] sm:$0xff] %v2639
      %2676 = vst [vmem:[#allocation3 + $0x98] sm:$0xff] %v2640
      %2677 = vst [vmem:[#allocation3 + $0xa0] sm:$0xff] %v2641
      %2678 = vst [vmem:[#allocation3 + $0xa8] sm:$0xff] %v2642
      %2679 = vst [vmem:[#allocation3 + $0xb0] sm:$0xff] %v2643
      %2680 = vst [vmem:[#allocation3 + $0xb8] sm:$0xff] %v2644
      %2681 = vst [vmem:[#allocation3 + $0xc0] sm:$0xff] %v2645
      %2682 = vst [vmem:[#allocation3 + $0xc8] sm:$0xff] %v2646
      %2683 = vst [vmem:[#allocation3 + $0xd0] sm:$0xff] %v2647
      %2684 = vst [vmem:[#allocation3 + $0xd8] sm:$0xff] %v2648
      %2685 = vst [vmem:[#allocation3 + $0xe0] sm:$0xff] %v2649
      %2686 = vst [vmem:[#allocation3 + $0xe8] sm:$0xff] %v2650
      %2687 = vst [vmem:[#allocation3 + $0xf0] sm:$0xff] %v2651
      %2688 = vst [vmem:[#allocation3 + $0xf8] sm:$0xff] %v2652
      %2689 = vst [vmem:[#allocation3 + $0x100] sm:$0xff] %v2653
      %2690 = vst [vmem:[#allocation3 + $0x108] sm:$0xff] %v2654
      %2691 = vst [vmem:[#allocation3 + $0x110] sm:$0xff] %v2655
      %2692 = vst [vmem:[#allocation3 + $0x118] sm:$0xff] %v2656
      %s2693 = scalar_lea.vmem %s252, 24
      %v2694 = vld [vmem:[%s2693] sm:$0xf]
      %v2695 = vld [vmem:[%s2693 + $0x4] sm:$0xf]
      %v2696 = vld [vmem:[%s2693 + $0xc] sm:$0xf]
      %v2697 = vld [vmem:[%s2693 + $0x10] sm:$0xf]
      %v2698 = vld [vmem:[%s2693 + $0x18] sm:$0xf]
      %v2699 = vld [vmem:[%s2693 + $0x1c] sm:$0xf]
      %v2700 = vld [vmem:[%s2693 + $0x24] sm:$0xf]
      %v2701 = vld [vmem:[%s2693 + $0x28] sm:$0xf]
      %v2702 = vld [vmem:[%s2693 + $0x30] sm:$0xf]
      %v2703 = vld [vmem:[%s2693 + $0x34] sm:$0xf]
      %v2704 = vld [vmem:[%s2693 + $0x3c] sm:$0xf]
      %v2705 = vld [vmem:[%s2693 + $0x40] sm:$0xf]
      %v2706 = vld [vmem:[%s2693 + $0x48] sm:$0xf]
      %v2707 = vld [vmem:[%s2693 + $0x4c] sm:$0xf]
      %v2708 = vld [vmem:[%s2693 + $0x54] sm:$0xf]
      %v2709 = vld [vmem:[%s2693 + $0x58] sm:$0xf]
      %v2710 = vld [vmem:[%s2693 + $0x60] sm:$0xf]
      %v2711 = vld [vmem:[%s2693 + $0x64] sm:$0xf]
      %v2712 = vld [vmem:[%s2693 + $0x6c] sm:$0xf]
      %v2713 = vld [vmem:[%s2693 + $0x70] sm:$0xf]
      %v2714 = vld [vmem:[%s2693 + $0x78] sm:$0xf]
      %v2715 = vld [vmem:[%s2693 + $0x7c] sm:$0xf]
      %v2716 = vld [vmem:[%s2693 + $0x84] sm:$0xf]
      %v2717 = vld [vmem:[%s2693 + $0x88] sm:$0xf]
      %v2718 = vld [vmem:[%s2693 + $0x90] sm:$0xf]
      %v2719 = vld [vmem:[%s2693 + $0x94] sm:$0xf]
      %v2720 = vld [vmem:[%s2693 + $0x9c] sm:$0xf]
      %v2721 = vld [vmem:[%s2693 + $0xa0] sm:$0xf]
      %v2722 = vld [vmem:[%s2693 + $0xa8] sm:$0xf]
      %v2723 = vld [vmem:[%s2693 + $0xac] sm:$0xf]
      %v2724 = vld [vmem:[%s2693 + $0xb4] sm:$0xf]
      %v2725 = vld [vmem:[%s2693 + $0xb8] sm:$0xf]
      %v2726 = vld [vmem:[%s2693 + $0xc0] sm:$0xf]
      %v2727 = vld [vmem:[%s2693 + $0xc4] sm:$0xf]
      %v2728 = vld [vmem:[%s2693 + $0xcc] sm:$0xf]
      %v2729 = vld [vmem:[%s2693 + $0xd0] sm:$0xf]
      %v2730 = vld [vmem:[%s2693 + $0x8] sm:$0x1]
      %v2731 = vld [vmem:[%s2693 + $0x14] sm:$0x1]
      %v2732 = vld [vmem:[%s2693 + $0x20] sm:$0x1]
      %v2733 = vld [vmem:[%s2693 + $0x2c] sm:$0x1]
      %v2734 = vld [vmem:[%s2693 + $0x38] sm:$0x1]
      %v2735 = vld [vmem:[%s2693 + $0x44] sm:$0x1]
      %v2736 = vld [vmem:[%s2693 + $0x50] sm:$0x1]
      %v2737 = vld [vmem:[%s2693 + $0x5c] sm:$0x1]
      %v2738 = vld [vmem:[%s2693 + $0x68] sm:$0x1]
      %v2739 = vld [vmem:[%s2693 + $0x74] sm:$0x1]
      %v2740 = vld [vmem:[%s2693 + $0x80] sm:$0x1]
      %v2741 = vld [vmem:[%s2693 + $0x8c] sm:$0x1]
      %v2742 = vld [vmem:[%s2693 + $0x98] sm:$0x1]
      %v2743 = vld [vmem:[%s2693 + $0xa4] sm:$0x1]
      %v2744 = vld [vmem:[%s2693 + $0xb0] sm:$0x1]
      %v2745 = vld [vmem:[%s2693 + $0xbc] sm:$0x1]
      %v2746 = vld [vmem:[%s2693 + $0xc8] sm:$0x1]
      %v2747 = vld [vmem:[%s2693 + $0xd4] sm:$0x1]
      %v2748 = vld [vmem:[%s2693] sm:$0xe]
      %v2749 = vld [vmem:[%s2693 + $0xc] sm:$0xe]
      %v2750 = vld [vmem:[%s2693 + $0x18] sm:$0xe]
      %v2751 = vld [vmem:[%s2693 + $0x24] sm:$0xe]
      %v2752 = vld [vmem:[%s2693 + $0x30] sm:$0xe]
      %v2753 = vld [vmem:[%s2693 + $0x3c] sm:$0xe]
      %v2754 = vld [vmem:[%s2693 + $0x48] sm:$0xe]
      %v2755 = vld [vmem:[%s2693 + $0x54] sm:$0xe]
      %v2756 = vld [vmem:[%s2693 + $0x60] sm:$0xe]
      %v2757 = vld [vmem:[%s2693 + $0x6c] sm:$0xe]
      %v2758 = vld [vmem:[%s2693 + $0x78] sm:$0xe]
      %v2759 = vld [vmem:[%s2693 + $0x84] sm:$0xe]
      %v2760 = vld [vmem:[%s2693 + $0x90] sm:$0xe]
      %v2761 = vld [vmem:[%s2693 + $0x9c] sm:$0xe]
      %v2762 = vld [vmem:[%s2693 + $0xa8] sm:$0xe]
      %v2763 = vld [vmem:[%s2693 + $0xb4] sm:$0xe]
      %v2764 = vld [vmem:[%s2693 + $0xc0] sm:$0xe]
      %v2765 = vld [vmem:[%s2693 + $0xcc] sm:$0xe]
      %v2802 = vunpack.c.l.b16 %v2694
      %v2803 = vunpack.c.l.b16 %v2695
      %v2804 = vunpack.c.l.b16 %v2696
      %v2805 = vunpack.c.l.b16 %v2697
      %v2806 = vunpack.c.l.b16 %v2698
      %v2807 = vunpack.c.l.b16 %v2699
      %v2808 = vunpack.c.l.b16 %v2700
      %v2809 = vunpack.c.l.b16 %v2701
      %v2810 = vunpack.c.l.b16 %v2702
      %v2811 = vunpack.c.l.b16 %v2703
      %v2812 = vunpack.c.l.b16 %v2704
      %v2813 = vunpack.c.l.b16 %v2705
      %v2814 = vunpack.c.l.b16 %v2706
      %v2815 = vunpack.c.l.b16 %v2707
      %v2816 = vunpack.c.l.b16 %v2708
      %v2817 = vunpack.c.l.b16 %v2709
      %v2818 = vunpack.c.l.b16 %v2710
      %v2819 = vunpack.c.l.b16 %v2711
      %v2820 = vunpack.c.l.b16 %v2712
      %v2821 = vunpack.c.l.b16 %v2713
      %v2822 = vunpack.c.l.b16 %v2714
      %v2823 = vunpack.c.l.b16 %v2715
      %v2824 = vunpack.c.l.b16 %v2716
      %v2825 = vunpack.c.l.b16 %v2717
      %v2826 = vunpack.c.l.b16 %v2718
      %v2827 = vunpack.c.l.b16 %v2719
      %v2828 = vunpack.c.l.b16 %v2720
      %v2829 = vunpack.c.l.b16 %v2721
      %v2830 = vunpack.c.l.b16 %v2722
      %v2831 = vunpack.c.l.b16 %v2723
      %v2832 = vunpack.c.l.b16 %v2724
      %v2833 = vunpack.c.l.b16 %v2725
      %v2834 = vunpack.c.l.b16 %v2726
      %v2835 = vunpack.c.l.b16 %v2727
      %v2836 = vunpack.c.l.b16 %v2728
      %v2837 = vunpack.c.l.b16 %v2729
      %v2838 = vpack.c.b16 %v2803, %v2802
      %v2839 = vpack.c.b16 %v2805, %v2804
      %v2840 = vpack.c.b16 %v2807, %v2806
      %v2841 = vpack.c.b16 %v2809, %v2808
      %v2842 = vpack.c.b16 %v2811, %v2810
      %v2843 = vpack.c.b16 %v2813, %v2812
      %v2844 = vpack.c.b16 %v2815, %v2814
      %v2845 = vpack.c.b16 %v2817, %v2816
      %v2846 = vpack.c.b16 %v2819, %v2818
      %v2847 = vpack.c.b16 %v2821, %v2820
      %v2848 = vpack.c.b16 %v2823, %v2822
      %v2849 = vpack.c.b16 %v2825, %v2824
      %v2850 = vpack.c.b16 %v2827, %v2826
      %v2851 = vpack.c.b16 %v2829, %v2828
      %v2852 = vpack.c.b16 %v2831, %v2830
      %v2853 = vpack.c.b16 %v2833, %v2832
      %v2854 = vpack.c.b16 %v2835, %v2834
      %v2855 = vpack.c.b16 %v2837, %v2836
      %v2892 = vunpack.c.l.b16 %v2730
      %v2893 = vunpack.c.l.b16 %v2731
      %v2894 = vunpack.c.l.b16 %v2732
      %v2895 = vunpack.c.l.b16 %v2733
      %v2896 = vunpack.c.l.b16 %v2734
      %v2897 = vunpack.c.l.b16 %v2735
      %v2898 = vunpack.c.l.b16 %v2736
      %v2899 = vunpack.c.l.b16 %v2737
      %v2900 = vunpack.c.l.b16 %v2738
      %v2901 = vunpack.c.l.b16 %v2739
      %v2902 = vunpack.c.l.b16 %v2740
      %v2903 = vunpack.c.l.b16 %v2741
      %v2904 = vunpack.c.l.b16 %v2742
      %v2905 = vunpack.c.l.b16 %v2743
      %v2906 = vunpack.c.l.b16 %v2744
      %v2907 = vunpack.c.l.b16 %v2745
      %v2908 = vunpack.c.l.b16 %v2746
      %v2909 = vunpack.c.l.b16 %v2747
      %v2910 = vpack.c.b16 %v2892, %v2892
      %v2911 = vpack.c.b16 %v2893, %v2893
      %v2912 = vpack.c.b16 %v2894, %v2894
      %v2913 = vpack.c.b16 %v2895, %v2895
      %v2914 = vpack.c.b16 %v2896, %v2896
      %v2915 = vpack.c.b16 %v2897, %v2897
      %v2916 = vpack.c.b16 %v2898, %v2898
      %v2917 = vpack.c.b16 %v2899, %v2899
      %v2918 = vpack.c.b16 %v2900, %v2900
      %v2919 = vpack.c.b16 %v2901, %v2901
      %v2920 = vpack.c.b16 %v2902, %v2902
      %v2921 = vpack.c.b16 %v2903, %v2903
      %v2922 = vpack.c.b16 %v2904, %v2904
      %v2923 = vpack.c.b16 %v2905, %v2905
      %v2924 = vpack.c.b16 %v2906, %v2906
      %v2925 = vpack.c.b16 %v2907, %v2907
      %v2926 = vpack.c.b16 %v2908, %v2908
      %v2927 = vpack.c.b16 %v2909, %v2909
      %v2929 = vshrl.u32 %v2838, 16
      %v2931 = vshll.u32 %v2838, 16
      %v2933 = vrot.slane %v2931, 1
      %v2934 = vor.u32 %v2929, %v2933
      %v2936 = vshll.u32 %v2910, 16
      %v2938 = vrot.slane %v2936, 1
      %v2939 = vsel %vm499, %v2934, %v2938
      %v2941 = vshrl.u32 %v2839, 16
      %v2943 = vshll.u32 %v2839, 16
      %v2945 = vrot.slane %v2943, 1
      %v2946 = vor.u32 %v2941, %v2945
      %v2948 = vshll.u32 %v2911, 16
      %v2950 = vrot.slane %v2948, 1
      %v2951 = vsel %vm499, %v2946, %v2950
      %v2953 = vshrl.u32 %v2840, 16
      %v2955 = vshll.u32 %v2840, 16
      %v2957 = vrot.slane %v2955, 1
      %v2958 = vor.u32 %v2953, %v2957
      %v2960 = vshll.u32 %v2912, 16
      %v2962 = vrot.slane %v2960, 1
      %v2963 = vsel %vm499, %v2958, %v2962
      %v2965 = vshrl.u32 %v2841, 16
      %v2967 = vshll.u32 %v2841, 16
      %v2969 = vrot.slane %v2967, 1
      %v2970 = vor.u32 %v2965, %v2969
      %v2972 = vshll.u32 %v2913, 16
      %v2974 = vrot.slane %v2972, 1
      %v2975 = vsel %vm499, %v2970, %v2974
      %v2977 = vshrl.u32 %v2842, 16
      %v2979 = vshll.u32 %v2842, 16
      %v2981 = vrot.slane %v2979, 1
      %v2982 = vor.u32 %v2977, %v2981
      %v2984 = vshll.u32 %v2914, 16
      %v2986 = vrot.slane %v2984, 1
      %v2987 = vsel %vm499, %v2982, %v2986
      %v2989 = vshrl.u32 %v2843, 16
      %v2991 = vshll.u32 %v2843, 16
      %v2993 = vrot.slane %v2991, 1
      %v2994 = vor.u32 %v2989, %v2993
      %v2996 = vshll.u32 %v2915, 16
      %v2998 = vrot.slane %v2996, 1
      %v2999 = vsel %vm499, %v2994, %v2998
      %v3001 = vshrl.u32 %v2844, 16
      %v3003 = vshll.u32 %v2844, 16
      %v3005 = vrot.slane %v3003, 1
      %v3006 = vor.u32 %v3001, %v3005
      %v3008 = vshll.u32 %v2916, 16
      %v3010 = vrot.slane %v3008, 1
      %v3011 = vsel %vm499, %v3006, %v3010
      %v3013 = vshrl.u32 %v2845, 16
      %v3015 = vshll.u32 %v2845, 16
      %v3017 = vrot.slane %v3015, 1
      %v3018 = vor.u32 %v3013, %v3017
      %v3020 = vshll.u32 %v2917, 16
      %v3022 = vrot.slane %v3020, 1
      %v3023 = vsel %vm499, %v3018, %v3022
      %v3025 = vshrl.u32 %v2846, 16
      %v3027 = vshll.u32 %v2846, 16
      %v3029 = vrot.slane %v3027, 1
      %v3030 = vor.u32 %v3025, %v3029
      %v3032 = vshll.u32 %v2918, 16
      %v3034 = vrot.slane %v3032, 1
      %v3035 = vsel %vm499, %v3030, %v3034
      %v3037 = vshrl.u32 %v2847, 16
      %v3039 = vshll.u32 %v2847, 16
      %v3041 = vrot.slane %v3039, 1
      %v3042 = vor.u32 %v3037, %v3041
      %v3044 = vshll.u32 %v2919, 16
      %v3046 = vrot.slane %v3044, 1
      %v3047 = vsel %vm499, %v3042, %v3046
      %v3049 = vshrl.u32 %v2848, 16
      %v3051 = vshll.u32 %v2848, 16
      %v3053 = vrot.slane %v3051, 1
      %v3054 = vor.u32 %v3049, %v3053
      %v3056 = vshll.u32 %v2920, 16
      %v3058 = vrot.slane %v3056, 1
      %v3059 = vsel %vm499, %v3054, %v3058
      %v3061 = vshrl.u32 %v2849, 16
      %v3063 = vshll.u32 %v2849, 16
      %v3065 = vrot.slane %v3063, 1
      %v3066 = vor.u32 %v3061, %v3065
      %v3068 = vshll.u32 %v2921, 16
      %v3070 = vrot.slane %v3068, 1
      %v3071 = vsel %vm499, %v3066, %v3070
      %v3073 = vshrl.u32 %v2850, 16
      %v3075 = vshll.u32 %v2850, 16
      %v3077 = vrot.slane %v3075, 1
      %v3078 = vor.u32 %v3073, %v3077
      %v3080 = vshll.u32 %v2922, 16
      %v3082 = vrot.slane %v3080, 1
      %v3083 = vsel %vm499, %v3078, %v3082
      %v3085 = vshrl.u32 %v2851, 16
      %v3087 = vshll.u32 %v2851, 16
      %v3089 = vrot.slane %v3087, 1
      %v3090 = vor.u32 %v3085, %v3089
      %v3092 = vshll.u32 %v2923, 16
      %v3094 = vrot.slane %v3092, 1
      %v3095 = vsel %vm499, %v3090, %v3094
      %v3097 = vshrl.u32 %v2852, 16
      %v3099 = vshll.u32 %v2852, 16
      %v3101 = vrot.slane %v3099, 1
      %v3102 = vor.u32 %v3097, %v3101
      %v3104 = vshll.u32 %v2924, 16
      %v3106 = vrot.slane %v3104, 1
      %v3107 = vsel %vm499, %v3102, %v3106
      %v3109 = vshrl.u32 %v2853, 16
      %v3111 = vshll.u32 %v2853, 16
      %v3113 = vrot.slane %v3111, 1
      %v3114 = vor.u32 %v3109, %v3113
      %v3116 = vshll.u32 %v2925, 16
      %v3118 = vrot.slane %v3116, 1
      %v3119 = vsel %vm499, %v3114, %v3118
      %v3121 = vshrl.u32 %v2854, 16
      %v3123 = vshll.u32 %v2854, 16
      %v3125 = vrot.slane %v3123, 1
      %v3126 = vor.u32 %v3121, %v3125
      %v3128 = vshll.u32 %v2926, 16
      %v3130 = vrot.slane %v3128, 1
      %v3131 = vsel %vm499, %v3126, %v3130
      %v3133 = vshrl.u32 %v2855, 16
      %v3135 = vshll.u32 %v2855, 16
      %v3137 = vrot.slane %v3135, 1
      %v3138 = vor.u32 %v3133, %v3137
      %v3140 = vshll.u32 %v2927, 16
      %v3142 = vrot.slane %v3140, 1
      %v3143 = vsel %vm499, %v3138, %v3142
      %v3180 = vunpack.c.l.b16 %v2748
      %v3181 = vunpack.c.l.b16 %v2749
      %v3182 = vunpack.c.l.b16 %v2750
      %v3183 = vunpack.c.l.b16 %v2751
      %v3184 = vunpack.c.l.b16 %v2752
      %v3185 = vunpack.c.l.b16 %v2753
      %v3186 = vunpack.c.l.b16 %v2754
      %v3187 = vunpack.c.l.b16 %v2755
      %v3188 = vunpack.c.l.b16 %v2756
      %v3189 = vunpack.c.l.b16 %v2757
      %v3190 = vunpack.c.l.b16 %v2758
      %v3191 = vunpack.c.l.b16 %v2759
      %v3192 = vunpack.c.l.b16 %v2760
      %v3193 = vunpack.c.l.b16 %v2761
      %v3194 = vunpack.c.l.b16 %v2762
      %v3195 = vunpack.c.l.b16 %v2763
      %v3196 = vunpack.c.l.b16 %v2764
      %v3197 = vunpack.c.l.b16 %v2765
      %v3198 = vpack.c.b16 %v2803, %v3180
      %v3199 = vpack.c.b16 %v2805, %v3181
      %v3200 = vpack.c.b16 %v2807, %v3182
      %v3201 = vpack.c.b16 %v2809, %v3183
      %v3202 = vpack.c.b16 %v2811, %v3184
      %v3203 = vpack.c.b16 %v2813, %v3185
      %v3204 = vpack.c.b16 %v2815, %v3186
      %v3205 = vpack.c.b16 %v2817, %v3187
      %v3206 = vpack.c.b16 %v2819, %v3188
      %v3207 = vpack.c.b16 %v2821, %v3189
      %v3208 = vpack.c.b16 %v2823, %v3190
      %v3209 = vpack.c.b16 %v2825, %v3191
      %v3210 = vpack.c.b16 %v2827, %v3192
      %v3211 = vpack.c.b16 %v2829, %v3193
      %v3212 = vpack.c.b16 %v2831, %v3194
      %v3213 = vpack.c.b16 %v2833, %v3195
      %v3214 = vpack.c.b16 %v2835, %v3196
      %v3215 = vpack.c.b16 %v2837, %v3197
      %v3216 = vrot.slane %v3198, 1
      %v3217 = vrot.slane %v2910, 1
      %v3218 = vsel %vm788, %v3216, %v3217
      %v3219 = vrot.slane %v3199, 1
      %v3220 = vrot.slane %v2911, 1
      %v3221 = vsel %vm788, %v3219, %v3220
      %v3222 = vrot.slane %v3200, 1
      %v3223 = vrot.slane %v2912, 1
      %v3224 = vsel %vm788, %v3222, %v3223
      %v3225 = vrot.slane %v3201, 1
      %v3226 = vrot.slane %v2913, 1
      %v3227 = vsel %vm788, %v3225, %v3226
      %v3228 = vrot.slane %v3202, 1
      %v3229 = vrot.slane %v2914, 1
      %v3230 = vsel %vm788, %v3228, %v3229
      %v3231 = vrot.slane %v3203, 1
      %v3232 = vrot.slane %v2915, 1
      %v3233 = vsel %vm788, %v3231, %v3232
      %v3234 = vrot.slane %v3204, 1
      %v3235 = vrot.slane %v2916, 1
      %v3236 = vsel %vm788, %v3234, %v3235
      %v3237 = vrot.slane %v3205, 1
      %v3238 = vrot.slane %v2917, 1
      %v3239 = vsel %vm788, %v3237, %v3238
      %v3240 = vrot.slane %v3206, 1
      %v3241 = vrot.slane %v2918, 1
      %v3242 = vsel %vm788, %v3240, %v3241
      %v3243 = vrot.slane %v3207, 1
      %v3244 = vrot.slane %v2919, 1
      %v3245 = vsel %vm788, %v3243, %v3244
      %v3246 = vrot.slane %v3208, 1
      %v3247 = vrot.slane %v2920, 1
      %v3248 = vsel %vm788, %v3246, %v3247
      %v3249 = vrot.slane %v3209, 1
      %v3250 = vrot.slane %v2921, 1
      %v3251 = vsel %vm788, %v3249, %v3250
      %v3252 = vrot.slane %v3210, 1
      %v3253 = vrot.slane %v2922, 1
      %v3254 = vsel %vm788, %v3252, %v3253
      %v3255 = vrot.slane %v3211, 1
      %v3256 = vrot.slane %v2923, 1
      %v3257 = vsel %vm788, %v3255, %v3256
      %v3258 = vrot.slane %v3212, 1
      %v3259 = vrot.slane %v2924, 1
      %v3260 = vsel %vm788, %v3258, %v3259
      %v3261 = vrot.slane %v3213, 1
      %v3262 = vrot.slane %v2925, 1
      %v3263 = vsel %vm788, %v3261, %v3262
      %v3264 = vrot.slane %v3214, 1
      %v3265 = vrot.slane %v2926, 1
      %v3266 = vsel %vm788, %v3264, %v3265
      %v3267 = vrot.slane %v3215, 1
      %v3268 = vrot.slane %v2927, 1
      %v3269 = vsel %vm788, %v3267, %v3268
      %s3288 = scalar_lea.vmem %s1, 384
      %v3289 = vld [vmem:[%s3288] sm:$0xf]
      %v3290 = vld [vmem:[%s3288 + $0x4] sm:$0xf]
      %v3291 = vld [vmem:[%s3288 + $0x8] sm:$0xf]
      %v3292 = vld [vmem:[%s3288 + $0xc] sm:$0xf]
      %v3293 = vld [vmem:[%s3288 + $0x10] sm:$0xf]
      %v3294 = vld [vmem:[%s3288 + $0x14] sm:$0xf]
      %v3295 = vld [vmem:[%s3288 + $0x18] sm:$0xf]
      %v3296 = vld [vmem:[%s3288 + $0x1c] sm:$0xf]
      %v3297 = vld [vmem:[%s3288 + $0x20] sm:$0xf]
      %v3298 = vld [vmem:[%s3288 + $0x24] sm:$0xf]
      %v3299 = vld [vmem:[%s3288 + $0x28] sm:$0xf]
      %v3300 = vld [vmem:[%s3288 + $0x2c] sm:$0xf]
      %v3301 = vld [vmem:[%s3288 + $0x30] sm:$0xf]
      %v3302 = vld [vmem:[%s3288 + $0x34] sm:$0xf]
      %v3303 = vld [vmem:[%s3288 + $0x38] sm:$0xf]
      %v3304 = vld [vmem:[%s3288 + $0x3c] sm:$0xf]
      %v3305 = vld [vmem:[%s3288 + $0x40] sm:$0xf]
      %v3306 = vld [vmem:[%s3288 + $0x44] sm:$0xf]
      %v3307 = vld [vmem:[%s3288 + $0x48] sm:$0xf]
      %v3308 = vld [vmem:[%s3288 + $0x4c] sm:$0xf]
      %v3309 = vld [vmem:[%s3288 + $0x50] sm:$0xf]
      %v3310 = vld [vmem:[%s3288 + $0x54] sm:$0xf]
      %v3311 = vld [vmem:[%s3288 + $0x58] sm:$0xf]
      %v3312 = vld [vmem:[%s3288 + $0x5c] sm:$0xf]
      %v3313 = vld [vmem:[%s3288 + $0x60] sm:$0xf]
      %v3314 = vld [vmem:[%s3288 + $0x64] sm:$0xf]
      %v3315 = vld [vmem:[%s3288 + $0x68] sm:$0xf]
      %v3316 = vld [vmem:[%s3288 + $0x6c] sm:$0xf]
      %v3317 = vld [vmem:[%s3288 + $0x70] sm:$0xf]
      %v3318 = vld [vmem:[%s3288 + $0x74] sm:$0xf]
      %v3319 = vld [vmem:[%s3288 + $0x78] sm:$0xf]
      %v3320 = vld [vmem:[%s3288 + $0x7c] sm:$0xf]
      %v3321 = vld [vmem:[%s3288 + $0x80] sm:$0xf]
      %v3322 = vld [vmem:[%s3288 + $0x84] sm:$0xf]
      %v3323 = vld [vmem:[%s3288 + $0x88] sm:$0xf]
      %v3324 = vld [vmem:[%s3288 + $0x8c] sm:$0xf]
      %v3325 = vld [vmem:[%s3288 + $0x90] sm:$0xf]
      %v3326 = vld [vmem:[%s3288 + $0x94] sm:$0xf]
      %v3327 = vld [vmem:[%s3288 + $0x98] sm:$0xf]
      %v3328 = vld [vmem:[%s3288 + $0x9c] sm:$0xf]
      %v3329 = vld [vmem:[%s3288 + $0xa0] sm:$0xf]
      %v3330 = vld [vmem:[%s3288 + $0xa4] sm:$0xf]
      %v3331 = vld [vmem:[%s3288 + $0xa8] sm:$0xf]
      %v3332 = vld [vmem:[%s3288 + $0xac] sm:$0xf]
      %v3333 = vld [vmem:[%s3288 + $0xb0] sm:$0xf]
      %v3334 = vld [vmem:[%s3288 + $0xb4] sm:$0xf]
      %v3335 = vld [vmem:[%s3288 + $0xb8] sm:$0xf]
      %v3336 = vld [vmem:[%s3288 + $0xbc] sm:$0xf]
      %v3385 = vunpack.c.l.b16 %v3289
      %v3386 = vunpack.c.l.b16 %v3290
      %v3387 = vunpack.c.l.b16 %v3291
      %v3388 = vunpack.c.l.b16 %v3292
      %v3389 = vunpack.c.l.b16 %v3293
      %v3390 = vunpack.c.l.b16 %v3294
      %v3391 = vunpack.c.l.b16 %v3295
      %v3392 = vunpack.c.l.b16 %v3296
      %v3393 = vunpack.c.l.b16 %v3297
      %v3394 = vunpack.c.l.b16 %v3298
      %v3395 = vunpack.c.l.b16 %v3299
      %v3396 = vunpack.c.l.b16 %v3300
      %v3397 = vunpack.c.l.b16 %v3301
      %v3398 = vunpack.c.l.b16 %v3302
      %v3399 = vunpack.c.l.b16 %v3303
      %v3400 = vunpack.c.l.b16 %v3304
      %v3401 = vunpack.c.l.b16 %v3305
      %v3402 = vunpack.c.l.b16 %v3306
      %v3403 = vunpack.c.l.b16 %v3307
      %v3404 = vunpack.c.l.b16 %v3308
      %v3405 = vunpack.c.l.b16 %v3309
      %v3406 = vunpack.c.l.b16 %v3310
      %v3407 = vunpack.c.l.b16 %v3311
      %v3408 = vunpack.c.l.b16 %v3312
      %v3409 = vunpack.c.l.b16 %v3313
      %v3410 = vunpack.c.l.b16 %v3314
      %v3411 = vunpack.c.l.b16 %v3315
      %v3412 = vunpack.c.l.b16 %v3316
      %v3413 = vunpack.c.l.b16 %v3317
      %v3414 = vunpack.c.l.b16 %v3318
      %v3415 = vunpack.c.l.b16 %v3319
      %v3416 = vunpack.c.l.b16 %v3320
      %v3417 = vunpack.c.l.b16 %v3321
      %v3418 = vunpack.c.l.b16 %v3322
      %v3419 = vunpack.c.l.b16 %v3323
      %v3420 = vunpack.c.l.b16 %v3324
      %v3421 = vunpack.c.l.b16 %v3325
      %v3422 = vunpack.c.l.b16 %v3326
      %v3423 = vunpack.c.l.b16 %v3327
      %v3424 = vunpack.c.l.b16 %v3328
      %v3425 = vunpack.c.l.b16 %v3329
      %v3426 = vunpack.c.l.b16 %v3330
      %v3427 = vunpack.c.l.b16 %v3331
      %v3428 = vunpack.c.l.b16 %v3332
      %v3429 = vunpack.c.l.b16 %v3333
      %v3430 = vunpack.c.l.b16 %v3334
      %v3431 = vunpack.c.l.b16 %v3335
      %v3432 = vunpack.c.l.b16 %v3336
      %v3433 = vpack.c.b16 %v3386, %v3385
      %v3434 = vpack.c.b16 %v3388, %v3387
      %v3435 = vpack.c.b16 %v3390, %v3389
      %v3436 = vpack.c.b16 %v3392, %v3391
      %v3437 = vpack.c.b16 %v3394, %v3393
      %v3438 = vpack.c.b16 %v3396, %v3395
      %v3439 = vpack.c.b16 %v3398, %v3397
      %v3440 = vpack.c.b16 %v3400, %v3399
      %v3441 = vpack.c.b16 %v3402, %v3401
      %v3442 = vpack.c.b16 %v3404, %v3403
      %v3443 = vpack.c.b16 %v3406, %v3405
      %v3444 = vpack.c.b16 %v3408, %v3407
      %v3445 = vpack.c.b16 %v3410, %v3409
      %v3446 = vpack.c.b16 %v3412, %v3411
      %v3447 = vpack.c.b16 %v3414, %v3413
      %v3448 = vpack.c.b16 %v3416, %v3415
      %v3449 = vpack.c.b16 %v3418, %v3417
      %v3450 = vpack.c.b16 %v3420, %v3419
      %v3451 = vpack.c.b16 %v3422, %v3421
      %v3452 = vpack.c.b16 %v3424, %v3423
      %v3453 = vpack.c.b16 %v3426, %v3425
      %v3454 = vpack.c.b16 %v3428, %v3427
      %v3455 = vpack.c.b16 %v3430, %v3429
      %v3456 = vpack.c.b16 %v3432, %v3431
      %3481 = vmatprep.subr.bf16.mxu0 0
      %3482 = vmatpush1.bf16.msra.mxu0 %v3433
      %3483 = vmatprep.subr.bf16.mxu0 0
      %3484 = vmatpush1.bf16.msra.mxu0 %v3434
      %3485 = vmatprep.subr.bf16.mxu0 0
      %3486 = vmatpush1.bf16.msra.mxu0 %v3435
      %3487 = vmatprep.subr.bf16.mxu0 0
      %3488 = vmatpush1.bf16.msra.mxu0 %v3436
      %3489 = vmatprep.subr.bf16.mxu0 0
      %3490 = vmatpush1.bf16.msra.mxu0 %v3437
      %3491 = vmatprep.subr.bf16.mxu0 0
      %3492 = vmatpush1.bf16.msra.mxu0 %v3438
      %3493 = vmatprep.subr.bf16.mxu0 0
      %3494 = vmatpush1.bf16.msra.mxu0 %v3439
      %3495 = vmatprep.subr.bf16.mxu0 0
      %3496 = vmatpush1.bf16.msra.mxu0 %v3440
      %3497 = vmatprep.subr.bf16.mxu0 0
      %3498 = vmatpush1.bf16.msra.mxu0 %v3441
      %3499 = vmatprep.subr.bf16.mxu0 0
      %3500 = vmatpush1.bf16.msra.mxu0 %v3442
      %3501 = vmatprep.subr.bf16.mxu0 0
      %3502 = vmatpush1.bf16.msra.mxu0 %v3443
      %3503 = vmatprep.subr.bf16.mxu0 0
      %3504 = vmatpush1.bf16.msra.mxu0 %v3444
      %3505 = vmatprep.subr.bf16.mxu0 0
      %3506 = vmatpush1.bf16.msra.mxu0 %v3445
      %3507 = vmatprep.subr.bf16.mxu0 0
      %3508 = vmatpush1.bf16.msra.mxu0 %v3446
      %3509 = vmatprep.subr.bf16.mxu0 0
      %3510 = vmatpush1.bf16.msra.mxu0 %v3447
      %3511 = vmatprep.subr.bf16.mxu0 0
      %3512 = vmatpush1.bf16.msra.mxu0 %v3448
      %3513 = vmatprep.mubr.bf16.mxu0 %v2939
      %3514 = vmatmul.mubr.bf16.gmra.mrb[0].mxu0 %v2838
      %v3515 = vpop.f32.mrb[0].mxu0
      %v3516 = vadd.f32 0.0, %v3515
      %v3517 = vpop.f32.mrb[0].mxu0
      %v3518 = vpop.f32.mrb[0].mxu0
      %v3519 = vadd.f32 0.0, %v3518
      %v3520 = vpop.f32.mrb[0].mxu0
      %3521 = vmatprep.mubr.bf16.mxu0 %v2951
      %3522 = vmatmul.mubr.bf16.gmra.mrb[0].mxu0 %v2839
      %v3523 = vpop.f32.mrb[0].mxu0
      %v3524 = vadd.f32 0.0, %v3523
      %v3525 = vpop.f32.mrb[0].mxu0
      %v3526 = vpop.f32.mrb[0].mxu0
      %v3527 = vadd.f32 0.0, %v3526
      %v3528 = vpop.f32.mrb[0].mxu0
      %3529 = vmatprep.mubr.bf16.mxu0 %v2963
      %3530 = vmatmul.mubr.bf16.gmra.mrb[0].mxu0 %v2840
      %v3531 = vpop.f32.mrb[0].mxu0
      %v3532 = vadd.f32 0.0, %v3531
      %v3533 = vpop.f32.mrb[0].mxu0
      %v3534 = vpop.f32.mrb[0].mxu0
      %v3535 = vadd.f32 0.0, %v3534
      %v3536 = vpop.f32.mrb[0].mxu0
      %3537 = vmatprep.mubr.bf16.mxu0 %v2975
      %3538 = vmatmul.mubr.bf16.gmra.mrb[0].mxu0 %v2841
      %v3539 = vpop.f32.mrb[0].mxu0
      %v3540 = vadd.f32 0.0, %v3539
      %v3541 = vpop.f32.mrb[0].mxu0
      %v3542 = vpop.f32.mrb[0].mxu0
      %v3543 = vadd.f32 0.0, %v3542
      %v3544 = vpop.f32.mrb[0].mxu0
      %3545 = vmatprep.mubr.bf16.mxu0 %v2987
      %3546 = vmatmul.mubr.bf16.gmra.mrb[0].mxu0 %v2842
      %v3547 = vpop.f32.mrb[0].mxu0
      %v3548 = vadd.f32 0.0, %v3547
      %v3549 = vpop.f32.mrb[0].mxu0
      %v3550 = vpop.f32.mrb[0].mxu0
      %v3551 = vadd.f32 0.0, %v3550
      %v3552 = vpop.f32.mrb[0].mxu0
      %3553 = vmatprep.mubr.bf16.mxu0 %v2999
      %3554 = vmatmul.mubr.bf16.gmra.mrb[0].mxu0 %v2843
      %v3555 = vpop.f32.mrb[0].mxu0
      %v3556 = vadd.f32 0.0, %v3555
      %v3557 = vpop.f32.mrb[0].mxu0
      %v3558 = vpop.f32.mrb[0].mxu0
      %v3559 = vadd.f32 0.0, %v3558
      %v3560 = vpop.f32.mrb[0].mxu0
      %3561 = vmatprep.mubr.bf16.mxu0 %v3011
      %3562 = vmatmul.mubr.bf16.gmra.mrb[0].mxu0 %v2844
      %v3563 = vpop.f32.mrb[0].mxu0
      %v3564 = vadd.f32 0.0, %v3563
      %v3565 = vpop.f32.mrb[0].mxu0
      %v3566 = vpop.f32.mrb[0].mxu0
      %v3567 = vadd.f32 0.0, %v3566
      %v3568 = vpop.f32.mrb[0].mxu0
      %3569 = vmatprep.mubr.bf16.mxu0 %v3023
      %3570 = vmatmul.mubr.bf16.gmra.mrb[0].mxu0 %v2845
      %v3571 = vpop.f32.mrb[0].mxu0
      %v3572 = vadd.f32 0.0, %v3571
      %v3573 = vpop.f32.mrb[0].mxu0
      %v3574 = vpop.f32.mrb[0].mxu0
      %v3575 = vadd.f32 0.0, %v3574
      %v3576 = vpop.f32.mrb[0].mxu0
      %3577 = vmatprep.mubr.bf16.mxu0 %v3035
      %3578 = vmatmul.mubr.bf16.gmra.mrb[0].mxu0 %v2846
      %v3579 = vpop.f32.mrb[0].mxu0
      %v3580 = vadd.f32 0.0, %v3579
      %v3581 = vpop.f32.mrb[0].mxu0
      %v3582 = vpop.f32.mrb[0].mxu0
      %v3583 = vadd.f32 0.0, %v3582
      %v3584 = vpop.f32.mrb[0].mxu0
      %3585 = vmatprep.mubr.bf16.mxu0 %v3047
      %3586 = vmatmul.mubr.bf16.gmra.mrb[0].mxu0 %v2847
      %v3587 = vpop.f32.mrb[0].mxu0
      %v3588 = vadd.f32 0.0, %v3587
      %v3589 = vpop.f32.mrb[0].mxu0
      %v3590 = vpop.f32.mrb[0].mxu0
      %v3591 = vadd.f32 0.0, %v3590
      %v3592 = vpop.f32.mrb[0].mxu0
      %3593 = vmatprep.mubr.bf16.mxu0 %v3059
      %3594 = vmatmul.mubr.bf16.gmra.mrb[0].mxu0 %v2848
      %v3595 = vpop.f32.mrb[0].mxu0
      %v3596 = vadd.f32 0.0, %v3595
      %v3597 = vpop.f32.mrb[0].mxu0
      %v3598 = vpop.f32.mrb[0].mxu0
      %v3599 = vadd.f32 0.0, %v3598
      %v3600 = vpop.f32.mrb[0].mxu0
      %3601 = vmatprep.mubr.bf16.mxu0 %v3071
      %3602 = vmatmul.mubr.bf16.gmra.mrb[0].mxu0 %v2849
      %v3603 = vpop.f32.mrb[0].mxu0
      %v3604 = vadd.f32 0.0, %v3603
      %v3605 = vpop.f32.mrb[0].mxu0
      %v3606 = vpop.f32.mrb[0].mxu0
      %v3607 = vadd.f32 0.0, %v3606
      %v3608 = vpop.f32.mrb[0].mxu0
      %3609 = vmatprep.mubr.bf16.mxu0 %v3083
      %3610 = vmatmul.mubr.bf16.gmra.mrb[0].mxu0 %v2850
      %v3611 = vpop.f32.mrb[0].mxu0
      %v3612 = vadd.f32 0.0, %v3611
      %v3613 = vpop.f32.mrb[0].mxu0
      %v3614 = vpop.f32.mrb[0].mxu0
      %v3615 = vadd.f32 0.0, %v3614
      %v3616 = vpop.f32.mrb[0].mxu0
      %3617 = vmatprep.mubr.bf16.mxu0 %v3095
      %3618 = vmatmul.mubr.bf16.gmra.mrb[0].mxu0 %v2851
      %v3619 = vpop.f32.mrb[0].mxu0
      %v3620 = vadd.f32 0.0, %v3619
      %v3621 = vpop.f32.mrb[0].mxu0
      %v3622 = vpop.f32.mrb[0].mxu0
      %v3623 = vadd.f32 0.0, %v3622
      %v3624 = vpop.f32.mrb[0].mxu0
      %3625 = vmatprep.mubr.bf16.mxu0 %v3107
      %3626 = vmatmul.mubr.bf16.gmra.mrb[0].mxu0 %v2852
      %v3627 = vpop.f32.mrb[0].mxu0
      %v3628 = vadd.f32 0.0, %v3627
      %v3629 = vpop.f32.mrb[0].mxu0
      %v3630 = vpop.f32.mrb[0].mxu0
      %v3631 = vadd.f32 0.0, %v3630
      %v3632 = vpop.f32.mrb[0].mxu0
      %3633 = vmatprep.mubr.bf16.mxu0 %v3119
      %3634 = vmatmul.mubr.bf16.gmra.mrb[0].mxu0 %v2853
      %v3635 = vpop.f32.mrb[0].mxu0
      %v3636 = vadd.f32 0.0, %v3635
      %v3637 = vpop.f32.mrb[0].mxu0
      %v3638 = vpop.f32.mrb[0].mxu0
      %v3639 = vadd.f32 0.0, %v3638
      %v3640 = vpop.f32.mrb[0].mxu0
      %3641 = vmatprep.mubr.bf16.mxu0 %v3131
      %3642 = vmatmul.mubr.bf16.gmra.mrb[0].mxu0 %v2854
      %v3643 = vpop.f32.mrb[0].mxu0
      %v3644 = vadd.f32 0.0, %v3643
      %v3645 = vpop.f32.mrb[0].mxu0
      %v3646 = vpop.f32.mrb[0].mxu0
      %v3647 = vadd.f32 0.0, %v3646
      %v3648 = vpop.f32.mrb[0].mxu0
      %3649 = vmatprep.mubr.bf16.mxu0 %v3143
      %3650 = vmatmul.mubr.bf16.gmra.mrb[0].mxu0 %v2855
      %v3651 = vpop.f32.mrb[0].mxu0
      %v3652 = vadd.f32 0.0, %v3651
      %v3653 = vpop.f32.mrb[0].mxu0
      %v3654 = vpop.f32.mrb[0].mxu0
      %v3655 = vadd.f32 0.0, %v3654
      %v3656 = vpop.f32.mrb[0].mxu0
      %3657 = vdwg.mxu0
      %3658 = vmatprep.subr.bf16.mxu0 0
      %3659 = vmatpush1.bf16.msra.mxu0 %v3449
      %3660 = vmatprep.subr.bf16.mxu0 0
      %3661 = vmatpush1.bf16.msra.mxu0 %v3450
      %3662 = vmatprep.subr.bf16.mxu0 0
      %3663 = vmatpush1.bf16.msra.mxu0 %v3451
      %3664 = vmatprep.subr.bf16.mxu0 0
      %3665 = vmatpush1.bf16.msra.mxu0 %v3452
      %3666 = vmatprep.subr.bf16.mxu0 0
      %3667 = vmatpush1.bf16.msra.mxu0 %v3453
      %3668 = vmatprep.subr.bf16.mxu0 0
      %3669 = vmatpush1.bf16.msra.mxu0 %v3454
      %3670 = vmatprep.subr.bf16.mxu0 0
      %3671 = vmatpush1.bf16.msra.mxu0 %v3455
      %3672 = vmatprep.subr.bf16.mxu0 0
      %3673 = vmatpush1.bf16.msra.mxu0 %v3456
      %3674 = vmatprep.subr.bf16.mxu0 0
      %3675 = vmatpush1.bf16.msra.mxu0 0
      %3676 = vmatprep.subr.bf16.mxu0 0
      %3677 = vmatpush1.bf16.msra.mxu0 0
      %3678 = vmatprep.subr.bf16.mxu0 0
      %3679 = vmatpush1.bf16.msra.mxu0 0
      %3680 = vmatprep.subr.bf16.mxu0 0
      %3681 = vmatpush1.bf16.msra.mxu0 0
      %3682 = vmatprep.subr.bf16.mxu0 0
      %3683 = vmatpush1.bf16.msra.mxu0 0
      %3684 = vmatprep.subr.bf16.mxu0 0
      %3685 = vmatpush1.bf16.msra.mxu0 0
      %3686 = vmatprep.subr.bf16.mxu0 0
      %3687 = vmatpush1.bf16.msra.mxu0 0
      %3688 = vmatprep.subr.bf16.mxu0 0
      %3689 = vmatpush1.bf16.msra.mxu0 0
      %3690 = vmatprep.mubr.bf16.mxu0 0
      %3691 = vmatmul.mubr.bf16.gmra.mrb[0].mxu0 %v3218
      %v3692 = vpop.f32.mrb[0].mxu0
      %v3693 = vadd.f32 %v3516, %v3692
      %v3694 = vpop.f32.mrb[0].mxu0
      %v3695 = vpop.f32.mrb[0].mxu0
      %v3696 = vadd.f32 %v3519, %v3695
      %v3697 = vpop.f32.mrb[0].mxu0
      %3698 = vmatprep.mubr.bf16.mxu0 0
      %3699 = vmatmul.mubr.bf16.gmra.mrb[0].mxu0 %v3221
      %v3700 = vpop.f32.mrb[0].mxu0
      %v3701 = vadd.f32 %v3524, %v3700
      %v3702 = vpop.f32.mrb[0].mxu0
      %v3703 = vpop.f32.mrb[0].mxu0
      %v3704 = vadd.f32 %v3527, %v3703
      %v3705 = vpop.f32.mrb[0].mxu0
      %3706 = vmatprep.mubr.bf16.mxu0 0
      %3707 = vmatmul.mubr.bf16.gmra.mrb[0].mxu0 %v3224
      %v3708 = vpop.f32.mrb[0].mxu0
      %v3709 = vadd.f32 %v3532, %v3708
      %v3710 = vpop.f32.mrb[0].mxu0
      %v3711 = vpop.f32.mrb[0].mxu0
      %v3712 = vadd.f32 %v3535, %v3711
      %v3713 = vpop.f32.mrb[0].mxu0
      %3714 = vmatprep.mubr.bf16.mxu0 0
      %3715 = vmatmul.mubr.bf16.gmra.mrb[0].mxu0 %v3227
      %v3716 = vpop.f32.mrb[0].mxu0
      %v3717 = vadd.f32 %v3540, %v3716
      %v3718 = vpop.f32.mrb[0].mxu0
      %v3719 = vpop.f32.mrb[0].mxu0
      %v3720 = vadd.f32 %v3543, %v3719
      %v3721 = vpop.f32.mrb[0].mxu0
      %3722 = vmatprep.mubr.bf16.mxu0 0
      %3723 = vmatmul.mubr.bf16.gmra.mrb[0].mxu0 %v3230
      %v3724 = vpop.f32.mrb[0].mxu0
      %v3725 = vadd.f32 %v3548, %v3724
      %v3726 = vpop.f32.mrb[0].mxu0
      %v3727 = vpop.f32.mrb[0].mxu0
      %v3728 = vadd.f32 %v3551, %v3727
      %v3729 = vpop.f32.mrb[0].mxu0
      %3730 = vmatprep.mubr.bf16.mxu0 0
      %3731 = vmatmul.mubr.bf16.gmra.mrb[0].mxu0 %v3233
      %v3732 = vpop.f32.mrb[0].mxu0
      %v3733 = vadd.f32 %v3556, %v3732
      %v3734 = vpop.f32.mrb[0].mxu0
      %v3735 = vpop.f32.mrb[0].mxu0
      %v3736 = vadd.f32 %v3559, %v3735
      %v3737 = vpop.f32.mrb[0].mxu0
      %3738 = vmatprep.mubr.bf16.mxu0 0
      %3739 = vmatmul.mubr.bf16.gmra.mrb[0].mxu0 %v3236
      %v3740 = vpop.f32.mrb[0].mxu0
      %v3741 = vadd.f32 %v3564, %v3740
      %v3742 = vpop.f32.mrb[0].mxu0
      %v3743 = vpop.f32.mrb[0].mxu0
      %v3744 = vadd.f32 %v3567, %v3743
      %v3745 = vpop.f32.mrb[0].mxu0
      %3746 = vmatprep.mubr.bf16.mxu0 0
      %3747 = vmatmul.mubr.bf16.gmra.mrb[0].mxu0 %v3239
      %v3748 = vpop.f32.mrb[0].mxu0
      %v3749 = vadd.f32 %v3572, %v3748
      %v3750 = vpop.f32.mrb[0].mxu0
      %v3751 = vpop.f32.mrb[0].mxu0
      %v3752 = vadd.f32 %v3575, %v3751
      %v3753 = vpop.f32.mrb[0].mxu0
      %3754 = vmatprep.mubr.bf16.mxu0 0
      %3755 = vmatmul.mubr.bf16.gmra.mrb[0].mxu0 %v3242
      %v3756 = vpop.f32.mrb[0].mxu0
      %v3757 = vadd.f32 %v3580, %v3756
      %v3758 = vpop.f32.mrb[0].mxu0
      %v3759 = vpop.f32.mrb[0].mxu0
      %v3760 = vadd.f32 %v3583, %v3759
      %v3761 = vpop.f32.mrb[0].mxu0
      %3762 = vmatprep.mubr.bf16.mxu0 0
      %3763 = vmatmul.mubr.bf16.gmra.mrb[0].mxu0 %v3245
      %v3764 = vpop.f32.mrb[0].mxu0
      %v3765 = vadd.f32 %v3588, %v3764
      %v3766 = vpop.f32.mrb[0].mxu0
      %v3767 = vpop.f32.mrb[0].mxu0
      %v3768 = vadd.f32 %v3591, %v3767
      %v3769 = vpop.f32.mrb[0].mxu0
      %3770 = vmatprep.mubr.bf16.mxu0 0
      %3771 = vmatmul.mubr.bf16.gmra.mrb[0].mxu0 %v3248
      %v3772 = vpop.f32.mrb[0].mxu0
      %v3773 = vadd.f32 %v3596, %v3772
      %v3774 = vpop.f32.mrb[0].mxu0
      %v3775 = vpop.f32.mrb[0].mxu0
      %v3776 = vadd.f32 %v3599, %v3775
      %v3777 = vpop.f32.mrb[0].mxu0
      %3778 = vmatprep.mubr.bf16.mxu0 0
      %3779 = vmatmul.mubr.bf16.gmra.mrb[0].mxu0 %v3251
      %v3780 = vpop.f32.mrb[0].mxu0
      %v3781 = vadd.f32 %v3604, %v3780
      %v3782 = vpop.f32.mrb[0].mxu0
      %v3783 = vpop.f32.mrb[0].mxu0
      %v3784 = vadd.f32 %v3607, %v3783
      %v3785 = vpop.f32.mrb[0].mxu0
      %3786 = vmatprep.mubr.bf16.mxu0 0
      %3787 = vmatmul.mubr.bf16.gmra.mrb[0].mxu0 %v3254
      %v3788 = vpop.f32.mrb[0].mxu0
      %v3789 = vadd.f32 %v3612, %v3788
      %v3790 = vpop.f32.mrb[0].mxu0
      %v3791 = vpop.f32.mrb[0].mxu0
      %v3792 = vadd.f32 %v3615, %v3791
      %v3793 = vpop.f32.mrb[0].mxu0
      %3794 = vmatprep.mubr.bf16.mxu0 0
      %3795 = vmatmul.mubr.bf16.gmra.mrb[0].mxu0 %v3257
      %v3796 = vpop.f32.mrb[0].mxu0
      %v3797 = vadd.f32 %v3620, %v3796
      %v3798 = vpop.f32.mrb[0].mxu0
      %v3799 = vpop.f32.mrb[0].mxu0
      %v3800 = vadd.f32 %v3623, %v3799
      %v3801 = vpop.f32.mrb[0].mxu0
      %3802 = vmatprep.mubr.bf16.mxu0 0
      %3803 = vmatmul.mubr.bf16.gmra.mrb[0].mxu0 %v3260
      %v3804 = vpop.f32.mrb[0].mxu0
      %v3805 = vadd.f32 %v3628, %v3804
      %v3806 = vpop.f32.mrb[0].mxu0
      %v3807 = vpop.f32.mrb[0].mxu0
      %v3808 = vadd.f32 %v3631, %v3807
      %v3809 = vpop.f32.mrb[0].mxu0
      %3810 = vmatprep.mubr.bf16.mxu0 0
      %3811 = vmatmul.mubr.bf16.gmra.mrb[0].mxu0 %v3263
      %v3812 = vpop.f32.mrb[0].mxu0
      %v3813 = vadd.f32 %v3636, %v3812
      %v3814 = vpop.f32.mrb[0].mxu0
      %v3815 = vpop.f32.mrb[0].mxu0
      %v3816 = vadd.f32 %v3639, %v3815
      %v3817 = vpop.f32.mrb[0].mxu0
      %3818 = vmatprep.mubr.bf16.mxu0 0
      %3819 = vmatmul.mubr.bf16.gmra.mrb[0].mxu0 %v3266
      %v3820 = vpop.f32.mrb[0].mxu0
      %v3821 = vadd.f32 %v3644, %v3820
      %v3822 = vpop.f32.mrb[0].mxu0
      %v3823 = vpop.f32.mrb[0].mxu0
      %v3824 = vadd.f32 %v3647, %v3823
      %v3825 = vpop.f32.mrb[0].mxu0
      %3826 = vmatprep.mubr.bf16.mxu0 0
      %3827 = vmatmul.mubr.bf16.gmra.mrb[0].mxu0 %v3269
      %v3828 = vpop.f32.mrb[0].mxu0
      %v3829 = vadd.f32 %v3652, %v3828
      %v3830 = vpop.f32.mrb[0].mxu0
      %v3831 = vpop.f32.mrb[0].mxu0
      %v3832 = vadd.f32 %v3655, %v3831
      %v3833 = vpop.f32.mrb[0].mxu0
      %3834 = vdwg.mxu0
      %v3835 = vld [vmem:[#allocation3] sm:$0xff]
      %v3836 = vld [vmem:[#allocation3 + $0x8] sm:$0xff]
      %v3837 = vld [vmem:[#allocation3 + $0x10] sm:$0xff]
      %v3838 = vld [vmem:[#allocation3 + $0x18] sm:$0xff]
      %v3839 = vld [vmem:[#allocation3 + $0x20] sm:$0xff]
      %v3840 = vld [vmem:[#allocation3 + $0x28] sm:$0xff]
      %v3841 = vld [vmem:[#allocation3 + $0x30] sm:$0xff]
      %v3842 = vld [vmem:[#allocation3 + $0x38] sm:$0xff]
      %v3843 = vld [vmem:[#allocation3 + $0x40] sm:$0xff]
      %v3844 = vld [vmem:[#allocation3 + $0x48] sm:$0xff]
      %v3845 = vld [vmem:[#allocation3 + $0x50] sm:$0xff]
      %v3846 = vld [vmem:[#allocation3 + $0x58] sm:$0xff]
      %v3847 = vld [vmem:[#allocation3 + $0x60] sm:$0xff]
      %v3848 = vld [vmem:[#allocation3 + $0x68] sm:$0xff]
      %v3849 = vld [vmem:[#allocation3 + $0x70] sm:$0xff]
      %v3850 = vld [vmem:[#allocation3 + $0x78] sm:$0xff]
      %v3851 = vld [vmem:[#allocation3 + $0x80] sm:$0xff]
      %v3852 = vld [vmem:[#allocation3 + $0x88] sm:$0xff]
      %v3853 = vld [vmem:[#allocation3 + $0x90] sm:$0xff]
      %v3854 = vld [vmem:[#allocation3 + $0x98] sm:$0xff]
      %v3855 = vld [vmem:[#allocation3 + $0xa0] sm:$0xff]
      %v3856 = vld [vmem:[#allocation3 + $0xa8] sm:$0xff]
      %v3857 = vld [vmem:[#allocation3 + $0xb0] sm:$0xff]
      %v3858 = vld [vmem:[#allocation3 + $0xb8] sm:$0xff]
      %v3859 = vld [vmem:[#allocation3 + $0xc0] sm:$0xff]
      %v3860 = vld [vmem:[#allocation3 + $0xc8] sm:$0xff]
      %v3861 = vld [vmem:[#allocation3 + $0xd0] sm:$0xff]
      %v3862 = vld [vmem:[#allocation3 + $0xd8] sm:$0xff]
      %v3863 = vld [vmem:[#allocation3 + $0xe0] sm:$0xff]
      %v3864 = vld [vmem:[#allocation3 + $0xe8] sm:$0xff]
      %v3865 = vld [vmem:[#allocation3 + $0xf0] sm:$0xff]
      %v3866 = vld [vmem:[#allocation3 + $0xf8] sm:$0xff]
      %v3867 = vld [vmem:[#allocation3 + $0x100] sm:$0xff]
      %v3868 = vld [vmem:[#allocation3 + $0x108] sm:$0xff]
      %v3869 = vld [vmem:[#allocation3 + $0x110] sm:$0xff]
      %v3870 = vld [vmem:[#allocation3 + $0x118] sm:$0xff]
      %v3871 = vadd.f32 %v3835, %v3693
      %v3872 = vadd.f32 %v3836, %v3696
      %v3873 = vadd.f32 %v3837, %v3701
      %v3874 = vadd.f32 %v3838, %v3704
      %v3875 = vadd.f32 %v3839, %v3709
      %v3876 = vadd.f32 %v3840, %v3712
      %v3877 = vadd.f32 %v3841, %v3717
      %v3878 = vadd.f32 %v3842, %v3720
      %v3879 = vadd.f32 %v3843, %v3725
      %v3880 = vadd.f32 %v3844, %v3728
      %v3881 = vadd.f32 %v3845, %v3733
      %v3882 = vadd.f32 %v3846, %v3736
      %v3883 = vadd.f32 %v3847, %v3741
      %v3884 = vadd.f32 %v3848, %v3744
      %v3885 = vadd.f32 %v3849, %v3749
      %v3886 = vadd.f32 %v3850, %v3752
      %v3887 = vadd.f32 %v3851, %v3757
      %v3888 = vadd.f32 %v3852, %v3760
      %v3889 = vadd.f32 %v3853, %v3765
      %v3890 = vadd.f32 %v3854, %v3768
      %v3891 = vadd.f32 %v3855, %v3773
      %v3892 = vadd.f32 %v3856, %v3776
      %v3893 = vadd.f32 %v3857, %v3781
      %v3894 = vadd.f32 %v3858, %v3784
      %v3895 = vadd.f32 %v3859, %v3789
      %v3896 = vadd.f32 %v3860, %v3792
      %v3897 = vadd.f32 %v3861, %v3797
      %v3898 = vadd.f32 %v3862, %v3800
      %v3899 = vadd.f32 %v3863, %v3805
      %v3900 = vadd.f32 %v3864, %v3808
      %v3901 = vadd.f32 %v3865, %v3813
      %v3902 = vadd.f32 %v3866, %v3816
      %v3903 = vadd.f32 %v3867, %v3821
      %v3904 = vadd.f32 %v3868, %v3824
      %v3905 = vadd.f32 %v3869, %v3829
      %v3906 = vadd.f32 %v3870, %v3832
      %3907 = vst [vmem:[#allocation3] sm:$0xff] %v3871
      %3908 = vst [vmem:[#allocation3 + $0x8] sm:$0xff] %v3872
      %3909 = vst [vmem:[#allocation3 + $0x10] sm:$0xff] %v3873
      %3910 = vst [vmem:[#allocation3 + $0x18] sm:$0xff] %v3874
      %3911 = vst [vmem:[#allocation3 + $0x20] sm:$0xff] %v3875
      %3912 = vst [vmem:[#allocation3 + $0x28] sm:$0xff] %v3876
      %3913 = vst [vmem:[#allocation3 + $0x30] sm:$0xff] %v3877
      %3914 = vst [vmem:[#allocation3 + $0x38] sm:$0xff] %v3878
      %3915 = vst [vmem:[#allocation3 + $0x40] sm:$0xff] %v3879
      %3916 = vst [vmem:[#allocation3 + $0x48] sm:$0xff] %v3880
      %3917 = vst [vmem:[#allocation3 + $0x50] sm:$0xff] %v3881
      %3918 = vst [vmem:[#allocation3 + $0x58] sm:$0xff] %v3882
      %3919 = vst [vmem:[#allocation3 + $0x60] sm:$0xff] %v3883
      %3920 = vst [vmem:[#allocation3 + $0x68] sm:$0xff] %v3884
      %3921 = vst [vmem:[#allocation3 + $0x70] sm:$0xff] %v3885
      %3922 = vst [vmem:[#allocation3 + $0x78] sm:$0xff] %v3886
      %3923 = vst [vmem:[#allocation3 + $0x80] sm:$0xff] %v3887
      %3924 = vst [vmem:[#allocation3 + $0x88] sm:$0xff] %v3888
      %3925 = vst [vmem:[#allocation3 + $0x90] sm:$0xff] %v3889
      %3926 = vst [vmem:[#allocation3 + $0x98] sm:$0xff] %v3890
      %3927 = vst [vmem:[#allocation3 + $0xa0] sm:$0xff] %v3891
      %3928 = vst [vmem:[#allocation3 + $0xa8] sm:$0xff] %v3892
      %3929 = vst [vmem:[#allocation3 + $0xb0] sm:$0xff] %v3893
      %3930 = vst [vmem:[#allocation3 + $0xb8] sm:$0xff] %v3894
      %3931 = vst [vmem:[#allocation3 + $0xc0] sm:$0xff] %v3895
      %3932 = vst [vmem:[#allocation3 + $0xc8] sm:$0xff] %v3896
      %3933 = vst [vmem:[#allocation3 + $0xd0] sm:$0xff] %v3897
      %3934 = vst [vmem:[#allocation3 + $0xd8] sm:$0xff] %v3898
      %3935 = vst [vmem:[#allocation3 + $0xe0] sm:$0xff] %v3899
      %3936 = vst [vmem:[#allocation3 + $0xe8] sm:$0xff] %v3900
      %3937 = vst [vmem:[#allocation3 + $0xf0] sm:$0xff] %v3901
      %3938 = vst [vmem:[#allocation3 + $0xf8] sm:$0xff] %v3902
      %3939 = vst [vmem:[#allocation3 + $0x100] sm:$0xff] %v3903
      %3940 = vst [vmem:[#allocation3 + $0x108] sm:$0xff] %v3904
      %3941 = vst [vmem:[#allocation3 + $0x110] sm:$0xff] %v3905
      %3942 = vst [vmem:[#allocation3 + $0x118] sm:$0xff] %v3906
      %v3943 = vld [vmem:[#allocation3] sm:$0xff]
      %v3944 = vld [vmem:[#allocation3 + $0x8] sm:$0xff]
      %v3945 = vld [vmem:[#allocation3 + $0x10] sm:$0xff]
      %v3946 = vld [vmem:[#allocation3 + $0x18] sm:$0xff]
      %v3947 = vld [vmem:[#allocation3 + $0x20] sm:$0xff]
      %v3948 = vld [vmem:[#allocation3 + $0x28] sm:$0xff]
      %v3949 = vld [vmem:[#allocation3 + $0x30] sm:$0xff]
      %v3950 = vld [vmem:[#allocation3 + $0x38] sm:$0xff]
      %v3951 = vld [vmem:[#allocation3 + $0x40] sm:$0xff]
      %v3952 = vld [vmem:[#allocation3 + $0x48] sm:$0xff]
      %v3953 = vld [vmem:[#allocation3 + $0x50] sm:$0xff]
      %v3954 = vld [vmem:[#allocation3 + $0x58] sm:$0xff]
      %v3955 = vld [vmem:[#allocation3 + $0x60] sm:$0xff]
      %v3956 = vld [vmem:[#allocation3 + $0x68] sm:$0xff]
      %v3957 = vld [vmem:[#allocation3 + $0x70] sm:$0xff]
      %v3958 = vld [vmem:[#allocation3 + $0x78] sm:$0xff]
      %v3959 = vld [vmem:[#allocation3 + $0x80] sm:$0xff]
      %v3960 = vld [vmem:[#allocation3 + $0x88] sm:$0xff]
      %v3961 = vld [vmem:[#allocation3 + $0x90] sm:$0xff]
      %v3962 = vld [vmem:[#allocation3 + $0x98] sm:$0xff]
      %v3963 = vld [vmem:[#allocation3 + $0xa0] sm:$0xff]
      %v3964 = vld [vmem:[#allocation3 + $0xa8] sm:$0xff]
      %v3965 = vld [vmem:[#allocation3 + $0xb0] sm:$0xff]
      %v3966 = vld [vmem:[#allocation3 + $0xb8] sm:$0xff]
      %v3967 = vld [vmem:[#allocation3 + $0xc0] sm:$0xff]
      %v3968 = vld [vmem:[#allocation3 + $0xc8] sm:$0xff]
      %v3969 = vld [vmem:[#allocation3 + $0xd0] sm:$0xff]
      %v3970 = vld [vmem:[#allocation3 + $0xd8] sm:$0xff]
      %v3971 = vld [vmem:[#allocation3 + $0xe0] sm:$0xff]
      %v3972 = vld [vmem:[#allocation3 + $0xe8] sm:$0xff]
      %v3973 = vld [vmem:[#allocation3 + $0xf0] sm:$0xff]
      %v3974 = vld [vmem:[#allocation3 + $0xf8] sm:$0xff]
      %v3975 = vld [vmem:[#allocation3 + $0x100] sm:$0xff]
      %v3976 = vld [vmem:[#allocation3 + $0x108] sm:$0xff]
      %v3977 = vld [vmem:[#allocation3 + $0x110] sm:$0xff]
      %v3978 = vld [vmem:[#allocation3 + $0x118] sm:$0xff]
      %v3979 = vld [vmem:[%s2] sm:$0x1]
      %v3981 = vlaneseq
      %v3982 = vshrl.u32 %v3981, 7
      %v3983 = vsub.s32 0, %v3982
      %v3984 = vrot.slane %v3979, %v3983
      %v3986 = vadd.f32 %v3943, %v3984
      %v3987 = vadd.f32 %v3944, %v3984
      %v3988 = vadd.f32 %v3945, %v3984
      %v3989 = vadd.f32 %v3946, %v3984
      %v3990 = vadd.f32 %v3947, %v3984
      %v3991 = vadd.f32 %v3948, %v3984
      %v3992 = vadd.f32 %v3949, %v3984
      %v3993 = vadd.f32 %v3950, %v3984
      %v3994 = vadd.f32 %v3951, %v3984
      %v3995 = vadd.f32 %v3952, %v3984
      %v3996 = vadd.f32 %v3953, %v3984
      %v3997 = vadd.f32 %v3954, %v3984
      %v3998 = vadd.f32 %v3955, %v3984
      %v3999 = vadd.f32 %v3956, %v3984
      %v4000 = vadd.f32 %v3957, %v3984
      %v4001 = vadd.f32 %v3958, %v3984
      %v4002 = vadd.f32 %v3959, %v3984
      %v4003 = vadd.f32 %v3960, %v3984
      %v4004 = vadd.f32 %v3961, %v3984
      %v4005 = vadd.f32 %v3962, %v3984
      %v4006 = vadd.f32 %v3963, %v3984
      %v4007 = vadd.f32 %v3964, %v3984
      %v4008 = vadd.f32 %v3965, %v3984
      %v4009 = vadd.f32 %v3966, %v3984
      %v4010 = vadd.f32 %v3967, %v3984
      %v4011 = vadd.f32 %v3968, %v3984
      %v4012 = vadd.f32 %v3969, %v3984
      %v4013 = vadd.f32 %v3970, %v3984
      %v4014 = vadd.f32 %v3971, %v3984
      %v4015 = vadd.f32 %v3972, %v3984
      %v4016 = vadd.f32 %v3973, %v3984
      %v4017 = vadd.f32 %v3974, %v3984
      %v4018 = vadd.f32 %v3975, %v3984
      %v4019 = vadd.f32 %v3976, %v3984
      %v4020 = vadd.f32 %v3977, %v3984
      %v4021 = vadd.f32 %v3978, %v3984
      %v4022 = vmax.f32 %v3986, 0.0
      %v4023 = vmax.f32 %v3987, 0.0
      %v4024 = vmax.f32 %v3988, 0.0
      %v4025 = vmax.f32 %v3989, 0.0
      %v4026 = vmax.f32 %v3990, 0.0
      %v4027 = vmax.f32 %v3991, 0.0
      %v4028 = vmax.f32 %v3992, 0.0
      %v4029 = vmax.f32 %v3993, 0.0
      %v4030 = vmax.f32 %v3994, 0.0
      %v4031 = vmax.f32 %v3995, 0.0
      %v4032 = vmax.f32 %v3996, 0.0
      %v4033 = vmax.f32 %v3997, 0.0
      %v4034 = vmax.f32 %v3998, 0.0
      %v4035 = vmax.f32 %v3999, 0.0
      %v4036 = vmax.f32 %v4000, 0.0
      %v4037 = vmax.f32 %v4001, 0.0
      %v4038 = vmax.f32 %v4002, 0.0
      %v4039 = vmax.f32 %v4003, 0.0
      %v4040 = vmax.f32 %v4004, 0.0
      %v4041 = vmax.f32 %v4005, 0.0
      %v4042 = vmax.f32 %v4006, 0.0
      %v4043 = vmax.f32 %v4007, 0.0
      %v4044 = vmax.f32 %v4008, 0.0
      %v4045 = vmax.f32 %v4009, 0.0
      %v4046 = vmax.f32 %v4010, 0.0
      %v4047 = vmax.f32 %v4011, 0.0
      %v4048 = vmax.f32 %v4012, 0.0
      %v4049 = vmax.f32 %v4013, 0.0
      %v4050 = vmax.f32 %v4014, 0.0
      %v4051 = vmax.f32 %v4015, 0.0
      %v4052 = vmax.f32 %v4016, 0.0
      %v4053 = vmax.f32 %v4017, 0.0
      %v4054 = vmax.f32 %v4018, 0.0
      %v4055 = vmax.f32 %v4019, 0.0
      %v4056 = vmax.f32 %v4020, 0.0
      %v4057 = vmax.f32 %v4021, 0.0
      %v4058 = vpack.c.bf16 %v4023, %v4022
      %v4059 = vpack.c.bf16 %v4025, %v4024
      %v4060 = vpack.c.bf16 %v4027, %v4026
      %v4061 = vpack.c.bf16 %v4029, %v4028
      %v4062 = vpack.c.bf16 %v4031, %v4030
      %v4063 = vpack.c.bf16 %v4033, %v4032
      %v4064 = vpack.c.bf16 %v4035, %v4034
      %v4065 = vpack.c.bf16 %v4037, %v4036
      %v4066 = vpack.c.bf16 %v4039, %v4038
      %v4067 = vpack.c.bf16 %v4041, %v4040
      %v4068 = vpack.c.bf16 %v4043, %v4042
      %v4069 = vpack.c.bf16 %v4045, %v4044
      %v4070 = vpack.c.bf16 %v4047, %v4046
      %v4071 = vpack.c.bf16 %v4049, %v4048
      %v4072 = vpack.c.bf16 %v4051, %v4050
      %v4073 = vpack.c.bf16 %v4053, %v4052
      %v4074 = vpack.c.bf16 %v4055, %v4054
      %v4075 = vpack.c.bf16 %v4057, %v4056
      %4076 = vst [vmem:[#allocation2] sm:$0xf] 0
      %4077 = vst [vmem:[#allocation2 + $0x4] sm:$0xf] 0
      %4078 = vst [vmem:[#allocation2 + $0x8] sm:$0x1] 0
      %4079 = vst [vmem:[#allocation2 + $0xc] sm:$0xf] 0
      %4080 = vst [vmem:[#allocation2 + $0x10] sm:$0xf] 0
      %4081 = vst [vmem:[#allocation2 + $0x14] sm:$0x1] 0
      %4082 = vst [vmem:[#allocation2 + $0x18] sm:$0xf] 0
      %4083 = vst [vmem:[#allocation2 + $0x1c] sm:$0xf] 0
      %4084 = vst [vmem:[#allocation2 + $0x20] sm:$0x1] 0
      %4085 = vst [vmem:[#allocation2 + $0x24] sm:$0xf] 0
      %4086 = vst [vmem:[#allocation2 + $0x28] sm:$0xf] 0
      %4087 = vst [vmem:[#allocation2 + $0x2c] sm:$0x1] 0
      %4088 = vst [vmem:[#allocation2 + $0x30] sm:$0xf] 0
      %4089 = vst [vmem:[#allocation2 + $0x34] sm:$0xf] 0
      %4090 = vst [vmem:[#allocation2 + $0x38] sm:$0x1] 0
      %4091 = vst [vmem:[#allocation2 + $0x3c] sm:$0xf] 0
      %4092 = vst [vmem:[#allocation2 + $0x40] sm:$0xf] 0
      %4093 = vst [vmem:[#allocation2 + $0x44] sm:$0x1] 0
      %4094 = vst [vmem:[#allocation2 + $0x48] sm:$0xf] 0
      %4095 = vst [vmem:[#allocation2 + $0x4c] sm:$0xf] 0
      %4096 = vst [vmem:[#allocation2 + $0x50] sm:$0x1] 0
      %4097 = vst [vmem:[#allocation2 + $0x54] sm:$0xf] 0
      %4098 = vst [vmem:[#allocation2 + $0x58] sm:$0xf] 0
      %4099 = vst [vmem:[#allocation2 + $0x5c] sm:$0x1] 0
      %4100 = vst [vmem:[#allocation2 + $0x60] sm:$0xf] 0
      %4101 = vst [vmem:[#allocation2 + $0x64] sm:$0xf] 0
      %4102 = vst [vmem:[#allocation2 + $0x68] sm:$0x1] 0
      %4103 = vst [vmem:[#allocation2 + $0x6c] sm:$0xf] 0
      %4104 = vst [vmem:[#allocation2 + $0x70] sm:$0xf] 0
      %4105 = vst [vmem:[#allocation2 + $0x74] sm:$0x1] 0
      %4106 = vst [vmem:[#allocation2 + $0x78] sm:$0xf] 0
      %4107 = vst [vmem:[#allocation2 + $0x7c] sm:$0xf] 0
      %4108 = vst [vmem:[#allocation2 + $0x80] sm:$0x1] 0
      %4109 = vst [vmem:[#allocation2 + $0x84] sm:$0xf] 0
      %4110 = vst [vmem:[#allocation2 + $0x88] sm:$0xf] 0
      %4111 = vst [vmem:[#allocation2 + $0x8c] sm:$0x1] 0
      %4112 = vst [vmem:[#allocation2 + $0x90] sm:$0xf] 0
      %4113 = vst [vmem:[#allocation2 + $0x94] sm:$0xf] 0
      %4114 = vst [vmem:[#allocation2 + $0x98] sm:$0x1] 0
      %4115 = vst [vmem:[#allocation2 + $0x9c] sm:$0xf] 0
      %4116 = vst [vmem:[#allocation2 + $0xa0] sm:$0xf] 0
      %4117 = vst [vmem:[#allocation2 + $0xa4] sm:$0x1] 0
      %4118 = vst [vmem:[#allocation2 + $0xa8] sm:$0xf] 0
      %4119 = vst [vmem:[#allocation2 + $0xac] sm:$0xf] 0
      %4120 = vst [vmem:[#allocation2 + $0xb0] sm:$0x1] 0
      %4121 = vst [vmem:[#allocation2 + $0xb4] sm:$0xf] 0
      %4122 = vst [vmem:[#allocation2 + $0xb8] sm:$0xf] 0
      %4123 = vst [vmem:[#allocation2 + $0xbc] sm:$0x1] 0
      %4124 = vst [vmem:[#allocation2 + $0xc0] sm:$0xf] 0
      %4125 = vst [vmem:[#allocation2 + $0xc4] sm:$0xf] 0
      %4126 = vst [vmem:[#allocation2 + $0xc8] sm:$0x1] 0
      %4127 = vst [vmem:[#allocation2 + $0xcc] sm:$0xf] 0
      %4128 = vst [vmem:[#allocation2 + $0xd0] sm:$0xf] 0
      %4129 = vst [vmem:[#allocation2 + $0xd4] sm:$0x1] 0
      %v4148 = vunpack.c.l.b16 %v4058
      %v4149 = vunpack.c.h.b16 %v4058
      %v4150 = vunpack.c.l.b16 %v4059
      %v4151 = vunpack.c.h.b16 %v4059
      %v4152 = vunpack.c.l.b16 %v4060
      %v4153 = vunpack.c.h.b16 %v4060
      %v4154 = vunpack.c.l.b16 %v4061
      %v4155 = vunpack.c.h.b16 %v4061
      %v4156 = vunpack.c.l.b16 %v4062
      %v4157 = vunpack.c.h.b16 %v4062
      %v4158 = vunpack.c.l.b16 %v4063
      %v4159 = vunpack.c.h.b16 %v4063
      %v4160 = vunpack.c.l.b16 %v4064
      %v4161 = vunpack.c.h.b16 %v4064
      %v4162 = vunpack.c.l.b16 %v4065
      %v4163 = vunpack.c.h.b16 %v4065
      %v4164 = vunpack.c.l.b16 %v4066
      %v4165 = vunpack.c.h.b16 %v4066
      %v4166 = vunpack.c.l.b16 %v4067
      %v4167 = vunpack.c.h.b16 %v4067
      %v4168 = vunpack.c.l.b16 %v4068
      %v4169 = vunpack.c.h.b16 %v4068
      %v4170 = vunpack.c.l.b16 %v4069
      %v4171 = vunpack.c.h.b16 %v4069
      %v4172 = vunpack.c.l.b16 %v4070
      %v4173 = vunpack.c.h.b16 %v4070
      %v4174 = vunpack.c.l.b16 %v4071
      %v4175 = vunpack.c.h.b16 %v4071
      %v4176 = vunpack.c.l.b16 %v4072
      %v4177 = vunpack.c.h.b16 %v4072
      %v4178 = vunpack.c.l.b16 %v4073
      %v4179 = vunpack.c.h.b16 %v4073
      %v4180 = vunpack.c.l.b16 %v4074
      %v4181 = vunpack.c.h.b16 %v4074
      %v4182 = vunpack.c.l.b16 %v4075
      %v4183 = vunpack.c.h.b16 %v4075
      %v4184 = vpack.c.b16 %v4148, %v4148
      %v4185 = vpack.c.b16 %v4149, %v4149
      %v4186 = vpack.c.b16 %v4150, %v4150
      %v4187 = vpack.c.b16 %v4151, %v4151
      %v4188 = vpack.c.b16 %v4152, %v4152
      %v4189 = vpack.c.b16 %v4153, %v4153
      %v4190 = vpack.c.b16 %v4154, %v4154
      %v4191 = vpack.c.b16 %v4155, %v4155
      %v4192 = vpack.c.b16 %v4156, %v4156
      %v4193 = vpack.c.b16 %v4157, %v4157
      %v4194 = vpack.c.b16 %v4158, %v4158
      %v4195 = vpack.c.b16 %v4159, %v4159
      %v4196 = vpack.c.b16 %v4160, %v4160
      %v4197 = vpack.c.b16 %v4161, %v4161
      %v4198 = vpack.c.b16 %v4162, %v4162
      %v4199 = vpack.c.b16 %v4163, %v4163
      %v4200 = vpack.c.b16 %v4164, %v4164
      %v4201 = vpack.c.b16 %v4165, %v4165
      %v4202 = vpack.c.b16 %v4166, %v4166
      %v4203 = vpack.c.b16 %v4167, %v4167
      %v4204 = vpack.c.b16 %v4168, %v4168
      %v4205 = vpack.c.b16 %v4169, %v4169
      %v4206 = vpack.c.b16 %v4170, %v4170
      %v4207 = vpack.c.b16 %v4171, %v4171
      %v4208 = vpack.c.b16 %v4172, %v4172
      %v4209 = vpack.c.b16 %v4173, %v4173
      %v4210 = vpack.c.b16 %v4174, %v4174
      %v4211 = vpack.c.b16 %v4175, %v4175
      %v4212 = vpack.c.b16 %v4176, %v4176
      %v4213 = vpack.c.b16 %v4177, %v4177
      %v4214 = vpack.c.b16 %v4178, %v4178
      %v4215 = vpack.c.b16 %v4179, %v4179
      %v4216 = vpack.c.b16 %v4180, %v4180
      %v4217 = vpack.c.b16 %v4181, %v4181
      %v4218 = vpack.c.b16 %v4182, %v4182
      %v4219 = vpack.c.b16 %v4183, %v4183
      %vm4220 = vsmask.f32 256
      %vm4221 = vsmask.f32 4368
      %vm4222 = vmor %vm4220, %vm4221
      %v4224 = vshrl.u32 %v4184, 16
      %v4226 = vrot.slane %v4224, 7
      %v4227 = vshll.u32 %v4184, 16
      %v4229 = vor.u32 %v4226, %v4227
      %v4230 = vrot.slane %v4226, 4
      %v4232 = vshrl.u32 %v4185, 16
      %v4234 = vrot.slane %v4232, 7
      %v4235 = vshll.u32 %v4185, 16
      %v4237 = vor.u32 %v4234, %v4235
      %v4238 = vsel %vm4222, %v4230, %v4237
      %v4239 = vrot.slane %v4234, 4
      %v4241 = vshrl.u32 %v4186, 16
      %v4243 = vrot.slane %v4241, 7
      %v4244 = vshll.u32 %v4186, 16
      %v4246 = vor.u32 %v4243, %v4244
      %v4247 = vrot.slane %v4243, 4
      %v4249 = vshrl.u32 %v4187, 16
      %v4251 = vrot.slane %v4249, 7
      %v4252 = vshll.u32 %v4187, 16
      %v4254 = vor.u32 %v4251, %v4252
      %v4255 = vsel %vm4222, %v4247, %v4254
      %v4256 = vrot.slane %v4251, 4
      %v4258 = vshrl.u32 %v4188, 16
      %v4260 = vrot.slane %v4258, 7
      %v4261 = vshll.u32 %v4188, 16
      %v4263 = vor.u32 %v4260, %v4261
      %v4264 = vrot.slane %v4260, 4
      %v4266 = vshrl.u32 %v4189, 16
      %v4268 = vrot.slane %v4266, 7
      %v4269 = vshll.u32 %v4189, 16
      %v4271 = vor.u32 %v4268, %v4269
      %v4272 = vsel %vm4222, %v4264, %v4271
      %v4273 = vrot.slane %v4268, 4
      %v4275 = vshrl.u32 %v4190, 16
      %v4277 = vrot.slane %v4275, 7
      %v4278 = vshll.u32 %v4190, 16
      %v4280 = vor.u32 %v4277, %v4278
      %v4281 = vrot.slane %v4277, 4
      %v4283 = vshrl.u32 %v4191, 16
      %v4285 = vrot.slane %v4283, 7
      %v4286 = vshll.u32 %v4191, 16
      %v4288 = vor.u32 %v4285, %v4286
      %v4289 = vsel %vm4222, %v4281, %v4288
      %v4290 = vrot.slane %v4285, 4
      %v4292 = vshrl.u32 %v4192, 16
      %v4294 = vrot.slane %v4292, 7
      %v4295 = vshll.u32 %v4192, 16
      %v4297 = vor.u32 %v4294, %v4295
      %v4298 = vrot.slane %v4294, 4
      %v4300 = vshrl.u32 %v4193, 16
      %v4302 = vrot.slane %v4300, 7
      %v4303 = vshll.u32 %v4193, 16
      %v4305 = vor.u32 %v4302, %v4303
      %v4306 = vsel %vm4222, %v4298, %v4305
      %v4307 = vrot.slane %v4302, 4
      %v4309 = vshrl.u32 %v4194, 16
      %v4311 = vrot.slane %v4309, 7
      %v4312 = vshll.u32 %v4194, 16
      %v4314 = vor.u32 %v4311, %v4312
      %v4315 = vrot.slane %v4311, 4
      %v4317 = vshrl.u32 %v4195, 16
      %v4319 = vrot.slane %v4317, 7
      %v4320 = vshll.u32 %v4195, 16
      %v4322 = vor.u32 %v4319, %v4320
      %v4323 = vsel %vm4222, %v4315, %v4322
      %v4324 = vrot.slane %v4319, 4
      %v4326 = vshrl.u32 %v4196, 16
      %v4328 = vrot.slane %v4326, 7
      %v4329 = vshll.u32 %v4196, 16
      %v4331 = vor.u32 %v4328, %v4329
      %v4332 = vrot.slane %v4328, 4
      %v4334 = vshrl.u32 %v4197, 16
      %v4336 = vrot.slane %v4334, 7
      %v4337 = vshll.u32 %v4197, 16
      %v4339 = vor.u32 %v4336, %v4337
      %v4340 = vsel %vm4222, %v4332, %v4339
      %v4341 = vrot.slane %v4336, 4
      %v4343 = vshrl.u32 %v4198, 16
      %v4345 = vrot.slane %v4343, 7
      %v4346 = vshll.u32 %v4198, 16
      %v4348 = vor.u32 %v4345, %v4346
      %v4349 = vrot.slane %v4345, 4
      %v4351 = vshrl.u32 %v4199, 16
      %v4353 = vrot.slane %v4351, 7
      %v4354 = vshll.u32 %v4199, 16
      %v4356 = vor.u32 %v4353, %v4354
      %v4357 = vsel %vm4222, %v4349, %v4356
      %v4358 = vrot.slane %v4353, 4
      %v4360 = vshrl.u32 %v4200, 16
      %v4362 = vrot.slane %v4360, 7
      %v4363 = vshll.u32 %v4200, 16
      %v4365 = vor.u32 %v4362, %v4363
      %v4366 = vrot.slane %v4362, 4
      %v4368 = vshrl.u32 %v4201, 16
      %v4370 = vrot.slane %v4368, 7
      %v4371 = vshll.u32 %v4201, 16
      %v4373 = vor.u32 %v4370, %v4371
      %v4374 = vsel %vm4222, %v4366, %v4373
      %v4375 = vrot.slane %v4370, 4
      %v4377 = vshrl.u32 %v4202, 16
      %v4379 = vrot.slane %v4377, 7
      %v4380 = vshll.u32 %v4202, 16
      %v4382 = vor.u32 %v4379, %v4380
      %v4383 = vrot.slane %v4379, 4
      %v4385 = vshrl.u32 %v4203, 16
      %v4387 = vrot.slane %v4385, 7
      %v4388 = vshll.u32 %v4203, 16
      %v4390 = vor.u32 %v4387, %v4388
      %v4391 = vsel %vm4222, %v4383, %v4390
      %v4392 = vrot.slane %v4387, 4
      %v4394 = vshrl.u32 %v4204, 16
      %v4396 = vrot.slane %v4394, 7
      %v4397 = vshll.u32 %v4204, 16
      %v4399 = vor.u32 %v4396, %v4397
      %v4400 = vrot.slane %v4396, 4
      %v4402 = vshrl.u32 %v4205, 16
      %v4404 = vrot.slane %v4402, 7
      %v4405 = vshll.u32 %v4205, 16
      %v4407 = vor.u32 %v4404, %v4405
      %v4408 = vsel %vm4222, %v4400, %v4407
      %v4409 = vrot.slane %v4404, 4
      %v4411 = vshrl.u32 %v4206, 16
      %v4413 = vrot.slane %v4411, 7
      %v4414 = vshll.u32 %v4206, 16
      %v4416 = vor.u32 %v4413, %v4414
      %v4417 = vrot.slane %v4413, 4
      %v4419 = vshrl.u32 %v4207, 16
      %v4421 = vrot.slane %v4419, 7
      %v4422 = vshll.u32 %v4207, 16
      %v4424 = vor.u32 %v4421, %v4422
      %v4425 = vsel %vm4222, %v4417, %v4424
      %v4426 = vrot.slane %v4421, 4
      %v4428 = vshrl.u32 %v4208, 16
      %v4430 = vrot.slane %v4428, 7
      %v4431 = vshll.u32 %v4208, 16
      %v4433 = vor.u32 %v4430, %v4431
      %v4434 = vrot.slane %v4430, 4
      %v4436 = vshrl.u32 %v4209, 16
      %v4438 = vrot.slane %v4436, 7
      %v4439 = vshll.u32 %v4209, 16
      %v4441 = vor.u32 %v4438, %v4439
      %v4442 = vsel %vm4222, %v4434, %v4441
      %v4443 = vrot.slane %v4438, 4
      %v4445 = vshrl.u32 %v4210, 16
      %v4447 = vrot.slane %v4445, 7
      %v4448 = vshll.u32 %v4210, 16
      %v4450 = vor.u32 %v4447, %v4448
      %v4451 = vrot.slane %v4447, 4
      %v4453 = vshrl.u32 %v4211, 16
      %v4455 = vrot.slane %v4453, 7
      %v4456 = vshll.u32 %v4211, 16
      %v4458 = vor.u32 %v4455, %v4456
      %v4459 = vsel %vm4222, %v4451, %v4458
      %v4460 = vrot.slane %v4455, 4
      %v4462 = vshrl.u32 %v4212, 16
      %v4464 = vrot.slane %v4462, 7
      %v4465 = vshll.u32 %v4212, 16
      %v4467 = vor.u32 %v4464, %v4465
      %v4468 = vrot.slane %v4464, 4
      %v4470 = vshrl.u32 %v4213, 16
      %v4472 = vrot.slane %v4470, 7
      %v4473 = vshll.u32 %v4213, 16
      %v4475 = vor.u32 %v4472, %v4473
      %v4476 = vsel %vm4222, %v4468, %v4475
      %v4477 = vrot.slane %v4472, 4
      %v4479 = vshrl.u32 %v4214, 16
      %v4481 = vrot.slane %v4479, 7
      %v4482 = vshll.u32 %v4214, 16
      %v4484 = vor.u32 %v4481, %v4482
      %v4485 = vrot.slane %v4481, 4
      %v4487 = vshrl.u32 %v4215, 16
      %v4489 = vrot.slane %v4487, 7
      %v4490 = vshll.u32 %v4215, 16
      %v4492 = vor.u32 %v4489, %v4490
      %v4493 = vsel %vm4222, %v4485, %v4492
      %v4494 = vrot.slane %v4489, 4
      %v4496 = vshrl.u32 %v4216, 16
      %v4498 = vrot.slane %v4496, 7
      %v4499 = vshll.u32 %v4216, 16
      %v4501 = vor.u32 %v4498, %v4499
      %v4502 = vrot.slane %v4498, 4
      %v4504 = vshrl.u32 %v4217, 16
      %v4506 = vrot.slane %v4504, 7
      %v4507 = vshll.u32 %v4217, 16
      %v4509 = vor.u32 %v4506, %v4507
      %v4510 = vsel %vm4222, %v4502, %v4509
      %v4511 = vrot.slane %v4506, 4
      %v4513 = vshrl.u32 %v4218, 16
      %v4515 = vrot.slane %v4513, 7
      %v4516 = vshll.u32 %v4218, 16
      %v4518 = vor.u32 %v4515, %v4516
      %v4519 = vrot.slane %v4515, 4
      %v4521 = vshrl.u32 %v4219, 16
      %v4523 = vrot.slane %v4521, 7
      %v4524 = vshll.u32 %v4219, 16
      %v4526 = vor.u32 %v4523, %v4524
      %v4527 = vsel %vm4222, %v4519, %v4526
      %v4528 = vrot.slane %v4523, 4
      %vm4583 = vcmask 1043456
      %vm4584 = vsmask.f32 7938
      %vm4585 = vmand %vm4583, %vm4584
      %v4586 = vld [vmem:[#allocation2] sm:$0xf]
      %v4587 = vsel %vm4585, %v4229, %v4586
      %4588 = vst [vmem:[#allocation2] sm:$0xf] %v4587
      %4589 = vst [vmem:[#allocation2 + $0x4] sm:$0xf] %v4238
      %vm4590 = vcmask 1040384
      %vm4591 = vmand %vm4590, %vm4220
      %v4592 = vld [vmem:[#allocation2 + $0x8] sm:$0x1]
      %v4593 = vsel %vm4591, %v4239, %v4592
      %4594 = vst [vmem:[#allocation2 + $0x8] sm:$0x1] %v4593
      %v4595 = vld [vmem:[#allocation2 + $0xc] sm:$0xf]
      %v4596 = vsel %vm4585, %v4246, %v4595
      %4597 = vst [vmem:[#allocation2 + $0xc] sm:$0xf] %v4596
      %4598 = vst [vmem:[#allocation2 + $0x10] sm:$0xf] %v4255
      %v4599 = vld [vmem:[#allocation2 + $0x14] sm:$0x1]
      %v4600 = vsel %vm4591, %v4256, %v4599
      %4601 = vst [vmem:[#allocation2 + $0x14] sm:$0x1] %v4600
      %v4602 = vld [vmem:[#allocation2 + $0x18] sm:$0xf]
      %v4603 = vsel %vm4585, %v4263, %v4602
      %4604 = vst [vmem:[#allocation2 + $0x18] sm:$0xf] %v4603
      %4605 = vst [vmem:[#allocation2 + $0x1c] sm:$0xf] %v4272
      %v4606 = vld [vmem:[#allocation2 + $0x20] sm:$0x1]
      %v4607 = vsel %vm4591, %v4273, %v4606
      %4608 = vst [vmem:[#allocation2 + $0x20] sm:$0x1] %v4607
      %v4609 = vld [vmem:[#allocation2 + $0x24] sm:$0xf]
      %v4610 = vsel %vm4585, %v4280, %v4609
      %4611 = vst [vmem:[#allocation2 + $0x24] sm:$0xf] %v4610
      %4612 = vst [vmem:[#allocation2 + $0x28] sm:$0xf] %v4289
      %v4613 = vld [vmem:[#allocation2 + $0x2c] sm:$0x1]
      %v4614 = vsel %vm4591, %v4290, %v4613
      %4615 = vst [vmem:[#allocation2 + $0x2c] sm:$0x1] %v4614
      %v4616 = vld [vmem:[#allocation2 + $0x30] sm:$0xf]
      %v4617 = vsel %vm4585, %v4297, %v4616
      %4618 = vst [vmem:[#allocation2 + $0x30] sm:$0xf] %v4617
      %4619 = vst [vmem:[#allocation2 + $0x34] sm:$0xf] %v4306
      %v4620 = vld [vmem:[#allocation2 + $0x38] sm:$0x1]
      %v4621 = vsel %vm4591, %v4307, %v4620
      %4622 = vst [vmem:[#allocation2 + $0x38] sm:$0x1] %v4621
      %v4623 = vld [vmem:[#allocation2 + $0x3c] sm:$0xf]
      %v4624 = vsel %vm4585, %v4314, %v4623
      %4625 = vst [vmem:[#allocation2 + $0x3c] sm:$0xf] %v4624
      %4626 = vst [vmem:[#allocation2 + $0x40] sm:$0xf] %v4323
      %v4627 = vld [vmem:[#allocation2 + $0x44] sm:$0x1]
      %v4628 = vsel %vm4591, %v4324, %v4627
      %4629 = vst [vmem:[#allocation2 + $0x44] sm:$0x1] %v4628
      %v4630 = vld [vmem:[#allocation2 + $0x48] sm:$0xf]
      %v4631 = vsel %vm4585, %v4331, %v4630
      %4632 = vst [vmem:[#allocation2 + $0x48] sm:$0xf] %v4631
      %4633 = vst [vmem:[#allocation2 + $0x4c] sm:$0xf] %v4340
      %v4634 = vld [vmem:[#allocation2 + $0x50] sm:$0x1]
      %v4635 = vsel %vm4591, %v4341, %v4634
      %4636 = vst [vmem:[#allocation2 + $0x50] sm:$0x1] %v4635
      %v4637 = vld [vmem:[#allocation2 + $0x54] sm:$0xf]
      %v4638 = vsel %vm4585, %v4348, %v4637
      %4639 = vst [vmem:[#allocation2 + $0x54] sm:$0xf] %v4638
      %4640 = vst [vmem:[#allocation2 + $0x58] sm:$0xf] %v4357
      %v4641 = vld [vmem:[#allocation2 + $0x5c] sm:$0x1]
      %v4642 = vsel %vm4591, %v4358, %v4641
      %4643 = vst [vmem:[#allocation2 + $0x5c] sm:$0x1] %v4642
      %v4644 = vld [vmem:[#allocation2 + $0x60] sm:$0xf]
      %v4645 = vsel %vm4585, %v4365, %v4644
      %4646 = vst [vmem:[#allocation2 + $0x60] sm:$0xf] %v4645
      %4647 = vst [vmem:[#allocation2 + $0x64] sm:$0xf] %v4374
      %v4648 = vld [vmem:[#allocation2 + $0x68] sm:$0x1]
      %v4649 = vsel %vm4591, %v4375, %v4648
      %4650 = vst [vmem:[#allocation2 + $0x68] sm:$0x1] %v4649
      %v4651 = vld [vmem:[#allocation2 + $0x6c] sm:$0xf]
      %v4652 = vsel %vm4585, %v4382, %v4651
      %4653 = vst [vmem:[#allocation2 + $0x6c] sm:$0xf] %v4652
      %4654 = vst [vmem:[#allocation2 + $0x70] sm:$0xf] %v4391
      %v4655 = vld [vmem:[#allocation2 + $0x74] sm:$0x1]
      %v4656 = vsel %vm4591, %v4392, %v4655
      %4657 = vst [vmem:[#allocation2 + $0x74] sm:$0x1] %v4656
      %v4658 = vld [vmem:[#allocation2 + $0x78] sm:$0xf]
      %v4659 = vsel %vm4585, %v4399, %v4658
      %4660 = vst [vmem:[#allocation2 + $0x78] sm:$0xf] %v4659
      %4661 = vst [vmem:[#allocation2 + $0x7c] sm:$0xf] %v4408
      %v4662 = vld [vmem:[#allocation2 + $0x80] sm:$0x1]
      %v4663 = vsel %vm4591, %v4409, %v4662
      %4664 = vst [vmem:[#allocation2 + $0x80] sm:$0x1] %v4663
      %v4665 = vld [vmem:[#allocation2 + $0x84] sm:$0xf]
      %v4666 = vsel %vm4585, %v4416, %v4665
      %4667 = vst [vmem:[#allocation2 + $0x84] sm:$0xf] %v4666
      %4668 = vst [vmem:[#allocation2 + $0x88] sm:$0xf] %v4425
      %v4669 = vld [vmem:[#allocation2 + $0x8c] sm:$0x1]
      %v4670 = vsel %vm4591, %v4426, %v4669
      %4671 = vst [vmem:[#allocation2 + $0x8c] sm:$0x1] %v4670
      %v4672 = vld [vmem:[#allocation2 + $0x90] sm:$0xf]
      %v4673 = vsel %vm4585, %v4433, %v4672
      %4674 = vst [vmem:[#allocation2 + $0x90] sm:$0xf] %v4673
      %4675 = vst [vmem:[#allocation2 + $0x94] sm:$0xf] %v4442
      %v4676 = vld [vmem:[#allocation2 + $0x98] sm:$0x1]
      %v4677 = vsel %vm4591, %v4443, %v4676
      %4678 = vst [vmem:[#allocation2 + $0x98] sm:$0x1] %v4677
      %v4679 = vld [vmem:[#allocation2 + $0x9c] sm:$0xf]
      %v4680 = vsel %vm4585, %v4450, %v4679
      %4681 = vst [vmem:[#allocation2 + $0x9c] sm:$0xf] %v4680
      %4682 = vst [vmem:[#allocation2 + $0xa0] sm:$0xf] %v4459
      %v4683 = vld [vmem:[#allocation2 + $0xa4] sm:$0x1]
      %v4684 = vsel %vm4591, %v4460, %v4683
      %4685 = vst [vmem:[#allocation2 + $0xa4] sm:$0x1] %v4684
      %v4686 = vld [vmem:[#allocation2 + $0xa8] sm:$0xf]
      %v4687 = vsel %vm4585, %v4467, %v4686
      %4688 = vst [vmem:[#allocation2 + $0xa8] sm:$0xf] %v4687
      %4689 = vst [vmem:[#allocation2 + $0xac] sm:$0xf] %v4476
      %v4690 = vld [vmem:[#allocation2 + $0xb0] sm:$0x1]
      %v4691 = vsel %vm4591, %v4477, %v4690
      %4692 = vst [vmem:[#allocation2 + $0xb0] sm:$0x1] %v4691
      %v4693 = vld [vmem:[#allocation2 + $0xb4] sm:$0xf]
      %v4694 = vsel %vm4585, %v4484, %v4693
      %4695 = vst [vmem:[#allocation2 + $0xb4] sm:$0xf] %v4694
      %4696 = vst [vmem:[#allocation2 + $0xb8] sm:$0xf] %v4493
      %v4697 = vld [vmem:[#allocation2 + $0xbc] sm:$0x1]
      %v4698 = vsel %vm4591, %v4494, %v4697
      %4699 = vst [vmem:[#allocation2 + $0xbc] sm:$0x1] %v4698
      %v4700 = vld [vmem:[#allocation2 + $0xc0] sm:$0xf]
      %v4701 = vsel %vm4585, %v4501, %v4700
      %4702 = vst [vmem:[#allocation2 + $0xc0] sm:$0xf] %v4701
      %4703 = vst [vmem:[#allocation2 + $0xc4] sm:$0xf] %v4510
      %v4704 = vld [vmem:[#allocation2 + $0xc8] sm:$0x1]
      %v4705 = vsel %vm4591, %v4511, %v4704
      %4706 = vst [vmem:[#allocation2 + $0xc8] sm:$0x1] %v4705
      %v4707 = vld [vmem:[#allocation2 + $0xcc] sm:$0xf]
      %v4708 = vsel %vm4585, %v4518, %v4707
      %4709 = vst [vmem:[#allocation2 + $0xcc] sm:$0xf] %v4708
      %4710 = vst [vmem:[#allocation2 + $0xd0] sm:$0xf] %v4527
      %v4711 = vld [vmem:[#allocation2 + $0xd4] sm:$0x1]
      %v4712 = vsel %vm4591, %v4528, %v4711
      %4713 = vst [vmem:[#allocation2 + $0xd4] sm:$0x1] %v4712
      %p4714 = scmp.eq.s32.totalorder %s21, 0
      // Predicated region
      $region41: #{conv_block_forward.1} parent=39 // pred_check
        %p4715 = pneg %p4714
      $region42: #{conv_block_forward.1} parent=39 // pred_check_branch
        %4717 = sbr.rel (%p4715) target = $region44
      $region43: #{conv_block_forward.1} parent=39 // pred_region
        %4718 = vst [vmem:[#allocation2] sm:$0xf] 0
        %4719 = vst [vmem:[#allocation2 + $0x4] sm:$0xf] 0
        %4720 = vst [vmem:[#allocation2 + $0x8] sm:$0x1] 0
        %s4721 = scalar_lea.vmem [#allocation2], 204
        %4722 = vst [vmem:[%s4721] sm:$0xf] 0
        %4723 = vst [vmem:[%s4721 + $0x4] sm:$0xf] 0
        %4724 = vst [vmem:[%s4721 + $0x8] sm:$0x1] 0
      $region44: #{conv_block_forward.1} parent=39 // pred_fallthru
        _
      %v4725 = vld [vmem:[#allocation2] sm:$0xf]
      %v4726 = vld [vmem:[#allocation2 + $0x4] sm:$0xf]
      %v4727 = vld [vmem:[#allocation2 + $0xc] sm:$0xf]
      %v4728 = vld [vmem:[#allocation2 + $0x10] sm:$0xf]
      %v4729 = vld [vmem:[#allocation2 + $0x18] sm:$0xf]
      %v4730 = vld [vmem:[#allocation2 + $0x1c] sm:$0xf]
      %v4731 = vld [vmem:[#allocation2 + $0x24] sm:$0xf]
      %v4732 = vld [vmem:[#allocation2 + $0x28] sm:$0xf]
      %v4733 = vld [vmem:[#allocation2 + $0x30] sm:$0xf]
      %v4734 = vld [vmem:[#allocation2 + $0x34] sm:$0xf]
      %v4735 = vld [vmem:[#allocation2 + $0x3c] sm:$0xf]
      %v4736 = vld [vmem:[#allocation2 + $0x40] sm:$0xf]
      %v4737 = vld [vmem:[#allocation2 + $0x48] sm:$0xf]
      %v4738 = vld [vmem:[#allocation2 + $0x4c] sm:$0xf]
      %v4739 = vld [vmem:[#allocation2 + $0x54] sm:$0xf]
      %v4740 = vld [vmem:[#allocation2 + $0x58] sm:$0xf]
      %v4741 = vld [vmem:[#allocation2 + $0x60] sm:$0xf]
      %v4742 = vld [vmem:[#allocation2 + $0x64] sm:$0xf]
      %v4743 = vld [vmem:[#allocation2 + $0x6c] sm:$0xf]
      %v4744 = vld [vmem:[#allocation2 + $0x70] sm:$0xf]
      %v4745 = vld [vmem:[#allocation2 + $0x78] sm:$0xf]
      %v4746 = vld [vmem:[#allocation2 + $0x7c] sm:$0xf]
      %v4747 = vld [vmem:[#allocation2 + $0x84] sm:$0xf]
      %v4748 = vld [vmem:[#allocation2 + $0x88] sm:$0xf]
      %v4749 = vld [vmem:[#allocation2 + $0x90] sm:$0xf]
      %v4750 = vld [vmem:[#allocation2 + $0x94] sm:$0xf]
      %v4751 = vld [vmem:[#allocation2 + $0x9c] sm:$0xf]
      %v4752 = vld [vmem:[#allocation2 + $0xa0] sm:$0xf]
      %v4753 = vld [vmem:[#allocation2 + $0xa8] sm:$0xf]
      %v4754 = vld [vmem:[#allocation2 + $0xac] sm:$0xf]
      %v4755 = vld [vmem:[#allocation2 + $0xb4] sm:$0xf]
      %v4756 = vld [vmem:[#allocation2 + $0xb8] sm:$0xf]
      %v4757 = vld [vmem:[#allocation2 + $0x8] sm:$0x1]
      %v4758 = vld [vmem:[#allocation2 + $0x14] sm:$0x1]
      %v4759 = vld [vmem:[#allocation2 + $0x20] sm:$0x1]
      %v4760 = vld [vmem:[#allocation2 + $0x2c] sm:$0x1]
      %v4761 = vld [vmem:[#allocation2 + $0x38] sm:$0x1]
      %v4762 = vld [vmem:[#allocation2 + $0x44] sm:$0x1]
      %v4763 = vld [vmem:[#allocation2 + $0x50] sm:$0x1]
      %v4764 = vld [vmem:[#allocation2 + $0x5c] sm:$0x1]
      %v4765 = vld [vmem:[#allocation2 + $0x68] sm:$0x1]
      %v4766 = vld [vmem:[#allocation2 + $0x74] sm:$0x1]
      %v4767 = vld [vmem:[#allocation2 + $0x80] sm:$0x1]
      %v4768 = vld [vmem:[#allocation2 + $0x8c] sm:$0x1]
      %v4769 = vld [vmem:[#allocation2 + $0x98] sm:$0x1]
      %v4770 = vld [vmem:[#allocation2 + $0xa4] sm:$0x1]
      %v4771 = vld [vmem:[#allocation2 + $0xb0] sm:$0x1]
      %v4772 = vld [vmem:[#allocation2 + $0xbc] sm:$0x1]
      %v4773 = vld [vmem:[#allocation2] sm:$0xe]
      %v4774 = vld [vmem:[#allocation2 + $0xc] sm:$0xe]
      %v4775 = vld [vmem:[#allocation2 + $0x18] sm:$0xe]
      %v4776 = vld [vmem:[#allocation2 + $0x24] sm:$0xe]
      %v4777 = vld [vmem:[#allocation2 + $0x30] sm:$0xe]
      %v4778 = vld [vmem:[#allocation2 + $0x3c] sm:$0xe]
      %v4779 = vld [vmem:[#allocation2 + $0x48] sm:$0xe]
      %v4780 = vld [vmem:[#allocation2 + $0x54] sm:$0xe]
      %v4781 = vld [vmem:[#allocation2 + $0x60] sm:$0xe]
      %v4782 = vld [vmem:[#allocation2 + $0x6c] sm:$0xe]
      %v4783 = vld [vmem:[#allocation2 + $0x78] sm:$0xe]
      %v4784 = vld [vmem:[#allocation2 + $0x84] sm:$0xe]
      %v4785 = vld [vmem:[#allocation2 + $0x90] sm:$0xe]
      %v4786 = vld [vmem:[#allocation2 + $0x9c] sm:$0xe]
      %v4787 = vld [vmem:[#allocation2 + $0xa8] sm:$0xe]
      %v4788 = vld [vmem:[#allocation2 + $0xb4] sm:$0xe]
      %v4821 = vunpack.c.l.b16 %v4725
      %v4822 = vunpack.c.l.b16 %v4726
      %v4823 = vunpack.c.l.b16 %v4727
      %v4824 = vunpack.c.l.b16 %v4728
      %v4825 = vunpack.c.l.b16 %v4729
      %v4826 = vunpack.c.l.b16 %v4730
      %v4827 = vunpack.c.l.b16 %v4731
      %v4828 = vunpack.c.l.b16 %v4732
      %v4829 = vunpack.c.l.b16 %v4733
      %v4830 = vunpack.c.l.b16 %v4734
      %v4831 = vunpack.c.l.b16 %v4735
      %v4832 = vunpack.c.l.b16 %v4736
      %v4833 = vunpack.c.l.b16 %v4737
      %v4834 = vunpack.c.l.b16 %v4738
      %v4835 = vunpack.c.l.b16 %v4739
      %v4836 = vunpack.c.l.b16 %v4740
      %v4837 = vunpack.c.l.b16 %v4741
      %v4838 = vunpack.c.l.b16 %v4742
      %v4839 = vunpack.c.l.b16 %v4743
      %v4840 = vunpack.c.l.b16 %v4744
      %v4841 = vunpack.c.l.b16 %v4745
      %v4842 = vunpack.c.l.b16 %v4746
      %v4843 = vunpack.c.l.b16 %v4747
      %v4844 = vunpack.c.l.b16 %v4748
      %v4845 = vunpack.c.l.b16 %v4749
      %v4846 = vunpack.c.l.b16 %v4750
      %v4847 = vunpack.c.l.b16 %v4751
      %v4848 = vunpack.c.l.b16 %v4752
      %v4849 = vunpack.c.l.b16 %v4753
      %v4850 = vunpack.c.l.b16 %v4754
      %v4851 = vunpack.c.l.b16 %v4755
      %v4852 = vunpack.c.l.b16 %v4756
      %v4853 = vpack.c.b16 %v4822, %v4821
      %v4854 = vpack.c.b16 %v4824, %v4823
      %v4855 = vpack.c.b16 %v4826, %v4825
      %v4856 = vpack.c.b16 %v4828, %v4827
      %v4857 = vpack.c.b16 %v4830, %v4829
      %v4858 = vpack.c.b16 %v4832, %v4831
      %v4859 = vpack.c.b16 %v4834, %v4833
      %v4860 = vpack.c.b16 %v4836, %v4835
      %v4861 = vpack.c.b16 %v4838, %v4837
      %v4862 = vpack.c.b16 %v4840, %v4839
      %v4863 = vpack.c.b16 %v4842, %v4841
      %v4864 = vpack.c.b16 %v4844, %v4843
      %v4865 = vpack.c.b16 %v4846, %v4845
      %v4866 = vpack.c.b16 %v4848, %v4847
      %v4867 = vpack.c.b16 %v4850, %v4849
      %v4868 = vpack.c.b16 %v4852, %v4851
      %v4901 = vunpack.c.l.b16 %v4757
      %v4902 = vunpack.c.l.b16 %v4758
      %v4903 = vunpack.c.l.b16 %v4759
      %v4904 = vunpack.c.l.b16 %v4760
      %v4905 = vunpack.c.l.b16 %v4761
      %v4906 = vunpack.c.l.b16 %v4762
      %v4907 = vunpack.c.l.b16 %v4763
      %v4908 = vunpack.c.l.b16 %v4764
      %v4909 = vunpack.c.l.b16 %v4765
      %v4910 = vunpack.c.l.b16 %v4766
      %v4911 = vunpack.c.l.b16 %v4767
      %v4912 = vunpack.c.l.b16 %v4768
      %v4913 = vunpack.c.l.b16 %v4769
      %v4914 = vunpack.c.l.b16 %v4770
      %v4915 = vunpack.c.l.b16 %v4771
      %v4916 = vunpack.c.l.b16 %v4772
      %v4917 = vpack.c.b16 %v4901, %v4901
      %v4918 = vpack.c.b16 %v4902, %v4902
      %v4919 = vpack.c.b16 %v4903, %v4903
      %v4920 = vpack.c.b16 %v4904, %v4904
      %v4921 = vpack.c.b16 %v4905, %v4905
      %v4922 = vpack.c.b16 %v4906, %v4906
      %v4923 = vpack.c.b16 %v4907, %v4907
      %v4924 = vpack.c.b16 %v4908, %v4908
      %v4925 = vpack.c.b16 %v4909, %v4909
      %v4926 = vpack.c.b16 %v4910, %v4910
      %v4927 = vpack.c.b16 %v4911, %v4911
      %v4928 = vpack.c.b16 %v4912, %v4912
      %v4929 = vpack.c.b16 %v4913, %v4913
      %v4930 = vpack.c.b16 %v4914, %v4914
      %v4931 = vpack.c.b16 %v4915, %v4915
      %v4932 = vpack.c.b16 %v4916, %v4916
      %v4934 = vshrl.u32 %v4853, 16
      %v4936 = vshll.u32 %v4853, 16
      %v4938 = vrot.slane %v4936, 1
      %v4939 = vor.u32 %v4934, %v4938
      %v4941 = vshll.u32 %v4917, 16
      %v4943 = vrot.slane %v4941, 1
      %v4944 = vsel %vm499, %v4939, %v4943
      %v4946 = vshrl.u32 %v4854, 16
      %v4948 = vshll.u32 %v4854, 16
      %v4950 = vrot.slane %v4948, 1
      %v4951 = vor.u32 %v4946, %v4950
      %v4953 = vshll.u32 %v4918, 16
      %v4955 = vrot.slane %v4953, 1
      %v4956 = vsel %vm499, %v4951, %v4955
      %v4958 = vshrl.u32 %v4855, 16
      %v4960 = vshll.u32 %v4855, 16
      %v4962 = vrot.slane %v4960, 1
      %v4963 = vor.u32 %v4958, %v4962
      %v4965 = vshll.u32 %v4919, 16
      %v4967 = vrot.slane %v4965, 1
      %v4968 = vsel %vm499, %v4963, %v4967
      %v4970 = vshrl.u32 %v4856, 16
      %v4972 = vshll.u32 %v4856, 16
      %v4974 = vrot.slane %v4972, 1
      %v4975 = vor.u32 %v4970, %v4974
      %v4977 = vshll.u32 %v4920, 16
      %v4979 = vrot.slane %v4977, 1
      %v4980 = vsel %vm499, %v4975, %v4979
      %v4982 = vshrl.u32 %v4857, 16
      %v4984 = vshll.u32 %v4857, 16
      %v4986 = vrot.slane %v4984, 1
      %v4987 = vor.u32 %v4982, %v4986
      %v4989 = vshll.u32 %v4921, 16
      %v4991 = vrot.slane %v4989, 1
      %v4992 = vsel %vm499, %v4987, %v4991
      %v4994 = vshrl.u32 %v4858, 16
      %v4996 = vshll.u32 %v4858, 16
      %v4998 = vrot.slane %v4996, 1
      %v4999 = vor.u32 %v4994, %v4998
      %v5001 = vshll.u32 %v4922, 16
      %v5003 = vrot.slane %v5001, 1
      %v5004 = vsel %vm499, %v4999, %v5003
      %v5006 = vshrl.u32 %v4859, 16
      %v5008 = vshll.u32 %v4859, 16
      %v5010 = vrot.slane %v5008, 1
      %v5011 = vor.u32 %v5006, %v5010
      %v5013 = vshll.u32 %v4923, 16
      %v5015 = vrot.slane %v5013, 1
      %v5016 = vsel %vm499, %v5011, %v5015
      %v5018 = vshrl.u32 %v4860, 16
      %v5020 = vshll.u32 %v4860, 16
      %v5022 = vrot.slane %v5020, 1
      %v5023 = vor.u32 %v5018, %v5022
      %v5025 = vshll.u32 %v4924, 16
      %v5027 = vrot.slane %v5025, 1
      %v5028 = vsel %vm499, %v5023, %v5027
      %v5030 = vshrl.u32 %v4861, 16
      %v5032 = vshll.u32 %v4861, 16
      %v5034 = vrot.slane %v5032, 1
      %v5035 = vor.u32 %v5030, %v5034
      %v5037 = vshll.u32 %v4925, 16
      %v5039 = vrot.slane %v5037, 1
      %v5040 = vsel %vm499, %v5035, %v5039
      %v5042 = vshrl.u32 %v4862, 16
      %v5044 = vshll.u32 %v4862, 16
      %v5046 = vrot.slane %v5044, 1
      %v5047 = vor.u32 %v5042, %v5046
      %v5049 = vshll.u32 %v4926, 16
      %v5051 = vrot.slane %v5049, 1
      %v5052 = vsel %vm499, %v5047, %v5051
      %v5054 = vshrl.u32 %v4863, 16
      %v5056 = vshll.u32 %v4863, 16
      %v5058 = vrot.slane %v5056, 1
      %v5059 = vor.u32 %v5054, %v5058
      %v5061 = vshll.u32 %v4927, 16
      %v5063 = vrot.slane %v5061, 1
      %v5064 = vsel %vm499, %v5059, %v5063
      %v5066 = vshrl.u32 %v4864, 16
      %v5068 = vshll.u32 %v4864, 16
      %v5070 = vrot.slane %v5068, 1
      %v5071 = vor.u32 %v5066, %v5070
      %v5073 = vshll.u32 %v4928, 16
      %v5075 = vrot.slane %v5073, 1
      %v5076 = vsel %vm499, %v5071, %v5075
      %v5078 = vshrl.u32 %v4865, 16
      %v5080 = vshll.u32 %v4865, 16
      %v5082 = vrot.slane %v5080, 1
      %v5083 = vor.u32 %v5078, %v5082
      %v5085 = vshll.u32 %v4929, 16
      %v5087 = vrot.slane %v5085, 1
      %v5088 = vsel %vm499, %v5083, %v5087
      %v5090 = vshrl.u32 %v4866, 16
      %v5092 = vshll.u32 %v4866, 16
      %v5094 = vrot.slane %v5092, 1
      %v5095 = vor.u32 %v5090, %v5094
      %v5097 = vshll.u32 %v4930, 16
      %v5099 = vrot.slane %v5097, 1
      %v5100 = vsel %vm499, %v5095, %v5099
      %v5102 = vshrl.u32 %v4867, 16
      %v5104 = vshll.u32 %v4867, 16
      %v5106 = vrot.slane %v5104, 1
      %v5107 = vor.u32 %v5102, %v5106
      %v5109 = vshll.u32 %v4931, 16
      %v5111 = vrot.slane %v5109, 1
      %v5112 = vsel %vm499, %v5107, %v5111
      %v5114 = vshrl.u32 %v4868, 16
      %v5116 = vshll.u32 %v4868, 16
      %v5118 = vrot.slane %v5116, 1
      %v5119 = vor.u32 %v5114, %v5118
      %v5121 = vshll.u32 %v4932, 16
      %v5123 = vrot.slane %v5121, 1
      %v5124 = vsel %vm499, %v5119, %v5123
      %v5157 = vunpack.c.l.b16 %v4773
      %v5158 = vunpack.c.l.b16 %v4774
      %v5159 = vunpack.c.l.b16 %v4775
      %v5160 = vunpack.c.l.b16 %v4776
      %v5161 = vunpack.c.l.b16 %v4777
      %v5162 = vunpack.c.l.b16 %v4778
      %v5163 = vunpack.c.l.b16 %v4779
      %v5164 = vunpack.c.l.b16 %v4780
      %v5165 = vunpack.c.l.b16 %v4781
      %v5166 = vunpack.c.l.b16 %v4782
      %v5167 = vunpack.c.l.b16 %v4783
      %v5168 = vunpack.c.l.b16 %v4784
      %v5169 = vunpack.c.l.b16 %v4785
      %v5170 = vunpack.c.l.b16 %v4786
      %v5171 = vunpack.c.l.b16 %v4787
      %v5172 = vunpack.c.l.b16 %v4788
      %v5173 = vpack.c.b16 %v4822, %v5157
      %v5174 = vpack.c.b16 %v4824, %v5158
      %v5175 = vpack.c.b16 %v4826, %v5159
      %v5176 = vpack.c.b16 %v4828, %v5160
      %v5177 = vpack.c.b16 %v4830, %v5161
      %v5178 = vpack.c.b16 %v4832, %v5162
      %v5179 = vpack.c.b16 %v4834, %v5163
      %v5180 = vpack.c.b16 %v4836, %v5164
      %v5181 = vpack.c.b16 %v4838, %v5165
      %v5182 = vpack.c.b16 %v4840, %v5166
      %v5183 = vpack.c.b16 %v4842, %v5167
      %v5184 = vpack.c.b16 %v4844, %v5168
      %v5185 = vpack.c.b16 %v4846, %v5169
      %v5186 = vpack.c.b16 %v4848, %v5170
      %v5187 = vpack.c.b16 %v4850, %v5171
      %v5188 = vpack.c.b16 %v4852, %v5172
      %v5189 = vrot.slane %v5173, 1
      %v5190 = vrot.slane %v4917, 1
      %v5191 = vsel %vm788, %v5189, %v5190
      %v5192 = vrot.slane %v5174, 1
      %v5193 = vrot.slane %v4918, 1
      %v5194 = vsel %vm788, %v5192, %v5193
      %v5195 = vrot.slane %v5175, 1
      %v5196 = vrot.slane %v4919, 1
      %v5197 = vsel %vm788, %v5195, %v5196
      %v5198 = vrot.slane %v5176, 1
      %v5199 = vrot.slane %v4920, 1
      %v5200 = vsel %vm788, %v5198, %v5199
      %v5201 = vrot.slane %v5177, 1
      %v5202 = vrot.slane %v4921, 1
      %v5203 = vsel %vm788, %v5201, %v5202
      %v5204 = vrot.slane %v5178, 1
      %v5205 = vrot.slane %v4922, 1
      %v5206 = vsel %vm788, %v5204, %v5205
      %v5207 = vrot.slane %v5179, 1
      %v5208 = vrot.slane %v4923, 1
      %v5209 = vsel %vm788, %v5207, %v5208
      %v5210 = vrot.slane %v5180, 1
      %v5211 = vrot.slane %v4924, 1
      %v5212 = vsel %vm788, %v5210, %v5211
      %v5213 = vrot.slane %v5181, 1
      %v5214 = vrot.slane %v4925, 1
      %v5215 = vsel %vm788, %v5213, %v5214
      %v5216 = vrot.slane %v5182, 1
      %v5217 = vrot.slane %v4926, 1
      %v5218 = vsel %vm788, %v5216, %v5217
      %v5219 = vrot.slane %v5183, 1
      %v5220 = vrot.slane %v4927, 1
      %v5221 = vsel %vm788, %v5219, %v5220
      %v5222 = vrot.slane %v5184, 1
      %v5223 = vrot.slane %v4928, 1
      %v5224 = vsel %vm788, %v5222, %v5223
      %v5225 = vrot.slane %v5185, 1
      %v5226 = vrot.slane %v4929, 1
      %v5227 = vsel %vm788, %v5225, %v5226
      %v5228 = vrot.slane %v5186, 1
      %v5229 = vrot.slane %v4930, 1
      %v5230 = vsel %vm788, %v5228, %v5229
      %v5231 = vrot.slane %v5187, 1
      %v5232 = vrot.slane %v4931, 1
      %v5233 = vsel %vm788, %v5231, %v5232
      %v5234 = vrot.slane %v5188, 1
      %v5235 = vrot.slane %v4932, 1
      %v5236 = vsel %vm788, %v5234, %v5235
      %v5253 = vld [vmem:[%s3] sm:$0xf]
      %v5254 = vld [vmem:[%s3 + $0x4] sm:$0xf]
      %v5255 = vld [vmem:[%s3 + $0x8] sm:$0xf]
      %v5256 = vld [vmem:[%s3 + $0xc] sm:$0xf]
      %v5257 = vld [vmem:[%s3 + $0x10] sm:$0xf]
      %v5258 = vld [vmem:[%s3 + $0x14] sm:$0xf]
      %v5259 = vld [vmem:[%s3 + $0x18] sm:$0xf]
      %v5260 = vld [vmem:[%s3 + $0x1c] sm:$0xf]
      %v5261 = vld [vmem:[%s3 + $0x20] sm:$0xf]
      %v5262 = vld [vmem:[%s3 + $0x24] sm:$0xf]
      %v5263 = vld [vmem:[%s3 + $0x28] sm:$0xf]
      %v5264 = vld [vmem:[%s3 + $0x2c] sm:$0xf]
      %v5265 = vld [vmem:[%s3 + $0x30] sm:$0xf]
      %v5266 = vld [vmem:[%s3 + $0x34] sm:$0xf]
      %v5267 = vld [vmem:[%s3 + $0x38] sm:$0xf]
      %v5268 = vld [vmem:[%s3 + $0x3c] sm:$0xf]
      %v5269 = vld [vmem:[%s3 + $0x40] sm:$0xf]
      %v5270 = vld [vmem:[%s3 + $0x44] sm:$0xf]
      %v5271 = vld [vmem:[%s3 + $0x48] sm:$0xf]
      %v5272 = vld [vmem:[%s3 + $0x4c] sm:$0xf]
      %v5273 = vld [vmem:[%s3 + $0x50] sm:$0xf]
      %v5274 = vld [vmem:[%s3 + $0x54] sm:$0xf]
      %v5275 = vld [vmem:[%s3 + $0x58] sm:$0xf]
      %v5276 = vld [vmem:[%s3 + $0x5c] sm:$0xf]
      %v5277 = vld [vmem:[%s3 + $0x60] sm:$0xf]
      %v5278 = vld [vmem:[%s3 + $0x64] sm:$0xf]
      %v5279 = vld [vmem:[%s3 + $0x68] sm:$0xf]
      %v5280 = vld [vmem:[%s3 + $0x6c] sm:$0xf]
      %v5281 = vld [vmem:[%s3 + $0x70] sm:$0xf]
      %v5282 = vld [vmem:[%s3 + $0x74] sm:$0xf]
      %v5283 = vld [vmem:[%s3 + $0x78] sm:$0xf]
      %v5284 = vld [vmem:[%s3 + $0x7c] sm:$0xf]
      %v5285 = vld [vmem:[%s3 + $0x80] sm:$0xf]
      %v5286 = vld [vmem:[%s3 + $0x84] sm:$0xf]
      %v5287 = vld [vmem:[%s3 + $0x88] sm:$0xf]
      %v5288 = vld [vmem:[%s3 + $0x8c] sm:$0xf]
      %v5289 = vld [vmem:[%s3 + $0x90] sm:$0xf]
      %v5290 = vld [vmem:[%s3 + $0x94] sm:$0xf]
      %v5291 = vld [vmem:[%s3 + $0x98] sm:$0xf]
      %v5292 = vld [vmem:[%s3 + $0x9c] sm:$0xf]
      %v5293 = vld [vmem:[%s3 + $0xa0] sm:$0xf]
      %v5294 = vld [vmem:[%s3 + $0xa4] sm:$0xf]
      %v5295 = vld [vmem:[%s3 + $0xa8] sm:$0xf]
      %v5296 = vld [vmem:[%s3 + $0xac] sm:$0xf]
      %v5297 = vld [vmem:[%s3 + $0xb0] sm:$0xf]
      %v5298 = vld [vmem:[%s3 + $0xb4] sm:$0xf]
      %v5299 = vld [vmem:[%s3 + $0xb8] sm:$0xf]
      %v5300 = vld [vmem:[%s3 + $0xbc] sm:$0xf]
      %v5349 = vunpack.c.l.b16 %v5253
      %v5350 = vunpack.c.l.b16 %v5254
      %v5351 = vunpack.c.l.b16 %v5255
      %v5352 = vunpack.c.l.b16 %v5256
      %v5353 = vunpack.c.l.b16 %v5257
      %v5354 = vunpack.c.l.b16 %v5258
      %v5355 = vunpack.c.l.b16 %v5259
      %v5356 = vunpack.c.l.b16 %v5260
      %v5357 = vunpack.c.l.b16 %v5261
      %v5358 = vunpack.c.l.b16 %v5262
      %v5359 = vunpack.c.l.b16 %v5263
      %v5360 = vunpack.c.l.b16 %v5264
      %v5361 = vunpack.c.l.b16 %v5265
      %v5362 = vunpack.c.l.b16 %v5266
      %v5363 = vunpack.c.l.b16 %v5267
      %v5364 = vunpack.c.l.b16 %v5268
      %v5365 = vunpack.c.l.b16 %v5269
      %v5366 = vunpack.c.l.b16 %v5270
      %v5367 = vunpack.c.l.b16 %v5271
      %v5368 = vunpack.c.l.b16 %v5272
      %v5369 = vunpack.c.l.b16 %v5273
      %v5370 = vunpack.c.l.b16 %v5274
      %v5371 = vunpack.c.l.b16 %v5275
      %v5372 = vunpack.c.l.b16 %v5276
      %v5373 = vunpack.c.l.b16 %v5277
      %v5374 = vunpack.c.l.b16 %v5278
      %v5375 = vunpack.c.l.b16 %v5279
      %v5376 = vunpack.c.l.b16 %v5280
      %v5377 = vunpack.c.l.b16 %v5281
      %v5378 = vunpack.c.l.b16 %v5282
      %v5379 = vunpack.c.l.b16 %v5283
      %v5380 = vunpack.c.l.b16 %v5284
      %v5381 = vunpack.c.l.b16 %v5285
      %v5382 = vunpack.c.l.b16 %v5286
      %v5383 = vunpack.c.l.b16 %v5287
      %v5384 = vunpack.c.l.b16 %v5288
      %v5385 = vunpack.c.l.b16 %v5289
      %v5386 = vunpack.c.l.b16 %v5290
      %v5387 = vunpack.c.l.b16 %v5291
      %v5388 = vunpack.c.l.b16 %v5292
      %v5389 = vunpack.c.l.b16 %v5293
      %v5390 = vunpack.c.l.b16 %v5294
      %v5391 = vunpack.c.l.b16 %v5295
      %v5392 = vunpack.c.l.b16 %v5296
      %v5393 = vunpack.c.l.b16 %v5297
      %v5394 = vunpack.c.l.b16 %v5298
      %v5395 = vunpack.c.l.b16 %v5299
      %v5396 = vunpack.c.l.b16 %v5300
      %v5397 = vpack.c.b16 %v5350, %v5349
      %v5398 = vpack.c.b16 %v5352, %v5351
      %v5399 = vpack.c.b16 %v5354, %v5353
      %v5400 = vpack.c.b16 %v5356, %v5355
      %v5401 = vpack.c.b16 %v5358, %v5357
      %v5402 = vpack.c.b16 %v5360, %v5359
      %v5403 = vpack.c.b16 %v5362, %v5361
      %v5404 = vpack.c.b16 %v5364, %v5363
      %v5405 = vpack.c.b16 %v5366, %v5365
      %v5406 = vpack.c.b16 %v5368, %v5367
      %v5407 = vpack.c.b16 %v5370, %v5369
      %v5408 = vpack.c.b16 %v5372, %v5371
      %v5409 = vpack.c.b16 %v5374, %v5373
      %v5410 = vpack.c.b16 %v5376, %v5375
      %v5411 = vpack.c.b16 %v5378, %v5377
      %v5412 = vpack.c.b16 %v5380, %v5379
      %v5413 = vpack.c.b16 %v5382, %v5381
      %v5414 = vpack.c.b16 %v5384, %v5383
      %v5415 = vpack.c.b16 %v5386, %v5385
      %v5416 = vpack.c.b16 %v5388, %v5387
      %v5417 = vpack.c.b16 %v5390, %v5389
      %v5418 = vpack.c.b16 %v5392, %v5391
      %v5419 = vpack.c.b16 %v5394, %v5393
      %v5420 = vpack.c.b16 %v5396, %v5395
      %5445 = vmatprep.subr.bf16.mxu0 0
      %5446 = vmatpush1.bf16.msra.mxu0 %v5397
      %5447 = vmatprep.subr.bf16.mxu0 0
      %5448 = vmatpush1.bf16.msra.mxu0 %v5398
      %5449 = vmatprep.subr.bf16.mxu0 0
      %5450 = vmatpush1.bf16.msra.mxu0 %v5399
      %5451 = vmatprep.subr.bf16.mxu0 0
      %5452 = vmatpush1.bf16.msra.mxu0 %v5400
      %5453 = vmatprep.subr.bf16.mxu0 0
      %5454 = vmatpush1.bf16.msra.mxu0 %v5401
      %5455 = vmatprep.subr.bf16.mxu0 0
      %5456 = vmatpush1.bf16.msra.mxu0 %v5402
      %5457 = vmatprep.subr.bf16.mxu0 0
      %5458 = vmatpush1.bf16.msra.mxu0 %v5403
      %5459 = vmatprep.subr.bf16.mxu0 0
      %5460 = vmatpush1.bf16.msra.mxu0 %v5404
      %5461 = vmatprep.subr.bf16.mxu0 0
      %5462 = vmatpush1.bf16.msra.mxu0 %v5405
      %5463 = vmatprep.subr.bf16.mxu0 0
      %5464 = vmatpush1.bf16.msra.mxu0 %v5406
      %5465 = vmatprep.subr.bf16.mxu0 0
      %5466 = vmatpush1.bf16.msra.mxu0 %v5407
      %5467 = vmatprep.subr.bf16.mxu0 0
      %5468 = vmatpush1.bf16.msra.mxu0 %v5408
      %5469 = vmatprep.subr.bf16.mxu0 0
      %5470 = vmatpush1.bf16.msra.mxu0 %v5409
      %5471 = vmatprep.subr.bf16.mxu0 0
      %5472 = vmatpush1.bf16.msra.mxu0 %v5410
      %5473 = vmatprep.subr.bf16.mxu0 0
      %5474 = vmatpush1.bf16.msra.mxu0 %v5411
      %5475 = vmatprep.subr.bf16.mxu0 0
      %5476 = vmatpush1.bf16.msra.mxu0 %v5412
      %5477 = vmatprep.mubr.bf16.mxu0 %v4944
      %5478 = vmatmul.mubr.bf16.gmra.mrb[0].mxu0 %v4853
      %v5479 = vpop.f32.mrb[0].mxu0
      %v5480 = vadd.f32 0.0, %v5479
      %v5481 = vpop.f32.mrb[0].mxu0
      %v5482 = vpop.f32.mrb[0].mxu0
      %v5483 = vadd.f32 0.0, %v5482
      %v5484 = vpop.f32.mrb[0].mxu0
      %5485 = vmatprep.mubr.bf16.mxu0 %v4956
      %5486 = vmatmul.mubr.bf16.gmra.mrb[0].mxu0 %v4854
      %v5487 = vpop.f32.mrb[0].mxu0
      %v5488 = vadd.f32 0.0, %v5487
      %v5489 = vpop.f32.mrb[0].mxu0
      %v5490 = vpop.f32.mrb[0].mxu0
      %v5491 = vadd.f32 0.0, %v5490
      %v5492 = vpop.f32.mrb[0].mxu0
      %5493 = vmatprep.mubr.bf16.mxu0 %v4968
      %5494 = vmatmul.mubr.bf16.gmra.mrb[0].mxu0 %v4855
      %v5495 = vpop.f32.mrb[0].mxu0
      %v5496 = vadd.f32 0.0, %v5495
      %v5497 = vpop.f32.mrb[0].mxu0
      %v5498 = vpop.f32.mrb[0].mxu0
      %v5499 = vadd.f32 0.0, %v5498
      %v5500 = vpop.f32.mrb[0].mxu0
      %5501 = vmatprep.mubr.bf16.mxu0 %v4980
      %5502 = vmatmul.mubr.bf16.gmra.mrb[0].mxu0 %v4856
      %v5503 = vpop.f32.mrb[0].mxu0
      %v5504 = vadd.f32 0.0, %v5503
      %v5505 = vpop.f32.mrb[0].mxu0
      %v5506 = vpop.f32.mrb[0].mxu0
      %v5507 = vadd.f32 0.0, %v5506
      %v5508 = vpop.f32.mrb[0].mxu0
      %5509 = vmatprep.mubr.bf16.mxu0 %v4992
      %5510 = vmatmul.mubr.bf16.gmra.mrb[0].mxu0 %v4857
      %v5511 = vpop.f32.mrb[0].mxu0
      %v5512 = vadd.f32 0.0, %v5511
      %v5513 = vpop.f32.mrb[0].mxu0
      %v5514 = vpop.f32.mrb[0].mxu0
      %v5515 = vadd.f32 0.0, %v5514
      %v5516 = vpop.f32.mrb[0].mxu0
      %5517 = vmatprep.mubr.bf16.mxu0 %v5004
      %5518 = vmatmul.mubr.bf16.gmra.mrb[0].mxu0 %v4858
      %v5519 = vpop.f32.mrb[0].mxu0
      %v5520 = vadd.f32 0.0, %v5519
      %v5521 = vpop.f32.mrb[0].mxu0
      %v5522 = vpop.f32.mrb[0].mxu0
      %v5523 = vadd.f32 0.0, %v5522
      %v5524 = vpop.f32.mrb[0].mxu0
      %5525 = vmatprep.mubr.bf16.mxu0 %v5016
      %5526 = vmatmul.mubr.bf16.gmra.mrb[0].mxu0 %v4859
      %v5527 = vpop.f32.mrb[0].mxu0
      %v5528 = vadd.f32 0.0, %v5527
      %v5529 = vpop.f32.mrb[0].mxu0
      %v5530 = vpop.f32.mrb[0].mxu0
      %v5531 = vadd.f32 0.0, %v5530
      %v5532 = vpop.f32.mrb[0].mxu0
      %5533 = vmatprep.mubr.bf16.mxu0 %v5028
      %5534 = vmatmul.mubr.bf16.gmra.mrb[0].mxu0 %v4860
      %v5535 = vpop.f32.mrb[0].mxu0
      %v5536 = vadd.f32 0.0, %v5535
      %v5537 = vpop.f32.mrb[0].mxu0
      %v5538 = vpop.f32.mrb[0].mxu0
      %v5539 = vadd.f32 0.0, %v5538
      %v5540 = vpop.f32.mrb[0].mxu0
      %5541 = vmatprep.mubr.bf16.mxu0 %v5040
      %5542 = vmatmul.mubr.bf16.gmra.mrb[0].mxu0 %v4861
      %v5543 = vpop.f32.mrb[0].mxu0
      %v5544 = vadd.f32 0.0, %v5543
      %v5545 = vpop.f32.mrb[0].mxu0
      %v5546 = vpop.f32.mrb[0].mxu0
      %v5547 = vadd.f32 0.0, %v5546
      %v5548 = vpop.f32.mrb[0].mxu0
      %5549 = vmatprep.mubr.bf16.mxu0 %v5052
      %5550 = vmatmul.mubr.bf16.gmra.mrb[0].mxu0 %v4862
      %v5551 = vpop.f32.mrb[0].mxu0
      %v5552 = vadd.f32 0.0, %v5551
      %v5553 = vpop.f32.mrb[0].mxu0
      %v5554 = vpop.f32.mrb[0].mxu0
      %v5555 = vadd.f32 0.0, %v5554
      %v5556 = vpop.f32.mrb[0].mxu0
      %5557 = vmatprep.mubr.bf16.mxu0 %v5064
      %5558 = vmatmul.mubr.bf16.gmra.mrb[0].mxu0 %v4863
      %v5559 = vpop.f32.mrb[0].mxu0
      %v5560 = vadd.f32 0.0, %v5559
      %v5561 = vpop.f32.mrb[0].mxu0
      %v5562 = vpop.f32.mrb[0].mxu0
      %v5563 = vadd.f32 0.0, %v5562
      %v5564 = vpop.f32.mrb[0].mxu0
      %5565 = vmatprep.mubr.bf16.mxu0 %v5076
      %5566 = vmatmul.mubr.bf16.gmra.mrb[0].mxu0 %v4864
      %v5567 = vpop.f32.mrb[0].mxu0
      %v5568 = vadd.f32 0.0, %v5567
      %v5569 = vpop.f32.mrb[0].mxu0
      %v5570 = vpop.f32.mrb[0].mxu0
      %v5571 = vadd.f32 0.0, %v5570
      %v5572 = vpop.f32.mrb[0].mxu0
      %5573 = vmatprep.mubr.bf16.mxu0 %v5088
      %5574 = vmatmul.mubr.bf16.gmra.mrb[0].mxu0 %v4865
      %v5575 = vpop.f32.mrb[0].mxu0
      %v5576 = vadd.f32 0.0, %v5575
      %v5577 = vpop.f32.mrb[0].mxu0
      %v5578 = vpop.f32.mrb[0].mxu0
      %v5579 = vadd.f32 0.0, %v5578
      %v5580 = vpop.f32.mrb[0].mxu0
      %5581 = vmatprep.mubr.bf16.mxu0 %v5100
      %5582 = vmatmul.mubr.bf16.gmra.mrb[0].mxu0 %v4866
      %v5583 = vpop.f32.mrb[0].mxu0
      %v5584 = vadd.f32 0.0, %v5583
      %v5585 = vpop.f32.mrb[0].mxu0
      %v5586 = vpop.f32.mrb[0].mxu0
      %v5587 = vadd.f32 0.0, %v5586
      %v5588 = vpop.f32.mrb[0].mxu0
      %5589 = vmatprep.mubr.bf16.mxu0 %v5112
      %5590 = vmatmul.mubr.bf16.gmra.mrb[0].mxu0 %v4867
      %v5591 = vpop.f32.mrb[0].mxu0
      %v5592 = vadd.f32 0.0, %v5591
      %v5593 = vpop.f32.mrb[0].mxu0
      %v5594 = vpop.f32.mrb[0].mxu0
      %v5595 = vadd.f32 0.0, %v5594
      %v5596 = vpop.f32.mrb[0].mxu0
      %5597 = vmatprep.mubr.bf16.mxu0 %v5124
      %5598 = vmatmul.mubr.bf16.gmra.mrb[0].mxu0 %v4868
      %v5599 = vpop.f32.mrb[0].mxu0
      %v5600 = vadd.f32 0.0, %v5599
      %v5601 = vpop.f32.mrb[0].mxu0
      %v5602 = vpop.f32.mrb[0].mxu0
      %v5603 = vadd.f32 0.0, %v5602
      %v5604 = vpop.f32.mrb[0].mxu0
      %5605 = vdwg.mxu0
      %5606 = vmatprep.subr.bf16.mxu0 0
      %5607 = vmatpush1.bf16.msra.mxu0 %v5413
      %5608 = vmatprep.subr.bf16.mxu0 0
      %5609 = vmatpush1.bf16.msra.mxu0 %v5414
      %5610 = vmatprep.subr.bf16.mxu0 0
      %5611 = vmatpush1.bf16.msra.mxu0 %v5415
      %5612 = vmatprep.subr.bf16.mxu0 0
      %5613 = vmatpush1.bf16.msra.mxu0 %v5416
      %5614 = vmatprep.subr.bf16.mxu0 0
      %5615 = vmatpush1.bf16.msra.mxu0 %v5417
      %5616 = vmatprep.subr.bf16.mxu0 0
      %5617 = vmatpush1.bf16.msra.mxu0 %v5418
      %5618 = vmatprep.subr.bf16.mxu0 0
      %5619 = vmatpush1.bf16.msra.mxu0 %v5419
      %5620 = vmatprep.subr.bf16.mxu0 0
      %5621 = vmatpush1.bf16.msra.mxu0 %v5420
      %5622 = vmatprep.subr.bf16.mxu0 0
      %5623 = vmatpush1.bf16.msra.mxu0 0
      %5624 = vmatprep.subr.bf16.mxu0 0
      %5625 = vmatpush1.bf16.msra.mxu0 0
      %5626 = vmatprep.subr.bf16.mxu0 0
      %5627 = vmatpush1.bf16.msra.mxu0 0
      %5628 = vmatprep.subr.bf16.mxu0 0
      %5629 = vmatpush1.bf16.msra.mxu0 0
      %5630 = vmatprep.subr.bf16.mxu0 0
      %5631 = vmatpush1.bf16.msra.mxu0 0
      %5632 = vmatprep.subr.bf16.mxu0 0
      %5633 = vmatpush1.bf16.msra.mxu0 0
      %5634 = vmatprep.subr.bf16.mxu0 0
      %5635 = vmatpush1.bf16.msra.mxu0 0
      %5636 = vmatprep.subr.bf16.mxu0 0
      %5637 = vmatpush1.bf16.msra.mxu0 0
      %5638 = vmatprep.mubr.bf16.mxu0 0
      %5639 = vmatmul.mubr.bf16.gmra.mrb[0].mxu0 %v5191
      %v5640 = vpop.f32.mrb[0].mxu0
      %v5641 = vadd.f32 %v5480, %v5640
      %v5642 = vpop.f32.mrb[0].mxu0
      %v5643 = vpop.f32.mrb[0].mxu0
      %v5644 = vadd.f32 %v5483, %v5643
      %v5645 = vpop.f32.mrb[0].mxu0
      %5646 = vmatprep.mubr.bf16.mxu0 0
      %5647 = vmatmul.mubr.bf16.gmra.mrb[0].mxu0 %v5194
      %v5648 = vpop.f32.mrb[0].mxu0
      %v5649 = vadd.f32 %v5488, %v5648
      %v5650 = vpop.f32.mrb[0].mxu0
      %v5651 = vpop.f32.mrb[0].mxu0
      %v5652 = vadd.f32 %v5491, %v5651
      %v5653 = vpop.f32.mrb[0].mxu0
      %5654 = vmatprep.mubr.bf16.mxu0 0
      %5655 = vmatmul.mubr.bf16.gmra.mrb[0].mxu0 %v5197
      %v5656 = vpop.f32.mrb[0].mxu0
      %v5657 = vadd.f32 %v5496, %v5656
      %v5658 = vpop.f32.mrb[0].mxu0
      %v5659 = vpop.f32.mrb[0].mxu0
      %v5660 = vadd.f32 %v5499, %v5659
      %v5661 = vpop.f32.mrb[0].mxu0
      %5662 = vmatprep.mubr.bf16.mxu0 0
      %5663 = vmatmul.mubr.bf16.gmra.mrb[0].mxu0 %v5200
      %v5664 = vpop.f32.mrb[0].mxu0
      %v5665 = vadd.f32 %v5504, %v5664
      %v5666 = vpop.f32.mrb[0].mxu0
      %v5667 = vpop.f32.mrb[0].mxu0
      %v5668 = vadd.f32 %v5507, %v5667
      %v5669 = vpop.f32.mrb[0].mxu0
      %5670 = vmatprep.mubr.bf16.mxu0 0
      %5671 = vmatmul.mubr.bf16.gmra.mrb[0].mxu0 %v5203
      %v5672 = vpop.f32.mrb[0].mxu0
      %v5673 = vadd.f32 %v5512, %v5672
      %v5674 = vpop.f32.mrb[0].mxu0
      %v5675 = vpop.f32.mrb[0].mxu0
      %v5676 = vadd.f32 %v5515, %v5675
      %v5677 = vpop.f32.mrb[0].mxu0
      %5678 = vmatprep.mubr.bf16.mxu0 0
      %5679 = vmatmul.mubr.bf16.gmra.mrb[0].mxu0 %v5206
      %v5680 = vpop.f32.mrb[0].mxu0
      %v5681 = vadd.f32 %v5520, %v5680
      %v5682 = vpop.f32.mrb[0].mxu0
      %v5683 = vpop.f32.mrb[0].mxu0
      %v5684 = vadd.f32 %v5523, %v5683
      %v5685 = vpop.f32.mrb[0].mxu0
      %5686 = vmatprep.mubr.bf16.mxu0 0
      %5687 = vmatmul.mubr.bf16.gmra.mrb[0].mxu0 %v5209
      %v5688 = vpop.f32.mrb[0].mxu0
      %v5689 = vadd.f32 %v5528, %v5688
      %v5690 = vpop.f32.mrb[0].mxu0
      %v5691 = vpop.f32.mrb[0].mxu0
      %v5692 = vadd.f32 %v5531, %v5691
      %v5693 = vpop.f32.mrb[0].mxu0
      %5694 = vmatprep.mubr.bf16.mxu0 0
      %5695 = vmatmul.mubr.bf16.gmra.mrb[0].mxu0 %v5212
      %v5696 = vpop.f32.mrb[0].mxu0
      %v5697 = vadd.f32 %v5536, %v5696
      %v5698 = vpop.f32.mrb[0].mxu0
      %v5699 = vpop.f32.mrb[0].mxu0
      %v5700 = vadd.f32 %v5539, %v5699
      %v5701 = vpop.f32.mrb[0].mxu0
      %5702 = vmatprep.mubr.bf16.mxu0 0
      %5703 = vmatmul.mubr.bf16.gmra.mrb[0].mxu0 %v5215
      %v5704 = vpop.f32.mrb[0].mxu0
      %v5705 = vadd.f32 %v5544, %v5704
      %v5706 = vpop.f32.mrb[0].mxu0
      %v5707 = vpop.f32.mrb[0].mxu0
      %v5708 = vadd.f32 %v5547, %v5707
      %v5709 = vpop.f32.mrb[0].mxu0
      %5710 = vmatprep.mubr.bf16.mxu0 0
      %5711 = vmatmul.mubr.bf16.gmra.mrb[0].mxu0 %v5218
      %v5712 = vpop.f32.mrb[0].mxu0
      %v5713 = vadd.f32 %v5552, %v5712
      %v5714 = vpop.f32.mrb[0].mxu0
      %v5715 = vpop.f32.mrb[0].mxu0
      %v5716 = vadd.f32 %v5555, %v5715
      %v5717 = vpop.f32.mrb[0].mxu0
      %5718 = vmatprep.mubr.bf16.mxu0 0
      %5719 = vmatmul.mubr.bf16.gmra.mrb[0].mxu0 %v5221
      %v5720 = vpop.f32.mrb[0].mxu0
      %v5721 = vadd.f32 %v5560, %v5720
      %v5722 = vpop.f32.mrb[0].mxu0
      %v5723 = vpop.f32.mrb[0].mxu0
      %v5724 = vadd.f32 %v5563, %v5723
      %v5725 = vpop.f32.mrb[0].mxu0
      %5726 = vmatprep.mubr.bf16.mxu0 0
      %5727 = vmatmul.mubr.bf16.gmra.mrb[0].mxu0 %v5224
      %v5728 = vpop.f32.mrb[0].mxu0
      %v5729 = vadd.f32 %v5568, %v5728
      %v5730 = vpop.f32.mrb[0].mxu0
      %v5731 = vpop.f32.mrb[0].mxu0
      %v5732 = vadd.f32 %v5571, %v5731
      %v5733 = vpop.f32.mrb[0].mxu0
      %5734 = vmatprep.mubr.bf16.mxu0 0
      %5735 = vmatmul.mubr.bf16.gmra.mrb[0].mxu0 %v5227
      %v5736 = vpop.f32.mrb[0].mxu0
      %v5737 = vadd.f32 %v5576, %v5736
      %v5738 = vpop.f32.mrb[0].mxu0
      %v5739 = vpop.f32.mrb[0].mxu0
      %v5740 = vadd.f32 %v5579, %v5739
      %v5741 = vpop.f32.mrb[0].mxu0
      %5742 = vmatprep.mubr.bf16.mxu0 0
      %5743 = vmatmul.mubr.bf16.gmra.mrb[0].mxu0 %v5230
      %v5744 = vpop.f32.mrb[0].mxu0
      %v5745 = vadd.f32 %v5584, %v5744
      %v5746 = vpop.f32.mrb[0].mxu0
      %v5747 = vpop.f32.mrb[0].mxu0
      %v5748 = vadd.f32 %v5587, %v5747
      %v5749 = vpop.f32.mrb[0].mxu0
      %5750 = vmatprep.mubr.bf16.mxu0 0
      %5751 = vmatmul.mubr.bf16.gmra.mrb[0].mxu0 %v5233
      %v5752 = vpop.f32.mrb[0].mxu0
      %v5753 = vadd.f32 %v5592, %v5752
      %v5754 = vpop.f32.mrb[0].mxu0
      %v5755 = vpop.f32.mrb[0].mxu0
      %v5756 = vadd.f32 %v5595, %v5755
      %v5757 = vpop.f32.mrb[0].mxu0
      %5758 = vmatprep.mubr.bf16.mxu0 0
      %5759 = vmatmul.mubr.bf16.gmra.mrb[0].mxu0 %v5236
      %v5760 = vpop.f32.mrb[0].mxu0
      %v5761 = vadd.f32 %v5600, %v5760
      %v5762 = vpop.f32.mrb[0].mxu0
      %v5763 = vpop.f32.mrb[0].mxu0
      %v5764 = vadd.f32 %v5603, %v5763
      %v5765 = vpop.f32.mrb[0].mxu0
      %5766 = vdwg.mxu0
      %5767 = vst [vmem:[#allocation4] sm:$0xff] %v5641
      %5768 = vst [vmem:[#allocation4 + $0x8] sm:$0xff] %v5644
      %5769 = vst [vmem:[#allocation4 + $0x10] sm:$0xff] %v5649
      %5770 = vst [vmem:[#allocation4 + $0x18] sm:$0xff] %v5652
      %5771 = vst [vmem:[#allocation4 + $0x20] sm:$0xff] %v5657
      %5772 = vst [vmem:[#allocation4 + $0x28] sm:$0xff] %v5660
      %5773 = vst [vmem:[#allocation4 + $0x30] sm:$0xff] %v5665
      %5774 = vst [vmem:[#allocation4 + $0x38] sm:$0xff] %v5668
      %5775 = vst [vmem:[#allocation4 + $0x40] sm:$0xff] %v5673
      %5776 = vst [vmem:[#allocation4 + $0x48] sm:$0xff] %v5676
      %5777 = vst [vmem:[#allocation4 + $0x50] sm:$0xff] %v5681
      %5778 = vst [vmem:[#allocation4 + $0x58] sm:$0xff] %v5684
      %5779 = vst [vmem:[#allocation4 + $0x60] sm:$0xff] %v5689
      %5780 = vst [vmem:[#allocation4 + $0x68] sm:$0xff] %v5692
      %5781 = vst [vmem:[#allocation4 + $0x70] sm:$0xff] %v5697
      %5782 = vst [vmem:[#allocation4 + $0x78] sm:$0xff] %v5700
      %5783 = vst [vmem:[#allocation4 + $0x80] sm:$0xff] %v5705
      %5784 = vst [vmem:[#allocation4 + $0x88] sm:$0xff] %v5708
      %5785 = vst [vmem:[#allocation4 + $0x90] sm:$0xff] %v5713
      %5786 = vst [vmem:[#allocation4 + $0x98] sm:$0xff] %v5716
      %5787 = vst [vmem:[#allocation4 + $0xa0] sm:$0xff] %v5721
      %5788 = vst [vmem:[#allocation4 + $0xa8] sm:$0xff] %v5724
      %5789 = vst [vmem:[#allocation4 + $0xb0] sm:$0xff] %v5729
      %5790 = vst [vmem:[#allocation4 + $0xb8] sm:$0xff] %v5732
      %5791 = vst [vmem:[#allocation4 + $0xc0] sm:$0xff] %v5737
      %5792 = vst [vmem:[#allocation4 + $0xc8] sm:$0xff] %v5740
      %5793 = vst [vmem:[#allocation4 + $0xd0] sm:$0xff] %v5745
      %5794 = vst [vmem:[#allocation4 + $0xd8] sm:$0xff] %v5748
      %5795 = vst [vmem:[#allocation4 + $0xe0] sm:$0xff] %v5753
      %5796 = vst [vmem:[#allocation4 + $0xe8] sm:$0xff] %v5756
      %5797 = vst [vmem:[#allocation4 + $0xf0] sm:$0xff] %v5761
      %5798 = vst [vmem:[#allocation4 + $0xf8] sm:$0xff] %v5764
      %s5799 = scalar_lea.vmem [#allocation2], 12
      %v5800 = vld [vmem:[%s5799] sm:$0xf]
      %v5801 = vld [vmem:[%s5799 + $0x4] sm:$0xf]
      %v5802 = vld [vmem:[%s5799 + $0xc] sm:$0xf]
      %v5803 = vld [vmem:[%s5799 + $0x10] sm:$0xf]
      %v5804 = vld [vmem:[%s5799 + $0x18] sm:$0xf]
      %v5805 = vld [vmem:[%s5799 + $0x1c] sm:$0xf]
      %v5806 = vld [vmem:[%s5799 + $0x24] sm:$0xf]
      %v5807 = vld [vmem:[%s5799 + $0x28] sm:$0xf]
      %v5808 = vld [vmem:[%s5799 + $0x30] sm:$0xf]
      %v5809 = vld [vmem:[%s5799 + $0x34] sm:$0xf]
      %v5810 = vld [vmem:[%s5799 + $0x3c] sm:$0xf]
      %v5811 = vld [vmem:[%s5799 + $0x40] sm:$0xf]
      %v5812 = vld [vmem:[%s5799 + $0x48] sm:$0xf]
      %v5813 = vld [vmem:[%s5799 + $0x4c] sm:$0xf]
      %v5814 = vld [vmem:[%s5799 + $0x54] sm:$0xf]
      %v5815 = vld [vmem:[%s5799 + $0x58] sm:$0xf]
      %v5816 = vld [vmem:[%s5799 + $0x60] sm:$0xf]
      %v5817 = vld [vmem:[%s5799 + $0x64] sm:$0xf]
      %v5818 = vld [vmem:[%s5799 + $0x6c] sm:$0xf]
      %v5819 = vld [vmem:[%s5799 + $0x70] sm:$0xf]
      %v5820 = vld [vmem:[%s5799 + $0x78] sm:$0xf]
      %v5821 = vld [vmem:[%s5799 + $0x7c] sm:$0xf]
      %v5822 = vld [vmem:[%s5799 + $0x84] sm:$0xf]
      %v5823 = vld [vmem:[%s5799 + $0x88] sm:$0xf]
      %v5824 = vld [vmem:[%s5799 + $0x90] sm:$0xf]
      %v5825 = vld [vmem:[%s5799 + $0x94] sm:$0xf]
      %v5826 = vld [vmem:[%s5799 + $0x9c] sm:$0xf]
      %v5827 = vld [vmem:[%s5799 + $0xa0] sm:$0xf]
      %v5828 = vld [vmem:[%s5799 + $0xa8] sm:$0xf]
      %v5829 = vld [vmem:[%s5799 + $0xac] sm:$0xf]
      %v5830 = vld [vmem:[%s5799 + $0xb4] sm:$0xf]
      %v5831 = vld [vmem:[%s5799 + $0xb8] sm:$0xf]
      %v5832 = vld [vmem:[%s5799 + $0x8] sm:$0x1]
      %v5833 = vld [vmem:[%s5799 + $0x14] sm:$0x1]
      %v5834 = vld [vmem:[%s5799 + $0x20] sm:$0x1]
      %v5835 = vld [vmem:[%s5799 + $0x2c] sm:$0x1]
      %v5836 = vld [vmem:[%s5799 + $0x38] sm:$0x1]
      %v5837 = vld [vmem:[%s5799 + $0x44] sm:$0x1]
      %v5838 = vld [vmem:[%s5799 + $0x50] sm:$0x1]
      %v5839 = vld [vmem:[%s5799 + $0x5c] sm:$0x1]
      %v5840 = vld [vmem:[%s5799 + $0x68] sm:$0x1]
      %v5841 = vld [vmem:[%s5799 + $0x74] sm:$0x1]
      %v5842 = vld [vmem:[%s5799 + $0x80] sm:$0x1]
      %v5843 = vld [vmem:[%s5799 + $0x8c] sm:$0x1]
      %v5844 = vld [vmem:[%s5799 + $0x98] sm:$0x1]
      %v5845 = vld [vmem:[%s5799 + $0xa4] sm:$0x1]
      %v5846 = vld [vmem:[%s5799 + $0xb0] sm:$0x1]
      %v5847 = vld [vmem:[%s5799 + $0xbc] sm:$0x1]
      %v5848 = vld [vmem:[%s5799] sm:$0xe]
      %v5849 = vld [vmem:[%s5799 + $0xc] sm:$0xe]
      %v5850 = vld [vmem:[%s5799 + $0x18] sm:$0xe]
      %v5851 = vld [vmem:[%s5799 + $0x24] sm:$0xe]
      %v5852 = vld [vmem:[%s5799 + $0x30] sm:$0xe]
      %v5853 = vld [vmem:[%s5799 + $0x3c] sm:$0xe]
      %v5854 = vld [vmem:[%s5799 + $0x48] sm:$0xe]
      %v5855 = vld [vmem:[%s5799 + $0x54] sm:$0xe]
      %v5856 = vld [vmem:[%s5799 + $0x60] sm:$0xe]
      %v5857 = vld [vmem:[%s5799 + $0x6c] sm:$0xe]
      %v5858 = vld [vmem:[%s5799 + $0x78] sm:$0xe]
      %v5859 = vld [vmem:[%s5799 + $0x84] sm:$0xe]
      %v5860 = vld [vmem:[%s5799 + $0x90] sm:$0xe]
      %v5861 = vld [vmem:[%s5799 + $0x9c] sm:$0xe]
      %v5862 = vld [vmem:[%s5799 + $0xa8] sm:$0xe]
      %v5863 = vld [vmem:[%s5799 + $0xb4] sm:$0xe]
      %v5896 = vunpack.c.l.b16 %v5800
      %v5897 = vunpack.c.l.b16 %v5801
      %v5898 = vunpack.c.l.b16 %v5802
      %v5899 = vunpack.c.l.b16 %v5803
      %v5900 = vunpack.c.l.b16 %v5804
      %v5901 = vunpack.c.l.b16 %v5805
      %v5902 = vunpack.c.l.b16 %v5806
      %v5903 = vunpack.c.l.b16 %v5807
      %v5904 = vunpack.c.l.b16 %v5808
      %v5905 = vunpack.c.l.b16 %v5809
      %v5906 = vunpack.c.l.b16 %v5810
      %v5907 = vunpack.c.l.b16 %v5811
      %v5908 = vunpack.c.l.b16 %v5812
      %v5909 = vunpack.c.l.b16 %v5813
      %v5910 = vunpack.c.l.b16 %v5814
      %v5911 = vunpack.c.l.b16 %v5815
      %v5912 = vunpack.c.l.b16 %v5816
      %v5913 = vunpack.c.l.b16 %v5817
      %v5914 = vunpack.c.l.b16 %v5818
      %v5915 = vunpack.c.l.b16 %v5819
      %v5916 = vunpack.c.l.b16 %v5820
      %v5917 = vunpack.c.l.b16 %v5821
      %v5918 = vunpack.c.l.b16 %v5822
      %v5919 = vunpack.c.l.b16 %v5823
      %v5920 = vunpack.c.l.b16 %v5824
      %v5921 = vunpack.c.l.b16 %v5825
      %v5922 = vunpack.c.l.b16 %v5826
      %v5923 = vunpack.c.l.b16 %v5827
      %v5924 = vunpack.c.l.b16 %v5828
      %v5925 = vunpack.c.l.b16 %v5829
      %v5926 = vunpack.c.l.b16 %v5830
      %v5927 = vunpack.c.l.b16 %v5831
      %v5928 = vpack.c.b16 %v5897, %v5896
      %v5929 = vpack.c.b16 %v5899, %v5898
      %v5930 = vpack.c.b16 %v5901, %v5900
      %v5931 = vpack.c.b16 %v5903, %v5902
      %v5932 = vpack.c.b16 %v5905, %v5904
      %v5933 = vpack.c.b16 %v5907, %v5906
      %v5934 = vpack.c.b16 %v5909, %v5908
      %v5935 = vpack.c.b16 %v5911, %v5910
      %v5936 = vpack.c.b16 %v5913, %v5912
      %v5937 = vpack.c.b16 %v5915, %v5914
      %v5938 = vpack.c.b16 %v5917, %v5916
      %v5939 = vpack.c.b16 %v5919, %v5918
      %v5940 = vpack.c.b16 %v5921, %v5920
      %v5941 = vpack.c.b16 %v5923, %v5922
      %v5942 = vpack.c.b16 %v5925, %v5924
      %v5943 = vpack.c.b16 %v5927, %v5926
      %v5976 = vunpack.c.l.b16 %v5832
      %v5977 = vunpack.c.l.b16 %v5833
      %v5978 = vunpack.c.l.b16 %v5834
      %v5979 = vunpack.c.l.b16 %v5835
      %v5980 = vunpack.c.l.b16 %v5836
      %v5981 = vunpack.c.l.b16 %v5837
      %v5982 = vunpack.c.l.b16 %v5838
      %v5983 = vunpack.c.l.b16 %v5839
      %v5984 = vunpack.c.l.b16 %v5840
      %v5985 = vunpack.c.l.b16 %v5841
      %v5986 = vunpack.c.l.b16 %v5842
      %v5987 = vunpack.c.l.b16 %v5843
      %v5988 = vunpack.c.l.b16 %v5844
      %v5989 = vunpack.c.l.b16 %v5845
      %v5990 = vunpack.c.l.b16 %v5846
      %v5991 = vunpack.c.l.b16 %v5847
      %v5992 = vpack.c.b16 %v5976, %v5976
      %v5993 = vpack.c.b16 %v5977, %v5977
      %v5994 = vpack.c.b16 %v5978, %v5978
      %v5995 = vpack.c.b16 %v5979, %v5979
      %v5996 = vpack.c.b16 %v5980, %v5980
      %v5997 = vpack.c.b16 %v5981, %v5981
      %v5998 = vpack.c.b16 %v5982, %v5982
      %v5999 = vpack.c.b16 %v5983, %v5983
      %v6000 = vpack.c.b16 %v5984, %v5984
      %v6001 = vpack.c.b16 %v5985, %v5985
      %v6002 = vpack.c.b16 %v5986, %v5986
      %v6003 = vpack.c.b16 %v5987, %v5987
      %v6004 = vpack.c.b16 %v5988, %v5988
      %v6005 = vpack.c.b16 %v5989, %v5989
      %v6006 = vpack.c.b16 %v5990, %v5990
      %v6007 = vpack.c.b16 %v5991, %v5991
      %v6009 = vshrl.u32 %v5928, 16
      %v6011 = vshll.u32 %v5928, 16
      %v6013 = vrot.slane %v6011, 1
      %v6014 = vor.u32 %v6009, %v6013
      %v6016 = vshll.u32 %v5992, 16
      %v6018 = vrot.slane %v6016, 1
      %v6019 = vsel %vm499, %v6014, %v6018
      %v6021 = vshrl.u32 %v5929, 16
      %v6023 = vshll.u32 %v5929, 16
      %v6025 = vrot.slane %v6023, 1
      %v6026 = vor.u32 %v6021, %v6025
      %v6028 = vshll.u32 %v5993, 16
      %v6030 = vrot.slane %v6028, 1
      %v6031 = vsel %vm499, %v6026, %v6030
      %v6033 = vshrl.u32 %v5930, 16
      %v6035 = vshll.u32 %v5930, 16
      %v6037 = vrot.slane %v6035, 1
      %v6038 = vor.u32 %v6033, %v6037
      %v6040 = vshll.u32 %v5994, 16
      %v6042 = vrot.slane %v6040, 1
      %v6043 = vsel %vm499, %v6038, %v6042
      %v6045 = vshrl.u32 %v5931, 16
      %v6047 = vshll.u32 %v5931, 16
      %v6049 = vrot.slane %v6047, 1
      %v6050 = vor.u32 %v6045, %v6049
      %v6052 = vshll.u32 %v5995, 16
      %v6054 = vrot.slane %v6052, 1
      %v6055 = vsel %vm499, %v6050, %v6054
      %v6057 = vshrl.u32 %v5932, 16
      %v6059 = vshll.u32 %v5932, 16
      %v6061 = vrot.slane %v6059, 1
      %v6062 = vor.u32 %v6057, %v6061
      %v6064 = vshll.u32 %v5996, 16
      %v6066 = vrot.slane %v6064, 1
      %v6067 = vsel %vm499, %v6062, %v6066
      %v6069 = vshrl.u32 %v5933, 16
      %v6071 = vshll.u32 %v5933, 16
      %v6073 = vrot.slane %v6071, 1
      %v6074 = vor.u32 %v6069, %v6073
      %v6076 = vshll.u32 %v5997, 16
      %v6078 = vrot.slane %v6076, 1
      %v6079 = vsel %vm499, %v6074, %v6078
      %v6081 = vshrl.u32 %v5934, 16
      %v6083 = vshll.u32 %v5934, 16
      %v6085 = vrot.slane %v6083, 1
      %v6086 = vor.u32 %v6081, %v6085
      %v6088 = vshll.u32 %v5998, 16
      %v6090 = vrot.slane %v6088, 1
      %v6091 = vsel %vm499, %v6086, %v6090
      %v6093 = vshrl.u32 %v5935, 16
      %v6095 = vshll.u32 %v5935, 16
      %v6097 = vrot.slane %v6095, 1
      %v6098 = vor.u32 %v6093, %v6097
      %v6100 = vshll.u32 %v5999, 16
      %v6102 = vrot.slane %v6100, 1
      %v6103 = vsel %vm499, %v6098, %v6102
      %v6105 = vshrl.u32 %v5936, 16
      %v6107 = vshll.u32 %v5936, 16
      %v6109 = vrot.slane %v6107, 1
      %v6110 = vor.u32 %v6105, %v6109
      %v6112 = vshll.u32 %v6000, 16
      %v6114 = vrot.slane %v6112, 1
      %v6115 = vsel %vm499, %v6110, %v6114
      %v6117 = vshrl.u32 %v5937, 16
      %v6119 = vshll.u32 %v5937, 16
      %v6121 = vrot.slane %v6119, 1
      %v6122 = vor.u32 %v6117, %v6121
      %v6124 = vshll.u32 %v6001, 16
      %v6126 = vrot.slane %v6124, 1
      %v6127 = vsel %vm499, %v6122, %v6126
      %v6129 = vshrl.u32 %v5938, 16
      %v6131 = vshll.u32 %v5938, 16
      %v6133 = vrot.slane %v6131, 1
      %v6134 = vor.u32 %v6129, %v6133
      %v6136 = vshll.u32 %v6002, 16
      %v6138 = vrot.slane %v6136, 1
      %v6139 = vsel %vm499, %v6134, %v6138
      %v6141 = vshrl.u32 %v5939, 16
      %v6143 = vshll.u32 %v5939, 16
      %v6145 = vrot.slane %v6143, 1
      %v6146 = vor.u32 %v6141, %v6145
      %v6148 = vshll.u32 %v6003, 16
      %v6150 = vrot.slane %v6148, 1
      %v6151 = vsel %vm499, %v6146, %v6150
      %v6153 = vshrl.u32 %v5940, 16
      %v6155 = vshll.u32 %v5940, 16
      %v6157 = vrot.slane %v6155, 1
      %v6158 = vor.u32 %v6153, %v6157
      %v6160 = vshll.u32 %v6004, 16
      %v6162 = vrot.slane %v6160, 1
      %v6163 = vsel %vm499, %v6158, %v6162
      %v6165 = vshrl.u32 %v5941, 16
      %v6167 = vshll.u32 %v5941, 16
      %v6169 = vrot.slane %v6167, 1
      %v6170 = vor.u32 %v6165, %v6169
      %v6172 = vshll.u32 %v6005, 16
      %v6174 = vrot.slane %v6172, 1
      %v6175 = vsel %vm499, %v6170, %v6174
      %v6177 = vshrl.u32 %v5942, 16
      %v6179 = vshll.u32 %v5942, 16
      %v6181 = vrot.slane %v6179, 1
      %v6182 = vor.u32 %v6177, %v6181
      %v6184 = vshll.u32 %v6006, 16
      %v6186 = vrot.slane %v6184, 1
      %v6187 = vsel %vm499, %v6182, %v6186
      %v6189 = vshrl.u32 %v5943, 16
      %v6191 = vshll.u32 %v5943, 16
      %v6193 = vrot.slane %v6191, 1
      %v6194 = vor.u32 %v6189, %v6193
      %v6196 = vshll.u32 %v6007, 16
      %v6198 = vrot.slane %v6196, 1
      %v6199 = vsel %vm499, %v6194, %v6198
      %v6232 = vunpack.c.l.b16 %v5848
      %v6233 = vunpack.c.l.b16 %v5849
      %v6234 = vunpack.c.l.b16 %v5850
      %v6235 = vunpack.c.l.b16 %v5851
      %v6236 = vunpack.c.l.b16 %v5852
      %v6237 = vunpack.c.l.b16 %v5853
      %v6238 = vunpack.c.l.b16 %v5854
      %v6239 = vunpack.c.l.b16 %v5855
      %v6240 = vunpack.c.l.b16 %v5856
      %v6241 = vunpack.c.l.b16 %v5857
      %v6242 = vunpack.c.l.b16 %v5858
      %v6243 = vunpack.c.l.b16 %v5859
      %v6244 = vunpack.c.l.b16 %v5860
      %v6245 = vunpack.c.l.b16 %v5861
      %v6246 = vunpack.c.l.b16 %v5862
      %v6247 = vunpack.c.l.b16 %v5863
      %v6248 = vpack.c.b16 %v5897, %v6232
      %v6249 = vpack.c.b16 %v5899, %v6233
      %v6250 = vpack.c.b16 %v5901, %v6234
      %v6251 = vpack.c.b16 %v5903, %v6235
      %v6252 = vpack.c.b16 %v5905, %v6236
      %v6253 = vpack.c.b16 %v5907, %v6237
      %v6254 = vpack.c.b16 %v5909, %v6238
      %v6255 = vpack.c.b16 %v5911, %v6239
      %v6256 = vpack.c.b16 %v5913, %v6240
      %v6257 = vpack.c.b16 %v5915, %v6241
      %v6258 = vpack.c.b16 %v5917, %v6242
      %v6259 = vpack.c.b16 %v5919, %v6243
      %v6260 = vpack.c.b16 %v5921, %v6244
      %v6261 = vpack.c.b16 %v5923, %v6245
      %v6262 = vpack.c.b16 %v5925, %v6246
      %v6263 = vpack.c.b16 %v5927, %v6247
      %v6264 = vrot.slane %v6248, 1
      %v6265 = vrot.slane %v5992, 1
      %v6266 = vsel %vm788, %v6264, %v6265
      %v6267 = vrot.slane %v6249, 1
      %v6268 = vrot.slane %v5993, 1
      %v6269 = vsel %vm788, %v6267, %v6268
      %v6270 = vrot.slane %v6250, 1
      %v6271 = vrot.slane %v5994, 1
      %v6272 = vsel %vm788, %v6270, %v6271
      %v6273 = vrot.slane %v6251, 1
      %v6274 = vrot.slane %v5995, 1
      %v6275 = vsel %vm788, %v6273, %v6274
      %v6276 = vrot.slane %v6252, 1
      %v6277 = vrot.slane %v5996, 1
      %v6278 = vsel %vm788, %v6276, %v6277
      %v6279 = vrot.slane %v6253, 1
      %v6280 = vrot.slane %v5997, 1
      %v6281 = vsel %vm788, %v6279, %v6280
      %v6282 = vrot.slane %v6254, 1
      %v6283 = vrot.slane %v5998, 1
      %v6284 = vsel %vm788, %v6282, %v6283
      %v6285 = vrot.slane %v6255, 1
      %v6286 = vrot.slane %v5999, 1
      %v6287 = vsel %vm788, %v6285, %v6286
      %v6288 = vrot.slane %v6256, 1
      %v6289 = vrot.slane %v6000, 1
      %v6290 = vsel %vm788, %v6288, %v6289
      %v6291 = vrot.slane %v6257, 1
      %v6292 = vrot.slane %v6001, 1
      %v6293 = vsel %vm788, %v6291, %v6292
      %v6294 = vrot.slane %v6258, 1
      %v6295 = vrot.slane %v6002, 1
      %v6296 = vsel %vm788, %v6294, %v6295
      %v6297 = vrot.slane %v6259, 1
      %v6298 = vrot.slane %v6003, 1
      %v6299 = vsel %vm788, %v6297, %v6298
      %v6300 = vrot.slane %v6260, 1
      %v6301 = vrot.slane %v6004, 1
      %v6302 = vsel %vm788, %v6300, %v6301
      %v6303 = vrot.slane %v6261, 1
      %v6304 = vrot.slane %v6005, 1
      %v6305 = vsel %vm788, %v6303, %v6304
      %v6306 = vrot.slane %v6262, 1
      %v6307 = vrot.slane %v6006, 1
      %v6308 = vsel %vm788, %v6306, %v6307
      %v6309 = vrot.slane %v6263, 1
      %v6310 = vrot.slane %v6007, 1
      %v6311 = vsel %vm788, %v6309, %v6310
      %s6328 = scalar_lea.vmem %s3, 192
      %v6329 = vld [vmem:[%s6328] sm:$0xf]
      %v6330 = vld [vmem:[%s6328 + $0x4] sm:$0xf]
      %v6331 = vld [vmem:[%s6328 + $0x8] sm:$0xf]
      %v6332 = vld [vmem:[%s6328 + $0xc] sm:$0xf]
      %v6333 = vld [vmem:[%s6328 + $0x10] sm:$0xf]
      %v6334 = vld [vmem:[%s6328 + $0x14] sm:$0xf]
      %v6335 = vld [vmem:[%s6328 + $0x18] sm:$0xf]
      %v6336 = vld [vmem:[%s6328 + $0x1c] sm:$0xf]
      %v6337 = vld [vmem:[%s6328 + $0x20] sm:$0xf]
      %v6338 = vld [vmem:[%s6328 + $0x24] sm:$0xf]
      %v6339 = vld [vmem:[%s6328 + $0x28] sm:$0xf]
      %v6340 = vld [vmem:[%s6328 + $0x2c] sm:$0xf]
      %v6341 = vld [vmem:[%s6328 + $0x30] sm:$0xf]
      %v6342 = vld [vmem:[%s6328 + $0x34] sm:$0xf]
      %v6343 = vld [vmem:[%s6328 + $0x38] sm:$0xf]
      %v6344 = vld [vmem:[%s6328 + $0x3c] sm:$0xf]
      %v6345 = vld [vmem:[%s6328 + $0x40] sm:$0xf]
      %v6346 = vld [vmem:[%s6328 + $0x44] sm:$0xf]
      %v6347 = vld [vmem:[%s6328 + $0x48] sm:$0xf]
      %v6348 = vld [vmem:[%s6328 + $0x4c] sm:$0xf]
      %v6349 = vld [vmem:[%s6328 + $0x50] sm:$0xf]
      %v6350 = vld [vmem:[%s6328 + $0x54] sm:$0xf]
      %v6351 = vld [vmem:[%s6328 + $0x58] sm:$0xf]
      %v6352 = vld [vmem:[%s6328 + $0x5c] sm:$0xf]
      %v6353 = vld [vmem:[%s6328 + $0x60] sm:$0xf]
      %v6354 = vld [vmem:[%s6328 + $0x64] sm:$0xf]
      %v6355 = vld [vmem:[%s6328 + $0x68] sm:$0xf]
      %v6356 = vld [vmem:[%s6328 + $0x6c] sm:$0xf]
      %v6357 = vld [vmem:[%s6328 + $0x70] sm:$0xf]
      %v6358 = vld [vmem:[%s6328 + $0x74] sm:$0xf]
      %v6359 = vld [vmem:[%s6328 + $0x78] sm:$0xf]
      %v6360 = vld [vmem:[%s6328 + $0x7c] sm:$0xf]
      %v6361 = vld [vmem:[%s6328 + $0x80] sm:$0xf]
      %v6362 = vld [vmem:[%s6328 + $0x84] sm:$0xf]
      %v6363 = vld [vmem:[%s6328 + $0x88] sm:$0xf]
      %v6364 = vld [vmem:[%s6328 + $0x8c] sm:$0xf]
      %v6365 = vld [vmem:[%s6328 + $0x90] sm:$0xf]
      %v6366 = vld [vmem:[%s6328 + $0x94] sm:$0xf]
      %v6367 = vld [vmem:[%s6328 + $0x98] sm:$0xf]
      %v6368 = vld [vmem:[%s6328 + $0x9c] sm:$0xf]
      %v6369 = vld [vmem:[%s6328 + $0xa0] sm:$0xf]
      %v6370 = vld [vmem:[%s6328 + $0xa4] sm:$0xf]
      %v6371 = vld [vmem:[%s6328 + $0xa8] sm:$0xf]
      %v6372 = vld [vmem:[%s6328 + $0xac] sm:$0xf]
      %v6373 = vld [vmem:[%s6328 + $0xb0] sm:$0xf]
      %v6374 = vld [vmem:[%s6328 + $0xb4] sm:$0xf]
      %v6375 = vld [vmem:[%s6328 + $0xb8] sm:$0xf]
      %v6376 = vld [vmem:[%s6328 + $0xbc] sm:$0xf]
      %v6425 = vunpack.c.l.b16 %v6329
      %v6426 = vunpack.c.l.b16 %v6330
      %v6427 = vunpack.c.l.b16 %v6331
      %v6428 = vunpack.c.l.b16 %v6332
      %v6429 = vunpack.c.l.b16 %v6333
      %v6430 = vunpack.c.l.b16 %v6334
      %v6431 = vunpack.c.l.b16 %v6335
      %v6432 = vunpack.c.l.b16 %v6336
      %v6433 = vunpack.c.l.b16 %v6337
      %v6434 = vunpack.c.l.b16 %v6338
      %v6435 = vunpack.c.l.b16 %v6339
      %v6436 = vunpack.c.l.b16 %v6340
      %v6437 = vunpack.c.l.b16 %v6341
      %v6438 = vunpack.c.l.b16 %v6342
      %v6439 = vunpack.c.l.b16 %v6343
      %v6440 = vunpack.c.l.b16 %v6344
      %v6441 = vunpack.c.l.b16 %v6345
      %v6442 = vunpack.c.l.b16 %v6346
      %v6443 = vunpack.c.l.b16 %v6347
      %v6444 = vunpack.c.l.b16 %v6348
      %v6445 = vunpack.c.l.b16 %v6349
      %v6446 = vunpack.c.l.b16 %v6350
      %v6447 = vunpack.c.l.b16 %v6351
      %v6448 = vunpack.c.l.b16 %v6352
      %v6449 = vunpack.c.l.b16 %v6353
      %v6450 = vunpack.c.l.b16 %v6354
      %v6451 = vunpack.c.l.b16 %v6355
      %v6452 = vunpack.c.l.b16 %v6356
      %v6453 = vunpack.c.l.b16 %v6357
      %v6454 = vunpack.c.l.b16 %v6358
      %v6455 = vunpack.c.l.b16 %v6359
      %v6456 = vunpack.c.l.b16 %v6360
      %v6457 = vunpack.c.l.b16 %v6361
      %v6458 = vunpack.c.l.b16 %v6362
      %v6459 = vunpack.c.l.b16 %v6363
      %v6460 = vunpack.c.l.b16 %v6364
      %v6461 = vunpack.c.l.b16 %v6365
      %v6462 = vunpack.c.l.b16 %v6366
      %v6463 = vunpack.c.l.b16 %v6367
      %v6464 = vunpack.c.l.b16 %v6368
      %v6465 = vunpack.c.l.b16 %v6369
      %v6466 = vunpack.c.l.b16 %v6370
      %v6467 = vunpack.c.l.b16 %v6371
      %v6468 = vunpack.c.l.b16 %v6372
      %v6469 = vunpack.c.l.b16 %v6373
      %v6470 = vunpack.c.l.b16 %v6374
      %v6471 = vunpack.c.l.b16 %v6375
      %v6472 = vunpack.c.l.b16 %v6376
      %v6473 = vpack.c.b16 %v6426, %v6425
      %v6474 = vpack.c.b16 %v6428, %v6427
      %v6475 = vpack.c.b16 %v6430, %v6429
      %v6476 = vpack.c.b16 %v6432, %v6431
      %v6477 = vpack.c.b16 %v6434, %v6433
      %v6478 = vpack.c.b16 %v6436, %v6435
      %v6479 = vpack.c.b16 %v6438, %v6437
      %v6480 = vpack.c.b16 %v6440, %v6439
      %v6481 = vpack.c.b16 %v6442, %v6441
      %v6482 = vpack.c.b16 %v6444, %v6443
      %v6483 = vpack.c.b16 %v6446, %v6445
      %v6484 = vpack.c.b16 %v6448, %v6447
      %v6485 = vpack.c.b16 %v6450, %v6449
      %v6486 = vpack.c.b16 %v6452, %v6451
      %v6487 = vpack.c.b16 %v6454, %v6453
      %v6488 = vpack.c.b16 %v6456, %v6455
      %v6489 = vpack.c.b16 %v6458, %v6457
      %v6490 = vpack.c.b16 %v6460, %v6459
      %v6491 = vpack.c.b16 %v6462, %v6461
      %v6492 = vpack.c.b16 %v6464, %v6463
      %v6493 = vpack.c.b16 %v6466, %v6465
      %v6494 = vpack.c.b16 %v6468, %v6467
      %v6495 = vpack.c.b16 %v6470, %v6469
      %v6496 = vpack.c.b16 %v6472, %v6471
      %6521 = vmatprep.subr.bf16.mxu0 0
      %6522 = vmatpush1.bf16.msra.mxu0 %v6473
      %6523 = vmatprep.subr.bf16.mxu0 0
      %6524 = vmatpush1.bf16.msra.mxu0 %v6474
      %6525 = vmatprep.subr.bf16.mxu0 0
      %6526 = vmatpush1.bf16.msra.mxu0 %v6475
      %6527 = vmatprep.subr.bf16.mxu0 0
      %6528 = vmatpush1.bf16.msra.mxu0 %v6476
      %6529 = vmatprep.subr.bf16.mxu0 0
      %6530 = vmatpush1.bf16.msra.mxu0 %v6477
      %6531 = vmatprep.subr.bf16.mxu0 0
      %6532 = vmatpush1.bf16.msra.mxu0 %v6478
      %6533 = vmatprep.subr.bf16.mxu0 0
      %6534 = vmatpush1.bf16.msra.mxu0 %v6479
      %6535 = vmatprep.subr.bf16.mxu0 0
      %6536 = vmatpush1.bf16.msra.mxu0 %v6480
      %6537 = vmatprep.subr.bf16.mxu0 0
      %6538 = vmatpush1.bf16.msra.mxu0 %v6481
      %6539 = vmatprep.subr.bf16.mxu0 0
      %6540 = vmatpush1.bf16.msra.mxu0 %v6482
      %6541 = vmatprep.subr.bf16.mxu0 0
      %6542 = vmatpush1.bf16.msra.mxu0 %v6483
      %6543 = vmatprep.subr.bf16.mxu0 0
      %6544 = vmatpush1.bf16.msra.mxu0 %v6484
      %6545 = vmatprep.subr.bf16.mxu0 0
      %6546 = vmatpush1.bf16.msra.mxu0 %v6485
      %6547 = vmatprep.subr.bf16.mxu0 0
      %6548 = vmatpush1.bf16.msra.mxu0 %v6486
      %6549 = vmatprep.subr.bf16.mxu0 0
      %6550 = vmatpush1.bf16.msra.mxu0 %v6487
      %6551 = vmatprep.subr.bf16.mxu0 0
      %6552 = vmatpush1.bf16.msra.mxu0 %v6488
      %6553 = vmatprep.mubr.bf16.mxu0 %v6019
      %6554 = vmatmul.mubr.bf16.gmra.mrb[0].mxu0 %v5928
      %v6555 = vpop.f32.mrb[0].mxu0
      %v6556 = vadd.f32 0.0, %v6555
      %v6557 = vpop.f32.mrb[0].mxu0
      %v6558 = vpop.f32.mrb[0].mxu0
      %v6559 = vadd.f32 0.0, %v6558
      %v6560 = vpop.f32.mrb[0].mxu0
      %6561 = vmatprep.mubr.bf16.mxu0 %v6031
      %6562 = vmatmul.mubr.bf16.gmra.mrb[0].mxu0 %v5929
      %v6563 = vpop.f32.mrb[0].mxu0
      %v6564 = vadd.f32 0.0, %v6563
      %v6565 = vpop.f32.mrb[0].mxu0
      %v6566 = vpop.f32.mrb[0].mxu0
      %v6567 = vadd.f32 0.0, %v6566
      %v6568 = vpop.f32.mrb[0].mxu0
      %6569 = vmatprep.mubr.bf16.mxu0 %v6043
      %6570 = vmatmul.mubr.bf16.gmra.mrb[0].mxu0 %v5930
      %v6571 = vpop.f32.mrb[0].mxu0
      %v6572 = vadd.f32 0.0, %v6571
      %v6573 = vpop.f32.mrb[0].mxu0
      %v6574 = vpop.f32.mrb[0].mxu0
      %v6575 = vadd.f32 0.0, %v6574
      %v6576 = vpop.f32.mrb[0].mxu0
      %6577 = vmatprep.mubr.bf16.mxu0 %v6055
      %6578 = vmatmul.mubr.bf16.gmra.mrb[0].mxu0 %v5931
      %v6579 = vpop.f32.mrb[0].mxu0
      %v6580 = vadd.f32 0.0, %v6579
      %v6581 = vpop.f32.mrb[0].mxu0
      %v6582 = vpop.f32.mrb[0].mxu0
      %v6583 = vadd.f32 0.0, %v6582
      %v6584 = vpop.f32.mrb[0].mxu0
      %6585 = vmatprep.mubr.bf16.mxu0 %v6067
      %6586 = vmatmul.mubr.bf16.gmra.mrb[0].mxu0 %v5932
      %v6587 = vpop.f32.mrb[0].mxu0
      %v6588 = vadd.f32 0.0, %v6587
      %v6589 = vpop.f32.mrb[0].mxu0
      %v6590 = vpop.f32.mrb[0].mxu0
      %v6591 = vadd.f32 0.0, %v6590
      %v6592 = vpop.f32.mrb[0].mxu0
      %6593 = vmatprep.mubr.bf16.mxu0 %v6079
      %6594 = vmatmul.mubr.bf16.gmra.mrb[0].mxu0 %v5933
      %v6595 = vpop.f32.mrb[0].mxu0
      %v6596 = vadd.f32 0.0, %v6595
      %v6597 = vpop.f32.mrb[0].mxu0
      %v6598 = vpop.f32.mrb[0].mxu0
      %v6599 = vadd.f32 0.0, %v6598
      %v6600 = vpop.f32.mrb[0].mxu0
      %6601 = vmatprep.mubr.bf16.mxu0 %v6091
      %6602 = vmatmul.mubr.bf16.gmra.mrb[0].mxu0 %v5934
      %v6603 = vpop.f32.mrb[0].mxu0
      %v6604 = vadd.f32 0.0, %v6603
      %v6605 = vpop.f32.mrb[0].mxu0
      %v6606 = vpop.f32.mrb[0].mxu0
      %v6607 = vadd.f32 0.0, %v6606
      %v6608 = vpop.f32.mrb[0].mxu0
      %6609 = vmatprep.mubr.bf16.mxu0 %v6103
      %6610 = vmatmul.mubr.bf16.gmra.mrb[0].mxu0 %v5935
      %v6611 = vpop.f32.mrb[0].mxu0
      %v6612 = vadd.f32 0.0, %v6611
      %v6613 = vpop.f32.mrb[0].mxu0
      %v6614 = vpop.f32.mrb[0].mxu0
      %v6615 = vadd.f32 0.0, %v6614
      %v6616 = vpop.f32.mrb[0].mxu0
      %6617 = vmatprep.mubr.bf16.mxu0 %v6115
      %6618 = vmatmul.mubr.bf16.gmra.mrb[0].mxu0 %v5936
      %v6619 = vpop.f32.mrb[0].mxu0
      %v6620 = vadd.f32 0.0, %v6619
      %v6621 = vpop.f32.mrb[0].mxu0
      %v6622 = vpop.f32.mrb[0].mxu0
      %v6623 = vadd.f32 0.0, %v6622
      %v6624 = vpop.f32.mrb[0].mxu0
      %6625 = vmatprep.mubr.bf16.mxu0 %v6127
      %6626 = vmatmul.mubr.bf16.gmra.mrb[0].mxu0 %v5937
      %v6627 = vpop.f32.mrb[0].mxu0
      %v6628 = vadd.f32 0.0, %v6627
      %v6629 = vpop.f32.mrb[0].mxu0
      %v6630 = vpop.f32.mrb[0].mxu0
      %v6631 = vadd.f32 0.0, %v6630
      %v6632 = vpop.f32.mrb[0].mxu0
      %6633 = vmatprep.mubr.bf16.mxu0 %v6139
      %6634 = vmatmul.mubr.bf16.gmra.mrb[0].mxu0 %v5938
      %v6635 = vpop.f32.mrb[0].mxu0
      %v6636 = vadd.f32 0.0, %v6635
      %v6637 = vpop.f32.mrb[0].mxu0
      %v6638 = vpop.f32.mrb[0].mxu0
      %v6639 = vadd.f32 0.0, %v6638
      %v6640 = vpop.f32.mrb[0].mxu0
      %6641 = vmatprep.mubr.bf16.mxu0 %v6151
      %6642 = vmatmul.mubr.bf16.gmra.mrb[0].mxu0 %v5939
      %v6643 = vpop.f32.mrb[0].mxu0
      %v6644 = vadd.f32 0.0, %v6643
      %v6645 = vpop.f32.mrb[0].mxu0
      %v6646 = vpop.f32.mrb[0].mxu0
      %v6647 = vadd.f32 0.0, %v6646
      %v6648 = vpop.f32.mrb[0].mxu0
      %6649 = vmatprep.mubr.bf16.mxu0 %v6163
      %6650 = vmatmul.mubr.bf16.gmra.mrb[0].mxu0 %v5940
      %v6651 = vpop.f32.mrb[0].mxu0
      %v6652 = vadd.f32 0.0, %v6651
      %v6653 = vpop.f32.mrb[0].mxu0
      %v6654 = vpop.f32.mrb[0].mxu0
      %v6655 = vadd.f32 0.0, %v6654
      %v6656 = vpop.f32.mrb[0].mxu0
      %6657 = vmatprep.mubr.bf16.mxu0 %v6175
      %6658 = vmatmul.mubr.bf16.gmra.mrb[0].mxu0 %v5941
      %v6659 = vpop.f32.mrb[0].mxu0
      %v6660 = vadd.f32 0.0, %v6659
      %v6661 = vpop.f32.mrb[0].mxu0
      %v6662 = vpop.f32.mrb[0].mxu0
      %v6663 = vadd.f32 0.0, %v6662
      %v6664 = vpop.f32.mrb[0].mxu0
      %6665 = vmatprep.mubr.bf16.mxu0 %v6187
      %6666 = vmatmul.mubr.bf16.gmra.mrb[0].mxu0 %v5942
      %v6667 = vpop.f32.mrb[0].mxu0
      %v6668 = vadd.f32 0.0, %v6667
      %v6669 = vpop.f32.mrb[0].mxu0
      %v6670 = vpop.f32.mrb[0].mxu0
      %v6671 = vadd.f32 0.0, %v6670
      %v6672 = vpop.f32.mrb[0].mxu0
      %6673 = vmatprep.mubr.bf16.mxu0 %v6199
      %6674 = vmatmul.mubr.bf16.gmra.mrb[0].mxu0 %v5943
      %v6675 = vpop.f32.mrb[0].mxu0
      %v6676 = vadd.f32 0.0, %v6675
      %v6677 = vpop.f32.mrb[0].mxu0
      %v6678 = vpop.f32.mrb[0].mxu0
      %v6679 = vadd.f32 0.0, %v6678
      %v6680 = vpop.f32.mrb[0].mxu0
      %6681 = vdwg.mxu0
      %6682 = vmatprep.subr.bf16.mxu0 0
      %6683 = vmatpush1.bf16.msra.mxu0 %v6489
      %6684 = vmatprep.subr.bf16.mxu0 0
      %6685 = vmatpush1.bf16.msra.mxu0 %v6490
      %6686 = vmatprep.subr.bf16.mxu0 0
      %6687 = vmatpush1.bf16.msra.mxu0 %v6491
      %6688 = vmatprep.subr.bf16.mxu0 0
      %6689 = vmatpush1.bf16.msra.mxu0 %v6492
      %6690 = vmatprep.subr.bf16.mxu0 0
      %6691 = vmatpush1.bf16.msra.mxu0 %v6493
      %6692 = vmatprep.subr.bf16.mxu0 0
      %6693 = vmatpush1.bf16.msra.mxu0 %v6494
      %6694 = vmatprep.subr.bf16.mxu0 0
      %6695 = vmatpush1.bf16.msra.mxu0 %v6495
      %6696 = vmatprep.subr.bf16.mxu0 0
      %6697 = vmatpush1.bf16.msra.mxu0 %v6496
      %6698 = vmatprep.subr.bf16.mxu0 0
      %6699 = vmatpush1.bf16.msra.mxu0 0
      %6700 = vmatprep.subr.bf16.mxu0 0
      %6701 = vmatpush1.bf16.msra.mxu0 0
      %6702 = vmatprep.subr.bf16.mxu0 0
      %6703 = vmatpush1.bf16.msra.mxu0 0
      %6704 = vmatprep.subr.bf16.mxu0 0
      %6705 = vmatpush1.bf16.msra.mxu0 0
      %6706 = vmatprep.subr.bf16.mxu0 0
      %6707 = vmatpush1.bf16.msra.mxu0 0
      %6708 = vmatprep.subr.bf16.mxu0 0
      %6709 = vmatpush1.bf16.msra.mxu0 0
      %6710 = vmatprep.subr.bf16.mxu0 0
      %6711 = vmatpush1.bf16.msra.mxu0 0
      %6712 = vmatprep.subr.bf16.mxu0 0
      %6713 = vmatpush1.bf16.msra.mxu0 0
      %6714 = vmatprep.mubr.bf16.mxu0 0
      %6715 = vmatmul.mubr.bf16.gmra.mrb[0].mxu0 %v6266
      %v6716 = vpop.f32.mrb[0].mxu0
      %v6717 = vadd.f32 %v6556, %v6716
      %v6718 = vpop.f32.mrb[0].mxu0
      %v6719 = vpop.f32.mrb[0].mxu0
      %v6720 = vadd.f32 %v6559, %v6719
      %v6721 = vpop.f32.mrb[0].mxu0
      %6722 = vmatprep.mubr.bf16.mxu0 0
      %6723 = vmatmul.mubr.bf16.gmra.mrb[0].mxu0 %v6269
      %v6724 = vpop.f32.mrb[0].mxu0
      %v6725 = vadd.f32 %v6564, %v6724
      %v6726 = vpop.f32.mrb[0].mxu0
      %v6727 = vpop.f32.mrb[0].mxu0
      %v6728 = vadd.f32 %v6567, %v6727
      %v6729 = vpop.f32.mrb[0].mxu0
      %6730 = vmatprep.mubr.bf16.mxu0 0
      %6731 = vmatmul.mubr.bf16.gmra.mrb[0].mxu0 %v6272
      %v6732 = vpop.f32.mrb[0].mxu0
      %v6733 = vadd.f32 %v6572, %v6732
      %v6734 = vpop.f32.mrb[0].mxu0
      %v6735 = vpop.f32.mrb[0].mxu0
      %v6736 = vadd.f32 %v6575, %v6735
      %v6737 = vpop.f32.mrb[0].mxu0
      %6738 = vmatprep.mubr.bf16.mxu0 0
      %6739 = vmatmul.mubr.bf16.gmra.mrb[0].mxu0 %v6275
      %v6740 = vpop.f32.mrb[0].mxu0
      %v6741 = vadd.f32 %v6580, %v6740
      %v6742 = vpop.f32.mrb[0].mxu0
      %v6743 = vpop.f32.mrb[0].mxu0
      %v6744 = vadd.f32 %v6583, %v6743
      %v6745 = vpop.f32.mrb[0].mxu0
      %6746 = vmatprep.mubr.bf16.mxu0 0
      %6747 = vmatmul.mubr.bf16.gmra.mrb[0].mxu0 %v6278
      %v6748 = vpop.f32.mrb[0].mxu0
      %v6749 = vadd.f32 %v6588, %v6748
      %v6750 = vpop.f32.mrb[0].mxu0
      %v6751 = vpop.f32.mrb[0].mxu0
      %v6752 = vadd.f32 %v6591, %v6751
      %v6753 = vpop.f32.mrb[0].mxu0
      %6754 = vmatprep.mubr.bf16.mxu0 0
      %6755 = vmatmul.mubr.bf16.gmra.mrb[0].mxu0 %v6281
      %v6756 = vpop.f32.mrb[0].mxu0
      %v6757 = vadd.f32 %v6596, %v6756
      %v6758 = vpop.f32.mrb[0].mxu0
      %v6759 = vpop.f32.mrb[0].mxu0
      %v6760 = vadd.f32 %v6599, %v6759
      %v6761 = vpop.f32.mrb[0].mxu0
      %6762 = vmatprep.mubr.bf16.mxu0 0
      %6763 = vmatmul.mubr.bf16.gmra.mrb[0].mxu0 %v6284
      %v6764 = vpop.f32.mrb[0].mxu0
      %v6765 = vadd.f32 %v6604, %v6764
      %v6766 = vpop.f32.mrb[0].mxu0
      %v6767 = vpop.f32.mrb[0].mxu0
      %v6768 = vadd.f32 %v6607, %v6767
      %v6769 = vpop.f32.mrb[0].mxu0
      %6770 = vmatprep.mubr.bf16.mxu0 0
      %6771 = vmatmul.mubr.bf16.gmra.mrb[0].mxu0 %v6287
      %v6772 = vpop.f32.mrb[0].mxu0
      %v6773 = vadd.f32 %v6612, %v6772
      %v6774 = vpop.f32.mrb[0].mxu0
      %v6775 = vpop.f32.mrb[0].mxu0
      %v6776 = vadd.f32 %v6615, %v6775
      %v6777 = vpop.f32.mrb[0].mxu0
      %6778 = vmatprep.mubr.bf16.mxu0 0
      %6779 = vmatmul.mubr.bf16.gmra.mrb[0].mxu0 %v6290
      %v6780 = vpop.f32.mrb[0].mxu0
      %v6781 = vadd.f32 %v6620, %v6780
      %v6782 = vpop.f32.mrb[0].mxu0
      %v6783 = vpop.f32.mrb[0].mxu0
      %v6784 = vadd.f32 %v6623, %v6783
      %v6785 = vpop.f32.mrb[0].mxu0
      %6786 = vmatprep.mubr.bf16.mxu0 0
      %6787 = vmatmul.mubr.bf16.gmra.mrb[0].mxu0 %v6293
      %v6788 = vpop.f32.mrb[0].mxu0
      %v6789 = vadd.f32 %v6628, %v6788
      %v6790 = vpop.f32.mrb[0].mxu0
      %v6791 = vpop.f32.mrb[0].mxu0
      %v6792 = vadd.f32 %v6631, %v6791
      %v6793 = vpop.f32.mrb[0].mxu0
      %6794 = vmatprep.mubr.bf16.mxu0 0
      %6795 = vmatmul.mubr.bf16.gmra.mrb[0].mxu0 %v6296
      %v6796 = vpop.f32.mrb[0].mxu0
      %v6797 = vadd.f32 %v6636, %v6796
      %v6798 = vpop.f32.mrb[0].mxu0
      %v6799 = vpop.f32.mrb[0].mxu0
      %v6800 = vadd.f32 %v6639, %v6799
      %v6801 = vpop.f32.mrb[0].mxu0
      %6802 = vmatprep.mubr.bf16.mxu0 0
      %6803 = vmatmul.mubr.bf16.gmra.mrb[0].mxu0 %v6299
      %v6804 = vpop.f32.mrb[0].mxu0
      %v6805 = vadd.f32 %v6644, %v6804
      %v6806 = vpop.f32.mrb[0].mxu0
      %v6807 = vpop.f32.mrb[0].mxu0
      %v6808 = vadd.f32 %v6647, %v6807
      %v6809 = vpop.f32.mrb[0].mxu0
      %6810 = vmatprep.mubr.bf16.mxu0 0
      %6811 = vmatmul.mubr.bf16.gmra.mrb[0].mxu0 %v6302
      %v6812 = vpop.f32.mrb[0].mxu0
      %v6813 = vadd.f32 %v6652, %v6812
      %v6814 = vpop.f32.mrb[0].mxu0
      %v6815 = vpop.f32.mrb[0].mxu0
      %v6816 = vadd.f32 %v6655, %v6815
      %v6817 = vpop.f32.mrb[0].mxu0
      %6818 = vmatprep.mubr.bf16.mxu0 0
      %6819 = vmatmul.mubr.bf16.gmra.mrb[0].mxu0 %v6305
      %v6820 = vpop.f32.mrb[0].mxu0
      %v6821 = vadd.f32 %v6660, %v6820
      %v6822 = vpop.f32.mrb[0].mxu0
      %v6823 = vpop.f32.mrb[0].mxu0
      %v6824 = vadd.f32 %v6663, %v6823
      %v6825 = vpop.f32.mrb[0].mxu0
      %6826 = vmatprep.mubr.bf16.mxu0 0
      %6827 = vmatmul.mubr.bf16.gmra.mrb[0].mxu0 %v6308
      %v6828 = vpop.f32.mrb[0].mxu0
      %v6829 = vadd.f32 %v6668, %v6828
      %v6830 = vpop.f32.mrb[0].mxu0
      %v6831 = vpop.f32.mrb[0].mxu0
      %v6832 = vadd.f32 %v6671, %v6831
      %v6833 = vpop.f32.mrb[0].mxu0
      %6834 = vmatprep.mubr.bf16.mxu0 0
      %6835 = vmatmul.mubr.bf16.gmra.mrb[0].mxu0 %v6311
      %v6836 = vpop.f32.mrb[0].mxu0
      %v6837 = vadd.f32 %v6676, %v6836
      %v6838 = vpop.f32.mrb[0].mxu0
      %v6839 = vpop.f32.mrb[0].mxu0
      %v6840 = vadd.f32 %v6679, %v6839
      %v6841 = vpop.f32.mrb[0].mxu0
      %6842 = vdwg.mxu0
      %v6843 = vld [vmem:[#allocation4] sm:$0xff]
      %v6844 = vld [vmem:[#allocation4 + $0x8] sm:$0xff]
      %v6845 = vld [vmem:[#allocation4 + $0x10] sm:$0xff]
      %v6846 = vld [vmem:[#allocation4 + $0x18] sm:$0xff]
      %v6847 = vld [vmem:[#allocation4 + $0x20] sm:$0xff]
      %v6848 = vld [vmem:[#allocation4 + $0x28] sm:$0xff]
      %v6849 = vld [vmem:[#allocation4 + $0x30] sm:$0xff]
      %v6850 = vld [vmem:[#allocation4 + $0x38] sm:$0xff]
      %v6851 = vld [vmem:[#allocation4 + $0x40] sm:$0xff]
      %v6852 = vld [vmem:[#allocation4 + $0x48] sm:$0xff]
      %v6853 = vld [vmem:[#allocation4 + $0x50] sm:$0xff]
      %v6854 = vld [vmem:[#allocation4 + $0x58] sm:$0xff]
      %v6855 = vld [vmem:[#allocation4 + $0x60] sm:$0xff]
      %v6856 = vld [vmem:[#allocation4 + $0x68] sm:$0xff]
      %v6857 = vld [vmem:[#allocation4 + $0x70] sm:$0xff]
      %v6858 = vld [vmem:[#allocation4 + $0x78] sm:$0xff]
      %v6859 = vld [vmem:[#allocation4 + $0x80] sm:$0xff]
      %v6860 = vld [vmem:[#allocation4 + $0x88] sm:$0xff]
      %v6861 = vld [vmem:[#allocation4 + $0x90] sm:$0xff]
      %v6862 = vld [vmem:[#allocation4 + $0x98] sm:$0xff]
      %v6863 = vld [vmem:[#allocation4 + $0xa0] sm:$0xff]
      %v6864 = vld [vmem:[#allocation4 + $0xa8] sm:$0xff]
      %v6865 = vld [vmem:[#allocation4 + $0xb0] sm:$0xff]
      %v6866 = vld [vmem:[#allocation4 + $0xb8] sm:$0xff]
      %v6867 = vld [vmem:[#allocation4 + $0xc0] sm:$0xff]
      %v6868 = vld [vmem:[#allocation4 + $0xc8] sm:$0xff]
      %v6869 = vld [vmem:[#allocation4 + $0xd0] sm:$0xff]
      %v6870 = vld [vmem:[#allocation4 + $0xd8] sm:$0xff]
      %v6871 = vld [vmem:[#allocation4 + $0xe0] sm:$0xff]
      %v6872 = vld [vmem:[#allocation4 + $0xe8] sm:$0xff]
      %v6873 = vld [vmem:[#allocation4 + $0xf0] sm:$0xff]
      %v6874 = vld [vmem:[#allocation4 + $0xf8] sm:$0xff]
      %v6875 = vadd.f32 %v6843, %v6717
      %v6876 = vadd.f32 %v6844, %v6720
      %v6877 = vadd.f32 %v6845, %v6725
      %v6878 = vadd.f32 %v6846, %v6728
      %v6879 = vadd.f32 %v6847, %v6733
      %v6880 = vadd.f32 %v6848, %v6736
      %v6881 = vadd.f32 %v6849, %v6741
      %v6882 = vadd.f32 %v6850, %v6744
      %v6883 = vadd.f32 %v6851, %v6749
      %v6884 = vadd.f32 %v6852, %v6752
      %v6885 = vadd.f32 %v6853, %v6757
      %v6886 = vadd.f32 %v6854, %v6760
      %v6887 = vadd.f32 %v6855, %v6765
      %v6888 = vadd.f32 %v6856, %v6768
      %v6889 = vadd.f32 %v6857, %v6773
      %v6890 = vadd.f32 %v6858, %v6776
      %v6891 = vadd.f32 %v6859, %v6781
      %v6892 = vadd.f32 %v6860, %v6784
      %v6893 = vadd.f32 %v6861, %v6789
      %v6894 = vadd.f32 %v6862, %v6792
      %v6895 = vadd.f32 %v6863, %v6797
      %v6896 = vadd.f32 %v6864, %v6800
      %v6897 = vadd.f32 %v6865, %v6805
      %v6898 = vadd.f32 %v6866, %v6808
      %v6899 = vadd.f32 %v6867, %v6813
      %v6900 = vadd.f32 %v6868, %v6816
      %v6901 = vadd.f32 %v6869, %v6821
      %v6902 = vadd.f32 %v6870, %v6824
      %v6903 = vadd.f32 %v6871, %v6829
      %v6904 = vadd.f32 %v6872, %v6832
      %v6905 = vadd.f32 %v6873, %v6837
      %v6906 = vadd.f32 %v6874, %v6840
      %6907 = vst [vmem:[#allocation4] sm:$0xff] %v6875
      %6908 = vst [vmem:[#allocation4 + $0x8] sm:$0xff] %v6876
      %6909 = vst [vmem:[#allocation4 + $0x10] sm:$0xff] %v6877
      %6910 = vst [vmem:[#allocation4 + $0x18] sm:$0xff] %v6878
      %6911 = vst [vmem:[#allocation4 + $0x20] sm:$0xff] %v6879
      %6912 = vst [vmem:[#allocation4 + $0x28] sm:$0xff] %v6880
      %6913 = vst [vmem:[#allocation4 + $0x30] sm:$0xff] %v6881
      %6914 = vst [vmem:[#allocation4 + $0x38] sm:$0xff] %v6882
      %6915 = vst [vmem:[#allocation4 + $0x40] sm:$0xff] %v6883
      %6916 = vst [vmem:[#allocation4 + $0x48] sm:$0xff] %v6884
      %6917 = vst [vmem:[#allocation4 + $0x50] sm:$0xff] %v6885
      %6918 = vst [vmem:[#allocation4 + $0x58] sm:$0xff] %v6886
      %6919 = vst [vmem:[#allocation4 + $0x60] sm:$0xff] %v6887
      %6920 = vst [vmem:[#allocation4 + $0x68] sm:$0xff] %v6888
      %6921 = vst [vmem:[#allocation4 + $0x70] sm:$0xff] %v6889
      %6922 = vst [vmem:[#allocation4 + $0x78] sm:$0xff] %v6890
      %6923 = vst [vmem:[#allocation4 + $0x80] sm:$0xff] %v6891
      %6924 = vst [vmem:[#allocation4 + $0x88] sm:$0xff] %v6892
      %6925 = vst [vmem:[#allocation4 + $0x90] sm:$0xff] %v6893
      %6926 = vst [vmem:[#allocation4 + $0x98] sm:$0xff] %v6894
      %6927 = vst [vmem:[#allocation4 + $0xa0] sm:$0xff] %v6895
      %6928 = vst [vmem:[#allocation4 + $0xa8] sm:$0xff] %v6896
      %6929 = vst [vmem:[#allocation4 + $0xb0] sm:$0xff] %v6897
      %6930 = vst [vmem:[#allocation4 + $0xb8] sm:$0xff] %v6898
      %6931 = vst [vmem:[#allocation4 + $0xc0] sm:$0xff] %v6899
      %6932 = vst [vmem:[#allocation4 + $0xc8] sm:$0xff] %v6900
      %6933 = vst [vmem:[#allocation4 + $0xd0] sm:$0xff] %v6901
      %6934 = vst [vmem:[#allocation4 + $0xd8] sm:$0xff] %v6902
      %6935 = vst [vmem:[#allocation4 + $0xe0] sm:$0xff] %v6903
      %6936 = vst [vmem:[#allocation4 + $0xe8] sm:$0xff] %v6904
      %6937 = vst [vmem:[#allocation4 + $0xf0] sm:$0xff] %v6905
      %6938 = vst [vmem:[#allocation4 + $0xf8] sm:$0xff] %v6906
      %s6939 = scalar_lea.vmem [#allocation2], 24
      %v6940 = vld [vmem:[%s6939] sm:$0xf]
      %v6941 = vld [vmem:[%s6939 + $0x4] sm:$0xf]
      %v6942 = vld [vmem:[%s6939 + $0xc] sm:$0xf]
      %v6943 = vld [vmem:[%s6939 + $0x10] sm:$0xf]
      %v6944 = vld [vmem:[%s6939 + $0x18] sm:$0xf]
      %v6945 = vld [vmem:[%s6939 + $0x1c] sm:$0xf]
      %v6946 = vld [vmem:[%s6939 + $0x24] sm:$0xf]
      %v6947 = vld [vmem:[%s6939 + $0x28] sm:$0xf]
      %v6948 = vld [vmem:[%s6939 + $0x30] sm:$0xf]
      %v6949 = vld [vmem:[%s6939 + $0x34] sm:$0xf]
      %v6950 = vld [vmem:[%s6939 + $0x3c] sm:$0xf]
      %v6951 = vld [vmem:[%s6939 + $0x40] sm:$0xf]
      %v6952 = vld [vmem:[%s6939 + $0x48] sm:$0xf]
      %v6953 = vld [vmem:[%s6939 + $0x4c] sm:$0xf]
      %v6954 = vld [vmem:[%s6939 + $0x54] sm:$0xf]
      %v6955 = vld [vmem:[%s6939 + $0x58] sm:$0xf]
      %v6956 = vld [vmem:[%s6939 + $0x60] sm:$0xf]
      %v6957 = vld [vmem:[%s6939 + $0x64] sm:$0xf]
      %v6958 = vld [vmem:[%s6939 + $0x6c] sm:$0xf]
      %v6959 = vld [vmem:[%s6939 + $0x70] sm:$0xf]
      %v6960 = vld [vmem:[%s6939 + $0x78] sm:$0xf]
      %v6961 = vld [vmem:[%s6939 + $0x7c] sm:$0xf]
      %v6962 = vld [vmem:[%s6939 + $0x84] sm:$0xf]
      %v6963 = vld [vmem:[%s6939 + $0x88] sm:$0xf]
      %v6964 = vld [vmem:[%s6939 + $0x90] sm:$0xf]
      %v6965 = vld [vmem:[%s6939 + $0x94] sm:$0xf]
      %v6966 = vld [vmem:[%s6939 + $0x9c] sm:$0xf]
      %v6967 = vld [vmem:[%s6939 + $0xa0] sm:$0xf]
      %v6968 = vld [vmem:[%s6939 + $0xa8] sm:$0xf]
      %v6969 = vld [vmem:[%s6939 + $0xac] sm:$0xf]
      %v6970 = vld [vmem:[%s6939 + $0xb4] sm:$0xf]
      %v6971 = vld [vmem:[%s6939 + $0xb8] sm:$0xf]
      %v6972 = vld [vmem:[%s6939 + $0x8] sm:$0x1]
      %v6973 = vld [vmem:[%s6939 + $0x14] sm:$0x1]
      %v6974 = vld [vmem:[%s6939 + $0x20] sm:$0x1]
      %v6975 = vld [vmem:[%s6939 + $0x2c] sm:$0x1]
      %v6976 = vld [vmem:[%s6939 + $0x38] sm:$0x1]
      %v6977 = vld [vmem:[%s6939 + $0x44] sm:$0x1]
      %v6978 = vld [vmem:[%s6939 + $0x50] sm:$0x1]
      %v6979 = vld [vmem:[%s6939 + $0x5c] sm:$0x1]
      %v6980 = vld [vmem:[%s6939 + $0x68] sm:$0x1]
      %v6981 = vld [vmem:[%s6939 + $0x74] sm:$0x1]
      %v6982 = vld [vmem:[%s6939 + $0x80] sm:$0x1]
      %v6983 = vld [vmem:[%s6939 + $0x8c] sm:$0x1]
      %v6984 = vld [vmem:[%s6939 + $0x98] sm:$0x1]
      %v6985 = vld [vmem:[%s6939 + $0xa4] sm:$0x1]
      %v6986 = vld [vmem:[%s6939 + $0xb0] sm:$0x1]
      %v6987 = vld [vmem:[%s6939 + $0xbc] sm:$0x1]
      %v6988 = vld [vmem:[%s6939] sm:$0xe]
      %v6989 = vld [vmem:[%s6939 + $0xc] sm:$0xe]
      %v6990 = vld [vmem:[%s6939 + $0x18] sm:$0xe]
      %v6991 = vld [vmem:[%s6939 + $0x24] sm:$0xe]
      %v6992 = vld [vmem:[%s6939 + $0x30] sm:$0xe]
      %v6993 = vld [vmem:[%s6939 + $0x3c] sm:$0xe]
      %v6994 = vld [vmem:[%s6939 + $0x48] sm:$0xe]
      %v6995 = vld [vmem:[%s6939 + $0x54] sm:$0xe]
      %v6996 = vld [vmem:[%s6939 + $0x60] sm:$0xe]
      %v6997 = vld [vmem:[%s6939 + $0x6c] sm:$0xe]
      %v6998 = vld [vmem:[%s6939 + $0x78] sm:$0xe]
      %v6999 = vld [vmem:[%s6939 + $0x84] sm:$0xe]
      %v7000 = vld [vmem:[%s6939 + $0x90] sm:$0xe]
      %v7001 = vld [vmem:[%s6939 + $0x9c] sm:$0xe]
      %v7002 = vld [vmem:[%s6939 + $0xa8] sm:$0xe]
      %v7003 = vld [vmem:[%s6939 + $0xb4] sm:$0xe]
      %v7036 = vunpack.c.l.b16 %v6940
      %v7037 = vunpack.c.l.b16 %v6941
      %v7038 = vunpack.c.l.b16 %v6942
      %v7039 = vunpack.c.l.b16 %v6943
      %v7040 = vunpack.c.l.b16 %v6944
      %v7041 = vunpack.c.l.b16 %v6945
      %v7042 = vunpack.c.l.b16 %v6946
      %v7043 = vunpack.c.l.b16 %v6947
      %v7044 = vunpack.c.l.b16 %v6948
      %v7045 = vunpack.c.l.b16 %v6949
      %v7046 = vunpack.c.l.b16 %v6950
      %v7047 = vunpack.c.l.b16 %v6951
      %v7048 = vunpack.c.l.b16 %v6952
      %v7049 = vunpack.c.l.b16 %v6953
      %v7050 = vunpack.c.l.b16 %v6954
      %v7051 = vunpack.c.l.b16 %v6955
      %v7052 = vunpack.c.l.b16 %v6956
      %v7053 = vunpack.c.l.b16 %v6957
      %v7054 = vunpack.c.l.b16 %v6958
      %v7055 = vunpack.c.l.b16 %v6959
      %v7056 = vunpack.c.l.b16 %v6960
      %v7057 = vunpack.c.l.b16 %v6961
      %v7058 = vunpack.c.l.b16 %v6962
      %v7059 = vunpack.c.l.b16 %v6963
      %v7060 = vunpack.c.l.b16 %v6964
      %v7061 = vunpack.c.l.b16 %v6965
      %v7062 = vunpack.c.l.b16 %v6966
      %v7063 = vunpack.c.l.b16 %v6967
      %v7064 = vunpack.c.l.b16 %v6968
      %v7065 = vunpack.c.l.b16 %v6969
      %v7066 = vunpack.c.l.b16 %v6970
      %v7067 = vunpack.c.l.b16 %v6971
      %v7068 = vpack.c.b16 %v7037, %v7036
      %v7069 = vpack.c.b16 %v7039, %v7038
      %v7070 = vpack.c.b16 %v7041, %v7040
      %v7071 = vpack.c.b16 %v7043, %v7042
      %v7072 = vpack.c.b16 %v7045, %v7044
      %v7073 = vpack.c.b16 %v7047, %v7046
      %v7074 = vpack.c.b16 %v7049, %v7048
      %v7075 = vpack.c.b16 %v7051, %v7050
      %v7076 = vpack.c.b16 %v7053, %v7052
      %v7077 = vpack.c.b16 %v7055, %v7054
      %v7078 = vpack.c.b16 %v7057, %v7056
      %v7079 = vpack.c.b16 %v7059, %v7058
      %v7080 = vpack.c.b16 %v7061, %v7060
      %v7081 = vpack.c.b16 %v7063, %v7062
      %v7082 = vpack.c.b16 %v7065, %v7064
      %v7083 = vpack.c.b16 %v7067, %v7066
      %v7116 = vunpack.c.l.b16 %v6972
      %v7117 = vunpack.c.l.b16 %v6973
      %v7118 = vunpack.c.l.b16 %v6974
      %v7119 = vunpack.c.l.b16 %v6975
      %v7120 = vunpack.c.l.b16 %v6976
      %v7121 = vunpack.c.l.b16 %v6977
      %v7122 = vunpack.c.l.b16 %v6978
      %v7123 = vunpack.c.l.b16 %v6979
      %v7124 = vunpack.c.l.b16 %v6980
      %v7125 = vunpack.c.l.b16 %v6981
      %v7126 = vunpack.c.l.b16 %v6982
      %v7127 = vunpack.c.l.b16 %v6983
      %v7128 = vunpack.c.l.b16 %v6984
      %v7129 = vunpack.c.l.b16 %v6985
      %v7130 = vunpack.c.l.b16 %v6986
      %v7131 = vunpack.c.l.b16 %v6987
      %v7132 = vpack.c.b16 %v7116, %v7116
      %v7133 = vpack.c.b16 %v7117, %v7117
      %v7134 = vpack.c.b16 %v7118, %v7118
      %v7135 = vpack.c.b16 %v7119, %v7119
      %v7136 = vpack.c.b16 %v7120, %v7120
      %v7137 = vpack.c.b16 %v7121, %v7121
      %v7138 = vpack.c.b16 %v7122, %v7122
      %v7139 = vpack.c.b16 %v7123, %v7123
      %v7140 = vpack.c.b16 %v7124, %v7124
      %v7141 = vpack.c.b16 %v7125, %v7125
      %v7142 = vpack.c.b16 %v7126, %v7126
      %v7143 = vpack.c.b16 %v7127, %v7127
      %v7144 = vpack.c.b16 %v7128, %v7128
      %v7145 = vpack.c.b16 %v7129, %v7129
      %v7146 = vpack.c.b16 %v7130, %v7130
      %v7147 = vpack.c.b16 %v7131, %v7131
      %v7149 = vshrl.u32 %v7068, 16
      %v7151 = vshll.u32 %v7068, 16
      %v7153 = vrot.slane %v7151, 1
      %v7154 = vor.u32 %v7149, %v7153
      %v7156 = vshll.u32 %v7132, 16
      %v7158 = vrot.slane %v7156, 1
      %v7159 = vsel %vm499, %v7154, %v7158
      %v7161 = vshrl.u32 %v7069, 16
      %v7163 = vshll.u32 %v7069, 16
      %v7165 = vrot.slane %v7163, 1
      %v7166 = vor.u32 %v7161, %v7165
      %v7168 = vshll.u32 %v7133, 16
      %v7170 = vrot.slane %v7168, 1
      %v7171 = vsel %vm499, %v7166, %v7170
      %v7173 = vshrl.u32 %v7070, 16
      %v7175 = vshll.u32 %v7070, 16
      %v7177 = vrot.slane %v7175, 1
      %v7178 = vor.u32 %v7173, %v7177
      %v7180 = vshll.u32 %v7134, 16
      %v7182 = vrot.slane %v7180, 1
      %v7183 = vsel %vm499, %v7178, %v7182
      %v7185 = vshrl.u32 %v7071, 16
      %v7187 = vshll.u32 %v7071, 16
      %v7189 = vrot.slane %v7187, 1
      %v7190 = vor.u32 %v7185, %v7189
      %v7192 = vshll.u32 %v7135, 16
      %v7194 = vrot.slane %v7192, 1
      %v7195 = vsel %vm499, %v7190, %v7194
      %v7197 = vshrl.u32 %v7072, 16
      %v7199 = vshll.u32 %v7072, 16
      %v7201 = vrot.slane %v7199, 1
      %v7202 = vor.u32 %v7197, %v7201
      %v7204 = vshll.u32 %v7136, 16
      %v7206 = vrot.slane %v7204, 1
      %v7207 = vsel %vm499, %v7202, %v7206
      %v7209 = vshrl.u32 %v7073, 16
      %v7211 = vshll.u32 %v7073, 16
      %v7213 = vrot.slane %v7211, 1
      %v7214 = vor.u32 %v7209, %v7213
      %v7216 = vshll.u32 %v7137, 16
      %v7218 = vrot.slane %v7216, 1
      %v7219 = vsel %vm499, %v7214, %v7218
      %v7221 = vshrl.u32 %v7074, 16
      %v7223 = vshll.u32 %v7074, 16
      %v7225 = vrot.slane %v7223, 1
      %v7226 = vor.u32 %v7221, %v7225
      %v7228 = vshll.u32 %v7138, 16
      %v7230 = vrot.slane %v7228, 1
      %v7231 = vsel %vm499, %v7226, %v7230
      %v7233 = vshrl.u32 %v7075, 16
      %v7235 = vshll.u32 %v7075, 16
      %v7237 = vrot.slane %v7235, 1
      %v7238 = vor.u32 %v7233, %v7237
      %v7240 = vshll.u32 %v7139, 16
      %v7242 = vrot.slane %v7240, 1
      %v7243 = vsel %vm499, %v7238, %v7242
      %v7245 = vshrl.u32 %v7076, 16
      %v7247 = vshll.u32 %v7076, 16
      %v7249 = vrot.slane %v7247, 1
      %v7250 = vor.u32 %v7245, %v7249
      %v7252 = vshll.u32 %v7140, 16
      %v7254 = vrot.slane %v7252, 1
      %v7255 = vsel %vm499, %v7250, %v7254
      %v7257 = vshrl.u32 %v7077, 16
      %v7259 = vshll.u32 %v7077, 16
      %v7261 = vrot.slane %v7259, 1
      %v7262 = vor.u32 %v7257, %v7261
      %v7264 = vshll.u32 %v7141, 16
      %v7266 = vrot.slane %v7264, 1
      %v7267 = vsel %vm499, %v7262, %v7266
      %v7269 = vshrl.u32 %v7078, 16
      %v7271 = vshll.u32 %v7078, 16
      %v7273 = vrot.slane %v7271, 1
      %v7274 = vor.u32 %v7269, %v7273
      %v7276 = vshll.u32 %v7142, 16
      %v7278 = vrot.slane %v7276, 1
      %v7279 = vsel %vm499, %v7274, %v7278
      %v7281 = vshrl.u32 %v7079, 16
      %v7283 = vshll.u32 %v7079, 16
      %v7285 = vrot.slane %v7283, 1
      %v7286 = vor.u32 %v7281, %v7285
      %v7288 = vshll.u32 %v7143, 16
      %v7290 = vrot.slane %v7288, 1
      %v7291 = vsel %vm499, %v7286, %v7290
      %v7293 = vshrl.u32 %v7080, 16
      %v7295 = vshll.u32 %v7080, 16
      %v7297 = vrot.slane %v7295, 1
      %v7298 = vor.u32 %v7293, %v7297
      %v7300 = vshll.u32 %v7144, 16
      %v7302 = vrot.slane %v7300, 1
      %v7303 = vsel %vm499, %v7298, %v7302
      %v7305 = vshrl.u32 %v7081, 16
      %v7307 = vshll.u32 %v7081, 16
      %v7309 = vrot.slane %v7307, 1
      %v7310 = vor.u32 %v7305, %v7309
      %v7312 = vshll.u32 %v7145, 16
      %v7314 = vrot.slane %v7312, 1
      %v7315 = vsel %vm499, %v7310, %v7314
      %v7317 = vshrl.u32 %v7082, 16
      %v7319 = vshll.u32 %v7082, 16
      %v7321 = vrot.slane %v7319, 1
      %v7322 = vor.u32 %v7317, %v7321
      %v7324 = vshll.u32 %v7146, 16
      %v7326 = vrot.slane %v7324, 1
      %v7327 = vsel %vm499, %v7322, %v7326
      %v7329 = vshrl.u32 %v7083, 16
      %v7331 = vshll.u32 %v7083, 16
      %v7333 = vrot.slane %v7331, 1
      %v7334 = vor.u32 %v7329, %v7333
      %v7336 = vshll.u32 %v7147, 16
      %v7338 = vrot.slane %v7336, 1
      %v7339 = vsel %vm499, %v7334, %v7338
      %v7372 = vunpack.c.l.b16 %v6988
      %v7373 = vunpack.c.l.b16 %v6989
      %v7374 = vunpack.c.l.b16 %v6990
      %v7375 = vunpack.c.l.b16 %v6991
      %v7376 = vunpack.c.l.b16 %v6992
      %v7377 = vunpack.c.l.b16 %v6993
      %v7378 = vunpack.c.l.b16 %v6994
      %v7379 = vunpack.c.l.b16 %v6995
      %v7380 = vunpack.c.l.b16 %v6996
      %v7381 = vunpack.c.l.b16 %v6997
      %v7382 = vunpack.c.l.b16 %v6998
      %v7383 = vunpack.c.l.b16 %v6999
      %v7384 = vunpack.c.l.b16 %v7000
      %v7385 = vunpack.c.l.b16 %v7001
      %v7386 = vunpack.c.l.b16 %v7002
      %v7387 = vunpack.c.l.b16 %v7003
      %v7388 = vpack.c.b16 %v7037, %v7372
      %v7389 = vpack.c.b16 %v7039, %v7373
      %v7390 = vpack.c.b16 %v7041, %v7374
      %v7391 = vpack.c.b16 %v7043, %v7375
      %v7392 = vpack.c.b16 %v7045, %v7376
      %v7393 = vpack.c.b16 %v7047, %v7377
      %v7394 = vpack.c.b16 %v7049, %v7378
      %v7395 = vpack.c.b16 %v7051, %v7379
      %v7396 = vpack.c.b16 %v7053, %v7380
      %v7397 = vpack.c.b16 %v7055, %v7381
      %v7398 = vpack.c.b16 %v7057, %v7382
      %v7399 = vpack.c.b16 %v7059, %v7383
      %v7400 = vpack.c.b16 %v7061, %v7384
      %v7401 = vpack.c.b16 %v7063, %v7385
      %v7402 = vpack.c.b16 %v7065, %v7386
      %v7403 = vpack.c.b16 %v7067, %v7387
      %v7404 = vrot.slane %v7388, 1
      %v7405 = vrot.slane %v7132, 1
      %v7406 = vsel %vm788, %v7404, %v7405
      %v7407 = vrot.slane %v7389, 1
      %v7408 = vrot.slane %v7133, 1
      %v7409 = vsel %vm788, %v7407, %v7408
      %v7410 = vrot.slane %v7390, 1
      %v7411 = vrot.slane %v7134, 1
      %v7412 = vsel %vm788, %v7410, %v7411
      %v7413 = vrot.slane %v7391, 1
      %v7414 = vrot.slane %v7135, 1
      %v7415 = vsel %vm788, %v7413, %v7414
      %v7416 = vrot.slane %v7392, 1
      %v7417 = vrot.slane %v7136, 1
      %v7418 = vsel %vm788, %v7416, %v7417
      %v7419 = vrot.slane %v7393, 1
      %v7420 = vrot.slane %v7137, 1
      %v7421 = vsel %vm788, %v7419, %v7420
      %v7422 = vrot.slane %v7394, 1
      %v7423 = vrot.slane %v7138, 1
      %v7424 = vsel %vm788, %v7422, %v7423
      %v7425 = vrot.slane %v7395, 1
      %v7426 = vrot.slane %v7139, 1
      %v7427 = vsel %vm788, %v7425, %v7426
      %v7428 = vrot.slane %v7396, 1
      %v7429 = vrot.slane %v7140, 1
      %v7430 = vsel %vm788, %v7428, %v7429
      %v7431 = vrot.slane %v7397, 1
      %v7432 = vrot.slane %v7141, 1
      %v7433 = vsel %vm788, %v7431, %v7432
      %v7434 = vrot.slane %v7398, 1
      %v7435 = vrot.slane %v7142, 1
      %v7436 = vsel %vm788, %v7434, %v7435
      %v7437 = vrot.slane %v7399, 1
      %v7438 = vrot.slane %v7143, 1
      %v7439 = vsel %vm788, %v7437, %v7438
      %v7440 = vrot.slane %v7400, 1
      %v7441 = vrot.slane %v7144, 1
      %v7442 = vsel %vm788, %v7440, %v7441
      %v7443 = vrot.slane %v7401, 1
      %v7444 = vrot.slane %v7145, 1
      %v7445 = vsel %vm788, %v7443, %v7444
      %v7446 = vrot.slane %v7402, 1
      %v7447 = vrot.slane %v7146, 1
      %v7448 = vsel %vm788, %v7446, %v7447
      %v7449 = vrot.slane %v7403, 1
      %v7450 = vrot.slane %v7147, 1
      %v7451 = vsel %vm788, %v7449, %v7450
      %s7468 = scalar_lea.vmem %s3, 384
      %v7469 = vld [vmem:[%s7468] sm:$0xf]
      %v7470 = vld [vmem:[%s7468 + $0x4] sm:$0xf]
      %v7471 = vld [vmem:[%s7468 + $0x8] sm:$0xf]
      %v7472 = vld [vmem:[%s7468 + $0xc] sm:$0xf]
      %v7473 = vld [vmem:[%s7468 + $0x10] sm:$0xf]
      %v7474 = vld [vmem:[%s7468 + $0x14] sm:$0xf]
      %v7475 = vld [vmem:[%s7468 + $0x18] sm:$0xf]
      %v7476 = vld [vmem:[%s7468 + $0x1c] sm:$0xf]
      %v7477 = vld [vmem:[%s7468 + $0x20] sm:$0xf]
      %v7478 = vld [vmem:[%s7468 + $0x24] sm:$0xf]
      %v7479 = vld [vmem:[%s7468 + $0x28] sm:$0xf]
      %v7480 = vld [vmem:[%s7468 + $0x2c] sm:$0xf]
      %v7481 = vld [vmem:[%s7468 + $0x30] sm:$0xf]
      %v7482 = vld [vmem:[%s7468 + $0x34] sm:$0xf]
      %v7483 = vld [vmem:[%s7468 + $0x38] sm:$0xf]
      %v7484 = vld [vmem:[%s7468 + $0x3c] sm:$0xf]
      %v7485 = vld [vmem:[%s7468 + $0x40] sm:$0xf]
      %v7486 = vld [vmem:[%s7468 + $0x44] sm:$0xf]
      %v7487 = vld [vmem:[%s7468 + $0x48] sm:$0xf]
      %v7488 = vld [vmem:[%s7468 + $0x4c] sm:$0xf]
      %v7489 = vld [vmem:[%s7468 + $0x50] sm:$0xf]
      %v7490 = vld [vmem:[%s7468 + $0x54] sm:$0xf]
      %v7491 = vld [vmem:[%s7468 + $0x58] sm:$0xf]
      %v7492 = vld [vmem:[%s7468 + $0x5c] sm:$0xf]
      %v7493 = vld [vmem:[%s7468 + $0x60] sm:$0xf]
      %v7494 = vld [vmem:[%s7468 + $0x64] sm:$0xf]
      %v7495 = vld [vmem:[%s7468 + $0x68] sm:$0xf]
      %v7496 = vld [vmem:[%s7468 + $0x6c] sm:$0xf]
      %v7497 = vld [vmem:[%s7468 + $0x70] sm:$0xf]
      %v7498 = vld [vmem:[%s7468 + $0x74] sm:$0xf]
      %v7499 = vld [vmem:[%s7468 + $0x78] sm:$0xf]
      %v7500 = vld [vmem:[%s7468 + $0x7c] sm:$0xf]
      %v7501 = vld [vmem:[%s7468 + $0x80] sm:$0xf]
      %v7502 = vld [vmem:[%s7468 + $0x84] sm:$0xf]
      %v7503 = vld [vmem:[%s7468 + $0x88] sm:$0xf]
      %v7504 = vld [vmem:[%s7468 + $0x8c] sm:$0xf]
      %v7505 = vld [vmem:[%s7468 + $0x90] sm:$0xf]
      %v7506 = vld [vmem:[%s7468 + $0x94] sm:$0xf]
      %v7507 = vld [vmem:[%s7468 + $0x98] sm:$0xf]
      %v7508 = vld [vmem:[%s7468 + $0x9c] sm:$0xf]
      %v7509 = vld [vmem:[%s7468 + $0xa0] sm:$0xf]
      %v7510 = vld [vmem:[%s7468 + $0xa4] sm:$0xf]
      %v7511 = vld [vmem:[%s7468 + $0xa8] sm:$0xf]
      %v7512 = vld [vmem:[%s7468 + $0xac] sm:$0xf]
      %v7513 = vld [vmem:[%s7468 + $0xb0] sm:$0xf]
      %v7514 = vld [vmem:[%s7468 + $0xb4] sm:$0xf]
      %v7515 = vld [vmem:[%s7468 + $0xb8] sm:$0xf]
      %v7516 = vld [vmem:[%s7468 + $0xbc] sm:$0xf]
      %v7565 = vunpack.c.l.b16 %v7469
      %v7566 = vunpack.c.l.b16 %v7470
      %v7567 = vunpack.c.l.b16 %v7471
      %v7568 = vunpack.c.l.b16 %v7472
      %v7569 = vunpack.c.l.b16 %v7473
      %v7570 = vunpack.c.l.b16 %v7474
      %v7571 = vunpack.c.l.b16 %v7475
      %v7572 = vunpack.c.l.b16 %v7476
      %v7573 = vunpack.c.l.b16 %v7477
      %v7574 = vunpack.c.l.b16 %v7478
      %v7575 = vunpack.c.l.b16 %v7479
      %v7576 = vunpack.c.l.b16 %v7480
      %v7577 = vunpack.c.l.b16 %v7481
      %v7578 = vunpack.c.l.b16 %v7482
      %v7579 = vunpack.c.l.b16 %v7483
      %v7580 = vunpack.c.l.b16 %v7484
      %v7581 = vunpack.c.l.b16 %v7485
      %v7582 = vunpack.c.l.b16 %v7486
      %v7583 = vunpack.c.l.b16 %v7487
      %v7584 = vunpack.c.l.b16 %v7488
      %v7585 = vunpack.c.l.b16 %v7489
      %v7586 = vunpack.c.l.b16 %v7490
      %v7587 = vunpack.c.l.b16 %v7491
      %v7588 = vunpack.c.l.b16 %v7492
      %v7589 = vunpack.c.l.b16 %v7493
      %v7590 = vunpack.c.l.b16 %v7494
      %v7591 = vunpack.c.l.b16 %v7495
      %v7592 = vunpack.c.l.b16 %v7496
      %v7593 = vunpack.c.l.b16 %v7497
      %v7594 = vunpack.c.l.b16 %v7498
      %v7595 = vunpack.c.l.b16 %v7499
      %v7596 = vunpack.c.l.b16 %v7500
      %v7597 = vunpack.c.l.b16 %v7501
      %v7598 = vunpack.c.l.b16 %v7502
      %v7599 = vunpack.c.l.b16 %v7503
      %v7600 = vunpack.c.l.b16 %v7504
      %v7601 = vunpack.c.l.b16 %v7505
      %v7602 = vunpack.c.l.b16 %v7506
      %v7603 = vunpack.c.l.b16 %v7507
      %v7604 = vunpack.c.l.b16 %v7508
      %v7605 = vunpack.c.l.b16 %v7509
      %v7606 = vunpack.c.l.b16 %v7510
      %v7607 = vunpack.c.l.b16 %v7511
      %v7608 = vunpack.c.l.b16 %v7512
      %v7609 = vunpack.c.l.b16 %v7513
      %v7610 = vunpack.c.l.b16 %v7514
      %v7611 = vunpack.c.l.b16 %v7515
      %v7612 = vunpack.c.l.b16 %v7516
      %v7613 = vpack.c.b16 %v7566, %v7565
      %v7614 = vpack.c.b16 %v7568, %v7567
      %v7615 = vpack.c.b16 %v7570, %v7569
      %v7616 = vpack.c.b16 %v7572, %v7571
      %v7617 = vpack.c.b16 %v7574, %v7573
      %v7618 = vpack.c.b16 %v7576, %v7575
      %v7619 = vpack.c.b16 %v7578, %v7577
      %v7620 = vpack.c.b16 %v7580, %v7579
      %v7621 = vpack.c.b16 %v7582, %v7581
      %v7622 = vpack.c.b16 %v7584, %v7583
      %v7623 = vpack.c.b16 %v7586, %v7585
      %v7624 = vpack.c.b16 %v7588, %v7587
      %v7625 = vpack.c.b16 %v7590, %v7589
      %v7626 = vpack.c.b16 %v7592, %v7591
      %v7627 = vpack.c.b16 %v7594, %v7593
      %v7628 = vpack.c.b16 %v7596, %v7595
      %v7629 = vpack.c.b16 %v7598, %v7597
      %v7630 = vpack.c.b16 %v7600, %v7599
      %v7631 = vpack.c.b16 %v7602, %v7601
      %v7632 = vpack.c.b16 %v7604, %v7603
      %v7633 = vpack.c.b16 %v7606, %v7605
      %v7634 = vpack.c.b16 %v7608, %v7607
      %v7635 = vpack.c.b16 %v7610, %v7609
      %v7636 = vpack.c.b16 %v7612, %v7611
      %7661 = vmatprep.subr.bf16.mxu0 0
      %7662 = vmatpush1.bf16.msra.mxu0 %v7613
      %7663 = vmatprep.subr.bf16.mxu0 0
      %7664 = vmatpush1.bf16.msra.mxu0 %v7614
      %7665 = vmatprep.subr.bf16.mxu0 0
      %7666 = vmatpush1.bf16.msra.mxu0 %v7615
      %7667 = vmatprep.subr.bf16.mxu0 0
      %7668 = vmatpush1.bf16.msra.mxu0 %v7616
      %7669 = vmatprep.subr.bf16.mxu0 0
      %7670 = vmatpush1.bf16.msra.mxu0 %v7617
      %7671 = vmatprep.subr.bf16.mxu0 0
      %7672 = vmatpush1.bf16.msra.mxu0 %v7618
      %7673 = vmatprep.subr.bf16.mxu0 0
      %7674 = vmatpush1.bf16.msra.mxu0 %v7619
      %7675 = vmatprep.subr.bf16.mxu0 0
      %7676 = vmatpush1.bf16.msra.mxu0 %v7620
      %7677 = vmatprep.subr.bf16.mxu0 0
      %7678 = vmatpush1.bf16.msra.mxu0 %v7621
      %7679 = vmatprep.subr.bf16.mxu0 0
      %7680 = vmatpush1.bf16.msra.mxu0 %v7622
      %7681 = vmatprep.subr.bf16.mxu0 0
      %7682 = vmatpush1.bf16.msra.mxu0 %v7623
      %7683 = vmatprep.subr.bf16.mxu0 0
      %7684 = vmatpush1.bf16.msra.mxu0 %v7624
      %7685 = vmatprep.subr.bf16.mxu0 0
      %7686 = vmatpush1.bf16.msra.mxu0 %v7625
      %7687 = vmatprep.subr.bf16.mxu0 0
      %7688 = vmatpush1.bf16.msra.mxu0 %v7626
      %7689 = vmatprep.subr.bf16.mxu0 0
      %7690 = vmatpush1.bf16.msra.mxu0 %v7627
      %7691 = vmatprep.subr.bf16.mxu0 0
      %7692 = vmatpush1.bf16.msra.mxu0 %v7628
      %7693 = vmatprep.mubr.bf16.mxu0 %v7159
      %7694 = vmatmul.mubr.bf16.gmra.mrb[0].mxu0 %v7068
      %v7695 = vpop.f32.mrb[0].mxu0
      %v7696 = vadd.f32 0.0, %v7695
      %v7697 = vpop.f32.mrb[0].mxu0
      %v7698 = vpop.f32.mrb[0].mxu0
      %v7699 = vadd.f32 0.0, %v7698
      %v7700 = vpop.f32.mrb[0].mxu0
      %7701 = vmatprep.mubr.bf16.mxu0 %v7171
      %7702 = vmatmul.mubr.bf16.gmra.mrb[0].mxu0 %v7069
      %v7703 = vpop.f32.mrb[0].mxu0
      %v7704 = vadd.f32 0.0, %v7703
      %v7705 = vpop.f32.mrb[0].mxu0
      %v7706 = vpop.f32.mrb[0].mxu0
      %v7707 = vadd.f32 0.0, %v7706
      %v7708 = vpop.f32.mrb[0].mxu0
      %7709 = vmatprep.mubr.bf16.mxu0 %v7183
      %7710 = vmatmul.mubr.bf16.gmra.mrb[0].mxu0 %v7070
      %v7711 = vpop.f32.mrb[0].mxu0
      %v7712 = vadd.f32 0.0, %v7711
      %v7713 = vpop.f32.mrb[0].mxu0
      %v7714 = vpop.f32.mrb[0].mxu0
      %v7715 = vadd.f32 0.0, %v7714
      %v7716 = vpop.f32.mrb[0].mxu0
      %7717 = vmatprep.mubr.bf16.mxu0 %v7195
      %7718 = vmatmul.mubr.bf16.gmra.mrb[0].mxu0 %v7071
      %v7719 = vpop.f32.mrb[0].mxu0
      %v7720 = vadd.f32 0.0, %v7719
      %v7721 = vpop.f32.mrb[0].mxu0
      %v7722 = vpop.f32.mrb[0].mxu0
      %v7723 = vadd.f32 0.0, %v7722
      %v7724 = vpop.f32.mrb[0].mxu0
      %7725 = vmatprep.mubr.bf16.mxu0 %v7207
      %7726 = vmatmul.mubr.bf16.gmra.mrb[0].mxu0 %v7072
      %v7727 = vpop.f32.mrb[0].mxu0
      %v7728 = vadd.f32 0.0, %v7727
      %v7729 = vpop.f32.mrb[0].mxu0
      %v7730 = vpop.f32.mrb[0].mxu0
      %v7731 = vadd.f32 0.0, %v7730
      %v7732 = vpop.f32.mrb[0].mxu0
      %7733 = vmatprep.mubr.bf16.mxu0 %v7219
      %7734 = vmatmul.mubr.bf16.gmra.mrb[0].mxu0 %v7073
      %v7735 = vpop.f32.mrb[0].mxu0
      %v7736 = vadd.f32 0.0, %v7735
      %v7737 = vpop.f32.mrb[0].mxu0
      %v7738 = vpop.f32.mrb[0].mxu0
      %v7739 = vadd.f32 0.0, %v7738
      %v7740 = vpop.f32.mrb[0].mxu0
      %7741 = vmatprep.mubr.bf16.mxu0 %v7231
      %7742 = vmatmul.mubr.bf16.gmra.mrb[0].mxu0 %v7074
      %v7743 = vpop.f32.mrb[0].mxu0
      %v7744 = vadd.f32 0.0, %v7743
      %v7745 = vpop.f32.mrb[0].mxu0
      %v7746 = vpop.f32.mrb[0].mxu0
      %v7747 = vadd.f32 0.0, %v7746
      %v7748 = vpop.f32.mrb[0].mxu0
      %7749 = vmatprep.mubr.bf16.mxu0 %v7243
      %7750 = vmatmul.mubr.bf16.gmra.mrb[0].mxu0 %v7075
      %v7751 = vpop.f32.mrb[0].mxu0
      %v7752 = vadd.f32 0.0, %v7751
      %v7753 = vpop.f32.mrb[0].mxu0
      %v7754 = vpop.f32.mrb[0].mxu0
      %v7755 = vadd.f32 0.0, %v7754
      %v7756 = vpop.f32.mrb[0].mxu0
      %7757 = vmatprep.mubr.bf16.mxu0 %v7255
      %7758 = vmatmul.mubr.bf16.gmra.mrb[0].mxu0 %v7076
      %v7759 = vpop.f32.mrb[0].mxu0
      %v7760 = vadd.f32 0.0, %v7759
      %v7761 = vpop.f32.mrb[0].mxu0
      %v7762 = vpop.f32.mrb[0].mxu0
      %v7763 = vadd.f32 0.0, %v7762
      %v7764 = vpop.f32.mrb[0].mxu0
      %7765 = vmatprep.mubr.bf16.mxu0 %v7267
      %7766 = vmatmul.mubr.bf16.gmra.mrb[0].mxu0 %v7077
      %v7767 = vpop.f32.mrb[0].mxu0
      %v7768 = vadd.f32 0.0, %v7767
      %v7769 = vpop.f32.mrb[0].mxu0
      %v7770 = vpop.f32.mrb[0].mxu0
      %v7771 = vadd.f32 0.0, %v7770
      %v7772 = vpop.f32.mrb[0].mxu0
      %7773 = vmatprep.mubr.bf16.mxu0 %v7279
      %7774 = vmatmul.mubr.bf16.gmra.mrb[0].mxu0 %v7078
      %v7775 = vpop.f32.mrb[0].mxu0
      %v7776 = vadd.f32 0.0, %v7775
      %v7777 = vpop.f32.mrb[0].mxu0
      %v7778 = vpop.f32.mrb[0].mxu0
      %v7779 = vadd.f32 0.0, %v7778
      %v7780 = vpop.f32.mrb[0].mxu0
      %7781 = vmatprep.mubr.bf16.mxu0 %v7291
      %7782 = vmatmul.mubr.bf16.gmra.mrb[0].mxu0 %v7079
      %v7783 = vpop.f32.mrb[0].mxu0
      %v7784 = vadd.f32 0.0, %v7783
      %v7785 = vpop.f32.mrb[0].mxu0
      %v7786 = vpop.f32.mrb[0].mxu0
      %v7787 = vadd.f32 0.0, %v7786
      %v7788 = vpop.f32.mrb[0].mxu0
      %7789 = vmatprep.mubr.bf16.mxu0 %v7303
      %7790 = vmatmul.mubr.bf16.gmra.mrb[0].mxu0 %v7080
      %v7791 = vpop.f32.mrb[0].mxu0
      %v7792 = vadd.f32 0.0, %v7791
      %v7793 = vpop.f32.mrb[0].mxu0
      %v7794 = vpop.f32.mrb[0].mxu0
      %v7795 = vadd.f32 0.0, %v7794
      %v7796 = vpop.f32.mrb[0].mxu0
      %7797 = vmatprep.mubr.bf16.mxu0 %v7315
      %7798 = vmatmul.mubr.bf16.gmra.mrb[0].mxu0 %v7081
      %v7799 = vpop.f32.mrb[0].mxu0
      %v7800 = vadd.f32 0.0, %v7799
      %v7801 = vpop.f32.mrb[0].mxu0
      %v7802 = vpop.f32.mrb[0].mxu0
      %v7803 = vadd.f32 0.0, %v7802
      %v7804 = vpop.f32.mrb[0].mxu0
      %7805 = vmatprep.mubr.bf16.mxu0 %v7327
      %7806 = vmatmul.mubr.bf16.gmra.mrb[0].mxu0 %v7082
      %v7807 = vpop.f32.mrb[0].mxu0
      %v7808 = vadd.f32 0.0, %v7807
      %v7809 = vpop.f32.mrb[0].mxu0
      %v7810 = vpop.f32.mrb[0].mxu0
      %v7811 = vadd.f32 0.0, %v7810
      %v7812 = vpop.f32.mrb[0].mxu0
      %7813 = vmatprep.mubr.bf16.mxu0 %v7339
      %7814 = vmatmul.mubr.bf16.gmra.mrb[0].mxu0 %v7083
      %v7815 = vpop.f32.mrb[0].mxu0
      %v7816 = vadd.f32 0.0, %v7815
      %v7817 = vpop.f32.mrb[0].mxu0
      %v7818 = vpop.f32.mrb[0].mxu0
      %v7819 = vadd.f32 0.0, %v7818
      %v7820 = vpop.f32.mrb[0].mxu0
      %7821 = vdwg.mxu0
      %7822 = vmatprep.subr.bf16.mxu0 0
      %7823 = vmatpush1.bf16.msra.mxu0 %v7629
      %7824 = vmatprep.subr.bf16.mxu0 0
      %7825 = vmatpush1.bf16.msra.mxu0 %v7630
      %7826 = vmatprep.subr.bf16.mxu0 0
      %7827 = vmatpush1.bf16.msra.mxu0 %v7631
      %7828 = vmatprep.subr.bf16.mxu0 0
      %7829 = vmatpush1.bf16.msra.mxu0 %v7632
      %7830 = vmatprep.subr.bf16.mxu0 0
      %7831 = vmatpush1.bf16.msra.mxu0 %v7633
      %7832 = vmatprep.subr.bf16.mxu0 0
      %7833 = vmatpush1.bf16.msra.mxu0 %v7634
      %7834 = vmatprep.subr.bf16.mxu0 0
      %7835 = vmatpush1.bf16.msra.mxu0 %v7635
      %7836 = vmatprep.subr.bf16.mxu0 0
      %7837 = vmatpush1.bf16.msra.mxu0 %v7636
      %7838 = vmatprep.subr.bf16.mxu0 0
      %7839 = vmatpush1.bf16.msra.mxu0 0
      %7840 = vmatprep.subr.bf16.mxu0 0
      %7841 = vmatpush1.bf16.msra.mxu0 0
      %7842 = vmatprep.subr.bf16.mxu0 0
      %7843 = vmatpush1.bf16.msra.mxu0 0
      %7844 = vmatprep.subr.bf16.mxu0 0
      %7845 = vmatpush1.bf16.msra.mxu0 0
      %7846 = vmatprep.subr.bf16.mxu0 0
      %7847 = vmatpush1.bf16.msra.mxu0 0
      %7848 = vmatprep.subr.bf16.mxu0 0
      %7849 = vmatpush1.bf16.msra.mxu0 0
      %7850 = vmatprep.subr.bf16.mxu0 0
      %7851 = vmatpush1.bf16.msra.mxu0 0
      %7852 = vmatprep.subr.bf16.mxu0 0
      %7853 = vmatpush1.bf16.msra.mxu0 0
      %7854 = vmatprep.mubr.bf16.mxu0 0
      %7855 = vmatmul.mubr.bf16.gmra.mrb[0].mxu0 %v7406
      %v7856 = vpop.f32.mrb[0].mxu0
      %v7857 = vadd.f32 %v7696, %v7856
      %v7858 = vpop.f32.mrb[0].mxu0
      %v7859 = vpop.f32.mrb[0].mxu0
      %v7860 = vadd.f32 %v7699, %v7859
      %v7861 = vpop.f32.mrb[0].mxu0
      %7862 = vmatprep.mubr.bf16.mxu0 0
      %7863 = vmatmul.mubr.bf16.gmra.mrb[0].mxu0 %v7409
      %v7864 = vpop.f32.mrb[0].mxu0
      %v7865 = vadd.f32 %v7704, %v7864
      %v7866 = vpop.f32.mrb[0].mxu0
      %v7867 = vpop.f32.mrb[0].mxu0
      %v7868 = vadd.f32 %v7707, %v7867
      %v7869 = vpop.f32.mrb[0].mxu0
      %7870 = vmatprep.mubr.bf16.mxu0 0
      %7871 = vmatmul.mubr.bf16.gmra.mrb[0].mxu0 %v7412
      %v7872 = vpop.f32.mrb[0].mxu0
      %v7873 = vadd.f32 %v7712, %v7872
      %v7874 = vpop.f32.mrb[0].mxu0
      %v7875 = vpop.f32.mrb[0].mxu0
      %v7876 = vadd.f32 %v7715, %v7875
      %v7877 = vpop.f32.mrb[0].mxu0
      %7878 = vmatprep.mubr.bf16.mxu0 0
      %7879 = vmatmul.mubr.bf16.gmra.mrb[0].mxu0 %v7415
      %v7880 = vpop.f32.mrb[0].mxu0
      %v7881 = vadd.f32 %v7720, %v7880
      %v7882 = vpop.f32.mrb[0].mxu0
      %v7883 = vpop.f32.mrb[0].mxu0
      %v7884 = vadd.f32 %v7723, %v7883
      %v7885 = vpop.f32.mrb[0].mxu0
      %7886 = vmatprep.mubr.bf16.mxu0 0
      %7887 = vmatmul.mubr.bf16.gmra.mrb[0].mxu0 %v7418
      %v7888 = vpop.f32.mrb[0].mxu0
      %v7889 = vadd.f32 %v7728, %v7888
      %v7890 = vpop.f32.mrb[0].mxu0
      %v7891 = vpop.f32.mrb[0].mxu0
      %v7892 = vadd.f32 %v7731, %v7891
      %v7893 = vpop.f32.mrb[0].mxu0
      %7894 = vmatprep.mubr.bf16.mxu0 0
      %7895 = vmatmul.mubr.bf16.gmra.mrb[0].mxu0 %v7421
      %v7896 = vpop.f32.mrb[0].mxu0
      %v7897 = vadd.f32 %v7736, %v7896
      %v7898 = vpop.f32.mrb[0].mxu0
      %v7899 = vpop.f32.mrb[0].mxu0
      %v7900 = vadd.f32 %v7739, %v7899
      %v7901 = vpop.f32.mrb[0].mxu0
      %7902 = vmatprep.mubr.bf16.mxu0 0
      %7903 = vmatmul.mubr.bf16.gmra.mrb[0].mxu0 %v7424
      %v7904 = vpop.f32.mrb[0].mxu0
      %v7905 = vadd.f32 %v7744, %v7904
      %v7906 = vpop.f32.mrb[0].mxu0
      %v7907 = vpop.f32.mrb[0].mxu0
      %v7908 = vadd.f32 %v7747, %v7907
      %v7909 = vpop.f32.mrb[0].mxu0
      %7910 = vmatprep.mubr.bf16.mxu0 0
      %7911 = vmatmul.mubr.bf16.gmra.mrb[0].mxu0 %v7427
      %v7912 = vpop.f32.mrb[0].mxu0
      %v7913 = vadd.f32 %v7752, %v7912
      %v7914 = vpop.f32.mrb[0].mxu0
      %v7915 = vpop.f32.mrb[0].mxu0
      %v7916 = vadd.f32 %v7755, %v7915
      %v7917 = vpop.f32.mrb[0].mxu0
      %7918 = vmatprep.mubr.bf16.mxu0 0
      %7919 = vmatmul.mubr.bf16.gmra.mrb[0].mxu0 %v7430
      %v7920 = vpop.f32.mrb[0].mxu0
      %v7921 = vadd.f32 %v7760, %v7920
      %v7922 = vpop.f32.mrb[0].mxu0
      %v7923 = vpop.f32.mrb[0].mxu0
      %v7924 = vadd.f32 %v7763, %v7923
      %v7925 = vpop.f32.mrb[0].mxu0
      %7926 = vmatprep.mubr.bf16.mxu0 0
      %7927 = vmatmul.mubr.bf16.gmra.mrb[0].mxu0 %v7433
      %v7928 = vpop.f32.mrb[0].mxu0
      %v7929 = vadd.f32 %v7768, %v7928
      %v7930 = vpop.f32.mrb[0].mxu0
      %v7931 = vpop.f32.mrb[0].mxu0
      %v7932 = vadd.f32 %v7771, %v7931
      %v7933 = vpop.f32.mrb[0].mxu0
      %7934 = vmatprep.mubr.bf16.mxu0 0
      %7935 = vmatmul.mubr.bf16.gmra.mrb[0].mxu0 %v7436
      %v7936 = vpop.f32.mrb[0].mxu0
      %v7937 = vadd.f32 %v7776, %v7936
      %v7938 = vpop.f32.mrb[0].mxu0
      %v7939 = vpop.f32.mrb[0].mxu0
      %v7940 = vadd.f32 %v7779, %v7939
      %v7941 = vpop.f32.mrb[0].mxu0
      %7942 = vmatprep.mubr.bf16.mxu0 0
      %7943 = vmatmul.mubr.bf16.gmra.mrb[0].mxu0 %v7439
      %v7944 = vpop.f32.mrb[0].mxu0
      %v7945 = vadd.f32 %v7784, %v7944
      %v7946 = vpop.f32.mrb[0].mxu0
      %v7947 = vpop.f32.mrb[0].mxu0
      %v7948 = vadd.f32 %v7787, %v7947
      %v7949 = vpop.f32.mrb[0].mxu0
      %7950 = vmatprep.mubr.bf16.mxu0 0
      %7951 = vmatmul.mubr.bf16.gmra.mrb[0].mxu0 %v7442
      %v7952 = vpop.f32.mrb[0].mxu0
      %v7953 = vadd.f32 %v7792, %v7952
      %v7954 = vpop.f32.mrb[0].mxu0
      %v7955 = vpop.f32.mrb[0].mxu0
      %v7956 = vadd.f32 %v7795, %v7955
      %v7957 = vpop.f32.mrb[0].mxu0
      %7958 = vmatprep.mubr.bf16.mxu0 0
      %7959 = vmatmul.mubr.bf16.gmra.mrb[0].mxu0 %v7445
      %v7960 = vpop.f32.mrb[0].mxu0
      %v7961 = vadd.f32 %v7800, %v7960
      %v7962 = vpop.f32.mrb[0].mxu0
      %v7963 = vpop.f32.mrb[0].mxu0
      %v7964 = vadd.f32 %v7803, %v7963
      %v7965 = vpop.f32.mrb[0].mxu0
      %7966 = vmatprep.mubr.bf16.mxu0 0
      %7967 = vmatmul.mubr.bf16.gmra.mrb[0].mxu0 %v7448
      %v7968 = vpop.f32.mrb[0].mxu0
      %v7969 = vadd.f32 %v7808, %v7968
      %v7970 = vpop.f32.mrb[0].mxu0
      %v7971 = vpop.f32.mrb[0].mxu0
      %v7972 = vadd.f32 %v7811, %v7971
      %v7973 = vpop.f32.mrb[0].mxu0
      %7974 = vmatprep.mubr.bf16.mxu0 0
      %7975 = vmatmul.mubr.bf16.gmra.mrb[0].mxu0 %v7451
      %v7976 = vpop.f32.mrb[0].mxu0
      %v7977 = vadd.f32 %v7816, %v7976
      %v7978 = vpop.f32.mrb[0].mxu0
      %v7979 = vpop.f32.mrb[0].mxu0
      %v7980 = vadd.f32 %v7819, %v7979
      %v7981 = vpop.f32.mrb[0].mxu0
      %7982 = vdwg.mxu0
      %v7983 = vld [vmem:[#allocation4] sm:$0xff]
      %v7984 = vld [vmem:[#allocation4 + $0x8] sm:$0xff]
      %v7985 = vld [vmem:[#allocation4 + $0x10] sm:$0xff]
      %v7986 = vld [vmem:[#allocation4 + $0x18] sm:$0xff]
      %v7987 = vld [vmem:[#allocation4 + $0x20] sm:$0xff]
      %v7988 = vld [vmem:[#allocation4 + $0x28] sm:$0xff]
      %v7989 = vld [vmem:[#allocation4 + $0x30] sm:$0xff]
      %v7990 = vld [vmem:[#allocation4 + $0x38] sm:$0xff]
      %v7991 = vld [vmem:[#allocation4 + $0x40] sm:$0xff]
      %v7992 = vld [vmem:[#allocation4 + $0x48] sm:$0xff]
      %v7993 = vld [vmem:[#allocation4 + $0x50] sm:$0xff]
      %v7994 = vld [vmem:[#allocation4 + $0x58] sm:$0xff]
      %v7995 = vld [vmem:[#allocation4 + $0x60] sm:$0xff]
      %v7996 = vld [vmem:[#allocation4 + $0x68] sm:$0xff]
      %v7997 = vld [vmem:[#allocation4 + $0x70] sm:$0xff]
      %v7998 = vld [vmem:[#allocation4 + $0x78] sm:$0xff]
      %v7999 = vld [vmem:[#allocation4 + $0x80] sm:$0xff]
      %v8000 = vld [vmem:[#allocation4 + $0x88] sm:$0xff]
      %v8001 = vld [vmem:[#allocation4 + $0x90] sm:$0xff]
      %v8002 = vld [vmem:[#allocation4 + $0x98] sm:$0xff]
      %v8003 = vld [vmem:[#allocation4 + $0xa0] sm:$0xff]
      %v8004 = vld [vmem:[#allocation4 + $0xa8] sm:$0xff]
      %v8005 = vld [vmem:[#allocation4 + $0xb0] sm:$0xff]
      %v8006 = vld [vmem:[#allocation4 + $0xb8] sm:$0xff]
      %v8007 = vld [vmem:[#allocation4 + $0xc0] sm:$0xff]
      %v8008 = vld [vmem:[#allocation4 + $0xc8] sm:$0xff]
      %v8009 = vld [vmem:[#allocation4 + $0xd0] sm:$0xff]
      %v8010 = vld [vmem:[#allocation4 + $0xd8] sm:$0xff]
      %v8011 = vld [vmem:[#allocation4 + $0xe0] sm:$0xff]
      %v8012 = vld [vmem:[#allocation4 + $0xe8] sm:$0xff]
      %v8013 = vld [vmem:[#allocation4 + $0xf0] sm:$0xff]
      %v8014 = vld [vmem:[#allocation4 + $0xf8] sm:$0xff]
      %v8015 = vadd.f32 %v7983, %v7857
      %v8016 = vadd.f32 %v7984, %v7860
      %v8017 = vadd.f32 %v7985, %v7865
      %v8018 = vadd.f32 %v7986, %v7868
      %v8019 = vadd.f32 %v7987, %v7873
      %v8020 = vadd.f32 %v7988, %v7876
      %v8021 = vadd.f32 %v7989, %v7881
      %v8022 = vadd.f32 %v7990, %v7884
      %v8023 = vadd.f32 %v7991, %v7889
      %v8024 = vadd.f32 %v7992, %v7892
      %v8025 = vadd.f32 %v7993, %v7897
      %v8026 = vadd.f32 %v7994, %v7900
      %v8027 = vadd.f32 %v7995, %v7905
      %v8028 = vadd.f32 %v7996, %v7908
      %v8029 = vadd.f32 %v7997, %v7913
      %v8030 = vadd.f32 %v7998, %v7916
      %v8031 = vadd.f32 %v7999, %v7921
      %v8032 = vadd.f32 %v8000, %v7924
      %v8033 = vadd.f32 %v8001, %v7929
      %v8034 = vadd.f32 %v8002, %v7932
      %v8035 = vadd.f32 %v8003, %v7937
      %v8036 = vadd.f32 %v8004, %v7940
      %v8037 = vadd.f32 %v8005, %v7945
      %v8038 = vadd.f32 %v8006, %v7948
      %v8039 = vadd.f32 %v8007, %v7953
      %v8040 = vadd.f32 %v8008, %v7956
      %v8041 = vadd.f32 %v8009, %v7961
      %v8042 = vadd.f32 %v8010, %v7964
      %v8043 = vadd.f32 %v8011, %v7969
      %v8044 = vadd.f32 %v8012, %v7972
      %v8045 = vadd.f32 %v8013, %v7977
      %v8046 = vadd.f32 %v8014, %v7980
      %8047 = vst [vmem:[#allocation4] sm:$0xff] %v8015
      %8048 = vst [vmem:[#allocation4 + $0x8] sm:$0xff] %v8016
      %8049 = vst [vmem:[#allocation4 + $0x10] sm:$0xff] %v8017
      %8050 = vst [vmem:[#allocation4 + $0x18] sm:$0xff] %v8018
      %8051 = vst [vmem:[#allocation4 + $0x20] sm:$0xff] %v8019
      %8052 = vst [vmem:[#allocation4 + $0x28] sm:$0xff] %v8020
      %8053 = vst [vmem:[#allocation4 + $0x30] sm:$0xff] %v8021
      %8054 = vst [vmem:[#allocation4 + $0x38] sm:$0xff] %v8022
      %8055 = vst [vmem:[#allocation4 + $0x40] sm:$0xff] %v8023
      %8056 = vst [vmem:[#allocation4 + $0x48] sm:$0xff] %v8024
      %8057 = vst [vmem:[#allocation4 + $0x50] sm:$0xff] %v8025
      %8058 = vst [vmem:[#allocation4 + $0x58] sm:$0xff] %v8026
      %8059 = vst [vmem:[#allocation4 + $0x60] sm:$0xff] %v8027
      %8060 = vst [vmem:[#allocation4 + $0x68] sm:$0xff] %v8028
      %8061 = vst [vmem:[#allocation4 + $0x70] sm:$0xff] %v8029
      %8062 = vst [vmem:[#allocation4 + $0x78] sm:$0xff] %v8030
      %8063 = vst [vmem:[#allocation4 + $0x80] sm:$0xff] %v8031
      %8064 = vst [vmem:[#allocation4 + $0x88] sm:$0xff] %v8032
      %8065 = vst [vmem:[#allocation4 + $0x90] sm:$0xff] %v8033
      %8066 = vst [vmem:[#allocation4 + $0x98] sm:$0xff] %v8034
      %8067 = vst [vmem:[#allocation4 + $0xa0] sm:$0xff] %v8035
      %8068 = vst [vmem:[#allocation4 + $0xa8] sm:$0xff] %v8036
      %8069 = vst [vmem:[#allocation4 + $0xb0] sm:$0xff] %v8037
      %8070 = vst [vmem:[#allocation4 + $0xb8] sm:$0xff] %v8038
      %8071 = vst [vmem:[#allocation4 + $0xc0] sm:$0xff] %v8039
      %8072 = vst [vmem:[#allocation4 + $0xc8] sm:$0xff] %v8040
      %8073 = vst [vmem:[#allocation4 + $0xd0] sm:$0xff] %v8041
      %8074 = vst [vmem:[#allocation4 + $0xd8] sm:$0xff] %v8042
      %8075 = vst [vmem:[#allocation4 + $0xe0] sm:$0xff] %v8043
      %8076 = vst [vmem:[#allocation4 + $0xe8] sm:$0xff] %v8044
      %8077 = vst [vmem:[#allocation4 + $0xf0] sm:$0xff] %v8045
      %8078 = vst [vmem:[#allocation4 + $0xf8] sm:$0xff] %v8046
      %v8079 = vld [vmem:[#allocation4] sm:$0xff]
      %v8080 = vld [vmem:[#allocation4 + $0x8] sm:$0xff]
      %v8081 = vld [vmem:[#allocation4 + $0x10] sm:$0xff]
      %v8082 = vld [vmem:[#allocation4 + $0x18] sm:$0xff]
      %v8083 = vld [vmem:[#allocation4 + $0x20] sm:$0xff]
      %v8084 = vld [vmem:[#allocation4 + $0x28] sm:$0xff]
      %v8085 = vld [vmem:[#allocation4 + $0x30] sm:$0xff]
      %v8086 = vld [vmem:[#allocation4 + $0x38] sm:$0xff]
      %v8087 = vld [vmem:[#allocation4 + $0x40] sm:$0xff]
      %v8088 = vld [vmem:[#allocation4 + $0x48] sm:$0xff]
      %v8089 = vld [vmem:[#allocation4 + $0x50] sm:$0xff]
      %v8090 = vld [vmem:[#allocation4 + $0x58] sm:$0xff]
      %v8091 = vld [vmem:[#allocation4 + $0x60] sm:$0xff]
      %v8092 = vld [vmem:[#allocation4 + $0x68] sm:$0xff]
      %v8093 = vld [vmem:[#allocation4 + $0x70] sm:$0xff]
      %v8094 = vld [vmem:[#allocation4 + $0x78] sm:$0xff]
      %v8095 = vld [vmem:[#allocation4 + $0x80] sm:$0xff]
      %v8096 = vld [vmem:[#allocation4 + $0x88] sm:$0xff]
      %v8097 = vld [vmem:[#allocation4 + $0x90] sm:$0xff]
      %v8098 = vld [vmem:[#allocation4 + $0x98] sm:$0xff]
      %v8099 = vld [vmem:[#allocation4 + $0xa0] sm:$0xff]
      %v8100 = vld [vmem:[#allocation4 + $0xa8] sm:$0xff]
      %v8101 = vld [vmem:[#allocation4 + $0xb0] sm:$0xff]
      %v8102 = vld [vmem:[#allocation4 + $0xb8] sm:$0xff]
      %v8103 = vld [vmem:[#allocation4 + $0xc0] sm:$0xff]
      %v8104 = vld [vmem:[#allocation4 + $0xc8] sm:$0xff]
      %v8105 = vld [vmem:[#allocation4 + $0xd0] sm:$0xff]
      %v8106 = vld [vmem:[#allocation4 + $0xd8] sm:$0xff]
      %v8107 = vld [vmem:[#allocation4 + $0xe0] sm:$0xff]
      %v8108 = vld [vmem:[#allocation4 + $0xe8] sm:$0xff]
      %v8109 = vld [vmem:[#allocation4 + $0xf0] sm:$0xff]
      %v8110 = vld [vmem:[#allocation4 + $0xf8] sm:$0xff]
      %v8111 = vld [vmem:[%s4] sm:$0x1]
      %v8113 = vlaneseq
      %v8114 = vshrl.u32 %v8113, 7
      %v8115 = vsub.s32 0, %v8114
      %v8116 = vrot.slane %v8111, %v8115
      %v8118 = vadd.f32 %v8079, %v8116
      %v8119 = vadd.f32 %v8080, %v8116
      %v8120 = vadd.f32 %v8081, %v8116
      %v8121 = vadd.f32 %v8082, %v8116
      %v8122 = vadd.f32 %v8083, %v8116
      %v8123 = vadd.f32 %v8084, %v8116
      %v8124 = vadd.f32 %v8085, %v8116
      %v8125 = vadd.f32 %v8086, %v8116
      %v8126 = vadd.f32 %v8087, %v8116
      %v8127 = vadd.f32 %v8088, %v8116
      %v8128 = vadd.f32 %v8089, %v8116
      %v8129 = vadd.f32 %v8090, %v8116
      %v8130 = vadd.f32 %v8091, %v8116
      %v8131 = vadd.f32 %v8092, %v8116
      %v8132 = vadd.f32 %v8093, %v8116
      %v8133 = vadd.f32 %v8094, %v8116
      %v8134 = vadd.f32 %v8095, %v8116
      %v8135 = vadd.f32 %v8096, %v8116
      %v8136 = vadd.f32 %v8097, %v8116
      %v8137 = vadd.f32 %v8098, %v8116
      %v8138 = vadd.f32 %v8099, %v8116
      %v8139 = vadd.f32 %v8100, %v8116
      %v8140 = vadd.f32 %v8101, %v8116
      %v8141 = vadd.f32 %v8102, %v8116
      %v8142 = vadd.f32 %v8103, %v8116
      %v8143 = vadd.f32 %v8104, %v8116
      %v8144 = vadd.f32 %v8105, %v8116
      %v8145 = vadd.f32 %v8106, %v8116
      %v8146 = vadd.f32 %v8107, %v8116
      %v8147 = vadd.f32 %v8108, %v8116
      %v8148 = vadd.f32 %v8109, %v8116
      %v8149 = vadd.f32 %v8110, %v8116
      %v8150 = vmax.f32 %v8118, 0.0
      %v8151 = vmax.f32 %v8119, 0.0
      %v8152 = vmax.f32 %v8120, 0.0
      %v8153 = vmax.f32 %v8121, 0.0
      %v8154 = vmax.f32 %v8122, 0.0
      %v8155 = vmax.f32 %v8123, 0.0
      %v8156 = vmax.f32 %v8124, 0.0
      %v8157 = vmax.f32 %v8125, 0.0
      %v8158 = vmax.f32 %v8126, 0.0
      %v8159 = vmax.f32 %v8127, 0.0
      %v8160 = vmax.f32 %v8128, 0.0
      %v8161 = vmax.f32 %v8129, 0.0
      %v8162 = vmax.f32 %v8130, 0.0
      %v8163 = vmax.f32 %v8131, 0.0
      %v8164 = vmax.f32 %v8132, 0.0
      %v8165 = vmax.f32 %v8133, 0.0
      %v8166 = vmax.f32 %v8134, 0.0
      %v8167 = vmax.f32 %v8135, 0.0
      %v8168 = vmax.f32 %v8136, 0.0
      %v8169 = vmax.f32 %v8137, 0.0
      %v8170 = vmax.f32 %v8138, 0.0
      %v8171 = vmax.f32 %v8139, 0.0
      %v8172 = vmax.f32 %v8140, 0.0
      %v8173 = vmax.f32 %v8141, 0.0
      %v8174 = vmax.f32 %v8142, 0.0
      %v8175 = vmax.f32 %v8143, 0.0
      %v8176 = vmax.f32 %v8144, 0.0
      %v8177 = vmax.f32 %v8145, 0.0
      %v8178 = vmax.f32 %v8146, 0.0
      %v8179 = vmax.f32 %v8147, 0.0
      %v8180 = vmax.f32 %v8148, 0.0
      %v8181 = vmax.f32 %v8149, 0.0
      %v8182 = vpack.c.bf16 %v8151, %v8150
      %v8183 = vpack.c.bf16 %v8153, %v8152
      %v8184 = vpack.c.bf16 %v8155, %v8154
      %v8185 = vpack.c.bf16 %v8157, %v8156
      %v8186 = vpack.c.bf16 %v8159, %v8158
      %v8187 = vpack.c.bf16 %v8161, %v8160
      %v8188 = vpack.c.bf16 %v8163, %v8162
      %v8189 = vpack.c.bf16 %v8165, %v8164
      %v8190 = vpack.c.bf16 %v8167, %v8166
      %v8191 = vpack.c.bf16 %v8169, %v8168
      %v8192 = vpack.c.bf16 %v8171, %v8170
      %v8193 = vpack.c.bf16 %v8173, %v8172
      %v8194 = vpack.c.bf16 %v8175, %v8174
      %v8195 = vpack.c.bf16 %v8177, %v8176
      %v8196 = vpack.c.bf16 %v8179, %v8178
      %v8197 = vpack.c.bf16 %v8181, %v8180
      %v8214 = vunpack.c.l.b16 %v8182
      %v8215 = vunpack.c.h.b16 %v8182
      %v8216 = vunpack.c.l.b16 %v8183
      %v8217 = vunpack.c.h.b16 %v8183
      %v8218 = vunpack.c.l.b16 %v8184
      %v8219 = vunpack.c.h.b16 %v8184
      %v8220 = vunpack.c.l.b16 %v8185
      %v8221 = vunpack.c.h.b16 %v8185
      %v8222 = vunpack.c.l.b16 %v8186
      %v8223 = vunpack.c.h.b16 %v8186
      %v8224 = vunpack.c.l.b16 %v8187
      %v8225 = vunpack.c.h.b16 %v8187
      %v8226 = vunpack.c.l.b16 %v8188
      %v8227 = vunpack.c.h.b16 %v8188
      %v8228 = vunpack.c.l.b16 %v8189
      %v8229 = vunpack.c.h.b16 %v8189
      %v8230 = vunpack.c.l.b16 %v8190
      %v8231 = vunpack.c.h.b16 %v8190
      %v8232 = vunpack.c.l.b16 %v8191
      %v8233 = vunpack.c.h.b16 %v8191
      %v8234 = vunpack.c.l.b16 %v8192
      %v8235 = vunpack.c.h.b16 %v8192
      %v8236 = vunpack.c.l.b16 %v8193
      %v8237 = vunpack.c.h.b16 %v8193
      %v8238 = vunpack.c.l.b16 %v8194
      %v8239 = vunpack.c.h.b16 %v8194
      %v8240 = vunpack.c.l.b16 %v8195
      %v8241 = vunpack.c.h.b16 %v8195
      %v8242 = vunpack.c.l.b16 %v8196
      %v8243 = vunpack.c.h.b16 %v8196
      %v8244 = vunpack.c.l.b16 %v8197
      %v8245 = vunpack.c.h.b16 %v8197
      %v8246 = vpack.c.b16 %v8214, %v8214
      %v8247 = vpack.c.b16 %v8215, %v8215
      %v8248 = vpack.c.b16 %v8216, %v8216
      %v8249 = vpack.c.b16 %v8217, %v8217
      %v8250 = vpack.c.b16 %v8218, %v8218
      %v8251 = vpack.c.b16 %v8219, %v8219
      %v8252 = vpack.c.b16 %v8220, %v8220
      %v8253 = vpack.c.b16 %v8221, %v8221
      %v8254 = vpack.c.b16 %v8222, %v8222
      %v8255 = vpack.c.b16 %v8223, %v8223
      %v8256 = vpack.c.b16 %v8224, %v8224
      %v8257 = vpack.c.b16 %v8225, %v8225
      %v8258 = vpack.c.b16 %v8226, %v8226
      %v8259 = vpack.c.b16 %v8227, %v8227
      %v8260 = vpack.c.b16 %v8228, %v8228
      %v8261 = vpack.c.b16 %v8229, %v8229
      %v8262 = vpack.c.b16 %v8230, %v8230
      %v8263 = vpack.c.b16 %v8231, %v8231
      %v8264 = vpack.c.b16 %v8232, %v8232
      %v8265 = vpack.c.b16 %v8233, %v8233
      %v8266 = vpack.c.b16 %v8234, %v8234
      %v8267 = vpack.c.b16 %v8235, %v8235
      %v8268 = vpack.c.b16 %v8236, %v8236
      %v8269 = vpack.c.b16 %v8237, %v8237
      %v8270 = vpack.c.b16 %v8238, %v8238
      %v8271 = vpack.c.b16 %v8239, %v8239
      %v8272 = vpack.c.b16 %v8240, %v8240
      %v8273 = vpack.c.b16 %v8241, %v8241
      %v8274 = vpack.c.b16 %v8242, %v8242
      %v8275 = vpack.c.b16 %v8243, %v8243
      %v8276 = vpack.c.b16 %v8244, %v8244
      %v8277 = vpack.c.b16 %v8245, %v8245
      %8310 = vst [vmem:[%s262] sm:$0xf] %v8246
      %8311 = vst [vmem:[%s262 + $0x4] sm:$0xf] %v8247
      %8312 = vst [vmem:[%s262 + $0x8] sm:$0xf] %v8248
      %8313 = vst [vmem:[%s262 + $0xc] sm:$0xf] %v8249
      %8314 = vst [vmem:[%s262 + $0x10] sm:$0xf] %v8250
      %8315 = vst [vmem:[%s262 + $0x14] sm:$0xf] %v8251
      %8316 = vst [vmem:[%s262 + $0x18] sm:$0xf] %v8252
      %8317 = vst [vmem:[%s262 + $0x1c] sm:$0xf] %v8253
      %8318 = vst [vmem:[%s262 + $0x20] sm:$0xf] %v8254
      %8319 = vst [vmem:[%s262 + $0x24] sm:$0xf] %v8255
      %8320 = vst [vmem:[%s262 + $0x28] sm:$0xf] %v8256
      %8321 = vst [vmem:[%s262 + $0x2c] sm:$0xf] %v8257
      %8322 = vst [vmem:[%s262 + $0x30] sm:$0xf] %v8258
      %8323 = vst [vmem:[%s262 + $0x34] sm:$0xf] %v8259
      %8324 = vst [vmem:[%s262 + $0x38] sm:$0xf] %v8260
      %8325 = vst [vmem:[%s262 + $0x3c] sm:$0xf] %v8261
      %8326 = vst [vmem:[%s262 + $0x40] sm:$0xf] %v8262
      %8327 = vst [vmem:[%s262 + $0x44] sm:$0xf] %v8263
      %8328 = vst [vmem:[%s262 + $0x48] sm:$0xf] %v8264
      %8329 = vst [vmem:[%s262 + $0x4c] sm:$0xf] %v8265
      %8330 = vst [vmem:[%s262 + $0x50] sm:$0xf] %v8266
      %8331 = vst [vmem:[%s262 + $0x54] sm:$0xf] %v8267
      %8332 = vst [vmem:[%s262 + $0x58] sm:$0xf] %v8268
      %8333 = vst [vmem:[%s262 + $0x5c] sm:$0xf] %v8269
      %8334 = vst [vmem:[%s262 + $0x60] sm:$0xf] %v8270
      %8335 = vst [vmem:[%s262 + $0x64] sm:$0xf] %v8271
      %8336 = vst [vmem:[%s262 + $0x68] sm:$0xf] %v8272
      %8337 = vst [vmem:[%s262 + $0x6c] sm:$0xf] %v8273
      %8338 = vst [vmem:[%s262 + $0x70] sm:$0xf] %v8274
      %8339 = vst [vmem:[%s262 + $0x74] sm:$0xf] %v8275
      %8340 = vst [vmem:[%s262 + $0x78] sm:$0xf] %v8276
      %8341 = vst [vmem:[%s262 + $0x7c] sm:$0xf] %v8277
      %s8342 = smul.u32 16, %s21
      %p8343 = scmp.lt.s32.totalorder %s20, 1
      %s8344 = scalar_select %p8343, %s20, 1
      %p8345 = scmp.lt.s32.totalorder %s8342, 15
      %s8346 = scalar_select %p8345, %s8342, 15
      %s8347 = smul.addr %s8346, 2
      %s8348 = smul.addr %s8344, 32
      %s8349 = sadd.s32 %s8347, %s8348
      %s8350 = smul.addr %s8349, 4
      %s8351 = scalar_lea.vmem %s5, %s8350
      // Predicated region
      $region45: #{conv_block_forward.1} parent=39 // pred_check
        %p8352 = pneg %p160
      $region46: #{conv_block_forward.1} parent=39 // pred_check_branch
        %8354 = sbr.rel (%p8352) target = $region48
      $region47: #{conv_block_forward.1} parent=39 // pred_region
        %s8355 = smul.u32 16, %s21
      $region48: #{conv_block_forward.1} parent=39 // pred_fallthru
        _
    $region40: #{conv_block_forward.1} parent=5 // pred_fallthru
      _
    %p8356 = scmp.le.s32.totalorder 2, %s11
    // Predicated region
    $region49: #{conv_block_forward.1} parent=5 // pred_check
      %p8357 = pneg %p8356
    $region50: #{conv_block_forward.1} parent=5 // pred_check_branch
      %8359 = sbr.rel (%p8357) target = $region52
    $region51: #{conv_block_forward.1} parent=5 // pred_region
      %s8360 = ssub.s32 %s11, 2
      // Predicated region
      $region53: #{conv_block_forward.1} parent=51 // pred_check
        %p8361 = pneg %p166
      $region54: #{conv_block_forward.1} parent=51 // pred_check_branch
        %8363 = sbr.rel (%p8361) target = $region56
      $region55: #{conv_block_forward.1} parent=51 // pred_region
        %s8364 = smul.u32 16, %s23
        %p8365 = scmp.lt.s32.totalorder %s22, 1
        %s8366 = scalar_select %p8365, %s22, 1
        %p8367 = scmp.lt.s32.totalorder %s8364, 15
        %s8368 = scalar_select %p8367, %s8364, 15
        %s8369 = smul.addr %s8368, 2
        %s8370 = smul.addr %s8366, 32
        %s8371 = sadd.s32 %s8369, %s8370
        %s8372 = smul.addr %s8371, 4
        %s8373 = scalar_lea.vmem %s5, %s8372
      $region56: #{conv_block_forward.1} parent=51 // pred_fallthru
        _
    $region52: #{conv_block_forward.1} parent=5 // pred_fallthru
      _
  $region6: #{conv_block_forward.1} parent=0 // loop_footer
    %s15 = sadd.s32 1, %s11
  $region7: #{conv_block_forward.1} parent=0 // loop_footer_branch
    %10 = sbr.rel target = $region3
  $region8: #{conv_block_forward.1} parent=0 // loop_exit
    _

</llo_original>
